<compile_context>
chip_gen: v7x
topology: tpu7x:2x2x1
jax: 0.10.0
libtpu: 0.0.40
codegen_flags: <defaults>
</compile_context>

<pallas_src>
import math

import jax
import jax.numpy as jnp
from jax.experimental import pallas as pl
from jax.experimental.pallas import tpu as pltpu

# ----------------- small, module-consistent configuration -----------------
D_MODEL = 32          # d_model
NHEAD = 4             # nhead
HEAD_DIM = D_MODEL // NHEAD
D_HID = 64            # d_hid (FFN width)
NUM_LAYERS = 2        # num_layers
OBS_LEN = 6           # T (obs_len)
N_REGISTERS = 4
MAX_LEN = OBS_LEN + N_REGISTERS + 2
CTRL_HID = 32         # controller hidden width (controller[0].in_features = D_MODEL)
ACTION_DIM = 2
LN_EPS = 1e-5
BATCH = 2
SEQ = 1 + OBS_LEN + N_REGISTERS   # ctx + obs + registers = 11

# packed-parameter slab layout (lane axis is the long/last axis; every sub-block
# starts on a 128-lane boundary so in-kernel static slices are aligned views).
_WM_QKV = 0           # wmat[l, :D, 0:3D]        = in_proj_w[l]^T   (D, 3D)
_WM_OUT = 128         # wmat[l, :D, 128:128+D]   = out_proj_w[l]^T  (D, D)
_WM_FF1 = 256         # wmat[l, :D, 256:256+H]   = ff1_w[l]^T       (D, H)
_WM_FF2 = 384         # wmat[l, :H, 384:384+D]   = ff2_w[l]^T       (H, D)
_WMAT_LANES = 512
_HM_OUTCOLS = 128     # hmat[:, 128:256] maps onto the packed (B, 128) output slab
_OUT_LANES = 128      # output slab: [:, 0:2] = actions, [:, 2] = temp, rest zero


# ----------------------------- kernel helpers -----------------------------
def _layer_norm(x, w, b):
    mu = jnp.mean(x, axis=-1, keepdims=True)
    var = jnp.mean(jnp.square(x - mu), axis=-1, keepdims=True)
    return (x - mu) * jax.lax.rsqrt(var + LN_EPS) * w + b


def _gelu_exact(x):
    # PyTorch F.gelu default = exact erf form (keeps numerical parity with the
    # reference module; erf runs on the EUP).
    return 0.5 * x * (1.0 + jax.lax.erf(x / math.sqrt(2.0)))


def _softmax_last(x):
    m = jnp.max(x, axis=-1, keepdims=True)
    e = jnp.exp(x - m)
    # EUP reciprocal instead of a VPU divide (the EUP slot is otherwise idle here).
    return e * pl.reciprocal(jnp.sum(e, axis=-1, keepdims=True), approx=True)


# ------------------------------- the kernel -------------------------------
def policy_kernel(x_ref, wmat_ref, wvec_ref, hmat_ref, hvec_ref, out_ref):
    D, Dh, H = D_MODEL, HEAD_DIM, D_HID
    scale = 1.0 / math.sqrt(Dh)

    x = x_ref[...]                                           # (B, S, D), PE already added

    for l in range(NUM_LAYERS):                              # static unroll (L = 2)
        # ------- packed per-layer params: static, lane-aligned views -------
        ln1_w = wvec_ref[l, 0:1, :D]
        ln1_b = wvec_ref[l, 1:2, :D]
        ln2_w = wvec_ref[l, 2:3, :D]
        ln2_b = wvec_ref[l, 3:4, :D]
        qkv_b = wvec_ref[l, 4:5, :3 * D]
        out_b = wvec_ref[l, 5:6, :D]
        ff1_b = wvec_ref[l, 6:7, :H]
        ff2_b = wvec_ref[l, 7:8, :D]
        w_qkv = wmat_ref[l, :D, _WM_QKV:_WM_QKV + 3 * D]     # (D, 3D)
        w_out = wmat_ref[l, :D, _WM_OUT:_WM_OUT + D]         # (D, D)
        w_ff1 = wmat_ref[l, :D, _WM_FF1:_WM_FF1 + H]         # (D, H)
        w_ff2 = wmat_ref[l, :H, _WM_FF2:_WM_FF2 + D]         # (H, D)

        # --------------- pre-LN multi-head self-attention ---------------
        xn = _layer_norm(x, ln1_w, ln1_b)
        # Fused QKV projection: ONE matmul + ONE bias add for all heads.
        qkv = jnp.einsum('bsd,de->bse', xn, w_qkv,
                         preferred_element_type=jnp.float32) + qkv_b         # (B, S, 3D)

        # Per-head score contractions (Dh = 8), then a SINGLE softmax over the
        # stacked head axis (single max/exp/sum/reciprocal chain per layer).
        s_list = []
        for h in range(NHEAD):
            q_h = qkv[:, :, h * Dh:(h + 1) * Dh]
            k_h = qkv[:, :, D + h * Dh:D + (h + 1) * Dh]
            s_list.append(jnp.einsum('bqe,bke->bqk', q_h, k_h,
                                     preferred_element_type=jnp.float32))
        p_all = _softmax_last(jnp.stack(s_list, axis=1) * scale)             # (B, NH, S, S)

        o_list = []
        for h in range(NHEAD):
            v_h = qkv[:, :, 2 * D + h * Dh:2 * D + (h + 1) * Dh]
            o_list.append(jnp.einsum('bqk,bke->bqe', p_all[:, h], v_h,
                                     preferred_element_type=jnp.float32))
        o = jnp.concatenate(o_list, axis=-1)                                 # (B, S, D)

        # Fused output projection: ONE matmul + ONE bias for all heads.
        x = x + jnp.einsum('bsd,de->bse', o, w_out,
                           preferred_element_type=jnp.float32) + out_b

        # ----------------------- pre-LN feed-forward -----------------------
        xn = _layer_norm(x, ln2_w, ln2_b)
        h1 = _gelu_exact(jnp.einsum('bsd,dh->bsh', xn, w_ff1,
                                    preferred_element_type=jnp.float32) + ff1_b)
        x = x + jnp.einsum('bsh,hd->bsd', h1, w_ff2,
                           preferred_element_type=jnp.float32) + ff2_b

    # ---------------------- heads on the CTX token ----------------------
    cls = x[:, 0, :]                                         # (B, D)
    out = _layer_norm(cls, hvec_ref[0:1, :D], hvec_ref[1:2, :D])

    w_c1 = hmat_ref[0:D, 0:CTRL_HID]                                  # (D, CTRL_HID)
    # fused head matrix: rows [0:D] = temp head, rows [D:D+CTRL_HID] = controller L2
    w_head = hmat_ref[0:D + CTRL_HID, _HM_OUTCOLS:_HM_OUTCOLS + _OUT_LANES]
    c1_b = hvec_ref[2:3, :CTRL_HID]
    head_b = hvec_ref[3:4, :]                                         # (1, 128)

    hc = jnp.maximum(jnp.dot(out, w_c1, preferred_element_type=jnp.float32) + c1_b, 0.0)
    # Single fused epilogue matmul into the lane-dense (B, 128) output slab:
    # cols [0:2] = actions (controller), col [2] = temp (temp_predictor).
    feats = jnp.concatenate([out, hc], axis=-1)                       # (B, D + CTRL_HID)
    out_ref[...] = (jnp.dot(feats, w_head, preferred_element_type=jnp.float32)
                    + head_b)


# --------------------------- parameter creation ---------------------------
def init_params(key):
    keys = iter(jax.random.split(key, 32))

    def nrm(shape, scale=0.05):
        return scale * jax.random.normal(next(keys), shape, jnp.float32)

    p = {}
    p['ctx_token_emb'] = jax.random.normal(next(keys), (1, 1, D_MODEL), jnp.float32)
    p['reg_token_emb'] = jax.random.normal(next(keys), (1, N_REGISTERS, D_MODEL), jnp.float32)

    # sinusoidal positional encoding table (standard PositionalEncoding)
    pos = jnp.arange(MAX_LEN, dtype=jnp.float32)[:, None]
    div = jnp.exp(jnp.arange(0, D_MODEL, 2, dtype=jnp.float32) * (-math.log(10000.0) / D_MODEL))
    pe = jnp.zeros((MAX_LEN, D_MODEL), jnp.float32)
    pe = pe.at[:, 0::2].set(jnp.sin(pos * div))
    pe = pe.at[:, 1::2].set(jnp.cos(pos * div))
    p['pe'] = pe

    # stacked per-layer encoder params (PyTorch weight shapes: (out, in))
    L, D, H = NUM_LAYERS, D_MODEL, D_HID
    p['ln1_w'] = jnp.ones((L, D), jnp.float32)
    p['ln1_b'] = jnp.zeros((L, D), jnp.float32)
    p['in_proj_w'] = nrm((L, 3 * D, D))
    p['in_proj_b'] = nrm((L, 3 * D))
    p['out_proj_w'] = nrm((L, D, D))
    p['out_proj_b'] = nrm((L, D))
    p['ln2_w'] = jnp.ones((L, D), jnp.float32)
    p['ln2_b'] = jnp.zeros((L, D), jnp.float32)
    p['ff1_w'] = nrm((L, H, D))
    p['ff1_b'] = nrm((L, H))
    p['ff2_w'] = nrm((L, D, H))
    p['ff2_b'] = nrm((L, D))

    # final LayerNorm([d_model])
    p['lnf_w'] = jnp.ones((D,), jnp.float32)
    p['lnf_b'] = jnp.zeros((D,), jnp.float32)

    # temp_predictor: Linear(d_model, 1)
    p['tp_w'] = nrm((1, D))
    p['tp_b'] = nrm((1,))

    # controller: Sequential(Linear(d_model, CTRL_HID), ReLU, Linear(CTRL_HID, ACTION_DIM))
    p['c1_w'] = nrm((CTRL_HID, D))
    p['c1_b'] = nrm((CTRL_HID,))
    p['c2_w'] = nrm((ACTION_DIM, CTRL_HID))
    p['c2_b'] = nrm((ACTION_DIM,))
    return p


# ------------------------- host-side param packing -------------------------
def _pack_params(params):
    """Pack the ~26 individual tensors into 4 contiguous, lane-aligned slabs."""
    L, D, H = NUM_LAYERS, D_MODEL, D_HID

    # per-layer matrix slab (L, 64, 512): weights stored transposed, (in, out)
    wmat = jnp.zeros((L, H, _WMAT_LANES), jnp.float32)
    wmat = wmat.at[:, :D, _WM_QKV:_WM_QKV + 3 * D].set(jnp.swapaxes(params['in_proj_w'], 1, 2))
    wmat = wmat.at[:, :D, _WM_OUT:_WM_OUT + D].set(jnp.swapaxes(params['out_proj_w'], 1, 2))
    wmat = wmat.at[:, :D, _WM_FF1:_WM_FF1 + H].set(jnp.swapaxes(params['ff1_w'], 1, 2))
    wmat = wmat.at[:, :H, _WM_FF2:_WM_FF2 + D].set(jnp.swapaxes(params['ff2_w'], 1, 2))

    # per-layer vector slab (L, 8, 128): one padded row per LN weight / bias vector
    wvec = jnp.zeros((L, 8, 128), jnp.float32)
    for r, name in enumerate(['ln1_w', 'ln1_b', 'ln2_w', 'ln2_b',
                              'in_proj_b', 'out_proj_b', 'ff1_b', 'ff2_b']):
        v = params[name]
        wvec = wvec.at[:, r, :v.shape[-1]].set(v)

    # head matrix slab (D + CTRL_HID, 256):
    #   [:D,   0:CTRL_HID]      = c1_w^T
    #   [:D,   128 + 2 : +1]    = tp_w^T   (writes temp into output col 2)
    #   [D:,   128 : 128 + 2]   = c2_w^T   (writes actions into output cols 0:2)
    hmat = jnp.zeros((D + CTRL_HID, _HM_OUTCOLS + _OUT_LANES), jnp.float32)
    hmat = hmat.at[:D, :CTRL_HID].set(params['c1_w'].T)
    hmat = hmat.at[:D, _HM_OUTCOLS + ACTION_DIM:_HM_OUTCOLS + ACTION_DIM + 1].set(params['tp_w'].T)
    hmat = hmat.at[D:D + CTRL_HID, _HM_OUTCOLS:_HM_OUTCOLS + ACTION_DIM].set(params['c2_w'].T)

    # head vector slab (4, 128): lnf_w, lnf_b, c1_b, packed output bias [c2_b | tp_b | 0]
    hvec = jnp.zeros((4, 128), jnp.float32)
    hvec = hvec.at[0, :D].set(params['lnf_w'])
    hvec = hvec.at[1, :D].set(params['lnf_b'])
    hvec = hvec.at[2, :CTRL_HID].set(params['c1_b'])
    hvec = hvec.at[3, :ACTION_DIM].set(params['c2_b'])
    hvec = hvec.at[3, ACTION_DIM:ACTION_DIM + 1].set(params['tp_b'])
    return wmat, wvec, hmat, hvec


# ------------------------------ host wrapper ------------------------------
def transformer_policy_forward(src, params):
    """src: (B, T, L=d_model) float32 -> (actions (B, ACTION_DIM), temp (B, 1))."""
    B = src.shape[0]

    # token assembly + positional encoding (pure data prep; dropout in
    # PositionalEncoding is identity in eval)
    ctx = jnp.broadcast_to(params['ctx_token_emb'], (B, 1, D_MODEL))
    reg = jnp.broadcast_to(params['reg_token_emb'], (B, N_REGISTERS, D_MODEL))
    tokens = jnp.concatenate([ctx, src, reg], axis=1)                  # (B, S, D)
    x = tokens + params['pe'][:tokens.shape[1]][None, :, :]

    wmat, wvec, hmat, hvec = _pack_params(params)

    vmem = pltpu.MemorySpace.VMEM
    # Total kernel footprint < 0.5 MiB -> default scoped-VMEM limit is ample.
    # NOTE: for large production batches, add a batch grid axis with
    # dimension_semantics=("parallel",) so v7x's second TensorCore is used.
    packed = pl.pallas_call(
        policy_kernel,
        out_shape=jax.ShapeDtypeStruct((B, _OUT_LANES), jnp.float32),
        in_specs=[pl.BlockSpec(memory_space=vmem)] * 5,
        out_specs=pl.BlockSpec(memory_space=vmem),
    )(x, wmat, wvec, hmat, hvec)

    actions = packed[:, :ACTION_DIM]
    temp = packed[:, ACTION_DIM:ACTION_DIM + 1]
    return actions, temp


if __name__ == "__main__":
    key = jax.random.PRNGKey(0)
    pkey, xkey = jax.random.split(key)
    params = init_params(pkey)
    src = jax.random.normal(xkey, (BATCH, OBS_LEN, D_MODEL), jnp.float32)   # (B, T, L)

    actions, temp = jax.jit(transformer_policy_forward)(src, params)
    jax.block_until_ready((actions, temp))

    assert actions.shape == (BATCH, ACTION_DIM)
    assert temp.shape == (BATCH, 1)
    assert bool(jnp.all(jnp.isfinite(actions))) and bool(jnp.all(jnp.isfinite(temp)))
    print("KERNEL_OK")
</pallas_src>

<mosaic_0001>
module attributes {stable_mosaic.version = 11 : i64} {
  func.func @policy_kernel(%arg0: memref<2x11x32xf32, #tpu.memory_space<vmem>>, %arg1: memref<2x64x512xf32, #tpu.memory_space<vmem>>, %arg2: memref<2x8x128xf32, #tpu.memory_space<vmem>>, %arg3: memref<64x256xf32, #tpu.memory_space<vmem>>, %arg4: memref<4x128xf32, #tpu.memory_space<vmem>>, %arg5: memref<2x128xf32, #tpu.memory_space<vmem>>) attributes {dimension_semantics = [], scalar_prefetch = 0 : i64, scratch_operands = 0 : i64, tpu.core_type = #tpu.core_type<tc>} {
    %c0 = arith.constant 0 : index
    %c0_0 = arith.constant 0 : index
    %c0_1 = arith.constant 0 : index
    %0 = vector.load %arg0[%c0, %c0_0, %c0_1] : memref<2x11x32xf32, #tpu.memory_space<vmem>>, vector<2x11x32xf32>
    %c0_2 = arith.constant 0 : index
    %c0_3 = arith.constant 0 : index
    %c0_4 = arith.constant 0 : index
    %1 = vector.load %arg2[%c0_2, %c0_3, %c0_4] : memref<2x8x128xf32, #tpu.memory_space<vmem>>, vector<1x1x32xf32>
    %2 = vector.shape_cast %1 : vector<1x1x32xf32> to vector<1x32xf32>
    %c0_5 = arith.constant 0 : index
    %c1 = arith.constant 1 : index
    %c0_6 = arith.constant 0 : index
    %3 = vector.load %arg2[%c0_5, %c1, %c0_6] : memref<2x8x128xf32, #tpu.memory_space<vmem>>, vector<1x1x32xf32>
    %4 = vector.shape_cast %3 : vector<1x1x32xf32> to vector<1x32xf32>
    %c0_7 = arith.constant 0 : index
    %c2 = arith.constant 2 : index
    %c0_8 = arith.constant 0 : index
    %5 = vector.load %arg2[%c0_7, %c2, %c0_8] : memref<2x8x128xf32, #tpu.memory_space<vmem>>, vector<1x1x32xf32>
    %6 = vector.shape_cast %5 : vector<1x1x32xf32> to vector<1x32xf32>
    %c0_9 = arith.constant 0 : index
    %c3 = arith.constant 3 : index
    %c0_10 = arith.constant 0 : index
    %7 = vector.load %arg2[%c0_9, %c3, %c0_10] : memref<2x8x128xf32, #tpu.memory_space<vmem>>, vector<1x1x32xf32>
    %8 = vector.shape_cast %7 : vector<1x1x32xf32> to vector<1x32xf32>
    %c0_11 = arith.constant 0 : index
    %c4 = arith.constant 4 : index
    %c0_12 = arith.constant 0 : index
    %9 = vector.load %arg2[%c0_11, %c4, %c0_12] : memref<2x8x128xf32, #tpu.memory_space<vmem>>, vector<1x1x96xf32>
    %10 = vector.shape_cast %9 : vector<1x1x96xf32> to vector<1x96xf32>
    %c0_13 = arith.constant 0 : index
    %c5 = arith.constant 5 : index
    %c0_14 = arith.constant 0 : index
    %11 = vector.load %arg2[%c0_13, %c5, %c0_14] : memref<2x8x128xf32, #tpu.memory_space<vmem>>, vector<1x1x32xf32>
    %12 = vector.shape_cast %11 : vector<1x1x32xf32> to vector<1x32xf32>
    %c0_15 = arith.constant 0 : index
    %c6 = arith.constant 6 : index
    %c0_16 = arith.constant 0 : index
    %13 = vector.load %arg2[%c0_15, %c6, %c0_16] : memref<2x8x128xf32, #tpu.memory_space<vmem>>, vector<1x1x64xf32>
    %14 = vector.shape_cast %13 : vector<1x1x64xf32> to vector<1x64xf32>
    %c0_17 = arith.constant 0 : index
    %c7 = arith.constant 7 : index
    %c0_18 = arith.constant 0 : index
    %15 = vector.load %arg2[%c0_17, %c7, %c0_18] : memref<2x8x128xf32, #tpu.memory_space<vmem>>, vector<1x1x32xf32>
    %16 = vector.shape_cast %15 : vector<1x1x32xf32> to vector<1x32xf32>
    %c0_19 = arith.constant 0 : index
    %c0_20 = arith.constant 0 : index
    %c0_21 = arith.constant 0 : index
    %17 = vector.load %arg1[%c0_19, %c0_20, %c0_21] : memref<2x64x512xf32, #tpu.memory_space<vmem>>, vector<1x32x96xf32>
    %18 = vector.shape_cast %17 : vector<1x32x96xf32> to vector<32x96xf32>
    %c0_22 = arith.constant 0 : index
    %c0_23 = arith.constant 0 : index
    %c128 = arith.constant 128 : index
    %19 = vector.load %arg1[%c0_22, %c0_23, %c128] : memref<2x64x512xf32, #tpu.memory_space<vmem>>, vector<1x32x32xf32>
    %20 = vector.shape_cast %19 : vector<1x32x32xf32> to vector<32x32xf32>
    %c0_24 = arith.constant 0 : index
    %c0_25 = arith.constant 0 : index
    %c256 = arith.constant 256 : index
    %21 = vector.load %arg1[%c0_24, %c0_25, %c256] : memref<2x64x512xf32, #tpu.memory_space<vmem>>, vector<1x32x64xf32>
    %22 = vector.shape_cast %21 : vector<1x32x64xf32> to vector<32x64xf32>
    %c0_26 = arith.constant 0 : index
    %c0_27 = arith.constant 0 : index
    %c384 = arith.constant 384 : index
    %23 = vector.load %arg1[%c0_26, %c0_27, %c384] : memref<2x64x512xf32, #tpu.memory_space<vmem>>, vector<1x64x32xf32>
    %24 = vector.shape_cast %23 : vector<1x64x32xf32> to vector<64x32xf32>
    %cst = arith.constant dense<0.000000e+00> : vector<2x11xf32>
    %25 = vector.multi_reduction <add>, %0, %cst [2] : vector<2x11x32xf32> to vector<2x11xf32>
    %26 = vector.shape_cast %25 : vector<2x11xf32> to vector<2x11x1xf32>
    %cst_28 = arith.constant 3.200000e+01 : f32
    %27 = vector.broadcast %cst_28 : f32 to vector<2x11x1xf32>
    %28 = arith.divf %26, %27 : vector<2x11x1xf32>
    %29 = vector.broadcast %28 : vector<2x11x1xf32> to vector<2x11x32xf32>
    %30 = arith.subf %0, %29 : vector<2x11x32xf32>
    %31 = arith.mulf %30, %30 : vector<2x11x32xf32>
    %cst_29 = arith.constant dense<0.000000e+00> : vector<2x11xf32>
    %32 = vector.multi_reduction <add>, %31, %cst_29 [2] : vector<2x11x32xf32> to vector<2x11xf32>
    %33 = vector.shape_cast %32 : vector<2x11xf32> to vector<2x11x1xf32>
    %cst_30 = arith.constant 3.200000e+01 : f32
    %34 = vector.broadcast %cst_30 : f32 to vector<2x11x1xf32>
    %35 = arith.divf %33, %34 : vector<2x11x1xf32>
    %36 = vector.broadcast %28 : vector<2x11x1xf32> to vector<2x11x32xf32>
    %37 = arith.subf %0, %36 : vector<2x11x32xf32>
    %cst_31 = arith.constant 9.99999974E-6 : f32
    %38 = vector.broadcast %cst_31 : f32 to vector<2x11x1xf32>
    %39 = arith.addf %35, %38 : vector<2x11x1xf32>
    %40 = math.rsqrt %39 : vector<2x11x1xf32>
    %41 = vector.broadcast %40 : vector<2x11x1xf32> to vector<2x11x32xf32>
    %42 = arith.mulf %37, %41 : vector<2x11x32xf32>
    %43 = vector.shape_cast %2 : vector<1x32xf32> to vector<1x1x32xf32>
    %44 = vector.broadcast %43 : vector<1x1x32xf32> to vector<2x11x32xf32>
    %45 = arith.mulf %42, %44 : vector<2x11x32xf32>
    %46 = vector.shape_cast %4 : vector<1x32xf32> to vector<1x1x32xf32>
    %47 = vector.broadcast %46 : vector<1x1x32xf32> to vector<2x11x32xf32>
    %48 = arith.addf %45, %47 : vector<2x11x32xf32>
    "tpu.trace_start"() <{level = 10 : i32, message = "bsd,de->bse"}> : () -> ()
    %cst_32 = arith.constant dense<0.000000e+00> : vector<2x11x96xf32>
    %49 = tpu.matmul %48, %18, %cst_32 {dimension_numbers = #tpu.dot_dimension_numbers<[2], [0], [0, 1], [1], [0, 0, 0, 1, 1, 1], [], []>} : vector<2x11x32xf32>, vector<32x96xf32>, vector<2x11x96xf32> -> vector<2x11x96xf32>
    "tpu.trace_stop"() : () -> ()
    %50 = vector.shape_cast %10 : vector<1x96xf32> to vector<1x1x96xf32>
    %51 = vector.broadcast %50 : vector<1x1x96xf32> to vector<2x11x96xf32>
    %52 = arith.addf %49, %51 : vector<2x11x96xf32>
    %53 = vector.extract_strided_slice %52 {offsets = [0, 0, 0], sizes = [2, 11, 8], strides = [1, 1, 1]} : vector<2x11x96xf32> to vector<2x11x8xf32>
    %54 = vector.extract_strided_slice %52 {offsets = [0, 0, 32], sizes = [2, 11, 8], strides = [1, 1, 1]} : vector<2x11x96xf32> to vector<2x11x8xf32>
    "tpu.trace_start"() <{level = 10 : i32, message = "bqe,bke->bqk"}> : () -> ()
    %cst_33 = arith.constant dense<0.000000e+00> : vector<2x11x11xf32>
    %55 = tpu.matmul %53, %54, %cst_33 {dimension_numbers = #tpu.dot_dimension_numbers<[2], [2], [1], [1], [0, 0, 0, 1, 1, 1], [0], [0]>} : vector<2x11x8xf32>, vector<2x11x8xf32>, vector<2x11x11xf32> -> vector<2x11x11xf32>
    "tpu.trace_stop"() : () -> ()
    %56 = vector.extract_strided_slice %52 {offsets = [0, 0, 8], sizes = [2, 11, 8], strides = [1, 1, 1]} : vector<2x11x96xf32> to vector<2x11x8xf32>
    %57 = vector.extract_strided_slice %52 {offsets = [0, 0, 40], sizes = [2, 11, 8], strides = [1, 1, 1]} : vector<2x11x96xf32> to vector<2x11x8xf32>
    "tpu.trace_start"() <{level = 10 : i32, message = "bqe,bke->bqk"}> : () -> ()
    %cst_34 = arith.constant dense<0.000000e+00> : vector<2x11x11xf32>
    %58 = tpu.matmul %56, %57, %cst_34 {dimension_numbers = #tpu.dot_dimension_numbers<[2], [2], [1], [1], [0, 0, 0, 1, 1, 1], [0], [0]>} : vector<2x11x8xf32>, vector<2x11x8xf32>, vector<2x11x11xf32> -> vector<2x11x11xf32>
    "tpu.trace_stop"() : () -> ()
    %59 = vector.extract_strided_slice %52 {offsets = [0, 0, 16], sizes = [2, 11, 8], strides = [1, 1, 1]} : vector<2x11x96xf32> to vector<2x11x8xf32>
    %60 = vector.extract_strided_slice %52 {offsets = [0, 0, 48], sizes = [2, 11, 8], strides = [1, 1, 1]} : vector<2x11x96xf32> to vector<2x11x8xf32>
    "tpu.trace_start"() <{level = 10 : i32, message = "bqe,bke->bqk"}> : () -> ()
    %cst_35 = arith.constant dense<0.000000e+00> : vector<2x11x11xf32>
    %61 = tpu.matmul %59, %60, %cst_35 {dimension_numbers = #tpu.dot_dimension_numbers<[2], [2], [1], [1], [0, 0, 0, 1, 1, 1], [0], [0]>} : vector<2x11x8xf32>, vector<2x11x8xf32>, vector<2x11x11xf32> -> vector<2x11x11xf32>
    "tpu.trace_stop"() : () -> ()
    %62 = vector.extract_strided_slice %52 {offsets = [0, 0, 24], sizes = [2, 11, 8], strides = [1, 1, 1]} : vector<2x11x96xf32> to vector<2x11x8xf32>
    %63 = vector.extract_strided_slice %52 {offsets = [0, 0, 56], sizes = [2, 11, 8], strides = [1, 1, 1]} : vector<2x11x96xf32> to vector<2x11x8xf32>
    "tpu.trace_start"() <{level = 10 : i32, message = "bqe,bke->bqk"}> : () -> ()
    %cst_36 = arith.constant dense<0.000000e+00> : vector<2x11x11xf32>
    %64 = tpu.matmul %62, %63, %cst_36 {dimension_numbers = #tpu.dot_dimension_numbers<[2], [2], [1], [1], [0, 0, 0, 1, 1, 1], [0], [0]>} : vector<2x11x8xf32>, vector<2x11x8xf32>, vector<2x11x11xf32> -> vector<2x11x11xf32>
    "tpu.trace_stop"() : () -> ()
    %65 = vector.shape_cast %55 : vector<2x11x11xf32> to vector<2x1x11x11xf32>
    %66 = vector.shape_cast %58 : vector<2x11x11xf32> to vector<2x1x11x11xf32>
    %67 = vector.shape_cast %61 : vector<2x11x11xf32> to vector<2x1x11x11xf32>
    %68 = vector.shape_cast %64 : vector<2x11x11xf32> to vector<2x1x11x11xf32>
    %69 = tpu.concatenate %65, %66, %67, %68 in 1 : vector<2x1x11x11xf32>, vector<2x1x11x11xf32>, vector<2x1x11x11xf32>, vector<2x1x11x11xf32> -> vector<2x4x11x11xf32>
    %cst_37 = arith.constant 0.353553385 : f32
    %70 = vector.broadcast %cst_37 : f32 to vector<2x4x11x11xf32>
    %71 = arith.mulf %69, %70 : vector<2x4x11x11xf32>
    %cst_38 = arith.constant dense<0xFF800000> : vector<2x4x11xf32>
    %72 = vector.multi_reduction <maximumf>, %71, %cst_38 [3] : vector<2x4x11x11xf32> to vector<2x4x11xf32>
    %73 = vector.shape_cast %72 : vector<2x4x11xf32> to vector<2x4x11x1xf32>
    %74 = vector.broadcast %73 : vector<2x4x11x1xf32> to vector<2x4x11x11xf32>
    %75 = arith.subf %71, %74 : vector<2x4x11x11xf32>
    %76 = math.exp %75 : vector<2x4x11x11xf32>
    %cst_39 = arith.constant dense<0.000000e+00> : vector<2x4x11xf32>
    %77 = vector.multi_reduction <add>, %76, %cst_39 [3] : vector<2x4x11x11xf32> to vector<2x4x11xf32>
    %78 = vector.shape_cast %77 : vector<2x4x11xf32> to vector<2x4x11x1xf32>
    %79 = tpu.reciprocal %78 {approx = true} : vector<2x4x11x1xf32> -> vector<2x4x11x1xf32>
    %80 = vector.broadcast %79 : vector<2x4x11x1xf32> to vector<2x4x11x11xf32>
    %81 = arith.mulf %76, %80 : vector<2x4x11x11xf32>
    %82 = vector.extract_strided_slice %52 {offsets = [0, 0, 64], sizes = [2, 11, 8], strides = [1, 1, 1]} : vector<2x11x96xf32> to vector<2x11x8xf32>
    %83 = vector.extract_strided_slice %81 {offsets = [0, 0, 0, 0], sizes = [2, 1, 11, 11], strides = [1, 1, 1, 1]} : vector<2x4x11x11xf32> to vector<2x1x11x11xf32>
    %84 = vector.shape_cast %83 : vector<2x1x11x11xf32> to vector<2x11x11xf32>
    "tpu.trace_start"() <{level = 10 : i32, message = "bqk,bke->bqe"}> : () -> ()
    %cst_40 = arith.constant dense<0.000000e+00> : vector<2x11x8xf32>
    %85 = tpu.matmul %84, %82, %cst_40 {dimension_numbers = #tpu.dot_dimension_numbers<[2], [1], [1], [2], [0, 0, 0, 1, 1, 2], [0], [0]>} : vector<2x11x11xf32>, vector<2x11x8xf32>, vector<2x11x8xf32> -> vector<2x11x8xf32>
    "tpu.trace_stop"() : () -> ()
    %86 = vector.extract_strided_slice %52 {offsets = [0, 0, 72], sizes = [2, 11, 8], strides = [1, 1, 1]} : vector<2x11x96xf32> to vector<2x11x8xf32>
    %87 = vector.extract_strided_slice %81 {offsets = [0, 1, 0, 0], sizes = [2, 1, 11, 11], strides = [1, 1, 1, 1]} : vector<2x4x11x11xf32> to vector<2x1x11x11xf32>
    %88 = vector.shape_cast %87 : vector<2x1x11x11xf32> to vector<2x11x11xf32>
    "tpu.trace_start"() <{level = 10 : i32, message = "bqk,bke->bqe"}> : () -> ()
    %cst_41 = arith.constant dense<0.000000e+00> : vector<2x11x8xf32>
    %89 = tpu.matmul %88, %86, %cst_41 {dimension_numbers = #tpu.dot_dimension_numbers<[2], [1], [1], [2], [0, 0, 0, 1, 1, 2], [0], [0]>} : vector<2x11x11xf32>, vector<2x11x8xf32>, vector<2x11x8xf32> -> vector<2x11x8xf32>
    "tpu.trace_stop"() : () -> ()
    %90 = vector.extract_strided_slice %52 {offsets = [0, 0, 80], sizes = [2, 11, 8], strides = [1, 1, 1]} : vector<2x11x96xf32> to vector<2x11x8xf32>
    %91 = vector.extract_strided_slice %81 {offsets = [0, 2, 0, 0], sizes = [2, 1, 11, 11], strides = [1, 1, 1, 1]} : vector<2x4x11x11xf32> to vector<2x1x11x11xf32>
    %92 = vector.shape_cast %91 : vector<2x1x11x11xf32> to vector<2x11x11xf32>
    "tpu.trace_start"() <{level = 10 : i32, message = "bqk,bke->bqe"}> : () -> ()
    %cst_42 = arith.constant dense<0.000000e+00> : vector<2x11x8xf32>
    %93 = tpu.matmul %92, %90, %cst_42 {dimension_numbers = #tpu.dot_dimension_numbers<[2], [1], [1], [2], [0, 0, 0, 1, 1, 2], [0], [0]>} : vector<2x11x11xf32>, vector<2x11x8xf32>, vector<2x11x8xf32> -> vector<2x11x8xf32>
    "tpu.trace_stop"() : () -> ()
    %94 = vector.extract_strided_slice %52 {offsets = [0, 0, 88], sizes = [2, 11, 8], strides = [1, 1, 1]} : vector<2x11x96xf32> to vector<2x11x8xf32>
    %95 = vector.extract_strided_slice %81 {offsets = [0, 3, 0, 0], sizes = [2, 1, 11, 11], strides = [1, 1, 1, 1]} : vector<2x4x11x11xf32> to vector<2x1x11x11xf32>
    %96 = vector.shape_cast %95 : vector<2x1x11x11xf32> to vector<2x11x11xf32>
    "tpu.trace_start"() <{level = 10 : i32, message = "bqk,bke->bqe"}> : () -> ()
    %cst_43 = arith.constant dense<0.000000e+00> : vector<2x11x8xf32>
    %97 = tpu.matmul %96, %94, %cst_43 {dimension_numbers = #tpu.dot_dimension_numbers<[2], [1], [1], [2], [0, 0, 0, 1, 1, 2], [0], [0]>} : vector<2x11x11xf32>, vector<2x11x8xf32>, vector<2x11x8xf32> -> vector<2x11x8xf32>
    "tpu.trace_stop"() : () -> ()
    %98 = tpu.concatenate %85, %89, %93, %97 in 2 : vector<2x11x8xf32>, vector<2x11x8xf32>, vector<2x11x8xf32>, vector<2x11x8xf32> -> vector<2x11x32xf32>
    "tpu.trace_start"() <{level = 10 : i32, message = "bsd,de->bse"}> : () -> ()
    %cst_44 = arith.constant dense<0.000000e+00> : vector<2x11x32xf32>
    %99 = tpu.matmul %98, %20, %cst_44 {dimension_numbers = #tpu.dot_dimension_numbers<[2], [0], [0, 1], [1], [0, 0, 0, 1, 1, 1], [], []>} : vector<2x11x32xf32>, vector<32x32xf32>, vector<2x11x32xf32> -> vector<2x11x32xf32>
    "tpu.trace_stop"() : () -> ()
    %100 = arith.addf %0, %99 : vector<2x11x32xf32>
    %101 = vector.shape_cast %12 : vector<1x32xf32> to vector<1x1x32xf32>
    %102 = vector.broadcast %101 : vector<1x1x32xf32> to vector<2x11x32xf32>
    %103 = arith.addf %100, %102 : vector<2x11x32xf32>
    %cst_45 = arith.constant dense<0.000000e+00> : vector<2x11xf32>
    %104 = vector.multi_reduction <add>, %103, %cst_45 [2] : vector<2x11x32xf32> to vector<2x11xf32>
    %105 = vector.shape_cast %104 : vector<2x11xf32> to vector<2x11x1xf32>
    %cst_46 = arith.constant 3.200000e+01 : f32
    %106 = vector.broadcast %cst_46 : f32 to vector<2x11x1xf32>
    %107 = arith.divf %105, %106 : vector<2x11x1xf32>
    %108 = vector.broadcast %107 : vector<2x11x1xf32> to vector<2x11x32xf32>
    %109 = arith.subf %103, %108 : vector<2x11x32xf32>
    %110 = arith.mulf %109, %109 : vector<2x11x32xf32>
    %cst_47 = arith.constant dense<0.000000e+00> : vector<2x11xf32>
    %111 = vector.multi_reduction <add>, %110, %cst_47 [2] : vector<2x11x32xf32> to vector<2x11xf32>
    %112 = vector.shape_cast %111 : vector<2x11xf32> to vector<2x11x1xf32>
    %cst_48 = arith.constant 3.200000e+01 : f32
    %113 = vector.broadcast %cst_48 : f32 to vector<2x11x1xf32>
    %114 = arith.divf %112, %113 : vector<2x11x1xf32>
    %115 = vector.broadcast %107 : vector<2x11x1xf32> to vector<2x11x32xf32>
    %116 = arith.subf %103, %115 : vector<2x11x32xf32>
    %cst_49 = arith.constant 9.99999974E-6 : f32
    %117 = vector.broadcast %cst_49 : f32 to vector<2x11x1xf32>
    %118 = arith.addf %114, %117 : vector<2x11x1xf32>
    %119 = math.rsqrt %118 : vector<2x11x1xf32>
    %120 = vector.broadcast %119 : vector<2x11x1xf32> to vector<2x11x32xf32>
    %121 = arith.mulf %116, %120 : vector<2x11x32xf32>
    %122 = vector.shape_cast %6 : vector<1x32xf32> to vector<1x1x32xf32>
    %123 = vector.broadcast %122 : vector<1x1x32xf32> to vector<2x11x32xf32>
    %124 = arith.mulf %121, %123 : vector<2x11x32xf32>
    %125 = vector.shape_cast %8 : vector<1x32xf32> to vector<1x1x32xf32>
    %126 = vector.broadcast %125 : vector<1x1x32xf32> to vector<2x11x32xf32>
    %127 = arith.addf %124, %126 : vector<2x11x32xf32>
    "tpu.trace_start"() <{level = 10 : i32, message = "bsd,dh->bsh"}> : () -> ()
    %cst_50 = arith.constant dense<0.000000e+00> : vector<2x11x64xf32>
    %128 = tpu.matmul %127, %22, %cst_50 {dimension_numbers = #tpu.dot_dimension_numbers<[2], [0], [0, 1], [1], [0, 0, 0, 1, 1, 1], [], []>} : vector<2x11x32xf32>, vector<32x64xf32>, vector<2x11x64xf32> -> vector<2x11x64xf32>
    "tpu.trace_stop"() : () -> ()
    %129 = vector.shape_cast %14 : vector<1x64xf32> to vector<1x1x64xf32>
    %130 = vector.broadcast %129 : vector<1x1x64xf32> to vector<2x11x64xf32>
    %131 = arith.addf %128, %130 : vector<2x11x64xf32>
    %cst_51 = arith.constant 5.000000e-01 : f32
    %132 = vector.broadcast %cst_51 : f32 to vector<2x11x64xf32>
    %133 = arith.mulf %132, %131 : vector<2x11x64xf32>
    %cst_52 = arith.constant 1.41421354 : f32
    %134 = vector.broadcast %cst_52 : f32 to vector<2x11x64xf32>
    %135 = arith.divf %131, %134 : vector<2x11x64xf32>
    %136 = math.erf %135 : vector<2x11x64xf32>
    %cst_53 = arith.constant 1.000000e+00 : f32
    %137 = vector.broadcast %cst_53 : f32 to vector<2x11x64xf32>
    %138 = arith.addf %137, %136 : vector<2x11x64xf32>
    %139 = arith.mulf %133, %138 : vector<2x11x64xf32>
    "tpu.trace_start"() <{level = 10 : i32, message = "bsh,hd->bsd"}> : () -> ()
    %cst_54 = arith.constant dense<0.000000e+00> : vector<2x11x32xf32>
    %140 = tpu.matmul %139, %24, %cst_54 {dimension_numbers = #tpu.dot_dimension_numbers<[2], [0], [0, 1], [1], [0, 0, 0, 1, 1, 1], [], []>} : vector<2x11x64xf32>, vector<64x32xf32>, vector<2x11x32xf32> -> vector<2x11x32xf32>
    "tpu.trace_stop"() : () -> ()
    %141 = arith.addf %103, %140 : vector<2x11x32xf32>
    %142 = vector.shape_cast %16 : vector<1x32xf32> to vector<1x1x32xf32>
    %143 = vector.broadcast %142 : vector<1x1x32xf32> to vector<2x11x32xf32>
    %144 = arith.addf %141, %143 : vector<2x11x32xf32>
    %c1_55 = arith.constant 1 : index
    %c0_56 = arith.constant 0 : index
    %c0_57 = arith.constant 0 : index
    %145 = vector.load %arg2[%c1_55, %c0_56, %c0_57] : memref<2x8x128xf32, #tpu.memory_space<vmem>>, vector<1x1x32xf32>
    %146 = vector.shape_cast %145 : vector<1x1x32xf32> to vector<1x32xf32>
    %c1_58 = arith.constant 1 : index
    %c1_59 = arith.constant 1 : index
    %c0_60 = arith.constant 0 : index
    %147 = vector.load %arg2[%c1_58, %c1_59, %c0_60] : memref<2x8x128xf32, #tpu.memory_space<vmem>>, vector<1x1x32xf32>
    %148 = vector.shape_cast %147 : vector<1x1x32xf32> to vector<1x32xf32>
    %c1_61 = arith.constant 1 : index
    %c2_62 = arith.constant 2 : index
    %c0_63 = arith.constant 0 : index
    %149 = vector.load %arg2[%c1_61, %c2_62, %c0_63] : memref<2x8x128xf32, #tpu.memory_space<vmem>>, vector<1x1x32xf32>
    %150 = vector.shape_cast %149 : vector<1x1x32xf32> to vector<1x32xf32>
    %c1_64 = arith.constant 1 : index
    %c3_65 = arith.constant 3 : index
    %c0_66 = arith.constant 0 : index
    %151 = vector.load %arg2[%c1_64, %c3_65, %c0_66] : memref<2x8x128xf32, #tpu.memory_space<vmem>>, vector<1x1x32xf32>
    %152 = vector.shape_cast %151 : vector<1x1x32xf32> to vector<1x32xf32>
    %c1_67 = arith.constant 1 : index
    %c4_68 = arith.constant 4 : index
    %c0_69 = arith.constant 0 : index
    %153 = vector.load %arg2[%c1_67, %c4_68, %c0_69] : memref<2x8x128xf32, #tpu.memory_space<vmem>>, vector<1x1x96xf32>
    %154 = vector.shape_cast %153 : vector<1x1x96xf32> to vector<1x96xf32>
    %c1_70 = arith.constant 1 : index
    %c5_71 = arith.constant 5 : index
    %c0_72 = arith.constant 0 : index
    %155 = vector.load %arg2[%c1_70, %c5_71, %c0_72] : memref<2x8x128xf32, #tpu.memory_space<vmem>>, vector<1x1x32xf32>
    %156 = vector.shape_cast %155 : vector<1x1x32xf32> to vector<1x32xf32>
    %c1_73 = arith.constant 1 : index
    %c6_74 = arith.constant 6 : index
    %c0_75 = arith.constant 0 : index
    %157 = vector.load %arg2[%c1_73, %c6_74, %c0_75] : memref<2x8x128xf32, #tpu.memory_space<vmem>>, vector<1x1x64xf32>
    %158 = vector.shape_cast %157 : vector<1x1x64xf32> to vector<1x64xf32>
    %c1_76 = arith.constant 1 : index
    %c7_77 = arith.constant 7 : index
    %c0_78 = arith.constant 0 : index
    %159 = vector.load %arg2[%c1_76, %c7_77, %c0_78] : memref<2x8x128xf32, #tpu.memory_space<vmem>>, vector<1x1x32xf32>
    %160 = vector.shape_cast %159 : vector<1x1x32xf32> to vector<1x32xf32>
    %c1_79 = arith.constant 1 : index
    %c0_80 = arith.constant 0 : index
    %c0_81 = arith.constant 0 : index
    %161 = vector.load %arg1[%c1_79, %c0_80, %c0_81] : memref<2x64x512xf32, #tpu.memory_space<vmem>>, vector<1x32x96xf32>
    %162 = vector.shape_cast %161 : vector<1x32x96xf32> to vector<32x96xf32>
    %c1_82 = arith.constant 1 : index
    %c0_83 = arith.constant 0 : index
    %c128_84 = arith.constant 128 : index
    %163 = vector.load %arg1[%c1_82, %c0_83, %c128_84] : memref<2x64x512xf32, #tpu.memory_space<vmem>>, vector<1x32x32xf32>
    %164 = vector.shape_cast %163 : vector<1x32x32xf32> to vector<32x32xf32>
    %c1_85 = arith.constant 1 : index
    %c0_86 = arith.constant 0 : index
    %c256_87 = arith.constant 256 : index
    %165 = vector.load %arg1[%c1_85, %c0_86, %c256_87] : memref<2x64x512xf32, #tpu.memory_space<vmem>>, vector<1x32x64xf32>
    %166 = vector.shape_cast %165 : vector<1x32x64xf32> to vector<32x64xf32>
    %c1_88 = arith.constant 1 : index
    %c0_89 = arith.constant 0 : index
    %c384_90 = arith.constant 384 : index
    %167 = vector.load %arg1[%c1_88, %c0_89, %c384_90] : memref<2x64x512xf32, #tpu.memory_space<vmem>>, vector<1x64x32xf32>
    %168 = vector.shape_cast %167 : vector<1x64x32xf32> to vector<64x32xf32>
    %cst_91 = arith.constant dense<0.000000e+00> : vector<2x11xf32>
    %169 = vector.multi_reduction <add>, %144, %cst_91 [2] : vector<2x11x32xf32> to vector<2x11xf32>
    %170 = vector.shape_cast %169 : vector<2x11xf32> to vector<2x11x1xf32>
    %cst_92 = arith.constant 3.200000e+01 : f32
    %171 = vector.broadcast %cst_92 : f32 to vector<2x11x1xf32>
    %172 = arith.divf %170, %171 : vector<2x11x1xf32>
    %173 = vector.broadcast %172 : vector<2x11x1xf32> to vector<2x11x32xf32>
    %174 = arith.subf %144, %173 : vector<2x11x32xf32>
    %175 = arith.mulf %174, %174 : vector<2x11x32xf32>
    %cst_93 = arith.constant dense<0.000000e+00> : vector<2x11xf32>
    %176 = vector.multi_reduction <add>, %175, %cst_93 [2] : vector<2x11x32xf32> to vector<2x11xf32>
    %177 = vector.shape_cast %176 : vector<2x11xf32> to vector<2x11x1xf32>
    %cst_94 = arith.constant 3.200000e+01 : f32
    %178 = vector.broadcast %cst_94 : f32 to vector<2x11x1xf32>
    %179 = arith.divf %177, %178 : vector<2x11x1xf32>
    %180 = vector.broadcast %172 : vector<2x11x1xf32> to vector<2x11x32xf32>
    %181 = arith.subf %144, %180 : vector<2x11x32xf32>
    %cst_95 = arith.constant 9.99999974E-6 : f32
    %182 = vector.broadcast %cst_95 : f32 to vector<2x11x1xf32>
    %183 = arith.addf %179, %182 : vector<2x11x1xf32>
    %184 = math.rsqrt %183 : vector<2x11x1xf32>
    %185 = vector.broadcast %184 : vector<2x11x1xf32> to vector<2x11x32xf32>
    %186 = arith.mulf %181, %185 : vector<2x11x32xf32>
    %187 = vector.shape_cast %146 : vector<1x32xf32> to vector<1x1x32xf32>
    %188 = vector.broadcast %187 : vector<1x1x32xf32> to vector<2x11x32xf32>
    %189 = arith.mulf %186, %188 : vector<2x11x32xf32>
    %190 = vector.shape_cast %148 : vector<1x32xf32> to vector<1x1x32xf32>
    %191 = vector.broadcast %190 : vector<1x1x32xf32> to vector<2x11x32xf32>
    %192 = arith.addf %189, %191 : vector<2x11x32xf32>
    "tpu.trace_start"() <{level = 10 : i32, message = "bsd,de->bse"}> : () -> ()
    %cst_96 = arith.constant dense<0.000000e+00> : vector<2x11x96xf32>
    %193 = tpu.matmul %192, %162, %cst_96 {dimension_numbers = #tpu.dot_dimension_numbers<[2], [0], [0, 1], [1], [0, 0, 0, 1, 1, 1], [], []>} : vector<2x11x32xf32>, vector<32x96xf32>, vector<2x11x96xf32> -> vector<2x11x96xf32>
    "tpu.trace_stop"() : () -> ()
    %194 = vector.shape_cast %154 : vector<1x96xf32> to vector<1x1x96xf32>
    %195 = vector.broadcast %194 : vector<1x1x96xf32> to vector<2x11x96xf32>
    %196 = arith.addf %193, %195 : vector<2x11x96xf32>
    %197 = vector.extract_strided_slice %196 {offsets = [0, 0, 0], sizes = [2, 11, 8], strides = [1, 1, 1]} : vector<2x11x96xf32> to vector<2x11x8xf32>
    %198 = vector.extract_strided_slice %196 {offsets = [0, 0, 32], sizes = [2, 11, 8], strides = [1, 1, 1]} : vector<2x11x96xf32> to vector<2x11x8xf32>
    "tpu.trace_start"() <{level = 10 : i32, message = "bqe,bke->bqk"}> : () -> ()
    %cst_97 = arith.constant dense<0.000000e+00> : vector<2x11x11xf32>
    %199 = tpu.matmul %197, %198, %cst_97 {dimension_numbers = #tpu.dot_dimension_numbers<[2], [2], [1], [1], [0, 0, 0, 1, 1, 1], [0], [0]>} : vector<2x11x8xf32>, vector<2x11x8xf32>, vector<2x11x11xf32> -> vector<2x11x11xf32>
    "tpu.trace_stop"() : () -> ()
    %200 = vector.extract_strided_slice %196 {offsets = [0, 0, 8], sizes = [2, 11, 8], strides = [1, 1, 1]} : vector<2x11x96xf32> to vector<2x11x8xf32>
    %201 = vector.extract_strided_slice %196 {offsets = [0, 0, 40], sizes = [2, 11, 8], strides = [1, 1, 1]} : vector<2x11x96xf32> to vector<2x11x8xf32>
    "tpu.trace_start"() <{level = 10 : i32, message = "bqe,bke->bqk"}> : () -> ()
    %cst_98 = arith.constant dense<0.000000e+00> : vector<2x11x11xf32>
    %202 = tpu.matmul %200, %201, %cst_98 {dimension_numbers = #tpu.dot_dimension_numbers<[2], [2], [1], [1], [0, 0, 0, 1, 1, 1], [0], [0]>} : vector<2x11x8xf32>, vector<2x11x8xf32>, vector<2x11x11xf32> -> vector<2x11x11xf32>
    "tpu.trace_stop"() : () -> ()
    %203 = vector.extract_strided_slice %196 {offsets = [0, 0, 16], sizes = [2, 11, 8], strides = [1, 1, 1]} : vector<2x11x96xf32> to vector<2x11x8xf32>
    %204 = vector.extract_strided_slice %196 {offsets = [0, 0, 48], sizes = [2, 11, 8], strides = [1, 1, 1]} : vector<2x11x96xf32> to vector<2x11x8xf32>
    "tpu.trace_start"() <{level = 10 : i32, message = "bqe,bke->bqk"}> : () -> ()
    %cst_99 = arith.constant dense<0.000000e+00> : vector<2x11x11xf32>
    %205 = tpu.matmul %203, %204, %cst_99 {dimension_numbers = #tpu.dot_dimension_numbers<[2], [2], [1], [1], [0, 0, 0, 1, 1, 1], [0], [0]>} : vector<2x11x8xf32>, vector<2x11x8xf32>, vector<2x11x11xf32> -> vector<2x11x11xf32>
    "tpu.trace_stop"() : () -> ()
    %206 = vector.extract_strided_slice %196 {offsets = [0, 0, 24], sizes = [2, 11, 8], strides = [1, 1, 1]} : vector<2x11x96xf32> to vector<2x11x8xf32>
    %207 = vector.extract_strided_slice %196 {offsets = [0, 0, 56], sizes = [2, 11, 8], strides = [1, 1, 1]} : vector<2x11x96xf32> to vector<2x11x8xf32>
    "tpu.trace_start"() <{level = 10 : i32, message = "bqe,bke->bqk"}> : () -> ()
    %cst_100 = arith.constant dense<0.000000e+00> : vector<2x11x11xf32>
    %208 = tpu.matmul %206, %207, %cst_100 {dimension_numbers = #tpu.dot_dimension_numbers<[2], [2], [1], [1], [0, 0, 0, 1, 1, 1], [0], [0]>} : vector<2x11x8xf32>, vector<2x11x8xf32>, vector<2x11x11xf32> -> vector<2x11x11xf32>
    "tpu.trace_stop"() : () -> ()
    %209 = vector.shape_cast %199 : vector<2x11x11xf32> to vector<2x1x11x11xf32>
    %210 = vector.shape_cast %202 : vector<2x11x11xf32> to vector<2x1x11x11xf32>
    %211 = vector.shape_cast %205 : vector<2x11x11xf32> to vector<2x1x11x11xf32>
    %212 = vector.shape_cast %208 : vector<2x11x11xf32> to vector<2x1x11x11xf32>
    %213 = tpu.concatenate %209, %210, %211, %212 in 1 : vector<2x1x11x11xf32>, vector<2x1x11x11xf32>, vector<2x1x11x11xf32>, vector<2x1x11x11xf32> -> vector<2x4x11x11xf32>
    %cst_101 = arith.constant 0.353553385 : f32
    %214 = vector.broadcast %cst_101 : f32 to vector<2x4x11x11xf32>
    %215 = arith.mulf %213, %214 : vector<2x4x11x11xf32>
    %cst_102 = arith.constant dense<0xFF800000> : vector<2x4x11xf32>
    %216 = vector.multi_reduction <maximumf>, %215, %cst_102 [3] : vector<2x4x11x11xf32> to vector<2x4x11xf32>
    %217 = vector.shape_cast %216 : vector<2x4x11xf32> to vector<2x4x11x1xf32>
    %218 = vector.broadcast %217 : vector<2x4x11x1xf32> to vector<2x4x11x11xf32>
    %219 = arith.subf %215, %218 : vector<2x4x11x11xf32>
    %220 = math.exp %219 : vector<2x4x11x11xf32>
    %cst_103 = arith.constant dense<0.000000e+00> : vector<2x4x11xf32>
    %221 = vector.multi_reduction <add>, %220, %cst_103 [3] : vector<2x4x11x11xf32> to vector<2x4x11xf32>
    %222 = vector.shape_cast %221 : vector<2x4x11xf32> to vector<2x4x11x1xf32>
    %223 = tpu.reciprocal %222 {approx = true} : vector<2x4x11x1xf32> -> vector<2x4x11x1xf32>
    %224 = vector.broadcast %223 : vector<2x4x11x1xf32> to vector<2x4x11x11xf32>
    %225 = arith.mulf %220, %224 : vector<2x4x11x11xf32>
    %226 = vector.extract_strided_slice %196 {offsets = [0, 0, 64], sizes = [2, 11, 8], strides = [1, 1, 1]} : vector<2x11x96xf32> to vector<2x11x8xf32>
    %227 = vector.extract_strided_slice %225 {offsets = [0, 0, 0, 0], sizes = [2, 1, 11, 11], strides = [1, 1, 1, 1]} : vector<2x4x11x11xf32> to vector<2x1x11x11xf32>
    %228 = vector.shape_cast %227 : vector<2x1x11x11xf32> to vector<2x11x11xf32>
    "tpu.trace_start"() <{level = 10 : i32, message = "bqk,bke->bqe"}> : () -> ()
    %cst_104 = arith.constant dense<0.000000e+00> : vector<2x11x8xf32>
    %229 = tpu.matmul %228, %226, %cst_104 {dimension_numbers = #tpu.dot_dimension_numbers<[2], [1], [1], [2], [0, 0, 0, 1, 1, 2], [0], [0]>} : vector<2x11x11xf32>, vector<2x11x8xf32>, vector<2x11x8xf32> -> vector<2x11x8xf32>
    "tpu.trace_stop"() : () -> ()
    %230 = vector.extract_strided_slice %196 {offsets = [0, 0, 72], sizes = [2, 11, 8], strides = [1, 1, 1]} : vector<2x11x96xf32> to vector<2x11x8xf32>
    %231 = vector.extract_strided_slice %225 {offsets = [0, 1, 0, 0], sizes = [2, 1, 11, 11], strides = [1, 1, 1, 1]} : vector<2x4x11x11xf32> to vector<2x1x11x11xf32>
    %232 = vector.shape_cast %231 : vector<2x1x11x11xf32> to vector<2x11x11xf32>
    "tpu.trace_start"() <{level = 10 : i32, message = "bqk,bke->bqe"}> : () -> ()
    %cst_105 = arith.constant dense<0.000000e+00> : vector<2x11x8xf32>
    %233 = tpu.matmul %232, %230, %cst_105 {dimension_numbers = #tpu.dot_dimension_numbers<[2], [1], [1], [2], [0, 0, 0, 1, 1, 2], [0], [0]>} : vector<2x11x11xf32>, vector<2x11x8xf32>, vector<2x11x8xf32> -> vector<2x11x8xf32>
    "tpu.trace_stop"() : () -> ()
    %234 = vector.extract_strided_slice %196 {offsets = [0, 0, 80], sizes = [2, 11, 8], strides = [1, 1, 1]} : vector<2x11x96xf32> to vector<2x11x8xf32>
    %235 = vector.extract_strided_slice %225 {offsets = [0, 2, 0, 0], sizes = [2, 1, 11, 11], strides = [1, 1, 1, 1]} : vector<2x4x11x11xf32> to vector<2x1x11x11xf32>
    %236 = vector.shape_cast %235 : vector<2x1x11x11xf32> to vector<2x11x11xf32>
    "tpu.trace_start"() <{level = 10 : i32, message = "bqk,bke->bqe"}> : () -> ()
    %cst_106 = arith.constant dense<0.000000e+00> : vector<2x11x8xf32>
    %237 = tpu.matmul %236, %234, %cst_106 {dimension_numbers = #tpu.dot_dimension_numbers<[2], [1], [1], [2], [0, 0, 0, 1, 1, 2], [0], [0]>} : vector<2x11x11xf32>, vector<2x11x8xf32>, vector<2x11x8xf32> -> vector<2x11x8xf32>
    "tpu.trace_stop"() : () -> ()
    %238 = vector.extract_strided_slice %196 {offsets = [0, 0, 88], sizes = [2, 11, 8], strides = [1, 1, 1]} : vector<2x11x96xf32> to vector<2x11x8xf32>
    %239 = vector.extract_strided_slice %225 {offsets = [0, 3, 0, 0], sizes = [2, 1, 11, 11], strides = [1, 1, 1, 1]} : vector<2x4x11x11xf32> to vector<2x1x11x11xf32>
    %240 = vector.shape_cast %239 : vector<2x1x11x11xf32> to vector<2x11x11xf32>
    "tpu.trace_start"() <{level = 10 : i32, message = "bqk,bke->bqe"}> : () -> ()
    %cst_107 = arith.constant dense<0.000000e+00> : vector<2x11x8xf32>
    %241 = tpu.matmul %240, %238, %cst_107 {dimension_numbers = #tpu.dot_dimension_numbers<[2], [1], [1], [2], [0, 0, 0, 1, 1, 2], [0], [0]>} : vector<2x11x11xf32>, vector<2x11x8xf32>, vector<2x11x8xf32> -> vector<2x11x8xf32>
    "tpu.trace_stop"() : () -> ()
    %242 = tpu.concatenate %229, %233, %237, %241 in 2 : vector<2x11x8xf32>, vector<2x11x8xf32>, vector<2x11x8xf32>, vector<2x11x8xf32> -> vector<2x11x32xf32>
    "tpu.trace_start"() <{level = 10 : i32, message = "bsd,de->bse"}> : () -> ()
    %cst_108 = arith.constant dense<0.000000e+00> : vector<2x11x32xf32>
    %243 = tpu.matmul %242, %164, %cst_108 {dimension_numbers = #tpu.dot_dimension_numbers<[2], [0], [0, 1], [1], [0, 0, 0, 1, 1, 1], [], []>} : vector<2x11x32xf32>, vector<32x32xf32>, vector<2x11x32xf32> -> vector<2x11x32xf32>
    "tpu.trace_stop"() : () -> ()
    %244 = arith.addf %144, %243 : vector<2x11x32xf32>
    %245 = vector.shape_cast %156 : vector<1x32xf32> to vector<1x1x32xf32>
    %246 = vector.broadcast %245 : vector<1x1x32xf32> to vector<2x11x32xf32>
    %247 = arith.addf %244, %246 : vector<2x11x32xf32>
    %cst_109 = arith.constant dense<0.000000e+00> : vector<2x11xf32>
    %248 = vector.multi_reduction <add>, %247, %cst_109 [2] : vector<2x11x32xf32> to vector<2x11xf32>
    %249 = vector.shape_cast %248 : vector<2x11xf32> to vector<2x11x1xf32>
    %cst_110 = arith.constant 3.200000e+01 : f32
    %250 = vector.broadcast %cst_110 : f32 to vector<2x11x1xf32>
    %251 = arith.divf %249, %250 : vector<2x11x1xf32>
    %252 = vector.broadcast %251 : vector<2x11x1xf32> to vector<2x11x32xf32>
    %253 = arith.subf %247, %252 : vector<2x11x32xf32>
    %254 = arith.mulf %253, %253 : vector<2x11x32xf32>
    %cst_111 = arith.constant dense<0.000000e+00> : vector<2x11xf32>
    %255 = vector.multi_reduction <add>, %254, %cst_111 [2] : vector<2x11x32xf32> to vector<2x11xf32>
    %256 = vector.shape_cast %255 : vector<2x11xf32> to vector<2x11x1xf32>
    %cst_112 = arith.constant 3.200000e+01 : f32
    %257 = vector.broadcast %cst_112 : f32 to vector<2x11x1xf32>
    %258 = arith.divf %256, %257 : vector<2x11x1xf32>
    %259 = vector.broadcast %251 : vector<2x11x1xf32> to vector<2x11x32xf32>
    %260 = arith.subf %247, %259 : vector<2x11x32xf32>
    %cst_113 = arith.constant 9.99999974E-6 : f32
    %261 = vector.broadcast %cst_113 : f32 to vector<2x11x1xf32>
    %262 = arith.addf %258, %261 : vector<2x11x1xf32>
    %263 = math.rsqrt %262 : vector<2x11x1xf32>
    %264 = vector.broadcast %263 : vector<2x11x1xf32> to vector<2x11x32xf32>
    %265 = arith.mulf %260, %264 : vector<2x11x32xf32>
    %266 = vector.shape_cast %150 : vector<1x32xf32> to vector<1x1x32xf32>
    %267 = vector.broadcast %266 : vector<1x1x32xf32> to vector<2x11x32xf32>
    %268 = arith.mulf %265, %267 : vector<2x11x32xf32>
    %269 = vector.shape_cast %152 : vector<1x32xf32> to vector<1x1x32xf32>
    %270 = vector.broadcast %269 : vector<1x1x32xf32> to vector<2x11x32xf32>
    %271 = arith.addf %268, %270 : vector<2x11x32xf32>
    "tpu.trace_start"() <{level = 10 : i32, message = "bsd,dh->bsh"}> : () -> ()
    %cst_114 = arith.constant dense<0.000000e+00> : vector<2x11x64xf32>
    %272 = tpu.matmul %271, %166, %cst_114 {dimension_numbers = #tpu.dot_dimension_numbers<[2], [0], [0, 1], [1], [0, 0, 0, 1, 1, 1], [], []>} : vector<2x11x32xf32>, vector<32x64xf32>, vector<2x11x64xf32> -> vector<2x11x64xf32>
    "tpu.trace_stop"() : () -> ()
    %273 = vector.shape_cast %158 : vector<1x64xf32> to vector<1x1x64xf32>
    %274 = vector.broadcast %273 : vector<1x1x64xf32> to vector<2x11x64xf32>
    %275 = arith.addf %272, %274 : vector<2x11x64xf32>
    %cst_115 = arith.constant 5.000000e-01 : f32
    %276 = vector.broadcast %cst_115 : f32 to vector<2x11x64xf32>
    %277 = arith.mulf %276, %275 : vector<2x11x64xf32>
    %cst_116 = arith.constant 1.41421354 : f32
    %278 = vector.broadcast %cst_116 : f32 to vector<2x11x64xf32>
    %279 = arith.divf %275, %278 : vector<2x11x64xf32>
    %280 = math.erf %279 : vector<2x11x64xf32>
    %cst_117 = arith.constant 1.000000e+00 : f32
    %281 = vector.broadcast %cst_117 : f32 to vector<2x11x64xf32>
    %282 = arith.addf %281, %280 : vector<2x11x64xf32>
    %283 = arith.mulf %277, %282 : vector<2x11x64xf32>
    "tpu.trace_start"() <{level = 10 : i32, message = "bsh,hd->bsd"}> : () -> ()
    %cst_118 = arith.constant dense<0.000000e+00> : vector<2x11x32xf32>
    %284 = tpu.matmul %283, %168, %cst_118 {dimension_numbers = #tpu.dot_dimension_numbers<[2], [0], [0, 1], [1], [0, 0, 0, 1, 1, 1], [], []>} : vector<2x11x64xf32>, vector<64x32xf32>, vector<2x11x32xf32> -> vector<2x11x32xf32>
    "tpu.trace_stop"() : () -> ()
    %285 = arith.addf %247, %284 : vector<2x11x32xf32>
    %286 = vector.shape_cast %160 : vector<1x32xf32> to vector<1x1x32xf32>
    %287 = vector.broadcast %286 : vector<1x1x32xf32> to vector<2x11x32xf32>
    %288 = arith.addf %285, %287 : vector<2x11x32xf32>
    %289 = vector.extract_strided_slice %288 {offsets = [0, 0, 0], sizes = [2, 1, 32], strides = [1, 1, 1]} : vector<2x11x32xf32> to vector<2x1x32xf32>
    %290 = vector.shape_cast %289 : vector<2x1x32xf32> to vector<2x32xf32>
    %c0_119 = arith.constant 0 : index
    %c0_120 = arith.constant 0 : index
    %291 = vector.load %arg4[%c0_119, %c0_120] : memref<4x128xf32, #tpu.memory_space<vmem>>, vector<1x32xf32>
    %c1_121 = arith.constant 1 : index
    %c0_122 = arith.constant 0 : index
    %292 = vector.load %arg4[%c1_121, %c0_122] : memref<4x128xf32, #tpu.memory_space<vmem>>, vector<1x32xf32>
    %cst_123 = arith.constant dense<0.000000e+00> : vector<2xf32>
    %293 = vector.multi_reduction <add>, %290, %cst_123 [1] : vector<2x32xf32> to vector<2xf32>
    %294 = vector.shape_cast %293 : vector<2xf32> to vector<2x1xf32>
    %cst_124 = arith.constant 3.200000e+01 : f32
    %295 = vector.broadcast %cst_124 : f32 to vector<2x1xf32>
    %296 = arith.divf %294, %295 : vector<2x1xf32>
    %297 = vector.broadcast %296 : vector<2x1xf32> to vector<2x32xf32>
    %298 = arith.subf %290, %297 : vector<2x32xf32>
    %299 = arith.mulf %298, %298 : vector<2x32xf32>
    %cst_125 = arith.constant dense<0.000000e+00> : vector<2xf32>
    %300 = vector.multi_reduction <add>, %299, %cst_125 [1] : vector<2x32xf32> to vector<2xf32>
    %301 = vector.shape_cast %300 : vector<2xf32> to vector<2x1xf32>
    %cst_126 = arith.constant 3.200000e+01 : f32
    %302 = vector.broadcast %cst_126 : f32 to vector<2x1xf32>
    %303 = arith.divf %301, %302 : vector<2x1xf32>
    %304 = vector.broadcast %296 : vector<2x1xf32> to vector<2x32xf32>
    %305 = arith.subf %290, %304 : vector<2x32xf32>
    %cst_127 = arith.constant 9.99999974E-6 : f32
    %306 = vector.broadcast %cst_127 : f32 to vector<2x1xf32>
    %307 = arith.addf %303, %306 : vector<2x1xf32>
    %308 = math.rsqrt %307 : vector<2x1xf32>
    %309 = vector.broadcast %308 : vector<2x1xf32> to vector<2x32xf32>
    %310 = arith.mulf %305, %309 : vector<2x32xf32>
    %311 = vector.broadcast %291 : vector<1x32xf32> to vector<2x32xf32>
    %312 = arith.mulf %310, %311 : vector<2x32xf32>
    %313 = vector.broadcast %292 : vector<1x32xf32> to vector<2x32xf32>
    %314 = arith.addf %312, %313 : vector<2x32xf32>
    %c0_128 = arith.constant 0 : index
    %c0_129 = arith.constant 0 : index
    %315 = vector.load %arg3[%c0_128, %c0_129] : memref<64x256xf32, #tpu.memory_space<vmem>>, vector<32x32xf32>
    %c0_130 = arith.constant 0 : index
    %c128_131 = arith.constant 128 : index
    %316 = vector.load %arg3[%c0_130, %c128_131] : memref<64x256xf32, #tpu.memory_space<vmem>>, vector<64x128xf32>
    %c2_132 = arith.constant 2 : index
    %c0_133 = arith.constant 0 : index
    %317 = vector.load %arg4[%c2_132, %c0_133] : memref<4x128xf32, #tpu.memory_space<vmem>>, vector<1x32xf32>
    %c3_134 = arith.constant 3 : index
    %c0_135 = arith.constant 0 : index
    %318 = vector.load %arg4[%c3_134, %c0_135] : memref<4x128xf32, #tpu.memory_space<vmem>>, vector<1x128xf32>
    %cst_136 = arith.constant dense<0.000000e+00> : vector<2x32xf32>
    %319 = tpu.matmul %314, %315, %cst_136 {dimension_numbers = #tpu.dot_dimension_numbers<[1], [0], [0], [1], [0, 0, 1, 1], [], []>} : vector<2x32xf32>, vector<32x32xf32>, vector<2x32xf32> -> vector<2x32xf32>
    %320 = vector.broadcast %317 : vector<1x32xf32> to vector<2x32xf32>
    %321 = arith.addf %319, %320 : vector<2x32xf32>
    %cst_137 = arith.constant 0.000000e+00 : f32
    %322 = vector.broadcast %cst_137 : f32 to vector<2x32xf32>
    %323 = arith.maximumf %321, %322 : vector<2x32xf32>
    %324 = tpu.concatenate %314, %323 in 1 : vector<2x32xf32>, vector<2x32xf32> -> vector<2x64xf32>
    %cst_138 = arith.constant dense<0.000000e+00> : vector<2x128xf32>
    %325 = tpu.matmul %324, %316, %cst_138 {dimension_numbers = #tpu.dot_dimension_numbers<[1], [0], [0], [1], [0, 0, 1, 1], [], []>} : vector<2x64xf32>, vector<64x128xf32>, vector<2x128xf32> -> vector<2x128xf32>
    %326 = vector.broadcast %318 : vector<1x128xf32> to vector<2x128xf32>
    %327 = arith.addf %325, %326 : vector<2x128xf32>
    %c0_139 = arith.constant 0 : index
    %c0_140 = arith.constant 0 : index
    %328 = vector.load %arg5[%c0_139, %c0_140] : memref<2x128xf32, #tpu.memory_space<vmem>>, vector<2x128xf32>
    tpu.vector_store %arg5[%c0_139, %c0_140], %327 {strides = array<i32>} : memref<2x128xf32, #tpu.memory_space<vmem>>, vector<2x128xf32>,
    return
  }
}

</mosaic_0001>

<llo_original>
// kernel: transformer_policy_forward.1
$region0: #{transformer_policy_forward.1}
  #allocation0 [shape = 'u32[]', space=smem, size = 0x4, offset = 0x4, fixed_abs, tag = 'smem constant byte address 0x4 - core index']
  #allocation1 [shape = 'u32[144,128]{1,0:T(1,128)}', space=vmem, size = 0x12000, scoped, tag = 'internal scratch']
  %s0 = inlined_call_operand.vmem [shape: f32[2,11,32], index: 0, kind: input, shape index: {}]
  %s1 = inlined_call_operand.vmem [shape: f32[2,64,512], index: 1, kind: input, shape index: {}]
  %s2 = inlined_call_operand.vmem [shape: f32[2,8,128], index: 2, kind: input, shape index: {}]
  %s3 = inlined_call_operand.vmem [shape: f32[64,256], index: 3, kind: input, shape index: {}]
  %s4 = inlined_call_operand.vmem [shape: f32[4,128], index: 4, kind: input, shape index: {}]
  %s5 = inlined_call_operand.vmem [shape: f32[2,128], index: 5, kind: output, shape index: {}]
  %s6 = sld [smem:[#allocation0]]
  $region30: #{transformer_policy_forward.1} parent=0
    _
  %s8 = ssub.s32 1, %s6
  %s9 = scalar_select 0, %s8, %s6
  // Predicated region
  $region2: #{transformer_policy_forward.1} parent=0 // pred_check
    _
  $region3: #{transformer_policy_forward.1} parent=0 // pred_check_branch
    %11 = sbr.rel (0) target = $region5
  $region4: #{transformer_policy_forward.1} parent=0 // pred_region
    _
  $region5: #{transformer_policy_forward.1} parent=0 // pred_fallthru
    _
  // Predicated region
  $region6: #{transformer_policy_forward.1} parent=0 // pred_check
    _
  $region7: #{transformer_policy_forward.1} parent=0 // pred_check_branch
    %13 = sbr.rel (0) target = $region9
  $region8: #{transformer_policy_forward.1} parent=0 // pred_region
    _
  $region9: #{transformer_policy_forward.1} parent=0 // pred_fallthru
    _
  // Predicated region
  $region10: #{transformer_policy_forward.1} parent=0 // pred_check
    _
  $region11: #{transformer_policy_forward.1} parent=0 // pred_check_branch
    %15 = sbr.rel (0) target = $region13
  $region12: #{transformer_policy_forward.1} parent=0 // pred_region
    _
  $region13: #{transformer_policy_forward.1} parent=0 // pred_fallthru
    _
  // Predicated region
  $region14: #{transformer_policy_forward.1} parent=0 // pred_check
    _
  $region15: #{transformer_policy_forward.1} parent=0 // pred_check_branch
    %17 = sbr.rel (0) target = $region17
  $region16: #{transformer_policy_forward.1} parent=0 // pred_region
    _
  $region17: #{transformer_policy_forward.1} parent=0 // pred_fallthru
    _
  // Predicated region
  $region18: #{transformer_policy_forward.1} parent=0 // pred_check
    _
  $region19: #{transformer_policy_forward.1} parent=0 // pred_check_branch
    %19 = sbr.rel (0) target = $region21
  $region20: #{transformer_policy_forward.1} parent=0 // pred_region
    _
  $region21: #{transformer_policy_forward.1} parent=0 // pred_fallthru
    _
  %v20 = vld [vmem:[%s0] sm:$0xff]
  %v21 = vld [vmem:[%s0 + $0x8] sm:$0x7]
  %v22 = vld [vmem:[%s0 + $0x10] sm:$0xff]
  %v23 = vld [vmem:[%s0 + $0x18] sm:$0x7]
  %v24 = vld [vmem:[%s2] sm:$0x1]
  %v25 = vld [vmem:[%s2 + $0x1] sm:$0x1]
  %v26 = vld [vmem:[%s2 + $0x2] sm:$0x1]
  %v27 = vld [vmem:[%s2 + $0x3] sm:$0x1]
  %v28 = vld [vmem:[%s2 + $0x4] sm:$0x1]
  %v29 = vld [vmem:[%s2 + $0x5] sm:$0x1]
  %v30 = vld [vmem:[%s2 + $0x6] sm:$0x1]
  %v31 = vld [vmem:[%s2 + $0x7] sm:$0x1]
  %v32 = vld [vmem:[%s1] sm:$0xff]
  %v33 = vld [vmem:[%s1 + $0x20] sm:$0xff]
  %v34 = vld [vmem:[%s1 + $0x40] sm:$0xff]
  %v35 = vld [vmem:[%s1 + $0x60] sm:$0xff]
  %v36 = vld [vmem:[%s1 + $0x8] sm:$0xff]
  %v37 = vld [vmem:[%s1 + $0x28] sm:$0xff]
  %v38 = vld [vmem:[%s1 + $0x48] sm:$0xff]
  %v39 = vld [vmem:[%s1 + $0x68] sm:$0xff]
  %v40 = vld [vmem:[%s1 + $0x10] sm:$0xff]
  %v41 = vld [vmem:[%s1 + $0x30] sm:$0xff]
  %v42 = vld [vmem:[%s1 + $0x50] sm:$0xff]
  %v43 = vld [vmem:[%s1 + $0x70] sm:$0xff]
  %v44 = vld [vmem:[%s1 + $0x18] sm:$0xff]
  %v45 = vld [vmem:[%s1 + $0x38] sm:$0xff]
  %v46 = vld [vmem:[%s1 + $0x58] sm:$0xff]
  %v47 = vld [vmem:[%s1 + $0x78] sm:$0xff]
  %v48 = vld [vmem:[%s1 + $0x98] sm:$0xff]
  %v49 = vld [vmem:[%s1 + $0xb8] sm:$0xff]
  %v50 = vld [vmem:[%s1 + $0xd8] sm:$0xff]
  %v51 = vld [vmem:[%s1 + $0xf8] sm:$0xff]
  %vm52 = vcmask 261120
  %v53 = vsel %vm52, %v20, 0.0
  %54 = vadd.xlane.f32.xlu0 %v53
  %v55 = vpop.xlane.xlu0 %54
  %vm56 = vcmask 256000
  %v57 = vsel %vm56, %v21, 0.0
  %58 = vadd.xlane.f32.xlu0 %v57
  %v59 = vpop.xlane.xlu0 %58
  %v60 = vsel %vm52, %v22, 0.0
  %61 = vadd.xlane.f32.xlu0 %v60
  %v62 = vpop.xlane.xlu0 %61
  %v63 = vsel %vm56, %v23, 0.0
  %64 = vadd.xlane.f32.xlu0 %v63
  %v65 = vpop.xlane.xlu0 %64
  %v66 = vrcp.pop 32.0
  %v67 = vmul.f32 %v55, %v66
  %v68 = vmul.f32 %v59, %v66
  %v69 = vmul.f32 %v62, %v66
  %v70 = vmul.f32 %v65, %v66
  %v71 = vsub.f32 %v20, %v67
  %v72 = vsub.f32 %v21, %v68
  %v73 = vsub.f32 %v22, %v69
  %v74 = vsub.f32 %v23, %v70
  %v75 = vmul.f32 %v71, %v71
  %v76 = vmul.f32 %v72, %v72
  %v77 = vmul.f32 %v73, %v73
  %v78 = vmul.f32 %v74, %v74
  %v79 = vsel %vm52, %v75, 0.0
  %80 = vadd.xlane.f32.xlu0 %v79
  %v81 = vpop.xlane.xlu0 %80
  %v82 = vsel %vm56, %v76, 0.0
  %83 = vadd.xlane.f32.xlu0 %v82
  %v84 = vpop.xlane.xlu0 %83
  %v85 = vsel %vm52, %v77, 0.0
  %86 = vadd.xlane.f32.xlu0 %v85
  %v87 = vpop.xlane.xlu0 %86
  %v88 = vsel %vm56, %v78, 0.0
  %89 = vadd.xlane.f32.xlu0 %v88
  %v90 = vpop.xlane.xlu0 %89
  %v91 = vmul.f32 %v81, %v66
  %v92 = vmul.f32 %v84, %v66
  %v93 = vmul.f32 %v87, %v66
  %v94 = vmul.f32 %v90, %v66
  %v95 = vadd.f32 %v91, 1e-05
  %v96 = vadd.f32 %v92, 1e-05
  %v97 = vadd.f32 %v93, 1e-05
  %v98 = vadd.f32 %v94, 1e-05
  %v99 = vrsqrt.pop %v95
  %v100 = vrsqrt.pop %v96
  %v101 = vrsqrt.pop %v97
  %v102 = vrsqrt.pop %v98
  %v103 = vmul.f32 %v71, %v99
  %v104 = vmul.f32 %v72, %v100
  %v105 = vmul.f32 %v73, %v101
  %v106 = vmul.f32 %v74, %v102
  %v107 = vlaneseq
  %v108 = vshrl.u32 %v107, 7
  %v109 = vsub.s32 0, %v108
  %v110 = vrot.slane %v24, %v109
  %v111 = vmul.f32 %v103, %v110
  %v112 = vmul.f32 %v104, %v110
  %v113 = vmul.f32 %v105, %v110
  %v114 = vmul.f32 %v106, %v110
  %v115 = vlaneseq
  %v116 = vshrl.u32 %v115, 7
  %v117 = vsub.s32 0, %v116
  %v118 = vrot.slane %v25, %v117
  %v119 = vadd.f32 %v111, %v118
  %v120 = vadd.f32 %v112, %v118
  %v121 = vadd.f32 %v113, %v118
  %v122 = vadd.f32 %v114, %v118
  %v123 = vlaneseq
  %v124 = vshrl.u32 %v123, 7
  %v125 = vsub.s32 0, %v124
  %v126 = vrot.slane %v28, %v125
  %v131 = vcombine.high %v119, %v119
  %v133 = vunpack.c.l.s4 1966171168
  %v134 = vunpack.c.0.s8 %v133
  %v135 = vlaneseq
  %v136 = vshrl.u32 %v135, 7
  %v137 = vsub.s32 %v134, %v136
  %v138 = vrot.slane %v119, %v137
  %v140 = vunpack.c.l.s4 1966171168
  %v141 = vunpack.c.0.s8 %v140
  %v142 = vlaneseq
  %v143 = vshrl.u32 %v142, 7
  %v144 = vsub.s32 %v141, %v143
  %v145 = vrot.slane %v131, %v144
  %v146 = vcombine.high %v138, %v138
  %v147 = vcombine.high %v145, %v145
  %v149 = vunpack.c.l.s4 1966171168
  %v150 = vunpack.c.0.s8 %v149
  %v151 = vlaneseq
  %v152 = vshrl.u32 %v151, 7
  %v153 = vsub.s32 %v150, %v152
  %v154 = vrot.slane %v138, %v153
  %v156 = vunpack.c.l.s4 1966171168
  %v157 = vunpack.c.0.s8 %v156
  %v158 = vlaneseq
  %v159 = vshrl.u32 %v158, 7
  %v160 = vsub.s32 %v157, %v159
  %v161 = vrot.slane %v145, %v160
  %v163 = vunpack.c.l.s4 1966171168
  %v164 = vunpack.c.0.s8 %v163
  %v165 = vlaneseq
  %v166 = vshrl.u32 %v165, 7
  %v167 = vsub.s32 %v164, %v166
  %v168 = vrot.slane %v146, %v167
  %v170 = vunpack.c.l.s4 1966171168
  %v171 = vunpack.c.0.s8 %v170
  %v172 = vlaneseq
  %v173 = vshrl.u32 %v172, 7
  %v174 = vsub.s32 %v171, %v173
  %v175 = vrot.slane %v147, %v174
  %v176 = vcombine.high %v154, %v154
  %v177 = vcombine.high %v161, %v161
  %v178 = vcombine.high %v168, %v168
  %v179 = vcombine.high %v175, %v175
  %v181 = vunpack.c.l.s4 1966171168
  %v182 = vunpack.c.0.s8 %v181
  %v183 = vlaneseq
  %v184 = vshrl.u32 %v183, 7
  %v185 = vsub.s32 %v182, %v184
  %v186 = vrot.slane %v120, %v185
  %v187 = vcombine.high %v186, %v186
  %v189 = vunpack.c.l.s4 1966171168
  %v190 = vunpack.c.0.s8 %v189
  %v191 = vlaneseq
  %v192 = vshrl.u32 %v191, 7
  %v193 = vsub.s32 %v190, %v192
  %v194 = vrot.slane %v186, %v193
  %v196 = vunpack.c.l.s4 1966171168
  %v197 = vunpack.c.0.s8 %v196
  %v198 = vlaneseq
  %v199 = vshrl.u32 %v198, 7
  %v200 = vsub.s32 %v197, %v199
  %v201 = vrot.slane %v187, %v200
  %v202 = vcombine.high %v194, %v194
  %v203 = vcombine.high %v121, %v121
  %v205 = vunpack.c.l.s4 1966171168
  %v206 = vunpack.c.0.s8 %v205
  %v207 = vlaneseq
  %v208 = vshrl.u32 %v207, 7
  %v209 = vsub.s32 %v206, %v208
  %v210 = vrot.slane %v121, %v209
  %v212 = vunpack.c.l.s4 1966171168
  %v213 = vunpack.c.0.s8 %v212
  %v214 = vlaneseq
  %v215 = vshrl.u32 %v214, 7
  %v216 = vsub.s32 %v213, %v215
  %v217 = vrot.slane %v203, %v216
  %v218 = vcombine.high %v210, %v210
  %v219 = vcombine.high %v217, %v217
  %v221 = vunpack.c.l.s4 1966171168
  %v222 = vunpack.c.0.s8 %v221
  %v223 = vlaneseq
  %v224 = vshrl.u32 %v223, 7
  %v225 = vsub.s32 %v222, %v224
  %v226 = vrot.slane %v210, %v225
  %v228 = vunpack.c.l.s4 1966171168
  %v229 = vunpack.c.0.s8 %v228
  %v230 = vlaneseq
  %v231 = vshrl.u32 %v230, 7
  %v232 = vsub.s32 %v229, %v231
  %v233 = vrot.slane %v217, %v232
  %v235 = vunpack.c.l.s4 1966171168
  %v236 = vunpack.c.0.s8 %v235
  %v237 = vlaneseq
  %v238 = vshrl.u32 %v237, 7
  %v239 = vsub.s32 %v236, %v238
  %v240 = vrot.slane %v218, %v239
  %v242 = vunpack.c.l.s4 1966171168
  %v243 = vunpack.c.0.s8 %v242
  %v244 = vlaneseq
  %v245 = vshrl.u32 %v244, 7
  %v246 = vsub.s32 %v243, %v245
  %v247 = vrot.slane %v219, %v246
  %v248 = vcombine.high %v226, %v226
  %v249 = vcombine.high %v233, %v233
  %v250 = vcombine.high %v240, %v240
  %v251 = vcombine.high %v247, %v247
  %v253 = vunpack.c.l.s4 1966171168
  %v254 = vunpack.c.0.s8 %v253
  %v255 = vlaneseq
  %v256 = vshrl.u32 %v255, 7
  %v257 = vsub.s32 %v254, %v256
  %v258 = vrot.slane %v122, %v257
  %v259 = vcombine.high %v258, %v258
  %v261 = vunpack.c.l.s4 1966171168
  %v262 = vunpack.c.0.s8 %v261
  %v263 = vlaneseq
  %v264 = vshrl.u32 %v263, 7
  %v265 = vsub.s32 %v262, %v264
  %v266 = vrot.slane %v258, %v265
  %v268 = vunpack.c.l.s4 1966171168
  %v269 = vunpack.c.0.s8 %v268
  %v270 = vlaneseq
  %v271 = vshrl.u32 %v270, 7
  %v272 = vsub.s32 %v269, %v271
  %v273 = vrot.slane %v259, %v272
  %v274 = vcombine.high %v266, %v266
  %v276 = vcombine.high %v126, %v126
  %v278 = vunpack.c.l.s4 1966171168
  %v279 = vunpack.c.0.s8 %v278
  %v280 = vlaneseq
  %v281 = vshrl.u32 %v280, 7
  %v282 = vsub.s32 %v279, %v281
  %v283 = vrot.slane %v126, %v282
  %v285 = vunpack.c.l.s4 1966171168
  %v286 = vunpack.c.0.s8 %v285
  %v287 = vlaneseq
  %v288 = vshrl.u32 %v287, 7
  %v289 = vsub.s32 %v286, %v288
  %v290 = vrot.slane %v276, %v289
  %v291 = vcombine.high %v283, %v283
  %v292 = vcombine.high %v290, %v290
  %v294 = vunpack.c.l.s4 1966171168
  %v295 = vunpack.c.0.s8 %v294
  %v296 = vlaneseq
  %v297 = vshrl.u32 %v296, 7
  %v298 = vsub.s32 %v295, %v297
  %v299 = vrot.slane %v283, %v298
  %v301 = vunpack.c.l.s4 1966171168
  %v302 = vunpack.c.0.s8 %v301
  %v303 = vlaneseq
  %v304 = vshrl.u32 %v303, 7
  %v305 = vsub.s32 %v302, %v304
  %v306 = vrot.slane %v290, %v305
  %v308 = vunpack.c.l.s4 1966171168
  %v309 = vunpack.c.0.s8 %v308
  %v310 = vlaneseq
  %v311 = vshrl.u32 %v310, 7
  %v312 = vsub.s32 %v309, %v311
  %v313 = vrot.slane %v291, %v312
  %v315 = vunpack.c.l.s4 1966171168
  %v316 = vunpack.c.0.s8 %v315
  %v317 = vlaneseq
  %v318 = vshrl.u32 %v317, 7
  %v319 = vsub.s32 %v316, %v318
  %v320 = vrot.slane %v292, %v319
  %v321 = vcombine.high %v299, %v299
  %v322 = vcombine.high %v306, %v306
  %v323 = vcombine.high %v313, %v313
  %v324 = vcombine.high %v320, %v320
  %v325 = vcombine.low %v154, %v168
  %v326 = vcombine.low %v176, %v178
  %v327 = vcombine.low %v161, %v175
  %v328 = vcombine.low %v177, %v179
  %v330 = vunpack.c.l.s4 1966171168
  %v331 = vunpack.c.0.s8 %v330
  %v332 = vlaneseq
  %v333 = vshrl.u32 %v332, 7
  %v334 = vsub.s32 %v331, %v333
  %v335 = vrot.slane %v325, %v334
  %v337 = vunpack.c.l.s4 1966171168
  %v338 = vunpack.c.0.s8 %v337
  %v339 = vlaneseq
  %v340 = vshrl.u32 %v339, 7
  %v341 = vsub.s32 %v338, %v340
  %v342 = vrot.slane %v326, %v341
  %v344 = vunpack.c.l.s4 1966171168
  %v345 = vunpack.c.0.s8 %v344
  %v346 = vlaneseq
  %v347 = vshrl.u32 %v346, 7
  %v348 = vsub.s32 %v345, %v347
  %v349 = vrot.slane %v327, %v348
  %v351 = vunpack.c.l.s4 1966171168
  %v352 = vunpack.c.0.s8 %v351
  %v353 = vlaneseq
  %v354 = vshrl.u32 %v353, 7
  %v355 = vsub.s32 %v352, %v354
  %v356 = vrot.slane %v328, %v355
  %v357 = vcombine.low %v335, %v342
  %v358 = vcombine.low %v349, %v356
  %v360 = vunpack.c.l.s4 1966171168
  %v361 = vunpack.c.0.s8 %v360
  %v362 = vlaneseq
  %v363 = vshrl.u32 %v362, 7
  %v364 = vsub.s32 %v361, %v363
  %v365 = vrot.slane %v357, %v364
  %v367 = vunpack.c.l.s4 1966171168
  %v368 = vunpack.c.0.s8 %v367
  %v369 = vlaneseq
  %v370 = vshrl.u32 %v369, 7
  %v371 = vsub.s32 %v368, %v370
  %v372 = vrot.slane %v358, %v371
  %v373 = vcombine.low %v365, %v372
  %v374 = vcombine.low %v194, %v201
  %v375 = vcombine.low %v202, %v226
  %v376 = vcombine.low %v240, %v248
  %v377 = vcombine.low %v250, %v233
  %v379 = vunpack.c.l.s4 1966171168
  %v380 = vunpack.c.0.s8 %v379
  %v381 = vlaneseq
  %v382 = vshrl.u32 %v381, 7
  %v383 = vsub.s32 %v380, %v382
  %v384 = vrot.slane %v374, %v383
  %v386 = vunpack.c.l.s4 1966171168
  %v387 = vunpack.c.0.s8 %v386
  %v388 = vlaneseq
  %v389 = vshrl.u32 %v388, 7
  %v390 = vsub.s32 %v387, %v389
  %v391 = vrot.slane %v375, %v390
  %v393 = vunpack.c.l.s4 1966171168
  %v394 = vunpack.c.0.s8 %v393
  %v395 = vlaneseq
  %v396 = vshrl.u32 %v395, 7
  %v397 = vsub.s32 %v394, %v396
  %v398 = vrot.slane %v376, %v397
  %v400 = vunpack.c.l.s4 1966171168
  %v401 = vunpack.c.0.s8 %v400
  %v402 = vlaneseq
  %v403 = vshrl.u32 %v402, 7
  %v404 = vsub.s32 %v401, %v403
  %v405 = vrot.slane %v377, %v404
  %v406 = vcombine.low %v384, %v391
  %v407 = vcombine.low %v398, %v405
  %v409 = vunpack.c.l.s4 1966171168
  %v410 = vunpack.c.0.s8 %v409
  %v411 = vlaneseq
  %v412 = vshrl.u32 %v411, 7
  %v413 = vsub.s32 %v410, %v412
  %v414 = vrot.slane %v406, %v413
  %v416 = vunpack.c.l.s4 1966171168
  %v417 = vunpack.c.0.s8 %v416
  %v418 = vlaneseq
  %v419 = vshrl.u32 %v418, 7
  %v420 = vsub.s32 %v417, %v419
  %v421 = vrot.slane %v407, %v420
  %v422 = vcombine.low %v414, %v421
  %v423 = vcombine.low %v247, %v249
  %v424 = vcombine.low %v251, %v266
  %v425 = vcombine.low %v273, %v274
  %v427 = vunpack.c.l.s4 1966171168
  %v428 = vunpack.c.0.s8 %v427
  %v429 = vlaneseq
  %v430 = vshrl.u32 %v429, 7
  %v431 = vsub.s32 %v428, %v430
  %v432 = vrot.slane %v423, %v431
  %v434 = vunpack.c.l.s4 1966171168
  %v435 = vunpack.c.0.s8 %v434
  %v436 = vlaneseq
  %v437 = vshrl.u32 %v436, 7
  %v438 = vsub.s32 %v435, %v437
  %v439 = vrot.slane %v424, %v438
  %v441 = vunpack.c.l.s4 1966171168
  %v442 = vunpack.c.0.s8 %v441
  %v443 = vlaneseq
  %v444 = vshrl.u32 %v443, 7
  %v445 = vsub.s32 %v442, %v444
  %v446 = vrot.slane %v425, %v445
  %v447 = vcombine.low %v432, %v439
  %v449 = vunpack.c.l.s4 1966171168
  %v450 = vunpack.c.0.s8 %v449
  %v451 = vlaneseq
  %v452 = vshrl.u32 %v451, 7
  %v453 = vsub.s32 %v450, %v452
  %v454 = vrot.slane %v447, %v453
  %v456 = vunpack.c.l.s4 1966171168
  %v457 = vunpack.c.0.s8 %v456
  %v458 = vlaneseq
  %v459 = vshrl.u32 %v458, 7
  %v460 = vsub.s32 %v457, %v459
  %v461 = vrot.slane %v446, %v460
  %v462 = vcombine.low %v454, %v461
  %v463 = vcombine.low %v299, %v313
  %v464 = vcombine.low %v321, %v323
  %v465 = vcombine.low %v306, %v320
  %v466 = vcombine.low %v322, %v324
  %v468 = vunpack.c.l.s4 1966171168
  %v469 = vunpack.c.0.s8 %v468
  %v470 = vlaneseq
  %v471 = vshrl.u32 %v470, 7
  %v472 = vsub.s32 %v469, %v471
  %v473 = vrot.slane %v463, %v472
  %v475 = vunpack.c.l.s4 1966171168
  %v476 = vunpack.c.0.s8 %v475
  %v477 = vlaneseq
  %v478 = vshrl.u32 %v477, 7
  %v479 = vsub.s32 %v476, %v478
  %v480 = vrot.slane %v464, %v479
  %v482 = vunpack.c.l.s4 1966171168
  %v483 = vunpack.c.0.s8 %v482
  %v484 = vlaneseq
  %v485 = vshrl.u32 %v484, 7
  %v486 = vsub.s32 %v483, %v485
  %v487 = vrot.slane %v465, %v486
  %v489 = vunpack.c.l.s4 1966171168
  %v490 = vunpack.c.0.s8 %v489
  %v491 = vlaneseq
  %v492 = vshrl.u32 %v491, 7
  %v493 = vsub.s32 %v490, %v492
  %v494 = vrot.slane %v466, %v493
  %v495 = vcombine.low %v473, %v480
  %v496 = vcombine.low %v487, %v494
  %v498 = vunpack.c.l.s4 1966171168
  %v499 = vunpack.c.0.s8 %v498
  %v500 = vlaneseq
  %v501 = vshrl.u32 %v500, 7
  %v502 = vsub.s32 %v499, %v501
  %v503 = vrot.slane %v495, %v502
  %v505 = vunpack.c.l.s4 1966171168
  %v506 = vunpack.c.0.s8 %v505
  %v507 = vlaneseq
  %v508 = vshrl.u32 %v507, 7
  %v509 = vsub.s32 %v506, %v508
  %v510 = vrot.slane %v496, %v509
  %v511 = vcombine.low %v503, %v510
  %v512 = vcombine.low %v321, %v299
  %v513 = vcombine.low %v313, %v321
  %v514 = vcombine.low %v323, %v306
  %v516 = vunpack.c.l.s4 1966171168
  %v517 = vunpack.c.0.s8 %v516
  %v518 = vlaneseq
  %v519 = vshrl.u32 %v518, 7
  %v520 = vsub.s32 %v517, %v519
  %v521 = vrot.slane %v512, %v520
  %v523 = vunpack.c.l.s4 1966171168
  %v524 = vunpack.c.0.s8 %v523
  %v525 = vlaneseq
  %v526 = vshrl.u32 %v525, 7
  %v527 = vsub.s32 %v524, %v526
  %v528 = vrot.slane %v513, %v527
  %v530 = vunpack.c.l.s4 1966171168
  %v531 = vunpack.c.0.s8 %v530
  %v532 = vlaneseq
  %v533 = vshrl.u32 %v532, 7
  %v534 = vsub.s32 %v531, %v533
  %v535 = vrot.slane %v514, %v534
  %v536 = vcombine.low %v473, %v521
  %v537 = vcombine.low %v528, %v535
  %v539 = vunpack.c.l.s4 1966171168
  %v540 = vunpack.c.0.s8 %v539
  %v541 = vlaneseq
  %v542 = vshrl.u32 %v541, 7
  %v543 = vsub.s32 %v540, %v542
  %v544 = vrot.slane %v536, %v543
  %v546 = vunpack.c.l.s4 1966171168
  %v547 = vunpack.c.0.s8 %v546
  %v548 = vlaneseq
  %v549 = vshrl.u32 %v548, 7
  %v550 = vsub.s32 %v547, %v549
  %v551 = vrot.slane %v537, %v550
  %v552 = vcombine.low %v544, %v551
  %v553 = vcombine.low %v320, %v322
  %v554 = vcombine.low %v324, %v299
  %v556 = vunpack.c.l.s4 1966171168
  %v557 = vunpack.c.0.s8 %v556
  %v558 = vlaneseq
  %v559 = vshrl.u32 %v558, 7
  %v560 = vsub.s32 %v557, %v559
  %v561 = vrot.slane %v553, %v560
  %v563 = vunpack.c.l.s4 1966171168
  %v564 = vunpack.c.0.s8 %v563
  %v565 = vlaneseq
  %v566 = vshrl.u32 %v565, 7
  %v567 = vsub.s32 %v564, %v566
  %v568 = vrot.slane %v554, %v567
  %v569 = vcombine.low %v561, %v568
  %v571 = vunpack.c.l.s4 1966171168
  %v572 = vunpack.c.0.s8 %v571
  %v573 = vlaneseq
  %v574 = vshrl.u32 %v573, 7
  %v575 = vsub.s32 %v572, %v574
  %v576 = vrot.slane %v569, %v575
  %v578 = vunpack.c.l.s4 1966171168
  %v579 = vunpack.c.0.s8 %v578
  %v580 = vlaneseq
  %v581 = vshrl.u32 %v580, 7
  %v582 = vsub.s32 %v579, %v581
  %v583 = vrot.slane %v528, %v582
  %v584 = vcombine.low %v576, %v583
  %v588 = vsel %vm52, %v373, 0
  %v590 = vsel %vm52, %v422, 0
  %v592 = vsel %vm52, %v462, 0
  %594 = vmatprep.subr.mxu0 0.0
  %595 = vmatpush1.msra.mxu0 %v32
  %596 = vmatprep.subr.mxu0 0.0
  %597 = vmatpush1.msra.mxu0 %v33
  %598 = vmatprep.subr.mxu0 0.0
  %599 = vmatpush1.msra.mxu0 %v34
  %600 = vmatprep.subr.mxu0 0.0
  %601 = vmatpush1.msra.mxu0 %v35
  %602 = vmatprep.subr.mxu0 0.0
  %603 = vmatpush1.msra.mxu0 0.0
  %604 = vmatprep.subr.mxu0 0.0
  %605 = vmatpush1.msra.mxu0 0.0
  %606 = vmatprep.subr.mxu0 0.0
  %607 = vmatpush1.msra.mxu0 0.0
  %608 = vmatprep.subr.mxu0 0.0
  %609 = vmatpush1.msra.mxu0 0.0
  %610 = vmatprep.subr.mxu0 0.0
  %611 = vmatpush1.msra.mxu0 0.0
  %612 = vmatprep.subr.mxu0 0.0
  %613 = vmatpush1.msra.mxu0 0.0
  %614 = vmatprep.subr.mxu0 0.0
  %615 = vmatpush1.msra.mxu0 0.0
  %616 = vmatprep.subr.mxu0 0.0
  %617 = vmatpush1.msra.mxu0 0.0
  %618 = vmatprep.subr.mxu0 0.0
  %619 = vmatpush1.msra.mxu0 0.0
  %620 = vmatprep.subr.mxu0 0.0
  %621 = vmatpush1.msra.mxu0 0.0
  %622 = vmatprep.subr.mxu0 0.0
  %623 = vmatpush1.msra.mxu0 0.0
  %624 = vmatprep.subr.mxu0 0.0
  %625 = vmatpush1.msra.mxu0 0.0
  %626 = vmatprep.subr.mxu0 0.0
  %627 = vmatpush1.msra.mxu0 0.0
  %628 = vmatprep.subr.mxu0 0.0
  %629 = vmatpush1.msra.mxu0 0.0
  %630 = vmatprep.subr.mxu0 0.0
  %631 = vmatpush1.msra.mxu0 0.0
  %632 = vmatprep.subr.mxu0 0.0
  %633 = vmatpush1.msra.mxu0 0.0
  %634 = vmatprep.subr.mxu0 0.0
  %635 = vmatpush1.msra.mxu0 0.0
  %636 = vmatprep.subr.mxu0 0.0
  %637 = vmatpush1.msra.mxu0 0.0
  %638 = vmatprep.subr.mxu0 0.0
  %639 = vmatpush1.msra.mxu0 0.0
  %640 = vmatprep.subr.mxu0 0.0
  %641 = vmatpush1.msra.mxu0 0.0
  %642 = vmatprep.subr.mxu0 0.0
  %643 = vmatpush1.msra.mxu0 0.0
  %644 = vmatprep.subr.mxu0 0.0
  %645 = vmatpush1.msra.mxu0 0.0
  %646 = vmatprep.subr.mxu0 0.0
  %647 = vmatpush1.msra.mxu0 0.0
  %648 = vmatprep.subr.mxu0 0.0
  %649 = vmatpush1.msra.mxu0 0.0
  %650 = vmatprep.subr.mxu0 0.0
  %651 = vmatpush1.msra.mxu0 0.0
  %652 = vmatprep.subr.mxu0 0.0
  %653 = vmatpush1.msra.mxu0 0.0
  %654 = vmatprep.subr.mxu0 0.0
  %655 = vmatpush1.msra.mxu0 0.0
  %656 = vmatprep.subr.mxu0 0.0
  %657 = vmatpush1.msra.mxu0 0.0
  %658 = vmatprep.mubr.f32.mxu0 0.0
  %659 = vmatmul.mubr.f32.gmra.mrb[0].mxu0 %v588
  %v660 = vpop.f32.mrb[0].mxu0
  %v661 = vadd.f32 %v511, %v660
  %v662 = vpop.f32.mrb[0].mxu0
  %663 = vmatprep.mubr.f32.mxu0 0.0
  %664 = vmatmul.mubr.f32.gmra.mrb[0].mxu0 %v590
  %v665 = vpop.f32.mrb[0].mxu0
  %v666 = vadd.f32 %v552, %v665
  %v667 = vpop.f32.mrb[0].mxu0
  %668 = vmatprep.mubr.f32.mxu0 0.0
  %669 = vmatmul.mubr.f32.gmra.mrb[0].mxu0 %v592
  %v670 = vpop.f32.mrb[0].mxu0
  %v671 = vadd.f32 %v584, %v670
  %v672 = vpop.f32.mrb[0].mxu0
  %673 = vdwg.mxu0
  %v677 = vcombine.high %v661, %v661
  %v679 = vunpack.c.l.s4 1966171168
  %v680 = vunpack.c.0.s8 %v679
  %v681 = vlaneseq
  %v682 = vshrl.u32 %v681, 7
  %v683 = vsub.s32 %v680, %v682
  %v684 = vrot.slane %v661, %v683
  %v686 = vunpack.c.l.s4 1966171168
  %v687 = vunpack.c.0.s8 %v686
  %v688 = vlaneseq
  %v689 = vshrl.u32 %v688, 7
  %v690 = vsub.s32 %v687, %v689
  %v691 = vrot.slane %v677, %v690
  %v692 = vcombine.high %v684, %v684
  %v693 = vcombine.high %v691, %v691
  %v695 = vunpack.c.l.s4 1966171168
  %v696 = vunpack.c.0.s8 %v695
  %v697 = vlaneseq
  %v698 = vshrl.u32 %v697, 7
  %v699 = vsub.s32 %v696, %v698
  %v700 = vrot.slane %v684, %v699
  %v702 = vunpack.c.l.s4 1966171168
  %v703 = vunpack.c.0.s8 %v702
  %v704 = vlaneseq
  %v705 = vshrl.u32 %v704, 7
  %v706 = vsub.s32 %v703, %v705
  %v707 = vrot.slane %v691, %v706
  %v709 = vunpack.c.l.s4 1966171168
  %v710 = vunpack.c.0.s8 %v709
  %v711 = vlaneseq
  %v712 = vshrl.u32 %v711, 7
  %v713 = vsub.s32 %v710, %v712
  %v714 = vrot.slane %v692, %v713
  %v716 = vunpack.c.l.s4 1966171168
  %v717 = vunpack.c.0.s8 %v716
  %v718 = vlaneseq
  %v719 = vshrl.u32 %v718, 7
  %v720 = vsub.s32 %v717, %v719
  %v721 = vrot.slane %v693, %v720
  %v722 = vcombine.high %v700, %v700
  %v723 = vcombine.high %v707, %v707
  %v724 = vcombine.high %v714, %v714
  %v725 = vcombine.high %v721, %v721
  %v726 = vcombine.high %v666, %v666
  %v728 = vunpack.c.l.s4 1966171168
  %v729 = vunpack.c.0.s8 %v728
  %v730 = vlaneseq
  %v731 = vshrl.u32 %v730, 7
  %v732 = vsub.s32 %v729, %v731
  %v733 = vrot.slane %v666, %v732
  %v735 = vunpack.c.l.s4 1966171168
  %v736 = vunpack.c.0.s8 %v735
  %v737 = vlaneseq
  %v738 = vshrl.u32 %v737, 7
  %v739 = vsub.s32 %v736, %v738
  %v740 = vrot.slane %v726, %v739
  %v741 = vcombine.high %v733, %v733
  %v742 = vcombine.high %v740, %v740
  %v744 = vunpack.c.l.s4 1966171168
  %v745 = vunpack.c.0.s8 %v744
  %v746 = vlaneseq
  %v747 = vshrl.u32 %v746, 7
  %v748 = vsub.s32 %v745, %v747
  %v749 = vrot.slane %v733, %v748
  %v751 = vunpack.c.l.s4 1966171168
  %v752 = vunpack.c.0.s8 %v751
  %v753 = vlaneseq
  %v754 = vshrl.u32 %v753, 7
  %v755 = vsub.s32 %v752, %v754
  %v756 = vrot.slane %v740, %v755
  %v758 = vunpack.c.l.s4 1966171168
  %v759 = vunpack.c.0.s8 %v758
  %v760 = vlaneseq
  %v761 = vshrl.u32 %v760, 7
  %v762 = vsub.s32 %v759, %v761
  %v763 = vrot.slane %v741, %v762
  %v765 = vunpack.c.l.s4 1966171168
  %v766 = vunpack.c.0.s8 %v765
  %v767 = vlaneseq
  %v768 = vshrl.u32 %v767, 7
  %v769 = vsub.s32 %v766, %v768
  %v770 = vrot.slane %v742, %v769
  %v771 = vcombine.high %v749, %v749
  %v772 = vcombine.high %v756, %v756
  %v773 = vcombine.high %v763, %v763
  %v774 = vcombine.high %v770, %v770
  %v775 = vcombine.high %v671, %v671
  %v777 = vunpack.c.l.s4 1966171168
  %v778 = vunpack.c.0.s8 %v777
  %v779 = vlaneseq
  %v780 = vshrl.u32 %v779, 7
  %v781 = vsub.s32 %v778, %v780
  %v782 = vrot.slane %v671, %v781
  %v784 = vunpack.c.l.s4 1966171168
  %v785 = vunpack.c.0.s8 %v784
  %v786 = vlaneseq
  %v787 = vshrl.u32 %v786, 7
  %v788 = vsub.s32 %v785, %v787
  %v789 = vrot.slane %v775, %v788
  %v790 = vcombine.high %v782, %v782
  %v791 = vcombine.high %v789, %v789
  %v793 = vunpack.c.l.s4 1966171168
  %v794 = vunpack.c.0.s8 %v793
  %v795 = vlaneseq
  %v796 = vshrl.u32 %v795, 7
  %v797 = vsub.s32 %v794, %v796
  %v798 = vrot.slane %v782, %v797
  %v800 = vunpack.c.l.s4 1966171168
  %v801 = vunpack.c.0.s8 %v800
  %v802 = vlaneseq
  %v803 = vshrl.u32 %v802, 7
  %v804 = vsub.s32 %v801, %v803
  %v805 = vrot.slane %v789, %v804
  %v807 = vunpack.c.l.s4 1966171168
  %v808 = vunpack.c.0.s8 %v807
  %v809 = vlaneseq
  %v810 = vshrl.u32 %v809, 7
  %v811 = vsub.s32 %v808, %v810
  %v812 = vrot.slane %v790, %v811
  %v814 = vunpack.c.l.s4 1966171168
  %v815 = vunpack.c.0.s8 %v814
  %v816 = vlaneseq
  %v817 = vshrl.u32 %v816, 7
  %v818 = vsub.s32 %v815, %v817
  %v819 = vrot.slane %v791, %v818
  %v820 = vcombine.high %v798, %v798
  %v821 = vcombine.high %v812, %v812
  %v822 = vcombine.low %v700, %v714
  %v823 = vcombine.low %v722, %v724
  %v824 = vcombine.low %v707, %v721
  %v825 = vcombine.low %v723, %v725
  %v827 = vunpack.c.l.s4 1966171168
  %v828 = vunpack.c.0.s8 %v827
  %v829 = vlaneseq
  %v830 = vshrl.u32 %v829, 7
  %v831 = vsub.s32 %v828, %v830
  %v832 = vrot.slane %v822, %v831
  %v834 = vunpack.c.l.s4 1966171168
  %v835 = vunpack.c.0.s8 %v834
  %v836 = vlaneseq
  %v837 = vshrl.u32 %v836, 7
  %v838 = vsub.s32 %v835, %v837
  %v839 = vrot.slane %v823, %v838
  %v841 = vunpack.c.l.s4 1966171168
  %v842 = vunpack.c.0.s8 %v841
  %v843 = vlaneseq
  %v844 = vshrl.u32 %v843, 7
  %v845 = vsub.s32 %v842, %v844
  %v846 = vrot.slane %v824, %v845
  %v848 = vunpack.c.l.s4 1966171168
  %v849 = vunpack.c.0.s8 %v848
  %v850 = vlaneseq
  %v851 = vshrl.u32 %v850, 7
  %v852 = vsub.s32 %v849, %v851
  %v853 = vrot.slane %v825, %v852
  %v854 = vcombine.low %v832, %v839
  %v855 = vcombine.low %v846, %v853
  %v857 = vunpack.c.l.s4 1966171168
  %v858 = vunpack.c.0.s8 %v857
  %v859 = vlaneseq
  %v860 = vshrl.u32 %v859, 7
  %v861 = vsub.s32 %v858, %v860
  %v862 = vrot.slane %v854, %v861
  %v864 = vunpack.c.l.s4 1966171168
  %v865 = vunpack.c.0.s8 %v864
  %v866 = vlaneseq
  %v867 = vshrl.u32 %v866, 7
  %v868 = vsub.s32 %v865, %v867
  %v869 = vrot.slane %v855, %v868
  %v870 = vcombine.low %v862, %v869
  %v871 = vcombine.low %v749, %v763
  %v873 = vunpack.c.l.s4 1966171168
  %v874 = vunpack.c.0.s8 %v873
  %v875 = vlaneseq
  %v876 = vshrl.u32 %v875, 7
  %v877 = vsub.s32 %v874, %v876
  %v878 = vrot.slane %v871, %v877
  %v880 = vunpack.c.l.s4 1966171168
  %v881 = vunpack.c.0.s8 %v880
  %v882 = vlaneseq
  %v883 = vshrl.u32 %v882, 7
  %v884 = vsub.s32 %v881, %v883
  %v885 = vrot.slane %v771, %v884
  %v886 = vcombine.low %v878, %v885
  %v888 = vunpack.c.l.s4 1966171168
  %v889 = vunpack.c.0.s8 %v888
  %v890 = vlaneseq
  %v891 = vshrl.u32 %v890, 7
  %v892 = vsub.s32 %v889, %v891
  %v893 = vrot.slane %v886, %v892
  %894 = vrot.lane.b32.xlu0 %v870, 96
  %v895 = vpop.permute.xlu0 %894
  %896 = vrot.lane.b32.xlu0 %v893, 96
  %v897 = vpop.permute.xlu0 %896
  %vm898 = vcmask 64512
  %v899 = vsel %vm898, %v870, 0
  %v901 = vsel %vm898, %v893, 0
  %v903 = vsel %vm898, %v895, 0
  %v905 = vsel %vm898, %v897, 0
  %907 = vmatprep.subr.mxu0 0.0
  %908 = vmatpush1.xpose.msra.mxu0 %v903
  %909 = vmatprep.subr.mxu0 0.0
  %910 = vmatpush1.xpose.msra.mxu0 %v905
  %911 = vmatprep.subr.mxu0 0.0
  %912 = vmatpush1.xpose.msra.mxu0 0.0
  %913 = vmatprep.subr.mxu0 0.0
  %914 = vmatpush1.xpose.msra.mxu0 0.0
  %915 = vmatprep.subr.mxu0 0.0
  %916 = vmatpush1.xpose.msra.mxu0 0.0
  %917 = vmatprep.subr.mxu0 0.0
  %918 = vmatpush1.xpose.msra.mxu0 0.0
  %919 = vmatprep.subr.mxu0 0.0
  %920 = vmatpush1.xpose.msra.mxu0 0.0
  %921 = vmatprep.subr.mxu0 0.0
  %922 = vmatpush1.xpose.msra.mxu0 0.0
  %923 = vmatprep.subr.mxu0 0.0
  %924 = vmatpush1.xpose.msra.mxu0 0.0
  %925 = vmatprep.subr.mxu0 0.0
  %926 = vmatpush1.xpose.msra.mxu0 0.0
  %927 = vmatprep.subr.mxu0 0.0
  %928 = vmatpush1.xpose.msra.mxu0 0.0
  %929 = vmatprep.subr.mxu0 0.0
  %930 = vmatpush1.xpose.msra.mxu0 0.0
  %931 = vmatprep.subr.mxu0 0.0
  %932 = vmatpush1.xpose.msra.mxu0 0.0
  %933 = vmatprep.subr.mxu0 0.0
  %934 = vmatpush1.xpose.msra.mxu0 0.0
  %935 = vmatprep.subr.mxu0 0.0
  %936 = vmatpush1.xpose.msra.mxu0 0.0
  %937 = vmatprep.subr.mxu0 0.0
  %938 = vmatpush1.xpose.msra.mxu0 0.0
  %939 = vmatprep.subr.mxu0 0.0
  %940 = vmatpush1.xpose.msra.mxu0 0.0
  %941 = vmatprep.subr.mxu0 0.0
  %942 = vmatpush1.xpose.msra.mxu0 0.0
  %943 = vmatprep.subr.mxu0 0.0
  %944 = vmatpush1.xpose.msra.mxu0 0.0
  %945 = vmatprep.subr.mxu0 0.0
  %946 = vmatpush1.xpose.msra.mxu0 0.0
  %947 = vmatprep.subr.mxu0 0.0
  %948 = vmatpush1.xpose.msra.mxu0 0.0
  %949 = vmatprep.subr.mxu0 0.0
  %950 = vmatpush1.xpose.msra.mxu0 0.0
  %951 = vmatprep.subr.mxu0 0.0
  %952 = vmatpush1.xpose.msra.mxu0 0.0
  %953 = vmatprep.subr.mxu0 0.0
  %954 = vmatpush1.xpose.msra.mxu0 0.0
  %955 = vmatprep.subr.mxu0 0.0
  %956 = vmatpush1.xpose.msra.mxu0 0.0
  %957 = vmatprep.subr.mxu0 0.0
  %958 = vmatpush1.xpose.msra.mxu0 0.0
  %959 = vmatprep.subr.mxu0 0.0
  %960 = vmatpush1.xpose.msra.mxu0 0.0
  %961 = vmatprep.subr.mxu0 0.0
  %962 = vmatpush1.xpose.msra.mxu0 0.0
  %963 = vmatprep.subr.mxu0 0.0
  %964 = vmatpush1.xpose.msra.mxu0 0.0
  %965 = vmatprep.subr.mxu0 0.0
  %966 = vmatpush1.xpose.msra.mxu0 0.0
  %967 = vmatprep.subr.mxu0 0.0
  %968 = vmatpush1.xpose.msra.mxu0 0.0
  %969 = vmatprep.subr.mxu0 0.0
  %970 = vmatpush1.xpose.msra.mxu0 0.0
  %971 = vmatprep.mubr.f32.mxu0 0.0
  %972 = vmatmul.mubr.f32.gmra.mrb[0].mxu0 %v899
  %v973 = vpop.f32.mrb[0].mxu0
  %v974 = vadd.f32 0.0, %v973
  %v975 = vpop.f32.mrb[0].mxu0
  %976 = vmatprep.mubr.f32.mxu0 0.0
  %977 = vmatmul.mubr.f32.gmra.mrb[0].mxu0 %v901
  %v978 = vpop.f32.mrb[0].mxu0
  %v979 = vadd.f32 0.0, %v978
  %v980 = vpop.f32.mrb[0].mxu0
  %981 = vdwg.mxu0
  %v982 = vcombine.low %v773, %v756
  %v983 = vcombine.low %v770, %v772
  %v984 = vcombine.low %v774, %v798
  %v985 = vcombine.low %v812, %v820
  %v987 = vunpack.c.l.s4 1966171168
  %v988 = vunpack.c.0.s8 %v987
  %v989 = vlaneseq
  %v990 = vshrl.u32 %v989, 7
  %v991 = vsub.s32 %v988, %v990
  %v992 = vrot.slane %v982, %v991
  %v994 = vunpack.c.l.s4 1966171168
  %v995 = vunpack.c.0.s8 %v994
  %v996 = vlaneseq
  %v997 = vshrl.u32 %v996, 7
  %v998 = vsub.s32 %v995, %v997
  %v999 = vrot.slane %v983, %v998
  %v1001 = vunpack.c.l.s4 1966171168
  %v1002 = vunpack.c.0.s8 %v1001
  %v1003 = vlaneseq
  %v1004 = vshrl.u32 %v1003, 7
  %v1005 = vsub.s32 %v1002, %v1004
  %v1006 = vrot.slane %v984, %v1005
  %v1008 = vunpack.c.l.s4 1966171168
  %v1009 = vunpack.c.0.s8 %v1008
  %v1010 = vlaneseq
  %v1011 = vshrl.u32 %v1010, 7
  %v1012 = vsub.s32 %v1009, %v1011
  %v1013 = vrot.slane %v985, %v1012
  %v1014 = vcombine.low %v992, %v999
  %v1015 = vcombine.low %v1006, %v1013
  %v1017 = vunpack.c.l.s4 1966171168
  %v1018 = vunpack.c.0.s8 %v1017
  %v1019 = vlaneseq
  %v1020 = vshrl.u32 %v1019, 7
  %v1021 = vsub.s32 %v1018, %v1020
  %v1022 = vrot.slane %v1014, %v1021
  %v1024 = vunpack.c.l.s4 1966171168
  %v1025 = vunpack.c.0.s8 %v1024
  %v1026 = vlaneseq
  %v1027 = vshrl.u32 %v1026, 7
  %v1028 = vsub.s32 %v1025, %v1027
  %v1029 = vrot.slane %v1015, %v1028
  %v1030 = vcombine.low %v1022, %v1029
  %v1031 = vcombine.low %v821, %v805
  %v1033 = vunpack.c.l.s4 1966171168
  %v1034 = vunpack.c.0.s8 %v1033
  %v1035 = vlaneseq
  %v1036 = vshrl.u32 %v1035, 7
  %v1037 = vsub.s32 %v1034, %v1036
  %v1038 = vrot.slane %v1031, %v1037
  %v1040 = vunpack.c.l.s4 1966171168
  %v1041 = vunpack.c.0.s8 %v1040
  %v1042 = vlaneseq
  %v1043 = vshrl.u32 %v1042, 7
  %v1044 = vsub.s32 %v1041, %v1043
  %v1045 = vrot.slane %v819, %v1044
  %v1046 = vcombine.low %v1038, %v1045
  %v1048 = vunpack.c.l.s4 1966171168
  %v1049 = vunpack.c.0.s8 %v1048
  %v1050 = vlaneseq
  %v1051 = vshrl.u32 %v1050, 7
  %v1052 = vsub.s32 %v1049, %v1051
  %v1053 = vrot.slane %v1046, %v1052
  %1054 = vrot.lane.b32.xlu0 %v1030, 96
  %v1055 = vpop.permute.xlu0 %1054
  %1056 = vrot.lane.b32.xlu0 %v1053, 96
  %v1057 = vpop.permute.xlu0 %1056
  %v1058 = vsel %vm898, %v1030, 0
  %v1060 = vsel %vm898, %v1053, 0
  %v1062 = vsel %vm898, %v1055, 0
  %v1064 = vsel %vm898, %v1057, 0
  %1066 = vmatprep.subr.mxu0 0.0
  %1067 = vmatpush1.xpose.msra.mxu0 %v1062
  %1068 = vmatprep.subr.mxu0 0.0
  %1069 = vmatpush1.xpose.msra.mxu0 %v1064
  %1070 = vmatprep.subr.mxu0 0.0
  %1071 = vmatpush1.xpose.msra.mxu0 0.0
  %1072 = vmatprep.subr.mxu0 0.0
  %1073 = vmatpush1.xpose.msra.mxu0 0.0
  %1074 = vmatprep.subr.mxu0 0.0
  %1075 = vmatpush1.xpose.msra.mxu0 0.0
  %1076 = vmatprep.subr.mxu0 0.0
  %1077 = vmatpush1.xpose.msra.mxu0 0.0
  %1078 = vmatprep.subr.mxu0 0.0
  %1079 = vmatpush1.xpose.msra.mxu0 0.0
  %1080 = vmatprep.subr.mxu0 0.0
  %1081 = vmatpush1.xpose.msra.mxu0 0.0
  %1082 = vmatprep.subr.mxu0 0.0
  %1083 = vmatpush1.xpose.msra.mxu0 0.0
  %1084 = vmatprep.subr.mxu0 0.0
  %1085 = vmatpush1.xpose.msra.mxu0 0.0
  %1086 = vmatprep.subr.mxu0 0.0
  %1087 = vmatpush1.xpose.msra.mxu0 0.0
  %1088 = vmatprep.subr.mxu0 0.0
  %1089 = vmatpush1.xpose.msra.mxu0 0.0
  %1090 = vmatprep.subr.mxu0 0.0
  %1091 = vmatpush1.xpose.msra.mxu0 0.0
  %1092 = vmatprep.subr.mxu0 0.0
  %1093 = vmatpush1.xpose.msra.mxu0 0.0
  %1094 = vmatprep.subr.mxu0 0.0
  %1095 = vmatpush1.xpose.msra.mxu0 0.0
  %1096 = vmatprep.subr.mxu0 0.0
  %1097 = vmatpush1.xpose.msra.mxu0 0.0
  %1098 = vmatprep.subr.mxu0 0.0
  %1099 = vmatpush1.xpose.msra.mxu0 0.0
  %1100 = vmatprep.subr.mxu0 0.0
  %1101 = vmatpush1.xpose.msra.mxu0 0.0
  %1102 = vmatprep.subr.mxu0 0.0
  %1103 = vmatpush1.xpose.msra.mxu0 0.0
  %1104 = vmatprep.subr.mxu0 0.0
  %1105 = vmatpush1.xpose.msra.mxu0 0.0
  %1106 = vmatprep.subr.mxu0 0.0
  %1107 = vmatpush1.xpose.msra.mxu0 0.0
  %1108 = vmatprep.subr.mxu0 0.0
  %1109 = vmatpush1.xpose.msra.mxu0 0.0
  %1110 = vmatprep.subr.mxu0 0.0
  %1111 = vmatpush1.xpose.msra.mxu0 0.0
  %1112 = vmatprep.subr.mxu0 0.0
  %1113 = vmatpush1.xpose.msra.mxu0 0.0
  %1114 = vmatprep.subr.mxu0 0.0
  %1115 = vmatpush1.xpose.msra.mxu0 0.0
  %1116 = vmatprep.subr.mxu0 0.0
  %1117 = vmatpush1.xpose.msra.mxu0 0.0
  %1118 = vmatprep.subr.mxu0 0.0
  %1119 = vmatpush1.xpose.msra.mxu0 0.0
  %1120 = vmatprep.subr.mxu0 0.0
  %1121 = vmatpush1.xpose.msra.mxu0 0.0
  %1122 = vmatprep.subr.mxu0 0.0
  %1123 = vmatpush1.xpose.msra.mxu0 0.0
  %1124 = vmatprep.subr.mxu0 0.0
  %1125 = vmatpush1.xpose.msra.mxu0 0.0
  %1126 = vmatprep.subr.mxu0 0.0
  %1127 = vmatpush1.xpose.msra.mxu0 0.0
  %1128 = vmatprep.subr.mxu0 0.0
  %1129 = vmatpush1.xpose.msra.mxu0 0.0
  %1130 = vmatprep.mubr.f32.mxu0 0.0
  %1131 = vmatmul.mubr.f32.gmra.mrb[0].mxu0 %v1058
  %v1132 = vpop.f32.mrb[0].mxu0
  %v1133 = vadd.f32 0.0, %v1132
  %v1134 = vpop.f32.mrb[0].mxu0
  %1135 = vmatprep.mubr.f32.mxu0 0.0
  %1136 = vmatmul.mubr.f32.gmra.mrb[0].mxu0 %v1060
  %v1137 = vpop.f32.mrb[0].mxu0
  %v1138 = vadd.f32 0.0, %v1137
  %v1139 = vpop.f32.mrb[0].mxu0
  %1140 = vdwg.mxu0
  %1141 = vrot.lane.b32.xlu0 %v870, 120
  %v1142 = vpop.permute.xlu0 %1141
  %1143 = vrot.lane.b32.xlu0 %v893, 120
  %v1144 = vpop.permute.xlu0 %1143
  %1145 = vrot.lane.b32.xlu0 %v870, 88
  %v1146 = vpop.permute.xlu0 %1145
  %1147 = vrot.lane.b32.xlu0 %v893, 88
  %v1148 = vpop.permute.xlu0 %1147
  %v1149 = vsel %vm898, %v1142, 0
  %v1151 = vsel %vm898, %v1144, 0
  %v1153 = vsel %vm898, %v1146, 0
  %v1155 = vsel %vm898, %v1148, 0
  %1157 = vmatprep.subr.mxu0 0.0
  %1158 = vmatpush1.xpose.msra.mxu0 %v1153
  %1159 = vmatprep.subr.mxu0 0.0
  %1160 = vmatpush1.xpose.msra.mxu0 %v1155
  %1161 = vmatprep.subr.mxu0 0.0
  %1162 = vmatpush1.xpose.msra.mxu0 0.0
  %1163 = vmatprep.subr.mxu0 0.0
  %1164 = vmatpush1.xpose.msra.mxu0 0.0
  %1165 = vmatprep.subr.mxu0 0.0
  %1166 = vmatpush1.xpose.msra.mxu0 0.0
  %1167 = vmatprep.subr.mxu0 0.0
  %1168 = vmatpush1.xpose.msra.mxu0 0.0
  %1169 = vmatprep.subr.mxu0 0.0
  %1170 = vmatpush1.xpose.msra.mxu0 0.0
  %1171 = vmatprep.subr.mxu0 0.0
  %1172 = vmatpush1.xpose.msra.mxu0 0.0
  %1173 = vmatprep.subr.mxu0 0.0
  %1174 = vmatpush1.xpose.msra.mxu0 0.0
  %1175 = vmatprep.subr.mxu0 0.0
  %1176 = vmatpush1.xpose.msra.mxu0 0.0
  %1177 = vmatprep.subr.mxu0 0.0
  %1178 = vmatpush1.xpose.msra.mxu0 0.0
  %1179 = vmatprep.subr.mxu0 0.0
  %1180 = vmatpush1.xpose.msra.mxu0 0.0
  %1181 = vmatprep.subr.mxu0 0.0
  %1182 = vmatpush1.xpose.msra.mxu0 0.0
  %1183 = vmatprep.subr.mxu0 0.0
  %1184 = vmatpush1.xpose.msra.mxu0 0.0
  %1185 = vmatprep.subr.mxu0 0.0
  %1186 = vmatpush1.xpose.msra.mxu0 0.0
  %1187 = vmatprep.subr.mxu0 0.0
  %1188 = vmatpush1.xpose.msra.mxu0 0.0
  %1189 = vmatprep.subr.mxu0 0.0
  %1190 = vmatpush1.xpose.msra.mxu0 0.0
  %1191 = vmatprep.subr.mxu0 0.0
  %1192 = vmatpush1.xpose.msra.mxu0 0.0
  %1193 = vmatprep.subr.mxu0 0.0
  %1194 = vmatpush1.xpose.msra.mxu0 0.0
  %1195 = vmatprep.subr.mxu0 0.0
  %1196 = vmatpush1.xpose.msra.mxu0 0.0
  %1197 = vmatprep.subr.mxu0 0.0
  %1198 = vmatpush1.xpose.msra.mxu0 0.0
  %1199 = vmatprep.subr.mxu0 0.0
  %1200 = vmatpush1.xpose.msra.mxu0 0.0
  %1201 = vmatprep.subr.mxu0 0.0
  %1202 = vmatpush1.xpose.msra.mxu0 0.0
  %1203 = vmatprep.subr.mxu0 0.0
  %1204 = vmatpush1.xpose.msra.mxu0 0.0
  %1205 = vmatprep.subr.mxu0 0.0
  %1206 = vmatpush1.xpose.msra.mxu0 0.0
  %1207 = vmatprep.subr.mxu0 0.0
  %1208 = vmatpush1.xpose.msra.mxu0 0.0
  %1209 = vmatprep.subr.mxu0 0.0
  %1210 = vmatpush1.xpose.msra.mxu0 0.0
  %1211 = vmatprep.subr.mxu0 0.0
  %1212 = vmatpush1.xpose.msra.mxu0 0.0
  %1213 = vmatprep.subr.mxu0 0.0
  %1214 = vmatpush1.xpose.msra.mxu0 0.0
  %1215 = vmatprep.subr.mxu0 0.0
  %1216 = vmatpush1.xpose.msra.mxu0 0.0
  %1217 = vmatprep.subr.mxu0 0.0
  %1218 = vmatpush1.xpose.msra.mxu0 0.0
  %1219 = vmatprep.subr.mxu0 0.0
  %1220 = vmatpush1.xpose.msra.mxu0 0.0
  %1221 = vmatprep.mubr.f32.mxu0 0.0
  %1222 = vmatmul.mubr.f32.gmra.mrb[0].mxu0 %v1149
  %v1223 = vpop.f32.mrb[0].mxu0
  %v1224 = vadd.f32 0.0, %v1223
  %v1225 = vpop.f32.mrb[0].mxu0
  %1226 = vmatprep.mubr.f32.mxu0 0.0
  %1227 = vmatmul.mubr.f32.gmra.mrb[0].mxu0 %v1151
  %v1228 = vpop.f32.mrb[0].mxu0
  %v1229 = vadd.f32 0.0, %v1228
  %v1230 = vpop.f32.mrb[0].mxu0
  %1231 = vdwg.mxu0
  %1232 = vrot.lane.b32.xlu0 %v1030, 120
  %v1233 = vpop.permute.xlu0 %1232
  %1234 = vrot.lane.b32.xlu0 %v1053, 120
  %v1235 = vpop.permute.xlu0 %1234
  %1236 = vrot.lane.b32.xlu0 %v1030, 88
  %v1237 = vpop.permute.xlu0 %1236
  %1238 = vrot.lane.b32.xlu0 %v1053, 88
  %v1239 = vpop.permute.xlu0 %1238
  %v1240 = vsel %vm898, %v1233, 0
  %v1242 = vsel %vm898, %v1235, 0
  %v1244 = vsel %vm898, %v1237, 0
  %v1246 = vsel %vm898, %v1239, 0
  %1248 = vmatprep.subr.mxu0 0.0
  %1249 = vmatpush1.xpose.msra.mxu0 %v1244
  %1250 = vmatprep.subr.mxu0 0.0
  %1251 = vmatpush1.xpose.msra.mxu0 %v1246
  %1252 = vmatprep.subr.mxu0 0.0
  %1253 = vmatpush1.xpose.msra.mxu0 0.0
  %1254 = vmatprep.subr.mxu0 0.0
  %1255 = vmatpush1.xpose.msra.mxu0 0.0
  %1256 = vmatprep.subr.mxu0 0.0
  %1257 = vmatpush1.xpose.msra.mxu0 0.0
  %1258 = vmatprep.subr.mxu0 0.0
  %1259 = vmatpush1.xpose.msra.mxu0 0.0
  %1260 = vmatprep.subr.mxu0 0.0
  %1261 = vmatpush1.xpose.msra.mxu0 0.0
  %1262 = vmatprep.subr.mxu0 0.0
  %1263 = vmatpush1.xpose.msra.mxu0 0.0
  %1264 = vmatprep.subr.mxu0 0.0
  %1265 = vmatpush1.xpose.msra.mxu0 0.0
  %1266 = vmatprep.subr.mxu0 0.0
  %1267 = vmatpush1.xpose.msra.mxu0 0.0
  %1268 = vmatprep.subr.mxu0 0.0
  %1269 = vmatpush1.xpose.msra.mxu0 0.0
  %1270 = vmatprep.subr.mxu0 0.0
  %1271 = vmatpush1.xpose.msra.mxu0 0.0
  %1272 = vmatprep.subr.mxu0 0.0
  %1273 = vmatpush1.xpose.msra.mxu0 0.0
  %1274 = vmatprep.subr.mxu0 0.0
  %1275 = vmatpush1.xpose.msra.mxu0 0.0
  %1276 = vmatprep.subr.mxu0 0.0
  %1277 = vmatpush1.xpose.msra.mxu0 0.0
  %1278 = vmatprep.subr.mxu0 0.0
  %1279 = vmatpush1.xpose.msra.mxu0 0.0
  %1280 = vmatprep.subr.mxu0 0.0
  %1281 = vmatpush1.xpose.msra.mxu0 0.0
  %1282 = vmatprep.subr.mxu0 0.0
  %1283 = vmatpush1.xpose.msra.mxu0 0.0
  %1284 = vmatprep.subr.mxu0 0.0
  %1285 = vmatpush1.xpose.msra.mxu0 0.0
  %1286 = vmatprep.subr.mxu0 0.0
  %1287 = vmatpush1.xpose.msra.mxu0 0.0
  %1288 = vmatprep.subr.mxu0 0.0
  %1289 = vmatpush1.xpose.msra.mxu0 0.0
  %1290 = vmatprep.subr.mxu0 0.0
  %1291 = vmatpush1.xpose.msra.mxu0 0.0
  %1292 = vmatprep.subr.mxu0 0.0
  %1293 = vmatpush1.xpose.msra.mxu0 0.0
  %1294 = vmatprep.subr.mxu0 0.0
  %1295 = vmatpush1.xpose.msra.mxu0 0.0
  %1296 = vmatprep.subr.mxu0 0.0
  %1297 = vmatpush1.xpose.msra.mxu0 0.0
  %1298 = vmatprep.subr.mxu0 0.0
  %1299 = vmatpush1.xpose.msra.mxu0 0.0
  %1300 = vmatprep.subr.mxu0 0.0
  %1301 = vmatpush1.xpose.msra.mxu0 0.0
  %1302 = vmatprep.subr.mxu0 0.0
  %1303 = vmatpush1.xpose.msra.mxu0 0.0
  %1304 = vmatprep.subr.mxu0 0.0
  %1305 = vmatpush1.xpose.msra.mxu0 0.0
  %1306 = vmatprep.subr.mxu0 0.0
  %1307 = vmatpush1.xpose.msra.mxu0 0.0
  %1308 = vmatprep.subr.mxu0 0.0
  %1309 = vmatpush1.xpose.msra.mxu0 0.0
  %1310 = vmatprep.subr.mxu0 0.0
  %1311 = vmatpush1.xpose.msra.mxu0 0.0
  %1312 = vmatprep.mubr.f32.mxu0 0.0
  %1313 = vmatmul.mubr.f32.gmra.mrb[0].mxu0 %v1240
  %v1314 = vpop.f32.mrb[0].mxu0
  %v1315 = vadd.f32 0.0, %v1314
  %v1316 = vpop.f32.mrb[0].mxu0
  %1317 = vmatprep.mubr.f32.mxu0 0.0
  %1318 = vmatmul.mubr.f32.gmra.mrb[0].mxu0 %v1242
  %v1319 = vpop.f32.mrb[0].mxu0
  %v1320 = vadd.f32 0.0, %v1319
  %v1321 = vpop.f32.mrb[0].mxu0
  %1322 = vdwg.mxu0
  %1323 = vrot.lane.b32.xlu0 %v870, 112
  %v1324 = vpop.permute.xlu0 %1323
  %1325 = vrot.lane.b32.xlu0 %v893, 112
  %v1326 = vpop.permute.xlu0 %1325
  %1327 = vrot.lane.b32.xlu0 %v870, 80
  %v1328 = vpop.permute.xlu0 %1327
  %1329 = vrot.lane.b32.xlu0 %v893, 80
  %v1330 = vpop.permute.xlu0 %1329
  %v1331 = vsel %vm898, %v1324, 0
  %v1333 = vsel %vm898, %v1326, 0
  %v1335 = vsel %vm898, %v1328, 0
  %v1337 = vsel %vm898, %v1330, 0
  %1339 = vmatprep.subr.mxu0 0.0
  %1340 = vmatpush1.xpose.msra.mxu0 %v1335
  %1341 = vmatprep.subr.mxu0 0.0
  %1342 = vmatpush1.xpose.msra.mxu0 %v1337
  %1343 = vmatprep.subr.mxu0 0.0
  %1344 = vmatpush1.xpose.msra.mxu0 0.0
  %1345 = vmatprep.subr.mxu0 0.0
  %1346 = vmatpush1.xpose.msra.mxu0 0.0
  %1347 = vmatprep.subr.mxu0 0.0
  %1348 = vmatpush1.xpose.msra.mxu0 0.0
  %1349 = vmatprep.subr.mxu0 0.0
  %1350 = vmatpush1.xpose.msra.mxu0 0.0
  %1351 = vmatprep.subr.mxu0 0.0
  %1352 = vmatpush1.xpose.msra.mxu0 0.0
  %1353 = vmatprep.subr.mxu0 0.0
  %1354 = vmatpush1.xpose.msra.mxu0 0.0
  %1355 = vmatprep.subr.mxu0 0.0
  %1356 = vmatpush1.xpose.msra.mxu0 0.0
  %1357 = vmatprep.subr.mxu0 0.0
  %1358 = vmatpush1.xpose.msra.mxu0 0.0
  %1359 = vmatprep.subr.mxu0 0.0
  %1360 = vmatpush1.xpose.msra.mxu0 0.0
  %1361 = vmatprep.subr.mxu0 0.0
  %1362 = vmatpush1.xpose.msra.mxu0 0.0
  %1363 = vmatprep.subr.mxu0 0.0
  %1364 = vmatpush1.xpose.msra.mxu0 0.0
  %1365 = vmatprep.subr.mxu0 0.0
  %1366 = vmatpush1.xpose.msra.mxu0 0.0
  %1367 = vmatprep.subr.mxu0 0.0
  %1368 = vmatpush1.xpose.msra.mxu0 0.0
  %1369 = vmatprep.subr.mxu0 0.0
  %1370 = vmatpush1.xpose.msra.mxu0 0.0
  %1371 = vmatprep.subr.mxu0 0.0
  %1372 = vmatpush1.xpose.msra.mxu0 0.0
  %1373 = vmatprep.subr.mxu0 0.0
  %1374 = vmatpush1.xpose.msra.mxu0 0.0
  %1375 = vmatprep.subr.mxu0 0.0
  %1376 = vmatpush1.xpose.msra.mxu0 0.0
  %1377 = vmatprep.subr.mxu0 0.0
  %1378 = vmatpush1.xpose.msra.mxu0 0.0
  %1379 = vmatprep.subr.mxu0 0.0
  %1380 = vmatpush1.xpose.msra.mxu0 0.0
  %1381 = vmatprep.subr.mxu0 0.0
  %1382 = vmatpush1.xpose.msra.mxu0 0.0
  %1383 = vmatprep.subr.mxu0 0.0
  %1384 = vmatpush1.xpose.msra.mxu0 0.0
  %1385 = vmatprep.subr.mxu0 0.0
  %1386 = vmatpush1.xpose.msra.mxu0 0.0
  %1387 = vmatprep.subr.mxu0 0.0
  %1388 = vmatpush1.xpose.msra.mxu0 0.0
  %1389 = vmatprep.subr.mxu0 0.0
  %1390 = vmatpush1.xpose.msra.mxu0 0.0
  %1391 = vmatprep.subr.mxu0 0.0
  %1392 = vmatpush1.xpose.msra.mxu0 0.0
  %1393 = vmatprep.subr.mxu0 0.0
  %1394 = vmatpush1.xpose.msra.mxu0 0.0
  %1395 = vmatprep.subr.mxu0 0.0
  %1396 = vmatpush1.xpose.msra.mxu0 0.0
  %1397 = vmatprep.subr.mxu0 0.0
  %1398 = vmatpush1.xpose.msra.mxu0 0.0
  %1399 = vmatprep.subr.mxu0 0.0
  %1400 = vmatpush1.xpose.msra.mxu0 0.0
  %1401 = vmatprep.subr.mxu0 0.0
  %1402 = vmatpush1.xpose.msra.mxu0 0.0
  %1403 = vmatprep.mubr.f32.mxu0 0.0
  %1404 = vmatmul.mubr.f32.gmra.mrb[0].mxu0 %v1331
  %v1405 = vpop.f32.mrb[0].mxu0
  %v1406 = vadd.f32 0.0, %v1405
  %v1407 = vpop.f32.mrb[0].mxu0
  %1408 = vmatprep.mubr.f32.mxu0 0.0
  %1409 = vmatmul.mubr.f32.gmra.mrb[0].mxu0 %v1333
  %v1410 = vpop.f32.mrb[0].mxu0
  %v1411 = vadd.f32 0.0, %v1410
  %v1412 = vpop.f32.mrb[0].mxu0
  %1413 = vdwg.mxu0
  %1414 = vrot.lane.b32.xlu0 %v1030, 112
  %v1415 = vpop.permute.xlu0 %1414
  %1416 = vrot.lane.b32.xlu0 %v1053, 112
  %v1417 = vpop.permute.xlu0 %1416
  %1418 = vrot.lane.b32.xlu0 %v1030, 80
  %v1419 = vpop.permute.xlu0 %1418
  %1420 = vrot.lane.b32.xlu0 %v1053, 80
  %v1421 = vpop.permute.xlu0 %1420
  %v1422 = vsel %vm898, %v1415, 0
  %v1424 = vsel %vm898, %v1417, 0
  %v1426 = vsel %vm898, %v1419, 0
  %v1428 = vsel %vm898, %v1421, 0
  %1430 = vmatprep.subr.mxu0 0.0
  %1431 = vmatpush1.xpose.msra.mxu0 %v1426
  %1432 = vmatprep.subr.mxu0 0.0
  %1433 = vmatpush1.xpose.msra.mxu0 %v1428
  %1434 = vmatprep.subr.mxu0 0.0
  %1435 = vmatpush1.xpose.msra.mxu0 0.0
  %1436 = vmatprep.subr.mxu0 0.0
  %1437 = vmatpush1.xpose.msra.mxu0 0.0
  %1438 = vmatprep.subr.mxu0 0.0
  %1439 = vmatpush1.xpose.msra.mxu0 0.0
  %1440 = vmatprep.subr.mxu0 0.0
  %1441 = vmatpush1.xpose.msra.mxu0 0.0
  %1442 = vmatprep.subr.mxu0 0.0
  %1443 = vmatpush1.xpose.msra.mxu0 0.0
  %1444 = vmatprep.subr.mxu0 0.0
  %1445 = vmatpush1.xpose.msra.mxu0 0.0
  %1446 = vmatprep.subr.mxu0 0.0
  %1447 = vmatpush1.xpose.msra.mxu0 0.0
  %1448 = vmatprep.subr.mxu0 0.0
  %1449 = vmatpush1.xpose.msra.mxu0 0.0
  %1450 = vmatprep.subr.mxu0 0.0
  %1451 = vmatpush1.xpose.msra.mxu0 0.0
  %1452 = vmatprep.subr.mxu0 0.0
  %1453 = vmatpush1.xpose.msra.mxu0 0.0
  %1454 = vmatprep.subr.mxu0 0.0
  %1455 = vmatpush1.xpose.msra.mxu0 0.0
  %1456 = vmatprep.subr.mxu0 0.0
  %1457 = vmatpush1.xpose.msra.mxu0 0.0
  %1458 = vmatprep.subr.mxu0 0.0
  %1459 = vmatpush1.xpose.msra.mxu0 0.0
  %1460 = vmatprep.subr.mxu0 0.0
  %1461 = vmatpush1.xpose.msra.mxu0 0.0
  %1462 = vmatprep.subr.mxu0 0.0
  %1463 = vmatpush1.xpose.msra.mxu0 0.0
  %1464 = vmatprep.subr.mxu0 0.0
  %1465 = vmatpush1.xpose.msra.mxu0 0.0
  %1466 = vmatprep.subr.mxu0 0.0
  %1467 = vmatpush1.xpose.msra.mxu0 0.0
  %1468 = vmatprep.subr.mxu0 0.0
  %1469 = vmatpush1.xpose.msra.mxu0 0.0
  %1470 = vmatprep.subr.mxu0 0.0
  %1471 = vmatpush1.xpose.msra.mxu0 0.0
  %1472 = vmatprep.subr.mxu0 0.0
  %1473 = vmatpush1.xpose.msra.mxu0 0.0
  %1474 = vmatprep.subr.mxu0 0.0
  %1475 = vmatpush1.xpose.msra.mxu0 0.0
  %1476 = vmatprep.subr.mxu0 0.0
  %1477 = vmatpush1.xpose.msra.mxu0 0.0
  %1478 = vmatprep.subr.mxu0 0.0
  %1479 = vmatpush1.xpose.msra.mxu0 0.0
  %1480 = vmatprep.subr.mxu0 0.0
  %1481 = vmatpush1.xpose.msra.mxu0 0.0
  %1482 = vmatprep.subr.mxu0 0.0
  %1483 = vmatpush1.xpose.msra.mxu0 0.0
  %1484 = vmatprep.subr.mxu0 0.0
  %1485 = vmatpush1.xpose.msra.mxu0 0.0
  %1486 = vmatprep.subr.mxu0 0.0
  %1487 = vmatpush1.xpose.msra.mxu0 0.0
  %1488 = vmatprep.subr.mxu0 0.0
  %1489 = vmatpush1.xpose.msra.mxu0 0.0
  %1490 = vmatprep.subr.mxu0 0.0
  %1491 = vmatpush1.xpose.msra.mxu0 0.0
  %1492 = vmatprep.subr.mxu0 0.0
  %1493 = vmatpush1.xpose.msra.mxu0 0.0
  %1494 = vmatprep.mubr.f32.mxu0 0.0
  %1495 = vmatmul.mubr.f32.gmra.mrb[0].mxu0 %v1422
  %v1496 = vpop.f32.mrb[0].mxu0
  %v1497 = vadd.f32 0.0, %v1496
  %v1498 = vpop.f32.mrb[0].mxu0
  %1499 = vmatprep.mubr.f32.mxu0 0.0
  %1500 = vmatmul.mubr.f32.gmra.mrb[0].mxu0 %v1424
  %v1501 = vpop.f32.mrb[0].mxu0
  %v1502 = vadd.f32 0.0, %v1501
  %v1503 = vpop.f32.mrb[0].mxu0
  %1504 = vdwg.mxu0
  %1505 = vrot.lane.b32.xlu0 %v870, 104
  %v1506 = vpop.permute.xlu0 %1505
  %1507 = vrot.lane.b32.xlu0 %v893, 104
  %v1508 = vpop.permute.xlu0 %1507
  %1509 = vrot.lane.b32.xlu0 %v870, 72
  %v1510 = vpop.permute.xlu0 %1509
  %1511 = vrot.lane.b32.xlu0 %v893, 72
  %v1512 = vpop.permute.xlu0 %1511
  %v1513 = vsel %vm898, %v1506, 0
  %v1515 = vsel %vm898, %v1508, 0
  %v1517 = vsel %vm898, %v1510, 0
  %v1519 = vsel %vm898, %v1512, 0
  %1521 = vmatprep.subr.mxu0 0.0
  %1522 = vmatpush1.xpose.msra.mxu0 %v1517
  %1523 = vmatprep.subr.mxu0 0.0
  %1524 = vmatpush1.xpose.msra.mxu0 %v1519
  %1525 = vmatprep.subr.mxu0 0.0
  %1526 = vmatpush1.xpose.msra.mxu0 0.0
  %1527 = vmatprep.subr.mxu0 0.0
  %1528 = vmatpush1.xpose.msra.mxu0 0.0
  %1529 = vmatprep.subr.mxu0 0.0
  %1530 = vmatpush1.xpose.msra.mxu0 0.0
  %1531 = vmatprep.subr.mxu0 0.0
  %1532 = vmatpush1.xpose.msra.mxu0 0.0
  %1533 = vmatprep.subr.mxu0 0.0
  %1534 = vmatpush1.xpose.msra.mxu0 0.0
  %1535 = vmatprep.subr.mxu0 0.0
  %1536 = vmatpush1.xpose.msra.mxu0 0.0
  %1537 = vmatprep.subr.mxu0 0.0
  %1538 = vmatpush1.xpose.msra.mxu0 0.0
  %1539 = vmatprep.subr.mxu0 0.0
  %1540 = vmatpush1.xpose.msra.mxu0 0.0
  %1541 = vmatprep.subr.mxu0 0.0
  %1542 = vmatpush1.xpose.msra.mxu0 0.0
  %1543 = vmatprep.subr.mxu0 0.0
  %1544 = vmatpush1.xpose.msra.mxu0 0.0
  %1545 = vmatprep.subr.mxu0 0.0
  %1546 = vmatpush1.xpose.msra.mxu0 0.0
  %1547 = vmatprep.subr.mxu0 0.0
  %1548 = vmatpush1.xpose.msra.mxu0 0.0
  %1549 = vmatprep.subr.mxu0 0.0
  %1550 = vmatpush1.xpose.msra.mxu0 0.0
  %1551 = vmatprep.subr.mxu0 0.0
  %1552 = vmatpush1.xpose.msra.mxu0 0.0
  %1553 = vmatprep.subr.mxu0 0.0
  %1554 = vmatpush1.xpose.msra.mxu0 0.0
  %1555 = vmatprep.subr.mxu0 0.0
  %1556 = vmatpush1.xpose.msra.mxu0 0.0
  %1557 = vmatprep.subr.mxu0 0.0
  %1558 = vmatpush1.xpose.msra.mxu0 0.0
  %1559 = vmatprep.subr.mxu0 0.0
  %1560 = vmatpush1.xpose.msra.mxu0 0.0
  %1561 = vmatprep.subr.mxu0 0.0
  %1562 = vmatpush1.xpose.msra.mxu0 0.0
  %1563 = vmatprep.subr.mxu0 0.0
  %1564 = vmatpush1.xpose.msra.mxu0 0.0
  %1565 = vmatprep.subr.mxu0 0.0
  %1566 = vmatpush1.xpose.msra.mxu0 0.0
  %1567 = vmatprep.subr.mxu0 0.0
  %1568 = vmatpush1.xpose.msra.mxu0 0.0
  %1569 = vmatprep.subr.mxu0 0.0
  %1570 = vmatpush1.xpose.msra.mxu0 0.0
  %1571 = vmatprep.subr.mxu0 0.0
  %1572 = vmatpush1.xpose.msra.mxu0 0.0
  %1573 = vmatprep.subr.mxu0 0.0
  %1574 = vmatpush1.xpose.msra.mxu0 0.0
  %1575 = vmatprep.subr.mxu0 0.0
  %1576 = vmatpush1.xpose.msra.mxu0 0.0
  %1577 = vmatprep.subr.mxu0 0.0
  %1578 = vmatpush1.xpose.msra.mxu0 0.0
  %1579 = vmatprep.subr.mxu0 0.0
  %1580 = vmatpush1.xpose.msra.mxu0 0.0
  %1581 = vmatprep.subr.mxu0 0.0
  %1582 = vmatpush1.xpose.msra.mxu0 0.0
  %1583 = vmatprep.subr.mxu0 0.0
  %1584 = vmatpush1.xpose.msra.mxu0 0.0
  %1585 = vmatprep.mubr.f32.mxu0 0.0
  %1586 = vmatmul.mubr.f32.gmra.mrb[0].mxu0 %v1513
  %v1587 = vpop.f32.mrb[0].mxu0
  %v1588 = vadd.f32 0.0, %v1587
  %v1589 = vpop.f32.mrb[0].mxu0
  %1590 = vmatprep.mubr.f32.mxu0 0.0
  %1591 = vmatmul.mubr.f32.gmra.mrb[0].mxu0 %v1515
  %v1592 = vpop.f32.mrb[0].mxu0
  %v1593 = vadd.f32 0.0, %v1592
  %v1594 = vpop.f32.mrb[0].mxu0
  %1595 = vdwg.mxu0
  %1596 = vrot.lane.b32.xlu0 %v1030, 104
  %v1597 = vpop.permute.xlu0 %1596
  %1598 = vrot.lane.b32.xlu0 %v1053, 104
  %v1599 = vpop.permute.xlu0 %1598
  %1600 = vrot.lane.b32.xlu0 %v1030, 72
  %v1601 = vpop.permute.xlu0 %1600
  %1602 = vrot.lane.b32.xlu0 %v1053, 72
  %v1603 = vpop.permute.xlu0 %1602
  %v1604 = vsel %vm898, %v1597, 0
  %v1606 = vsel %vm898, %v1599, 0
  %v1608 = vsel %vm898, %v1601, 0
  %v1610 = vsel %vm898, %v1603, 0
  %1612 = vmatprep.subr.mxu0 0.0
  %1613 = vmatpush1.xpose.msra.mxu0 %v1608
  %1614 = vmatprep.subr.mxu0 0.0
  %1615 = vmatpush1.xpose.msra.mxu0 %v1610
  %1616 = vmatprep.subr.mxu0 0.0
  %1617 = vmatpush1.xpose.msra.mxu0 0.0
  %1618 = vmatprep.subr.mxu0 0.0
  %1619 = vmatpush1.xpose.msra.mxu0 0.0
  %1620 = vmatprep.subr.mxu0 0.0
  %1621 = vmatpush1.xpose.msra.mxu0 0.0
  %1622 = vmatprep.subr.mxu0 0.0
  %1623 = vmatpush1.xpose.msra.mxu0 0.0
  %1624 = vmatprep.subr.mxu0 0.0
  %1625 = vmatpush1.xpose.msra.mxu0 0.0
  %1626 = vmatprep.subr.mxu0 0.0
  %1627 = vmatpush1.xpose.msra.mxu0 0.0
  %1628 = vmatprep.subr.mxu0 0.0
  %1629 = vmatpush1.xpose.msra.mxu0 0.0
  %1630 = vmatprep.subr.mxu0 0.0
  %1631 = vmatpush1.xpose.msra.mxu0 0.0
  %1632 = vmatprep.subr.mxu0 0.0
  %1633 = vmatpush1.xpose.msra.mxu0 0.0
  %1634 = vmatprep.subr.mxu0 0.0
  %1635 = vmatpush1.xpose.msra.mxu0 0.0
  %1636 = vmatprep.subr.mxu0 0.0
  %1637 = vmatpush1.xpose.msra.mxu0 0.0
  %1638 = vmatprep.subr.mxu0 0.0
  %1639 = vmatpush1.xpose.msra.mxu0 0.0
  %1640 = vmatprep.subr.mxu0 0.0
  %1641 = vmatpush1.xpose.msra.mxu0 0.0
  %1642 = vmatprep.subr.mxu0 0.0
  %1643 = vmatpush1.xpose.msra.mxu0 0.0
  %1644 = vmatprep.subr.mxu0 0.0
  %1645 = vmatpush1.xpose.msra.mxu0 0.0
  %1646 = vmatprep.subr.mxu0 0.0
  %1647 = vmatpush1.xpose.msra.mxu0 0.0
  %1648 = vmatprep.subr.mxu0 0.0
  %1649 = vmatpush1.xpose.msra.mxu0 0.0
  %1650 = vmatprep.subr.mxu0 0.0
  %1651 = vmatpush1.xpose.msra.mxu0 0.0
  %1652 = vmatprep.subr.mxu0 0.0
  %1653 = vmatpush1.xpose.msra.mxu0 0.0
  %1654 = vmatprep.subr.mxu0 0.0
  %1655 = vmatpush1.xpose.msra.mxu0 0.0
  %1656 = vmatprep.subr.mxu0 0.0
  %1657 = vmatpush1.xpose.msra.mxu0 0.0
  %1658 = vmatprep.subr.mxu0 0.0
  %1659 = vmatpush1.xpose.msra.mxu0 0.0
  %1660 = vmatprep.subr.mxu0 0.0
  %1661 = vmatpush1.xpose.msra.mxu0 0.0
  %1662 = vmatprep.subr.mxu0 0.0
  %1663 = vmatpush1.xpose.msra.mxu0 0.0
  %1664 = vmatprep.subr.mxu0 0.0
  %1665 = vmatpush1.xpose.msra.mxu0 0.0
  %1666 = vmatprep.subr.mxu0 0.0
  %1667 = vmatpush1.xpose.msra.mxu0 0.0
  %1668 = vmatprep.subr.mxu0 0.0
  %1669 = vmatpush1.xpose.msra.mxu0 0.0
  %1670 = vmatprep.subr.mxu0 0.0
  %1671 = vmatpush1.xpose.msra.mxu0 0.0
  %1672 = vmatprep.subr.mxu0 0.0
  %1673 = vmatpush1.xpose.msra.mxu0 0.0
  %1674 = vmatprep.subr.mxu0 0.0
  %1675 = vmatpush1.xpose.msra.mxu0 0.0
  %1676 = vmatprep.mubr.f32.mxu0 0.0
  %1677 = vmatmul.mubr.f32.gmra.mrb[0].mxu0 %v1604
  %v1678 = vpop.f32.mrb[0].mxu0
  %v1679 = vadd.f32 0.0, %v1678
  %v1680 = vpop.f32.mrb[0].mxu0
  %1681 = vmatprep.mubr.f32.mxu0 0.0
  %1682 = vmatmul.mubr.f32.gmra.mrb[0].mxu0 %v1606
  %v1683 = vpop.f32.mrb[0].mxu0
  %v1684 = vadd.f32 0.0, %v1683
  %v1685 = vpop.f32.mrb[0].mxu0
  %1686 = vdwg.mxu0
  %v1687 = vmul.f32 %v974, 0.35355338
  %v1688 = vmul.f32 %v979, 0.35355338
  %v1689 = vmul.f32 %v1224, 0.35355338
  %v1690 = vmul.f32 %v1229, 0.35355338
  %v1691 = vmul.f32 %v1406, 0.35355338
  %v1692 = vmul.f32 %v1411, 0.35355338
  %v1693 = vmul.f32 %v1588, 0.35355338
  %v1694 = vmul.f32 %v1593, 0.35355338
  %v1695 = vmul.f32 %v1133, 0.35355338
  %v1696 = vmul.f32 %v1138, 0.35355338
  %v1697 = vmul.f32 %v1315, 0.35355338
  %v1698 = vmul.f32 %v1320, 0.35355338
  %v1699 = vmul.f32 %v1497, 0.35355338
  %v1700 = vmul.f32 %v1502, 0.35355338
  %v1701 = vmul.f32 %v1679, 0.35355338
  %v1702 = vmul.f32 %v1684, 0.35355338
  %vm1703 = vcmask 89088
  %v1704 = vsel %vm1703, %v1687, -inf
  %1705 = vmax.xlane.f32.xlu0 %v1704
  %v1706 = vpop.xlane.xlu0 %1705
  %vm1707 = vcmask 83968
  %v1708 = vsel %vm1707, %v1688, -inf
  %1709 = vmax.xlane.f32.xlu0 %v1708
  %v1710 = vpop.xlane.xlu0 %1709
  %v1711 = vsel %vm1703, %v1689, -inf
  %1712 = vmax.xlane.f32.xlu0 %v1711
  %v1713 = vpop.xlane.xlu0 %1712
  %v1714 = vsel %vm1707, %v1690, -inf
  %1715 = vmax.xlane.f32.xlu0 %v1714
  %v1716 = vpop.xlane.xlu0 %1715
  %v1717 = vsel %vm1703, %v1691, -inf
  %1718 = vmax.xlane.f32.xlu0 %v1717
  %v1719 = vpop.xlane.xlu0 %1718
  %v1720 = vsel %vm1707, %v1692, -inf
  %1721 = vmax.xlane.f32.xlu0 %v1720
  %v1722 = vpop.xlane.xlu0 %1721
  %v1723 = vsel %vm1703, %v1693, -inf
  %1724 = vmax.xlane.f32.xlu0 %v1723
  %v1725 = vpop.xlane.xlu0 %1724
  %v1726 = vsel %vm1707, %v1694, -inf
  %1727 = vmax.xlane.f32.xlu0 %v1726
  %v1728 = vpop.xlane.xlu0 %1727
  %v1729 = vsel %vm1703, %v1695, -inf
  %1730 = vmax.xlane.f32.xlu0 %v1729
  %v1731 = vpop.xlane.xlu0 %1730
  %v1732 = vsel %vm1707, %v1696, -inf
  %1733 = vmax.xlane.f32.xlu0 %v1732
  %v1734 = vpop.xlane.xlu0 %1733
  %v1735 = vsel %vm1703, %v1697, -inf
  %1736 = vmax.xlane.f32.xlu0 %v1735
  %v1737 = vpop.xlane.xlu0 %1736
  %v1738 = vsel %vm1707, %v1698, -inf
  %1739 = vmax.xlane.f32.xlu0 %v1738
  %v1740 = vpop.xlane.xlu0 %1739
  %v1741 = vsel %vm1703, %v1699, -inf
  %1742 = vmax.xlane.f32.xlu0 %v1741
  %v1743 = vpop.xlane.xlu0 %1742
  %v1744 = vsel %vm1707, %v1700, -inf
  %1745 = vmax.xlane.f32.xlu0 %v1744
  %v1746 = vpop.xlane.xlu0 %1745
  %v1747 = vsel %vm1703, %v1701, -inf
  %1748 = vmax.xlane.f32.xlu0 %v1747
  %v1749 = vpop.xlane.xlu0 %1748
  %v1750 = vsel %vm1707, %v1702, -inf
  %1751 = vmax.xlane.f32.xlu0 %v1750
  %v1752 = vpop.xlane.xlu0 %1751
  %v1753 = vsub.f32 %v1687, %v1706
  %v1754 = vsub.f32 %v1688, %v1710
  %v1755 = vsub.f32 %v1689, %v1713
  %v1756 = vsub.f32 %v1690, %v1716
  %v1757 = vsub.f32 %v1691, %v1719
  %v1758 = vsub.f32 %v1692, %v1722
  %v1759 = vsub.f32 %v1693, %v1725
  %v1760 = vsub.f32 %v1694, %v1728
  %v1761 = vsub.f32 %v1695, %v1731
  %v1762 = vsub.f32 %v1696, %v1734
  %v1763 = vsub.f32 %v1697, %v1737
  %v1764 = vsub.f32 %v1698, %v1740
  %v1765 = vsub.f32 %v1699, %v1743
  %v1766 = vsub.f32 %v1700, %v1746
  %v1767 = vsub.f32 %v1701, %v1749
  %v1768 = vsub.f32 %v1702, %v1752
  %v1769 = vmul.f32 %v1753, 1.442695
  %v1770 = vpow.pop %v1769
  %v1771 = vmul.f32 %v1754, 1.442695
  %v1772 = vpow.pop %v1771
  %v1773 = vmul.f32 %v1755, 1.442695
  %v1774 = vpow.pop %v1773
  %v1775 = vmul.f32 %v1756, 1.442695
  %v1776 = vpow.pop %v1775
  %v1777 = vmul.f32 %v1757, 1.442695
  %v1778 = vpow.pop %v1777
  %v1779 = vmul.f32 %v1758, 1.442695
  %v1780 = vpow.pop %v1779
  %v1781 = vmul.f32 %v1759, 1.442695
  %v1782 = vpow.pop %v1781
  %v1783 = vmul.f32 %v1760, 1.442695
  %v1784 = vpow.pop %v1783
  %v1785 = vmul.f32 %v1761, 1.442695
  %v1786 = vpow.pop %v1785
  %v1787 = vmul.f32 %v1762, 1.442695
  %v1788 = vpow.pop %v1787
  %v1789 = vmul.f32 %v1763, 1.442695
  %v1790 = vpow.pop %v1789
  %v1791 = vmul.f32 %v1764, 1.442695
  %v1792 = vpow.pop %v1791
  %v1793 = vmul.f32 %v1765, 1.442695
  %v1794 = vpow.pop %v1793
  %v1795 = vmul.f32 %v1766, 1.442695
  %v1796 = vpow.pop %v1795
  %v1797 = vmul.f32 %v1767, 1.442695
  %v1798 = vpow.pop %v1797
  %v1799 = vmul.f32 %v1768, 1.442695
  %v1800 = vpow.pop %v1799
  %v1801 = vsel %vm1703, %v1770, 0.0
  %1802 = vadd.xlane.f32.xlu0 %v1801
  %v1803 = vpop.xlane.xlu0 %1802
  %v1804 = vsel %vm1707, %v1772, 0.0
  %1805 = vadd.xlane.f32.xlu0 %v1804
  %v1806 = vpop.xlane.xlu0 %1805
  %v1807 = vsel %vm1703, %v1774, 0.0
  %1808 = vadd.xlane.f32.xlu0 %v1807
  %v1809 = vpop.xlane.xlu0 %1808
  %v1810 = vsel %vm1707, %v1776, 0.0
  %1811 = vadd.xlane.f32.xlu0 %v1810
  %v1812 = vpop.xlane.xlu0 %1811
  %v1813 = vsel %vm1703, %v1778, 0.0
  %1814 = vadd.xlane.f32.xlu0 %v1813
  %v1815 = vpop.xlane.xlu0 %1814
  %v1816 = vsel %vm1707, %v1780, 0.0
  %1817 = vadd.xlane.f32.xlu0 %v1816
  %v1818 = vpop.xlane.xlu0 %1817
  %v1819 = vsel %vm1703, %v1782, 0.0
  %1820 = vadd.xlane.f32.xlu0 %v1819
  %v1821 = vpop.xlane.xlu0 %1820
  %v1822 = vsel %vm1707, %v1784, 0.0
  %1823 = vadd.xlane.f32.xlu0 %v1822
  %v1824 = vpop.xlane.xlu0 %1823
  %v1825 = vsel %vm1703, %v1786, 0.0
  %1826 = vadd.xlane.f32.xlu0 %v1825
  %v1827 = vpop.xlane.xlu0 %1826
  %v1828 = vsel %vm1707, %v1788, 0.0
  %1829 = vadd.xlane.f32.xlu0 %v1828
  %v1830 = vpop.xlane.xlu0 %1829
  %v1831 = vsel %vm1703, %v1790, 0.0
  %1832 = vadd.xlane.f32.xlu0 %v1831
  %v1833 = vpop.xlane.xlu0 %1832
  %v1834 = vsel %vm1707, %v1792, 0.0
  %1835 = vadd.xlane.f32.xlu0 %v1834
  %v1836 = vpop.xlane.xlu0 %1835
  %v1837 = vsel %vm1703, %v1794, 0.0
  %1838 = vadd.xlane.f32.xlu0 %v1837
  %v1839 = vpop.xlane.xlu0 %1838
  %v1840 = vsel %vm1707, %v1796, 0.0
  %1841 = vadd.xlane.f32.xlu0 %v1840
  %v1842 = vpop.xlane.xlu0 %1841
  %v1843 = vsel %vm1703, %v1798, 0.0
  %1844 = vadd.xlane.f32.xlu0 %v1843
  %v1845 = vpop.xlane.xlu0 %1844
  %v1846 = vsel %vm1707, %v1800, 0.0
  %1847 = vadd.xlane.f32.xlu0 %v1846
  %v1848 = vpop.xlane.xlu0 %1847
  %v1849 = vrcp.pop %v1803
  %v1850 = vrcp.pop %v1806
  %v1851 = vrcp.pop %v1809
  %v1852 = vrcp.pop %v1812
  %v1853 = vrcp.pop %v1815
  %v1854 = vrcp.pop %v1818
  %v1855 = vrcp.pop %v1821
  %v1856 = vrcp.pop %v1824
  %v1857 = vrcp.pop %v1827
  %v1858 = vrcp.pop %v1830
  %v1859 = vrcp.pop %v1833
  %v1860 = vrcp.pop %v1836
  %v1861 = vrcp.pop %v1839
  %v1862 = vrcp.pop %v1842
  %v1863 = vrcp.pop %v1845
  %v1864 = vrcp.pop %v1848
  %v1865 = vmul.f32 %v1770, %v1849
  %v1866 = vmul.f32 %v1772, %v1850
  %v1867 = vmul.f32 %v1774, %v1851
  %v1868 = vmul.f32 %v1776, %v1852
  %v1869 = vmul.f32 %v1778, %v1853
  %v1870 = vmul.f32 %v1780, %v1854
  %v1871 = vmul.f32 %v1782, %v1855
  %v1872 = vmul.f32 %v1784, %v1856
  %v1873 = vmul.f32 %v1786, %v1857
  %v1874 = vmul.f32 %v1788, %v1858
  %v1875 = vmul.f32 %v1790, %v1859
  %v1876 = vmul.f32 %v1792, %v1860
  %v1877 = vmul.f32 %v1794, %v1861
  %v1878 = vmul.f32 %v1796, %v1862
  %v1879 = vmul.f32 %v1798, %v1863
  %v1880 = vmul.f32 %v1800, %v1864
  %1881 = vrot.lane.b32.xlu0 %v870, 64
  %v1882 = vpop.permute.xlu0 %1881
  %1883 = vrot.lane.b32.xlu0 %v893, 64
  %v1884 = vpop.permute.xlu0 %1883
  %v1887 = vsel %vm1703, %v1865, 0
  %v1890 = vsel %vm1703, %v1866, 0
  %vm1892 = vcmask 1042432
  %v1893 = vsel %vm1892, %v1884, 0
  %1895 = vmatprep.subr.mxu0 0.0
  %1896 = vmatpush1.msra.mxu0 %v1882
  %1897 = vmatprep.subr.mxu0 0.0
  %1898 = vmatpush1.msra.mxu0 %v1893
  %1899 = vmatprep.subr.mxu0 0.0
  %1900 = vmatpush1.msra.mxu0 0.0
  %1901 = vmatprep.subr.mxu0 0.0
  %1902 = vmatpush1.msra.mxu0 0.0
  %1903 = vmatprep.subr.mxu0 0.0
  %1904 = vmatpush1.msra.mxu0 0.0
  %1905 = vmatprep.subr.mxu0 0.0
  %1906 = vmatpush1.msra.mxu0 0.0
  %1907 = vmatprep.subr.mxu0 0.0
  %1908 = vmatpush1.msra.mxu0 0.0
  %1909 = vmatprep.subr.mxu0 0.0
  %1910 = vmatpush1.msra.mxu0 0.0
  %1911 = vmatprep.subr.mxu0 0.0
  %1912 = vmatpush1.msra.mxu0 0.0
  %1913 = vmatprep.subr.mxu0 0.0
  %1914 = vmatpush1.msra.mxu0 0.0
  %1915 = vmatprep.subr.mxu0 0.0
  %1916 = vmatpush1.msra.mxu0 0.0
  %1917 = vmatprep.subr.mxu0 0.0
  %1918 = vmatpush1.msra.mxu0 0.0
  %1919 = vmatprep.subr.mxu0 0.0
  %1920 = vmatpush1.msra.mxu0 0.0
  %1921 = vmatprep.subr.mxu0 0.0
  %1922 = vmatpush1.msra.mxu0 0.0
  %1923 = vmatprep.subr.mxu0 0.0
  %1924 = vmatpush1.msra.mxu0 0.0
  %1925 = vmatprep.subr.mxu0 0.0
  %1926 = vmatpush1.msra.mxu0 0.0
  %1927 = vmatprep.subr.mxu0 0.0
  %1928 = vmatpush1.msra.mxu0 0.0
  %1929 = vmatprep.subr.mxu0 0.0
  %1930 = vmatpush1.msra.mxu0 0.0
  %1931 = vmatprep.subr.mxu0 0.0
  %1932 = vmatpush1.msra.mxu0 0.0
  %1933 = vmatprep.subr.mxu0 0.0
  %1934 = vmatpush1.msra.mxu0 0.0
  %1935 = vmatprep.subr.mxu0 0.0
  %1936 = vmatpush1.msra.mxu0 0.0
  %1937 = vmatprep.subr.mxu0 0.0
  %1938 = vmatpush1.msra.mxu0 0.0
  %1939 = vmatprep.subr.mxu0 0.0
  %1940 = vmatpush1.msra.mxu0 0.0
  %1941 = vmatprep.subr.mxu0 0.0
  %1942 = vmatpush1.msra.mxu0 0.0
  %1943 = vmatprep.subr.mxu0 0.0
  %1944 = vmatpush1.msra.mxu0 0.0
  %1945 = vmatprep.subr.mxu0 0.0
  %1946 = vmatpush1.msra.mxu0 0.0
  %1947 = vmatprep.subr.mxu0 0.0
  %1948 = vmatpush1.msra.mxu0 0.0
  %1949 = vmatprep.subr.mxu0 0.0
  %1950 = vmatpush1.msra.mxu0 0.0
  %1951 = vmatprep.subr.mxu0 0.0
  %1952 = vmatpush1.msra.mxu0 0.0
  %1953 = vmatprep.subr.mxu0 0.0
  %1954 = vmatpush1.msra.mxu0 0.0
  %1955 = vmatprep.subr.mxu0 0.0
  %1956 = vmatpush1.msra.mxu0 0.0
  %1957 = vmatprep.subr.mxu0 0.0
  %1958 = vmatpush1.msra.mxu0 0.0
  %1959 = vmatprep.mubr.f32.mxu0 0.0
  %1960 = vmatmul.mubr.f32.gmra.mrb[0].mxu0 %v1887
  %v1961 = vpop.f32.mrb[0].mxu0
  %v1962 = vadd.f32 0.0, %v1961
  %v1963 = vpop.f32.mrb[0].mxu0
  %1964 = vmatprep.mubr.f32.mxu0 0.0
  %1965 = vmatmul.mubr.f32.gmra.mrb[0].mxu0 %v1890
  %v1966 = vpop.f32.mrb[0].mxu0
  %v1967 = vadd.f32 0.0, %v1966
  %v1968 = vpop.f32.mrb[0].mxu0
  %1969 = vdwg.mxu0
  %1970 = vrot.lane.b32.xlu0 %v1030, 64
  %v1971 = vpop.permute.xlu0 %1970
  %1972 = vrot.lane.b32.xlu0 %v1053, 64
  %v1973 = vpop.permute.xlu0 %1972
  %v1976 = vsel %vm1703, %v1873, 0
  %v1979 = vsel %vm1703, %v1874, 0
  %v1981 = vsel %vm1892, %v1973, 0
  %1983 = vmatprep.subr.mxu0 0.0
  %1984 = vmatpush1.msra.mxu0 %v1971
  %1985 = vmatprep.subr.mxu0 0.0
  %1986 = vmatpush1.msra.mxu0 %v1981
  %1987 = vmatprep.subr.mxu0 0.0
  %1988 = vmatpush1.msra.mxu0 0.0
  %1989 = vmatprep.subr.mxu0 0.0
  %1990 = vmatpush1.msra.mxu0 0.0
  %1991 = vmatprep.subr.mxu0 0.0
  %1992 = vmatpush1.msra.mxu0 0.0
  %1993 = vmatprep.subr.mxu0 0.0
  %1994 = vmatpush1.msra.mxu0 0.0
  %1995 = vmatprep.subr.mxu0 0.0
  %1996 = vmatpush1.msra.mxu0 0.0
  %1997 = vmatprep.subr.mxu0 0.0
  %1998 = vmatpush1.msra.mxu0 0.0
  %1999 = vmatprep.subr.mxu0 0.0
  %2000 = vmatpush1.msra.mxu0 0.0
  %2001 = vmatprep.subr.mxu0 0.0
  %2002 = vmatpush1.msra.mxu0 0.0
  %2003 = vmatprep.subr.mxu0 0.0
  %2004 = vmatpush1.msra.mxu0 0.0
  %2005 = vmatprep.subr.mxu0 0.0
  %2006 = vmatpush1.msra.mxu0 0.0
  %2007 = vmatprep.subr.mxu0 0.0
  %2008 = vmatpush1.msra.mxu0 0.0
  %2009 = vmatprep.subr.mxu0 0.0
  %2010 = vmatpush1.msra.mxu0 0.0
  %2011 = vmatprep.subr.mxu0 0.0
  %2012 = vmatpush1.msra.mxu0 0.0
  %2013 = vmatprep.subr.mxu0 0.0
  %2014 = vmatpush1.msra.mxu0 0.0
  %2015 = vmatprep.subr.mxu0 0.0
  %2016 = vmatpush1.msra.mxu0 0.0
  %2017 = vmatprep.subr.mxu0 0.0
  %2018 = vmatpush1.msra.mxu0 0.0
  %2019 = vmatprep.subr.mxu0 0.0
  %2020 = vmatpush1.msra.mxu0 0.0
  %2021 = vmatprep.subr.mxu0 0.0
  %2022 = vmatpush1.msra.mxu0 0.0
  %2023 = vmatprep.subr.mxu0 0.0
  %2024 = vmatpush1.msra.mxu0 0.0
  %2025 = vmatprep.subr.mxu0 0.0
  %2026 = vmatpush1.msra.mxu0 0.0
  %2027 = vmatprep.subr.mxu0 0.0
  %2028 = vmatpush1.msra.mxu0 0.0
  %2029 = vmatprep.subr.mxu0 0.0
  %2030 = vmatpush1.msra.mxu0 0.0
  %2031 = vmatprep.subr.mxu0 0.0
  %2032 = vmatpush1.msra.mxu0 0.0
  %2033 = vmatprep.subr.mxu0 0.0
  %2034 = vmatpush1.msra.mxu0 0.0
  %2035 = vmatprep.subr.mxu0 0.0
  %2036 = vmatpush1.msra.mxu0 0.0
  %2037 = vmatprep.subr.mxu0 0.0
  %2038 = vmatpush1.msra.mxu0 0.0
  %2039 = vmatprep.subr.mxu0 0.0
  %2040 = vmatpush1.msra.mxu0 0.0
  %2041 = vmatprep.subr.mxu0 0.0
  %2042 = vmatpush1.msra.mxu0 0.0
  %2043 = vmatprep.subr.mxu0 0.0
  %2044 = vmatpush1.msra.mxu0 0.0
  %2045 = vmatprep.subr.mxu0 0.0
  %2046 = vmatpush1.msra.mxu0 0.0
  %2047 = vmatprep.mubr.f32.mxu0 0.0
  %2048 = vmatmul.mubr.f32.gmra.mrb[0].mxu0 %v1976
  %v2049 = vpop.f32.mrb[0].mxu0
  %v2050 = vadd.f32 0.0, %v2049
  %v2051 = vpop.f32.mrb[0].mxu0
  %2052 = vmatprep.mubr.f32.mxu0 0.0
  %2053 = vmatmul.mubr.f32.gmra.mrb[0].mxu0 %v1979
  %v2054 = vpop.f32.mrb[0].mxu0
  %v2055 = vadd.f32 0.0, %v2054
  %v2056 = vpop.f32.mrb[0].mxu0
  %2057 = vdwg.mxu0
  %2058 = vrot.lane.b32.xlu0 %v870, 56
  %v2059 = vpop.permute.xlu0 %2058
  %2060 = vrot.lane.b32.xlu0 %v893, 56
  %v2061 = vpop.permute.xlu0 %2060
  %v2064 = vsel %vm1703, %v1867, 0
  %v2067 = vsel %vm1703, %v1868, 0
  %v2069 = vsel %vm1892, %v2061, 0
  %2071 = vmatprep.subr.mxu0 0.0
  %2072 = vmatpush1.msra.mxu0 %v2059
  %2073 = vmatprep.subr.mxu0 0.0
  %2074 = vmatpush1.msra.mxu0 %v2069
  %2075 = vmatprep.subr.mxu0 0.0
  %2076 = vmatpush1.msra.mxu0 0.0
  %2077 = vmatprep.subr.mxu0 0.0
  %2078 = vmatpush1.msra.mxu0 0.0
  %2079 = vmatprep.subr.mxu0 0.0
  %2080 = vmatpush1.msra.mxu0 0.0
  %2081 = vmatprep.subr.mxu0 0.0
  %2082 = vmatpush1.msra.mxu0 0.0
  %2083 = vmatprep.subr.mxu0 0.0
  %2084 = vmatpush1.msra.mxu0 0.0
  %2085 = vmatprep.subr.mxu0 0.0
  %2086 = vmatpush1.msra.mxu0 0.0
  %2087 = vmatprep.subr.mxu0 0.0
  %2088 = vmatpush1.msra.mxu0 0.0
  %2089 = vmatprep.subr.mxu0 0.0
  %2090 = vmatpush1.msra.mxu0 0.0
  %2091 = vmatprep.subr.mxu0 0.0
  %2092 = vmatpush1.msra.mxu0 0.0
  %2093 = vmatprep.subr.mxu0 0.0
  %2094 = vmatpush1.msra.mxu0 0.0
  %2095 = vmatprep.subr.mxu0 0.0
  %2096 = vmatpush1.msra.mxu0 0.0
  %2097 = vmatprep.subr.mxu0 0.0
  %2098 = vmatpush1.msra.mxu0 0.0
  %2099 = vmatprep.subr.mxu0 0.0
  %2100 = vmatpush1.msra.mxu0 0.0
  %2101 = vmatprep.subr.mxu0 0.0
  %2102 = vmatpush1.msra.mxu0 0.0
  %2103 = vmatprep.subr.mxu0 0.0
  %2104 = vmatpush1.msra.mxu0 0.0
  %2105 = vmatprep.subr.mxu0 0.0
  %2106 = vmatpush1.msra.mxu0 0.0
  %2107 = vmatprep.subr.mxu0 0.0
  %2108 = vmatpush1.msra.mxu0 0.0
  %2109 = vmatprep.subr.mxu0 0.0
  %2110 = vmatpush1.msra.mxu0 0.0
  %2111 = vmatprep.subr.mxu0 0.0
  %2112 = vmatpush1.msra.mxu0 0.0
  %2113 = vmatprep.subr.mxu0 0.0
  %2114 = vmatpush1.msra.mxu0 0.0
  %2115 = vmatprep.subr.mxu0 0.0
  %2116 = vmatpush1.msra.mxu0 0.0
  %2117 = vmatprep.subr.mxu0 0.0
  %2118 = vmatpush1.msra.mxu0 0.0
  %2119 = vmatprep.subr.mxu0 0.0
  %2120 = vmatpush1.msra.mxu0 0.0
  %2121 = vmatprep.subr.mxu0 0.0
  %2122 = vmatpush1.msra.mxu0 0.0
  %2123 = vmatprep.subr.mxu0 0.0
  %2124 = vmatpush1.msra.mxu0 0.0
  %2125 = vmatprep.subr.mxu0 0.0
  %2126 = vmatpush1.msra.mxu0 0.0
  %2127 = vmatprep.subr.mxu0 0.0
  %2128 = vmatpush1.msra.mxu0 0.0
  %2129 = vmatprep.subr.mxu0 0.0
  %2130 = vmatpush1.msra.mxu0 0.0
  %2131 = vmatprep.subr.mxu0 0.0
  %2132 = vmatpush1.msra.mxu0 0.0
  %2133 = vmatprep.subr.mxu0 0.0
  %2134 = vmatpush1.msra.mxu0 0.0
  %2135 = vmatprep.mubr.f32.mxu0 0.0
  %2136 = vmatmul.mubr.f32.gmra.mrb[0].mxu0 %v2064
  %v2137 = vpop.f32.mrb[0].mxu0
  %v2138 = vadd.f32 0.0, %v2137
  %v2139 = vpop.f32.mrb[0].mxu0
  %2140 = vmatprep.mubr.f32.mxu0 0.0
  %2141 = vmatmul.mubr.f32.gmra.mrb[0].mxu0 %v2067
  %v2142 = vpop.f32.mrb[0].mxu0
  %v2143 = vadd.f32 0.0, %v2142
  %v2144 = vpop.f32.mrb[0].mxu0
  %2145 = vdwg.mxu0
  %2146 = vrot.lane.b32.xlu0 %v1030, 56
  %v2147 = vpop.permute.xlu0 %2146
  %2148 = vrot.lane.b32.xlu0 %v1053, 56
  %v2149 = vpop.permute.xlu0 %2148
  %v2152 = vsel %vm1703, %v1875, 0
  %v2155 = vsel %vm1703, %v1876, 0
  %v2157 = vsel %vm1892, %v2149, 0
  %2159 = vmatprep.subr.mxu0 0.0
  %2160 = vmatpush1.msra.mxu0 %v2147
  %2161 = vmatprep.subr.mxu0 0.0
  %2162 = vmatpush1.msra.mxu0 %v2157
  %2163 = vmatprep.subr.mxu0 0.0
  %2164 = vmatpush1.msra.mxu0 0.0
  %2165 = vmatprep.subr.mxu0 0.0
  %2166 = vmatpush1.msra.mxu0 0.0
  %2167 = vmatprep.subr.mxu0 0.0
  %2168 = vmatpush1.msra.mxu0 0.0
  %2169 = vmatprep.subr.mxu0 0.0
  %2170 = vmatpush1.msra.mxu0 0.0
  %2171 = vmatprep.subr.mxu0 0.0
  %2172 = vmatpush1.msra.mxu0 0.0
  %2173 = vmatprep.subr.mxu0 0.0
  %2174 = vmatpush1.msra.mxu0 0.0
  %2175 = vmatprep.subr.mxu0 0.0
  %2176 = vmatpush1.msra.mxu0 0.0
  %2177 = vmatprep.subr.mxu0 0.0
  %2178 = vmatpush1.msra.mxu0 0.0
  %2179 = vmatprep.subr.mxu0 0.0
  %2180 = vmatpush1.msra.mxu0 0.0
  %2181 = vmatprep.subr.mxu0 0.0
  %2182 = vmatpush1.msra.mxu0 0.0
  %2183 = vmatprep.subr.mxu0 0.0
  %2184 = vmatpush1.msra.mxu0 0.0
  %2185 = vmatprep.subr.mxu0 0.0
  %2186 = vmatpush1.msra.mxu0 0.0
  %2187 = vmatprep.subr.mxu0 0.0
  %2188 = vmatpush1.msra.mxu0 0.0
  %2189 = vmatprep.subr.mxu0 0.0
  %2190 = vmatpush1.msra.mxu0 0.0
  %2191 = vmatprep.subr.mxu0 0.0
  %2192 = vmatpush1.msra.mxu0 0.0
  %2193 = vmatprep.subr.mxu0 0.0
  %2194 = vmatpush1.msra.mxu0 0.0
  %2195 = vmatprep.subr.mxu0 0.0
  %2196 = vmatpush1.msra.mxu0 0.0
  %2197 = vmatprep.subr.mxu0 0.0
  %2198 = vmatpush1.msra.mxu0 0.0
  %2199 = vmatprep.subr.mxu0 0.0
  %2200 = vmatpush1.msra.mxu0 0.0
  %2201 = vmatprep.subr.mxu0 0.0
  %2202 = vmatpush1.msra.mxu0 0.0
  %2203 = vmatprep.subr.mxu0 0.0
  %2204 = vmatpush1.msra.mxu0 0.0
  %2205 = vmatprep.subr.mxu0 0.0
  %2206 = vmatpush1.msra.mxu0 0.0
  %2207 = vmatprep.subr.mxu0 0.0
  %2208 = vmatpush1.msra.mxu0 0.0
  %2209 = vmatprep.subr.mxu0 0.0
  %2210 = vmatpush1.msra.mxu0 0.0
  %2211 = vmatprep.subr.mxu0 0.0
  %2212 = vmatpush1.msra.mxu0 0.0
  %2213 = vmatprep.subr.mxu0 0.0
  %2214 = vmatpush1.msra.mxu0 0.0
  %2215 = vmatprep.subr.mxu0 0.0
  %2216 = vmatpush1.msra.mxu0 0.0
  %2217 = vmatprep.subr.mxu0 0.0
  %2218 = vmatpush1.msra.mxu0 0.0
  %2219 = vmatprep.subr.mxu0 0.0
  %2220 = vmatpush1.msra.mxu0 0.0
  %2221 = vmatprep.subr.mxu0 0.0
  %2222 = vmatpush1.msra.mxu0 0.0
  %2223 = vmatprep.mubr.f32.mxu0 0.0
  %2224 = vmatmul.mubr.f32.gmra.mrb[0].mxu0 %v2152
  %v2225 = vpop.f32.mrb[0].mxu0
  %v2226 = vadd.f32 0.0, %v2225
  %v2227 = vpop.f32.mrb[0].mxu0
  %2228 = vmatprep.mubr.f32.mxu0 0.0
  %2229 = vmatmul.mubr.f32.gmra.mrb[0].mxu0 %v2155
  %v2230 = vpop.f32.mrb[0].mxu0
  %v2231 = vadd.f32 0.0, %v2230
  %v2232 = vpop.f32.mrb[0].mxu0
  %2233 = vdwg.mxu0
  %2234 = vrot.lane.b32.xlu0 %v870, 48
  %v2235 = vpop.permute.xlu0 %2234
  %2236 = vrot.lane.b32.xlu0 %v893, 48
  %v2237 = vpop.permute.xlu0 %2236
  %v2240 = vsel %vm1703, %v1869, 0
  %v2243 = vsel %vm1703, %v1870, 0
  %v2245 = vsel %vm1892, %v2237, 0
  %2247 = vmatprep.subr.mxu0 0.0
  %2248 = vmatpush1.msra.mxu0 %v2235
  %2249 = vmatprep.subr.mxu0 0.0
  %2250 = vmatpush1.msra.mxu0 %v2245
  %2251 = vmatprep.subr.mxu0 0.0
  %2252 = vmatpush1.msra.mxu0 0.0
  %2253 = vmatprep.subr.mxu0 0.0
  %2254 = vmatpush1.msra.mxu0 0.0
  %2255 = vmatprep.subr.mxu0 0.0
  %2256 = vmatpush1.msra.mxu0 0.0
  %2257 = vmatprep.subr.mxu0 0.0
  %2258 = vmatpush1.msra.mxu0 0.0
  %2259 = vmatprep.subr.mxu0 0.0
  %2260 = vmatpush1.msra.mxu0 0.0
  %2261 = vmatprep.subr.mxu0 0.0
  %2262 = vmatpush1.msra.mxu0 0.0
  %2263 = vmatprep.subr.mxu0 0.0
  %2264 = vmatpush1.msra.mxu0 0.0
  %2265 = vmatprep.subr.mxu0 0.0
  %2266 = vmatpush1.msra.mxu0 0.0
  %2267 = vmatprep.subr.mxu0 0.0
  %2268 = vmatpush1.msra.mxu0 0.0
  %2269 = vmatprep.subr.mxu0 0.0
  %2270 = vmatpush1.msra.mxu0 0.0
  %2271 = vmatprep.subr.mxu0 0.0
  %2272 = vmatpush1.msra.mxu0 0.0
  %2273 = vmatprep.subr.mxu0 0.0
  %2274 = vmatpush1.msra.mxu0 0.0
  %2275 = vmatprep.subr.mxu0 0.0
  %2276 = vmatpush1.msra.mxu0 0.0
  %2277 = vmatprep.subr.mxu0 0.0
  %2278 = vmatpush1.msra.mxu0 0.0
  %2279 = vmatprep.subr.mxu0 0.0
  %2280 = vmatpush1.msra.mxu0 0.0
  %2281 = vmatprep.subr.mxu0 0.0
  %2282 = vmatpush1.msra.mxu0 0.0
  %2283 = vmatprep.subr.mxu0 0.0
  %2284 = vmatpush1.msra.mxu0 0.0
  %2285 = vmatprep.subr.mxu0 0.0
  %2286 = vmatpush1.msra.mxu0 0.0
  %2287 = vmatprep.subr.mxu0 0.0
  %2288 = vmatpush1.msra.mxu0 0.0
  %2289 = vmatprep.subr.mxu0 0.0
  %2290 = vmatpush1.msra.mxu0 0.0
  %2291 = vmatprep.subr.mxu0 0.0
  %2292 = vmatpush1.msra.mxu0 0.0
  %2293 = vmatprep.subr.mxu0 0.0
  %2294 = vmatpush1.msra.mxu0 0.0
  %2295 = vmatprep.subr.mxu0 0.0
  %2296 = vmatpush1.msra.mxu0 0.0
  %2297 = vmatprep.subr.mxu0 0.0
  %2298 = vmatpush1.msra.mxu0 0.0
  %2299 = vmatprep.subr.mxu0 0.0
  %2300 = vmatpush1.msra.mxu0 0.0
  %2301 = vmatprep.subr.mxu0 0.0
  %2302 = vmatpush1.msra.mxu0 0.0
  %2303 = vmatprep.subr.mxu0 0.0
  %2304 = vmatpush1.msra.mxu0 0.0
  %2305 = vmatprep.subr.mxu0 0.0
  %2306 = vmatpush1.msra.mxu0 0.0
  %2307 = vmatprep.subr.mxu0 0.0
  %2308 = vmatpush1.msra.mxu0 0.0
  %2309 = vmatprep.subr.mxu0 0.0
  %2310 = vmatpush1.msra.mxu0 0.0
  %2311 = vmatprep.mubr.f32.mxu0 0.0
  %2312 = vmatmul.mubr.f32.gmra.mrb[0].mxu0 %v2240
  %v2313 = vpop.f32.mrb[0].mxu0
  %v2314 = vadd.f32 0.0, %v2313
  %v2315 = vpop.f32.mrb[0].mxu0
  %2316 = vmatprep.mubr.f32.mxu0 0.0
  %2317 = vmatmul.mubr.f32.gmra.mrb[0].mxu0 %v2243
  %v2318 = vpop.f32.mrb[0].mxu0
  %v2319 = vadd.f32 0.0, %v2318
  %v2320 = vpop.f32.mrb[0].mxu0
  %2321 = vdwg.mxu0
  %2322 = vrot.lane.b32.xlu0 %v1030, 48
  %v2323 = vpop.permute.xlu0 %2322
  %2324 = vrot.lane.b32.xlu0 %v1053, 48
  %v2325 = vpop.permute.xlu0 %2324
  %v2328 = vsel %vm1703, %v1877, 0
  %v2331 = vsel %vm1703, %v1878, 0
  %v2333 = vsel %vm1892, %v2325, 0
  %2335 = vmatprep.subr.mxu0 0.0
  %2336 = vmatpush1.msra.mxu0 %v2323
  %2337 = vmatprep.subr.mxu0 0.0
  %2338 = vmatpush1.msra.mxu0 %v2333
  %2339 = vmatprep.subr.mxu0 0.0
  %2340 = vmatpush1.msra.mxu0 0.0
  %2341 = vmatprep.subr.mxu0 0.0
  %2342 = vmatpush1.msra.mxu0 0.0
  %2343 = vmatprep.subr.mxu0 0.0
  %2344 = vmatpush1.msra.mxu0 0.0
  %2345 = vmatprep.subr.mxu0 0.0
  %2346 = vmatpush1.msra.mxu0 0.0
  %2347 = vmatprep.subr.mxu0 0.0
  %2348 = vmatpush1.msra.mxu0 0.0
  %2349 = vmatprep.subr.mxu0 0.0
  %2350 = vmatpush1.msra.mxu0 0.0
  %2351 = vmatprep.subr.mxu0 0.0
  %2352 = vmatpush1.msra.mxu0 0.0
  %2353 = vmatprep.subr.mxu0 0.0
  %2354 = vmatpush1.msra.mxu0 0.0
  %2355 = vmatprep.subr.mxu0 0.0
  %2356 = vmatpush1.msra.mxu0 0.0
  %2357 = vmatprep.subr.mxu0 0.0
  %2358 = vmatpush1.msra.mxu0 0.0
  %2359 = vmatprep.subr.mxu0 0.0
  %2360 = vmatpush1.msra.mxu0 0.0
  %2361 = vmatprep.subr.mxu0 0.0
  %2362 = vmatpush1.msra.mxu0 0.0
  %2363 = vmatprep.subr.mxu0 0.0
  %2364 = vmatpush1.msra.mxu0 0.0
  %2365 = vmatprep.subr.mxu0 0.0
  %2366 = vmatpush1.msra.mxu0 0.0
  %2367 = vmatprep.subr.mxu0 0.0
  %2368 = vmatpush1.msra.mxu0 0.0
  %2369 = vmatprep.subr.mxu0 0.0
  %2370 = vmatpush1.msra.mxu0 0.0
  %2371 = vmatprep.subr.mxu0 0.0
  %2372 = vmatpush1.msra.mxu0 0.0
  %2373 = vmatprep.subr.mxu0 0.0
  %2374 = vmatpush1.msra.mxu0 0.0
  %2375 = vmatprep.subr.mxu0 0.0
  %2376 = vmatpush1.msra.mxu0 0.0
  %2377 = vmatprep.subr.mxu0 0.0
  %2378 = vmatpush1.msra.mxu0 0.0
  %2379 = vmatprep.subr.mxu0 0.0
  %2380 = vmatpush1.msra.mxu0 0.0
  %2381 = vmatprep.subr.mxu0 0.0
  %2382 = vmatpush1.msra.mxu0 0.0
  %2383 = vmatprep.subr.mxu0 0.0
  %2384 = vmatpush1.msra.mxu0 0.0
  %2385 = vmatprep.subr.mxu0 0.0
  %2386 = vmatpush1.msra.mxu0 0.0
  %2387 = vmatprep.subr.mxu0 0.0
  %2388 = vmatpush1.msra.mxu0 0.0
  %2389 = vmatprep.subr.mxu0 0.0
  %2390 = vmatpush1.msra.mxu0 0.0
  %2391 = vmatprep.subr.mxu0 0.0
  %2392 = vmatpush1.msra.mxu0 0.0
  %2393 = vmatprep.subr.mxu0 0.0
  %2394 = vmatpush1.msra.mxu0 0.0
  %2395 = vmatprep.subr.mxu0 0.0
  %2396 = vmatpush1.msra.mxu0 0.0
  %2397 = vmatprep.subr.mxu0 0.0
  %2398 = vmatpush1.msra.mxu0 0.0
  %2399 = vmatprep.mubr.f32.mxu0 0.0
  %2400 = vmatmul.mubr.f32.gmra.mrb[0].mxu0 %v2328
  %v2401 = vpop.f32.mrb[0].mxu0
  %v2402 = vadd.f32 0.0, %v2401
  %v2403 = vpop.f32.mrb[0].mxu0
  %2404 = vmatprep.mubr.f32.mxu0 0.0
  %2405 = vmatmul.mubr.f32.gmra.mrb[0].mxu0 %v2331
  %v2406 = vpop.f32.mrb[0].mxu0
  %v2407 = vadd.f32 0.0, %v2406
  %v2408 = vpop.f32.mrb[0].mxu0
  %2409 = vdwg.mxu0
  %2410 = vrot.lane.b32.xlu0 %v870, 40
  %v2411 = vpop.permute.xlu0 %2410
  %2412 = vrot.lane.b32.xlu0 %v893, 40
  %v2413 = vpop.permute.xlu0 %2412
  %v2416 = vsel %vm1703, %v1871, 0
  %v2419 = vsel %vm1703, %v1872, 0
  %v2421 = vsel %vm1892, %v2413, 0
  %2423 = vmatprep.subr.mxu0 0.0
  %2424 = vmatpush1.msra.mxu0 %v2411
  %2425 = vmatprep.subr.mxu0 0.0
  %2426 = vmatpush1.msra.mxu0 %v2421
  %2427 = vmatprep.subr.mxu0 0.0
  %2428 = vmatpush1.msra.mxu0 0.0
  %2429 = vmatprep.subr.mxu0 0.0
  %2430 = vmatpush1.msra.mxu0 0.0
  %2431 = vmatprep.subr.mxu0 0.0
  %2432 = vmatpush1.msra.mxu0 0.0
  %2433 = vmatprep.subr.mxu0 0.0
  %2434 = vmatpush1.msra.mxu0 0.0
  %2435 = vmatprep.subr.mxu0 0.0
  %2436 = vmatpush1.msra.mxu0 0.0
  %2437 = vmatprep.subr.mxu0 0.0
  %2438 = vmatpush1.msra.mxu0 0.0
  %2439 = vmatprep.subr.mxu0 0.0
  %2440 = vmatpush1.msra.mxu0 0.0
  %2441 = vmatprep.subr.mxu0 0.0
  %2442 = vmatpush1.msra.mxu0 0.0
  %2443 = vmatprep.subr.mxu0 0.0
  %2444 = vmatpush1.msra.mxu0 0.0
  %2445 = vmatprep.subr.mxu0 0.0
  %2446 = vmatpush1.msra.mxu0 0.0
  %2447 = vmatprep.subr.mxu0 0.0
  %2448 = vmatpush1.msra.mxu0 0.0
  %2449 = vmatprep.subr.mxu0 0.0
  %2450 = vmatpush1.msra.mxu0 0.0
  %2451 = vmatprep.subr.mxu0 0.0
  %2452 = vmatpush1.msra.mxu0 0.0
  %2453 = vmatprep.subr.mxu0 0.0
  %2454 = vmatpush1.msra.mxu0 0.0
  %2455 = vmatprep.subr.mxu0 0.0
  %2456 = vmatpush1.msra.mxu0 0.0
  %2457 = vmatprep.subr.mxu0 0.0
  %2458 = vmatpush1.msra.mxu0 0.0
  %2459 = vmatprep.subr.mxu0 0.0
  %2460 = vmatpush1.msra.mxu0 0.0
  %2461 = vmatprep.subr.mxu0 0.0
  %2462 = vmatpush1.msra.mxu0 0.0
  %2463 = vmatprep.subr.mxu0 0.0
  %2464 = vmatpush1.msra.mxu0 0.0
  %2465 = vmatprep.subr.mxu0 0.0
  %2466 = vmatpush1.msra.mxu0 0.0
  %2467 = vmatprep.subr.mxu0 0.0
  %2468 = vmatpush1.msra.mxu0 0.0
  %2469 = vmatprep.subr.mxu0 0.0
  %2470 = vmatpush1.msra.mxu0 0.0
  %2471 = vmatprep.subr.mxu0 0.0
  %2472 = vmatpush1.msra.mxu0 0.0
  %2473 = vmatprep.subr.mxu0 0.0
  %2474 = vmatpush1.msra.mxu0 0.0
  %2475 = vmatprep.subr.mxu0 0.0
  %2476 = vmatpush1.msra.mxu0 0.0
  %2477 = vmatprep.subr.mxu0 0.0
  %2478 = vmatpush1.msra.mxu0 0.0
  %2479 = vmatprep.subr.mxu0 0.0
  %2480 = vmatpush1.msra.mxu0 0.0
  %2481 = vmatprep.subr.mxu0 0.0
  %2482 = vmatpush1.msra.mxu0 0.0
  %2483 = vmatprep.subr.mxu0 0.0
  %2484 = vmatpush1.msra.mxu0 0.0
  %2485 = vmatprep.subr.mxu0 0.0
  %2486 = vmatpush1.msra.mxu0 0.0
  %2487 = vmatprep.mubr.f32.mxu0 0.0
  %2488 = vmatmul.mubr.f32.gmra.mrb[0].mxu0 %v2416
  %v2489 = vpop.f32.mrb[0].mxu0
  %v2490 = vadd.f32 0.0, %v2489
  %v2491 = vpop.f32.mrb[0].mxu0
  %2492 = vmatprep.mubr.f32.mxu0 0.0
  %2493 = vmatmul.mubr.f32.gmra.mrb[0].mxu0 %v2419
  %v2494 = vpop.f32.mrb[0].mxu0
  %v2495 = vadd.f32 0.0, %v2494
  %v2496 = vpop.f32.mrb[0].mxu0
  %2497 = vdwg.mxu0
  %2498 = vrot.lane.b32.xlu0 %v1030, 40
  %v2499 = vpop.permute.xlu0 %2498
  %2500 = vrot.lane.b32.xlu0 %v1053, 40
  %v2501 = vpop.permute.xlu0 %2500
  %v2504 = vsel %vm1703, %v1879, 0
  %v2507 = vsel %vm1703, %v1880, 0
  %v2509 = vsel %vm1892, %v2501, 0
  %2511 = vmatprep.subr.mxu0 0.0
  %2512 = vmatpush1.msra.mxu0 %v2499
  %2513 = vmatprep.subr.mxu0 0.0
  %2514 = vmatpush1.msra.mxu0 %v2509
  %2515 = vmatprep.subr.mxu0 0.0
  %2516 = vmatpush1.msra.mxu0 0.0
  %2517 = vmatprep.subr.mxu0 0.0
  %2518 = vmatpush1.msra.mxu0 0.0
  %2519 = vmatprep.subr.mxu0 0.0
  %2520 = vmatpush1.msra.mxu0 0.0
  %2521 = vmatprep.subr.mxu0 0.0
  %2522 = vmatpush1.msra.mxu0 0.0
  %2523 = vmatprep.subr.mxu0 0.0
  %2524 = vmatpush1.msra.mxu0 0.0
  %2525 = vmatprep.subr.mxu0 0.0
  %2526 = vmatpush1.msra.mxu0 0.0
  %2527 = vmatprep.subr.mxu0 0.0
  %2528 = vmatpush1.msra.mxu0 0.0
  %2529 = vmatprep.subr.mxu0 0.0
  %2530 = vmatpush1.msra.mxu0 0.0
  %2531 = vmatprep.subr.mxu0 0.0
  %2532 = vmatpush1.msra.mxu0 0.0
  %2533 = vmatprep.subr.mxu0 0.0
  %2534 = vmatpush1.msra.mxu0 0.0
  %2535 = vmatprep.subr.mxu0 0.0
  %2536 = vmatpush1.msra.mxu0 0.0
  %2537 = vmatprep.subr.mxu0 0.0
  %2538 = vmatpush1.msra.mxu0 0.0
  %2539 = vmatprep.subr.mxu0 0.0
  %2540 = vmatpush1.msra.mxu0 0.0
  %2541 = vmatprep.subr.mxu0 0.0
  %2542 = vmatpush1.msra.mxu0 0.0
  %2543 = vmatprep.subr.mxu0 0.0
  %2544 = vmatpush1.msra.mxu0 0.0
  %2545 = vmatprep.subr.mxu0 0.0
  %2546 = vmatpush1.msra.mxu0 0.0
  %2547 = vmatprep.subr.mxu0 0.0
  %2548 = vmatpush1.msra.mxu0 0.0
  %2549 = vmatprep.subr.mxu0 0.0
  %2550 = vmatpush1.msra.mxu0 0.0
  %2551 = vmatprep.subr.mxu0 0.0
  %2552 = vmatpush1.msra.mxu0 0.0
  %2553 = vmatprep.subr.mxu0 0.0
  %2554 = vmatpush1.msra.mxu0 0.0
  %2555 = vmatprep.subr.mxu0 0.0
  %2556 = vmatpush1.msra.mxu0 0.0
  %2557 = vmatprep.subr.mxu0 0.0
  %2558 = vmatpush1.msra.mxu0 0.0
  %2559 = vmatprep.subr.mxu0 0.0
  %2560 = vmatpush1.msra.mxu0 0.0
  %2561 = vmatprep.subr.mxu0 0.0
  %2562 = vmatpush1.msra.mxu0 0.0
  %2563 = vmatprep.subr.mxu0 0.0
  %2564 = vmatpush1.msra.mxu0 0.0
  %2565 = vmatprep.subr.mxu0 0.0
  %2566 = vmatpush1.msra.mxu0 0.0
  %2567 = vmatprep.subr.mxu0 0.0
  %2568 = vmatpush1.msra.mxu0 0.0
  %2569 = vmatprep.subr.mxu0 0.0
  %2570 = vmatpush1.msra.mxu0 0.0
  %2571 = vmatprep.subr.mxu0 0.0
  %2572 = vmatpush1.msra.mxu0 0.0
  %2573 = vmatprep.subr.mxu0 0.0
  %2574 = vmatpush1.msra.mxu0 0.0
  %2575 = vmatprep.mubr.f32.mxu0 0.0
  %2576 = vmatmul.mubr.f32.gmra.mrb[0].mxu0 %v2504
  %v2577 = vpop.f32.mrb[0].mxu0
  %v2578 = vadd.f32 0.0, %v2577
  %v2579 = vpop.f32.mrb[0].mxu0
  %2580 = vmatprep.mubr.f32.mxu0 0.0
  %2581 = vmatmul.mubr.f32.gmra.mrb[0].mxu0 %v2507
  %v2582 = vpop.f32.mrb[0].mxu0
  %v2583 = vadd.f32 0.0, %v2582
  %v2584 = vpop.f32.mrb[0].mxu0
  %2585 = vdwg.mxu0
  %2590 = vrot.lane.b32.xlu0 %v2138, 8
  %v2591 = vpop.permute.xlu0 %2590
  %2592 = vrot.lane.b32.xlu0 %v2143, 8
  %v2593 = vpop.permute.xlu0 %2592
  %2594 = vrot.lane.b32.xlu0 %v2226, 8
  %v2595 = vpop.permute.xlu0 %2594
  %2596 = vrot.lane.b32.xlu0 %v2231, 8
  %v2597 = vpop.permute.xlu0 %2596
  %2606 = vrot.lane.b32.xlu0 %v2314, 16
  %v2607 = vpop.permute.xlu0 %2606
  %2608 = vrot.lane.b32.xlu0 %v2319, 16
  %v2609 = vpop.permute.xlu0 %2608
  %2610 = vrot.lane.b32.xlu0 %v2402, 16
  %v2611 = vpop.permute.xlu0 %2610
  %2612 = vrot.lane.b32.xlu0 %v2407, 16
  %v2613 = vpop.permute.xlu0 %2612
  %2622 = vrot.lane.b32.xlu0 %v2490, 24
  %v2623 = vpop.permute.xlu0 %2622
  %2624 = vrot.lane.b32.xlu0 %v2495, 24
  %v2625 = vpop.permute.xlu0 %2624
  %2626 = vrot.lane.b32.xlu0 %v2578, 24
  %v2627 = vpop.permute.xlu0 %2626
  %2628 = vrot.lane.b32.xlu0 %v2583, 24
  %v2629 = vpop.permute.xlu0 %2628
  %v2634 = vsel %vm898, %v1962, %v2591
  %v2635 = vsel %vm898, %v1967, %v2593
  %v2636 = vsel %vm898, %v2050, %v2595
  %v2637 = vsel %vm898, %v2055, %v2597
  %vm2638 = vcmask 130048
  %v2639 = vsel %vm2638, %v2634, %v2607
  %v2640 = vsel %vm2638, %v2635, %v2609
  %v2641 = vsel %vm2638, %v2636, %v2611
  %v2642 = vsel %vm2638, %v2637, %v2613
  %vm2643 = vcmask 195584
  %v2644 = vsel %vm2643, %v2639, %v2623
  %v2645 = vsel %vm2643, %v2640, %v2625
  %v2646 = vsel %vm2643, %v2641, %v2627
  %v2647 = vsel %vm2643, %v2642, %v2629
  %v2652 = vcombine.high %v2644, %v2644
  %v2654 = vunpack.c.l.s4 1966171168
  %v2655 = vunpack.c.0.s8 %v2654
  %v2656 = vlaneseq
  %v2657 = vshrl.u32 %v2656, 7
  %v2658 = vsub.s32 %v2655, %v2657
  %v2659 = vrot.slane %v2644, %v2658
  %v2661 = vunpack.c.l.s4 1966171168
  %v2662 = vunpack.c.0.s8 %v2661
  %v2663 = vlaneseq
  %v2664 = vshrl.u32 %v2663, 7
  %v2665 = vsub.s32 %v2662, %v2664
  %v2666 = vrot.slane %v2652, %v2665
  %v2667 = vcombine.high %v2659, %v2659
  %v2668 = vcombine.high %v2666, %v2666
  %v2670 = vunpack.c.l.s4 1966171168
  %v2671 = vunpack.c.0.s8 %v2670
  %v2672 = vlaneseq
  %v2673 = vshrl.u32 %v2672, 7
  %v2674 = vsub.s32 %v2671, %v2673
  %v2675 = vrot.slane %v2659, %v2674
  %v2677 = vunpack.c.l.s4 1966171168
  %v2678 = vunpack.c.0.s8 %v2677
  %v2679 = vlaneseq
  %v2680 = vshrl.u32 %v2679, 7
  %v2681 = vsub.s32 %v2678, %v2680
  %v2682 = vrot.slane %v2666, %v2681
  %v2684 = vunpack.c.l.s4 1966171168
  %v2685 = vunpack.c.0.s8 %v2684
  %v2686 = vlaneseq
  %v2687 = vshrl.u32 %v2686, 7
  %v2688 = vsub.s32 %v2685, %v2687
  %v2689 = vrot.slane %v2667, %v2688
  %v2691 = vunpack.c.l.s4 1966171168
  %v2692 = vunpack.c.0.s8 %v2691
  %v2693 = vlaneseq
  %v2694 = vshrl.u32 %v2693, 7
  %v2695 = vsub.s32 %v2692, %v2694
  %v2696 = vrot.slane %v2668, %v2695
  %v2697 = vcombine.high %v2675, %v2675
  %v2698 = vcombine.high %v2682, %v2682
  %v2699 = vcombine.high %v2689, %v2689
  %v2700 = vcombine.high %v2696, %v2696
  %v2702 = vunpack.c.l.s4 1966171168
  %v2703 = vunpack.c.0.s8 %v2702
  %v2704 = vlaneseq
  %v2705 = vshrl.u32 %v2704, 7
  %v2706 = vsub.s32 %v2703, %v2705
  %v2707 = vrot.slane %v2645, %v2706
  %v2708 = vcombine.high %v2707, %v2707
  %v2710 = vunpack.c.l.s4 1966171168
  %v2711 = vunpack.c.0.s8 %v2710
  %v2712 = vlaneseq
  %v2713 = vshrl.u32 %v2712, 7
  %v2714 = vsub.s32 %v2711, %v2713
  %v2715 = vrot.slane %v2707, %v2714
  %v2717 = vunpack.c.l.s4 1966171168
  %v2718 = vunpack.c.0.s8 %v2717
  %v2719 = vlaneseq
  %v2720 = vshrl.u32 %v2719, 7
  %v2721 = vsub.s32 %v2718, %v2720
  %v2722 = vrot.slane %v2708, %v2721
  %v2723 = vcombine.high %v2715, %v2715
  %v2724 = vcombine.high %v2646, %v2646
  %v2726 = vunpack.c.l.s4 1966171168
  %v2727 = vunpack.c.0.s8 %v2726
  %v2728 = vlaneseq
  %v2729 = vshrl.u32 %v2728, 7
  %v2730 = vsub.s32 %v2727, %v2729
  %v2731 = vrot.slane %v2646, %v2730
  %v2733 = vunpack.c.l.s4 1966171168
  %v2734 = vunpack.c.0.s8 %v2733
  %v2735 = vlaneseq
  %v2736 = vshrl.u32 %v2735, 7
  %v2737 = vsub.s32 %v2734, %v2736
  %v2738 = vrot.slane %v2724, %v2737
  %v2739 = vcombine.high %v2731, %v2731
  %v2740 = vcombine.high %v2738, %v2738
  %v2742 = vunpack.c.l.s4 1966171168
  %v2743 = vunpack.c.0.s8 %v2742
  %v2744 = vlaneseq
  %v2745 = vshrl.u32 %v2744, 7
  %v2746 = vsub.s32 %v2743, %v2745
  %v2747 = vrot.slane %v2731, %v2746
  %v2749 = vunpack.c.l.s4 1966171168
  %v2750 = vunpack.c.0.s8 %v2749
  %v2751 = vlaneseq
  %v2752 = vshrl.u32 %v2751, 7
  %v2753 = vsub.s32 %v2750, %v2752
  %v2754 = vrot.slane %v2738, %v2753
  %v2756 = vunpack.c.l.s4 1966171168
  %v2757 = vunpack.c.0.s8 %v2756
  %v2758 = vlaneseq
  %v2759 = vshrl.u32 %v2758, 7
  %v2760 = vsub.s32 %v2757, %v2759
  %v2761 = vrot.slane %v2739, %v2760
  %v2763 = vunpack.c.l.s4 1966171168
  %v2764 = vunpack.c.0.s8 %v2763
  %v2765 = vlaneseq
  %v2766 = vshrl.u32 %v2765, 7
  %v2767 = vsub.s32 %v2764, %v2766
  %v2768 = vrot.slane %v2740, %v2767
  %v2769 = vcombine.high %v2747, %v2747
  %v2770 = vcombine.high %v2754, %v2754
  %v2771 = vcombine.high %v2761, %v2761
  %v2772 = vcombine.high %v2768, %v2768
  %v2774 = vunpack.c.l.s4 1966171168
  %v2775 = vunpack.c.0.s8 %v2774
  %v2776 = vlaneseq
  %v2777 = vshrl.u32 %v2776, 7
  %v2778 = vsub.s32 %v2775, %v2777
  %v2779 = vrot.slane %v2647, %v2778
  %v2780 = vcombine.high %v2779, %v2779
  %v2782 = vunpack.c.l.s4 1966171168
  %v2783 = vunpack.c.0.s8 %v2782
  %v2784 = vlaneseq
  %v2785 = vshrl.u32 %v2784, 7
  %v2786 = vsub.s32 %v2783, %v2785
  %v2787 = vrot.slane %v2779, %v2786
  %v2789 = vunpack.c.l.s4 1966171168
  %v2790 = vunpack.c.0.s8 %v2789
  %v2791 = vlaneseq
  %v2792 = vshrl.u32 %v2791, 7
  %v2793 = vsub.s32 %v2790, %v2792
  %v2794 = vrot.slane %v2780, %v2793
  %v2795 = vcombine.high %v2787, %v2787
  %v2796 = vcombine.low %v2675, %v2689
  %v2797 = vcombine.low %v2697, %v2699
  %v2798 = vcombine.low %v2682, %v2696
  %v2799 = vcombine.low %v2698, %v2700
  %v2801 = vunpack.c.l.s4 1966171168
  %v2802 = vunpack.c.0.s8 %v2801
  %v2803 = vlaneseq
  %v2804 = vshrl.u32 %v2803, 7
  %v2805 = vsub.s32 %v2802, %v2804
  %v2806 = vrot.slane %v2796, %v2805
  %v2808 = vunpack.c.l.s4 1966171168
  %v2809 = vunpack.c.0.s8 %v2808
  %v2810 = vlaneseq
  %v2811 = vshrl.u32 %v2810, 7
  %v2812 = vsub.s32 %v2809, %v2811
  %v2813 = vrot.slane %v2797, %v2812
  %v2815 = vunpack.c.l.s4 1966171168
  %v2816 = vunpack.c.0.s8 %v2815
  %v2817 = vlaneseq
  %v2818 = vshrl.u32 %v2817, 7
  %v2819 = vsub.s32 %v2816, %v2818
  %v2820 = vrot.slane %v2798, %v2819
  %v2822 = vunpack.c.l.s4 1966171168
  %v2823 = vunpack.c.0.s8 %v2822
  %v2824 = vlaneseq
  %v2825 = vshrl.u32 %v2824, 7
  %v2826 = vsub.s32 %v2823, %v2825
  %v2827 = vrot.slane %v2799, %v2826
  %v2828 = vcombine.low %v2806, %v2813
  %v2829 = vcombine.low %v2820, %v2827
  %v2831 = vunpack.c.l.s4 1966171168
  %v2832 = vunpack.c.0.s8 %v2831
  %v2833 = vlaneseq
  %v2834 = vshrl.u32 %v2833, 7
  %v2835 = vsub.s32 %v2832, %v2834
  %v2836 = vrot.slane %v2828, %v2835
  %v2838 = vunpack.c.l.s4 1966171168
  %v2839 = vunpack.c.0.s8 %v2838
  %v2840 = vlaneseq
  %v2841 = vshrl.u32 %v2840, 7
  %v2842 = vsub.s32 %v2839, %v2841
  %v2843 = vrot.slane %v2829, %v2842
  %v2844 = vcombine.low %v2836, %v2843
  %v2845 = vcombine.low %v2715, %v2722
  %v2846 = vcombine.low %v2723, %v2747
  %v2847 = vcombine.low %v2761, %v2769
  %v2848 = vcombine.low %v2771, %v2754
  %v2850 = vunpack.c.l.s4 1966171168
  %v2851 = vunpack.c.0.s8 %v2850
  %v2852 = vlaneseq
  %v2853 = vshrl.u32 %v2852, 7
  %v2854 = vsub.s32 %v2851, %v2853
  %v2855 = vrot.slane %v2845, %v2854
  %v2857 = vunpack.c.l.s4 1966171168
  %v2858 = vunpack.c.0.s8 %v2857
  %v2859 = vlaneseq
  %v2860 = vshrl.u32 %v2859, 7
  %v2861 = vsub.s32 %v2858, %v2860
  %v2862 = vrot.slane %v2846, %v2861
  %v2864 = vunpack.c.l.s4 1966171168
  %v2865 = vunpack.c.0.s8 %v2864
  %v2866 = vlaneseq
  %v2867 = vshrl.u32 %v2866, 7
  %v2868 = vsub.s32 %v2865, %v2867
  %v2869 = vrot.slane %v2847, %v2868
  %v2871 = vunpack.c.l.s4 1966171168
  %v2872 = vunpack.c.0.s8 %v2871
  %v2873 = vlaneseq
  %v2874 = vshrl.u32 %v2873, 7
  %v2875 = vsub.s32 %v2872, %v2874
  %v2876 = vrot.slane %v2848, %v2875
  %v2877 = vcombine.low %v2855, %v2862
  %v2878 = vcombine.low %v2869, %v2876
  %v2880 = vunpack.c.l.s4 1966171168
  %v2881 = vunpack.c.0.s8 %v2880
  %v2882 = vlaneseq
  %v2883 = vshrl.u32 %v2882, 7
  %v2884 = vsub.s32 %v2881, %v2883
  %v2885 = vrot.slane %v2877, %v2884
  %v2887 = vunpack.c.l.s4 1966171168
  %v2888 = vunpack.c.0.s8 %v2887
  %v2889 = vlaneseq
  %v2890 = vshrl.u32 %v2889, 7
  %v2891 = vsub.s32 %v2888, %v2890
  %v2892 = vrot.slane %v2878, %v2891
  %v2893 = vcombine.low %v2885, %v2892
  %v2894 = vcombine.low %v2768, %v2770
  %v2895 = vcombine.low %v2772, %v2787
  %v2896 = vcombine.low %v2794, %v2795
  %v2898 = vunpack.c.l.s4 1966171168
  %v2899 = vunpack.c.0.s8 %v2898
  %v2900 = vlaneseq
  %v2901 = vshrl.u32 %v2900, 7
  %v2902 = vsub.s32 %v2899, %v2901
  %v2903 = vrot.slane %v2894, %v2902
  %v2905 = vunpack.c.l.s4 1966171168
  %v2906 = vunpack.c.0.s8 %v2905
  %v2907 = vlaneseq
  %v2908 = vshrl.u32 %v2907, 7
  %v2909 = vsub.s32 %v2906, %v2908
  %v2910 = vrot.slane %v2895, %v2909
  %v2912 = vunpack.c.l.s4 1966171168
  %v2913 = vunpack.c.0.s8 %v2912
  %v2914 = vlaneseq
  %v2915 = vshrl.u32 %v2914, 7
  %v2916 = vsub.s32 %v2913, %v2915
  %v2917 = vrot.slane %v2896, %v2916
  %v2918 = vcombine.low %v2903, %v2910
  %v2920 = vunpack.c.l.s4 1966171168
  %v2921 = vunpack.c.0.s8 %v2920
  %v2922 = vlaneseq
  %v2923 = vshrl.u32 %v2922, 7
  %v2924 = vsub.s32 %v2921, %v2923
  %v2925 = vrot.slane %v2918, %v2924
  %v2927 = vunpack.c.l.s4 1966171168
  %v2928 = vunpack.c.0.s8 %v2927
  %v2929 = vlaneseq
  %v2930 = vshrl.u32 %v2929, 7
  %v2931 = vsub.s32 %v2928, %v2930
  %v2932 = vrot.slane %v2917, %v2931
  %v2933 = vcombine.low %v2925, %v2932
  %v2934 = vsel %vm52, %v2844, 0
  %v2936 = vsel %vm52, %v2893, 0
  %v2938 = vsel %vm52, %v2933, 0
  %2940 = vmatprep.subr.mxu0 0.0
  %2941 = vmatpush1.msra.mxu0 %v36
  %2942 = vmatprep.subr.mxu0 0.0
  %2943 = vmatpush1.msra.mxu0 %v37
  %2944 = vmatprep.subr.mxu0 0.0
  %2945 = vmatpush1.msra.mxu0 %v38
  %2946 = vmatprep.subr.mxu0 0.0
  %2947 = vmatpush1.msra.mxu0 %v39
  %2948 = vmatprep.subr.mxu0 0.0
  %2949 = vmatpush1.msra.mxu0 0.0
  %2950 = vmatprep.subr.mxu0 0.0
  %2951 = vmatpush1.msra.mxu0 0.0
  %2952 = vmatprep.subr.mxu0 0.0
  %2953 = vmatpush1.msra.mxu0 0.0
  %2954 = vmatprep.subr.mxu0 0.0
  %2955 = vmatpush1.msra.mxu0 0.0
  %2956 = vmatprep.subr.mxu0 0.0
  %2957 = vmatpush1.msra.mxu0 0.0
  %2958 = vmatprep.subr.mxu0 0.0
  %2959 = vmatpush1.msra.mxu0 0.0
  %2960 = vmatprep.subr.mxu0 0.0
  %2961 = vmatpush1.msra.mxu0 0.0
  %2962 = vmatprep.subr.mxu0 0.0
  %2963 = vmatpush1.msra.mxu0 0.0
  %2964 = vmatprep.subr.mxu0 0.0
  %2965 = vmatpush1.msra.mxu0 0.0
  %2966 = vmatprep.subr.mxu0 0.0
  %2967 = vmatpush1.msra.mxu0 0.0
  %2968 = vmatprep.subr.mxu0 0.0
  %2969 = vmatpush1.msra.mxu0 0.0
  %2970 = vmatprep.subr.mxu0 0.0
  %2971 = vmatpush1.msra.mxu0 0.0
  %2972 = vmatprep.subr.mxu0 0.0
  %2973 = vmatpush1.msra.mxu0 0.0
  %2974 = vmatprep.subr.mxu0 0.0
  %2975 = vmatpush1.msra.mxu0 0.0
  %2976 = vmatprep.subr.mxu0 0.0
  %2977 = vmatpush1.msra.mxu0 0.0
  %2978 = vmatprep.subr.mxu0 0.0
  %2979 = vmatpush1.msra.mxu0 0.0
  %2980 = vmatprep.subr.mxu0 0.0
  %2981 = vmatpush1.msra.mxu0 0.0
  %2982 = vmatprep.subr.mxu0 0.0
  %2983 = vmatpush1.msra.mxu0 0.0
  %2984 = vmatprep.subr.mxu0 0.0
  %2985 = vmatpush1.msra.mxu0 0.0
  %2986 = vmatprep.subr.mxu0 0.0
  %2987 = vmatpush1.msra.mxu0 0.0
  %2988 = vmatprep.subr.mxu0 0.0
  %2989 = vmatpush1.msra.mxu0 0.0
  %2990 = vmatprep.subr.mxu0 0.0
  %2991 = vmatpush1.msra.mxu0 0.0
  %2992 = vmatprep.subr.mxu0 0.0
  %2993 = vmatpush1.msra.mxu0 0.0
  %2994 = vmatprep.subr.mxu0 0.0
  %2995 = vmatpush1.msra.mxu0 0.0
  %2996 = vmatprep.subr.mxu0 0.0
  %2997 = vmatpush1.msra.mxu0 0.0
  %2998 = vmatprep.subr.mxu0 0.0
  %2999 = vmatpush1.msra.mxu0 0.0
  %3000 = vmatprep.subr.mxu0 0.0
  %3001 = vmatpush1.msra.mxu0 0.0
  %3002 = vmatprep.subr.mxu0 0.0
  %3003 = vmatpush1.msra.mxu0 0.0
  %3004 = vmatprep.mubr.f32.mxu0 0.0
  %3005 = vmatmul.mubr.f32.gmra.mrb[0].mxu0 %v2934
  %v3006 = vpop.f32.mrb[0].mxu0
  %v3007 = vadd.f32 0.0, %v3006
  %v3008 = vpop.f32.mrb[0].mxu0
  %3009 = vmatprep.mubr.f32.mxu0 0.0
  %3010 = vmatmul.mubr.f32.gmra.mrb[0].mxu0 %v2936
  %v3011 = vpop.f32.mrb[0].mxu0
  %v3012 = vadd.f32 0.0, %v3011
  %v3013 = vpop.f32.mrb[0].mxu0
  %3014 = vmatprep.mubr.f32.mxu0 0.0
  %3015 = vmatmul.mubr.f32.gmra.mrb[0].mxu0 %v2938
  %v3016 = vpop.f32.mrb[0].mxu0
  %v3017 = vadd.f32 0.0, %v3016
  %v3018 = vpop.f32.mrb[0].mxu0
  %3019 = vdwg.mxu0
  %v3023 = vcombine.high %v3007, %v3007
  %v3025 = vunpack.c.l.s4 1966171168
  %v3026 = vunpack.c.0.s8 %v3025
  %v3027 = vlaneseq
  %v3028 = vshrl.u32 %v3027, 7
  %v3029 = vsub.s32 %v3026, %v3028
  %v3030 = vrot.slane %v3007, %v3029
  %v3032 = vunpack.c.l.s4 1966171168
  %v3033 = vunpack.c.0.s8 %v3032
  %v3034 = vlaneseq
  %v3035 = vshrl.u32 %v3034, 7
  %v3036 = vsub.s32 %v3033, %v3035
  %v3037 = vrot.slane %v3023, %v3036
  %v3038 = vcombine.high %v3030, %v3030
  %v3039 = vcombine.high %v3037, %v3037
  %v3041 = vunpack.c.l.s4 1966171168
  %v3042 = vunpack.c.0.s8 %v3041
  %v3043 = vlaneseq
  %v3044 = vshrl.u32 %v3043, 7
  %v3045 = vsub.s32 %v3042, %v3044
  %v3046 = vrot.slane %v3030, %v3045
  %v3048 = vunpack.c.l.s4 1966171168
  %v3049 = vunpack.c.0.s8 %v3048
  %v3050 = vlaneseq
  %v3051 = vshrl.u32 %v3050, 7
  %v3052 = vsub.s32 %v3049, %v3051
  %v3053 = vrot.slane %v3037, %v3052
  %v3055 = vunpack.c.l.s4 1966171168
  %v3056 = vunpack.c.0.s8 %v3055
  %v3057 = vlaneseq
  %v3058 = vshrl.u32 %v3057, 7
  %v3059 = vsub.s32 %v3056, %v3058
  %v3060 = vrot.slane %v3038, %v3059
  %v3062 = vunpack.c.l.s4 1966171168
  %v3063 = vunpack.c.0.s8 %v3062
  %v3064 = vlaneseq
  %v3065 = vshrl.u32 %v3064, 7
  %v3066 = vsub.s32 %v3063, %v3065
  %v3067 = vrot.slane %v3039, %v3066
  %v3068 = vcombine.high %v3046, %v3046
  %v3069 = vcombine.high %v3053, %v3053
  %v3070 = vcombine.high %v3060, %v3060
  %v3071 = vcombine.high %v3067, %v3067
  %v3072 = vcombine.high %v3012, %v3012
  %v3074 = vunpack.c.l.s4 1966171168
  %v3075 = vunpack.c.0.s8 %v3074
  %v3076 = vlaneseq
  %v3077 = vshrl.u32 %v3076, 7
  %v3078 = vsub.s32 %v3075, %v3077
  %v3079 = vrot.slane %v3012, %v3078
  %v3081 = vunpack.c.l.s4 1966171168
  %v3082 = vunpack.c.0.s8 %v3081
  %v3083 = vlaneseq
  %v3084 = vshrl.u32 %v3083, 7
  %v3085 = vsub.s32 %v3082, %v3084
  %v3086 = vrot.slane %v3072, %v3085
  %v3087 = vcombine.high %v3079, %v3079
  %v3088 = vcombine.high %v3086, %v3086
  %v3090 = vunpack.c.l.s4 1966171168
  %v3091 = vunpack.c.0.s8 %v3090
  %v3092 = vlaneseq
  %v3093 = vshrl.u32 %v3092, 7
  %v3094 = vsub.s32 %v3091, %v3093
  %v3095 = vrot.slane %v3079, %v3094
  %v3097 = vunpack.c.l.s4 1966171168
  %v3098 = vunpack.c.0.s8 %v3097
  %v3099 = vlaneseq
  %v3100 = vshrl.u32 %v3099, 7
  %v3101 = vsub.s32 %v3098, %v3100
  %v3102 = vrot.slane %v3086, %v3101
  %v3104 = vunpack.c.l.s4 1966171168
  %v3105 = vunpack.c.0.s8 %v3104
  %v3106 = vlaneseq
  %v3107 = vshrl.u32 %v3106, 7
  %v3108 = vsub.s32 %v3105, %v3107
  %v3109 = vrot.slane %v3087, %v3108
  %v3111 = vunpack.c.l.s4 1966171168
  %v3112 = vunpack.c.0.s8 %v3111
  %v3113 = vlaneseq
  %v3114 = vshrl.u32 %v3113, 7
  %v3115 = vsub.s32 %v3112, %v3114
  %v3116 = vrot.slane %v3088, %v3115
  %v3117 = vcombine.high %v3095, %v3095
  %v3118 = vcombine.high %v3102, %v3102
  %v3119 = vcombine.high %v3109, %v3109
  %v3120 = vcombine.high %v3116, %v3116
  %v3121 = vcombine.high %v3017, %v3017
  %v3123 = vunpack.c.l.s4 1966171168
  %v3124 = vunpack.c.0.s8 %v3123
  %v3125 = vlaneseq
  %v3126 = vshrl.u32 %v3125, 7
  %v3127 = vsub.s32 %v3124, %v3126
  %v3128 = vrot.slane %v3017, %v3127
  %v3130 = vunpack.c.l.s4 1966171168
  %v3131 = vunpack.c.0.s8 %v3130
  %v3132 = vlaneseq
  %v3133 = vshrl.u32 %v3132, 7
  %v3134 = vsub.s32 %v3131, %v3133
  %v3135 = vrot.slane %v3121, %v3134
  %v3136 = vcombine.high %v3128, %v3128
  %v3137 = vcombine.high %v3135, %v3135
  %v3139 = vunpack.c.l.s4 1966171168
  %v3140 = vunpack.c.0.s8 %v3139
  %v3141 = vlaneseq
  %v3142 = vshrl.u32 %v3141, 7
  %v3143 = vsub.s32 %v3140, %v3142
  %v3144 = vrot.slane %v3128, %v3143
  %v3146 = vunpack.c.l.s4 1966171168
  %v3147 = vunpack.c.0.s8 %v3146
  %v3148 = vlaneseq
  %v3149 = vshrl.u32 %v3148, 7
  %v3150 = vsub.s32 %v3147, %v3149
  %v3151 = vrot.slane %v3135, %v3150
  %v3153 = vunpack.c.l.s4 1966171168
  %v3154 = vunpack.c.0.s8 %v3153
  %v3155 = vlaneseq
  %v3156 = vshrl.u32 %v3155, 7
  %v3157 = vsub.s32 %v3154, %v3156
  %v3158 = vrot.slane %v3136, %v3157
  %v3160 = vunpack.c.l.s4 1966171168
  %v3161 = vunpack.c.0.s8 %v3160
  %v3162 = vlaneseq
  %v3163 = vshrl.u32 %v3162, 7
  %v3164 = vsub.s32 %v3161, %v3163
  %v3165 = vrot.slane %v3137, %v3164
  %v3166 = vcombine.high %v3144, %v3144
  %v3167 = vcombine.high %v3158, %v3158
  %v3168 = vcombine.low %v3046, %v3060
  %v3169 = vcombine.low %v3068, %v3070
  %v3170 = vcombine.low %v3053, %v3067
  %v3171 = vcombine.low %v3069, %v3071
  %v3173 = vunpack.c.l.s4 1966171168
  %v3174 = vunpack.c.0.s8 %v3173
  %v3175 = vlaneseq
  %v3176 = vshrl.u32 %v3175, 7
  %v3177 = vsub.s32 %v3174, %v3176
  %v3178 = vrot.slane %v3168, %v3177
  %v3180 = vunpack.c.l.s4 1966171168
  %v3181 = vunpack.c.0.s8 %v3180
  %v3182 = vlaneseq
  %v3183 = vshrl.u32 %v3182, 7
  %v3184 = vsub.s32 %v3181, %v3183
  %v3185 = vrot.slane %v3169, %v3184
  %v3187 = vunpack.c.l.s4 1966171168
  %v3188 = vunpack.c.0.s8 %v3187
  %v3189 = vlaneseq
  %v3190 = vshrl.u32 %v3189, 7
  %v3191 = vsub.s32 %v3188, %v3190
  %v3192 = vrot.slane %v3170, %v3191
  %v3194 = vunpack.c.l.s4 1966171168
  %v3195 = vunpack.c.0.s8 %v3194
  %v3196 = vlaneseq
  %v3197 = vshrl.u32 %v3196, 7
  %v3198 = vsub.s32 %v3195, %v3197
  %v3199 = vrot.slane %v3171, %v3198
  %v3200 = vcombine.low %v3178, %v3185
  %v3201 = vcombine.low %v3192, %v3199
  %v3203 = vunpack.c.l.s4 1966171168
  %v3204 = vunpack.c.0.s8 %v3203
  %v3205 = vlaneseq
  %v3206 = vshrl.u32 %v3205, 7
  %v3207 = vsub.s32 %v3204, %v3206
  %v3208 = vrot.slane %v3200, %v3207
  %v3210 = vunpack.c.l.s4 1966171168
  %v3211 = vunpack.c.0.s8 %v3210
  %v3212 = vlaneseq
  %v3213 = vshrl.u32 %v3212, 7
  %v3214 = vsub.s32 %v3211, %v3213
  %v3215 = vrot.slane %v3201, %v3214
  %v3216 = vcombine.low %v3208, %v3215
  %v3217 = vcombine.low %v3095, %v3109
  %v3219 = vunpack.c.l.s4 1966171168
  %v3220 = vunpack.c.0.s8 %v3219
  %v3221 = vlaneseq
  %v3222 = vshrl.u32 %v3221, 7
  %v3223 = vsub.s32 %v3220, %v3222
  %v3224 = vrot.slane %v3217, %v3223
  %v3226 = vunpack.c.l.s4 1966171168
  %v3227 = vunpack.c.0.s8 %v3226
  %v3228 = vlaneseq
  %v3229 = vshrl.u32 %v3228, 7
  %v3230 = vsub.s32 %v3227, %v3229
  %v3231 = vrot.slane %v3117, %v3230
  %v3232 = vcombine.low %v3224, %v3231
  %v3234 = vunpack.c.l.s4 1966171168
  %v3235 = vunpack.c.0.s8 %v3234
  %v3236 = vlaneseq
  %v3237 = vshrl.u32 %v3236, 7
  %v3238 = vsub.s32 %v3235, %v3237
  %v3239 = vrot.slane %v3232, %v3238
  %v3240 = vcombine.low %v3119, %v3102
  %v3241 = vcombine.low %v3116, %v3118
  %v3242 = vcombine.low %v3120, %v3144
  %v3243 = vcombine.low %v3158, %v3166
  %v3245 = vunpack.c.l.s4 1966171168
  %v3246 = vunpack.c.0.s8 %v3245
  %v3247 = vlaneseq
  %v3248 = vshrl.u32 %v3247, 7
  %v3249 = vsub.s32 %v3246, %v3248
  %v3250 = vrot.slane %v3240, %v3249
  %v3252 = vunpack.c.l.s4 1966171168
  %v3253 = vunpack.c.0.s8 %v3252
  %v3254 = vlaneseq
  %v3255 = vshrl.u32 %v3254, 7
  %v3256 = vsub.s32 %v3253, %v3255
  %v3257 = vrot.slane %v3241, %v3256
  %v3259 = vunpack.c.l.s4 1966171168
  %v3260 = vunpack.c.0.s8 %v3259
  %v3261 = vlaneseq
  %v3262 = vshrl.u32 %v3261, 7
  %v3263 = vsub.s32 %v3260, %v3262
  %v3264 = vrot.slane %v3242, %v3263
  %v3266 = vunpack.c.l.s4 1966171168
  %v3267 = vunpack.c.0.s8 %v3266
  %v3268 = vlaneseq
  %v3269 = vshrl.u32 %v3268, 7
  %v3270 = vsub.s32 %v3267, %v3269
  %v3271 = vrot.slane %v3243, %v3270
  %v3272 = vcombine.low %v3250, %v3257
  %v3273 = vcombine.low %v3264, %v3271
  %v3275 = vunpack.c.l.s4 1966171168
  %v3276 = vunpack.c.0.s8 %v3275
  %v3277 = vlaneseq
  %v3278 = vshrl.u32 %v3277, 7
  %v3279 = vsub.s32 %v3276, %v3278
  %v3280 = vrot.slane %v3272, %v3279
  %v3282 = vunpack.c.l.s4 1966171168
  %v3283 = vunpack.c.0.s8 %v3282
  %v3284 = vlaneseq
  %v3285 = vshrl.u32 %v3284, 7
  %v3286 = vsub.s32 %v3283, %v3285
  %v3287 = vrot.slane %v3273, %v3286
  %v3288 = vcombine.low %v3280, %v3287
  %v3289 = vcombine.low %v3167, %v3151
  %v3291 = vunpack.c.l.s4 1966171168
  %v3292 = vunpack.c.0.s8 %v3291
  %v3293 = vlaneseq
  %v3294 = vshrl.u32 %v3293, 7
  %v3295 = vsub.s32 %v3292, %v3294
  %v3296 = vrot.slane %v3289, %v3295
  %v3298 = vunpack.c.l.s4 1966171168
  %v3299 = vunpack.c.0.s8 %v3298
  %v3300 = vlaneseq
  %v3301 = vshrl.u32 %v3300, 7
  %v3302 = vsub.s32 %v3299, %v3301
  %v3303 = vrot.slane %v3165, %v3302
  %v3304 = vcombine.low %v3296, %v3303
  %v3306 = vunpack.c.l.s4 1966171168
  %v3307 = vunpack.c.0.s8 %v3306
  %v3308 = vlaneseq
  %v3309 = vshrl.u32 %v3308, 7
  %v3310 = vsub.s32 %v3307, %v3309
  %v3311 = vrot.slane %v3304, %v3310
  %v3316 = vadd.f32 %v20, %v3216
  %v3317 = vadd.f32 %v21, %v3239
  %v3318 = vadd.f32 %v22, %v3288
  %v3319 = vadd.f32 %v23, %v3311
  %v3320 = vlaneseq
  %v3321 = vshrl.u32 %v3320, 7
  %v3322 = vsub.s32 0, %v3321
  %v3323 = vrot.slane %v29, %v3322
  %v3324 = vadd.f32 %v3316, %v3323
  %v3325 = vadd.f32 %v3317, %v3323
  %v3326 = vadd.f32 %v3318, %v3323
  %v3327 = vadd.f32 %v3319, %v3323
  %v3328 = vsel %vm52, %v3324, 0.0
  %3329 = vadd.xlane.f32.xlu0 %v3328
  %v3330 = vpop.xlane.xlu0 %3329
  %v3331 = vsel %vm56, %v3325, 0.0
  %3332 = vadd.xlane.f32.xlu0 %v3331
  %v3333 = vpop.xlane.xlu0 %3332
  %v3334 = vsel %vm52, %v3326, 0.0
  %3335 = vadd.xlane.f32.xlu0 %v3334
  %v3336 = vpop.xlane.xlu0 %3335
  %v3337 = vsel %vm56, %v3327, 0.0
  %3338 = vadd.xlane.f32.xlu0 %v3337
  %v3339 = vpop.xlane.xlu0 %3338
  %v3340 = vmul.f32 %v3330, %v66
  %v3341 = vmul.f32 %v3333, %v66
  %v3342 = vmul.f32 %v3336, %v66
  %v3343 = vmul.f32 %v3339, %v66
  %v3344 = vsub.f32 %v3324, %v3340
  %v3345 = vsub.f32 %v3325, %v3341
  %v3346 = vsub.f32 %v3326, %v3342
  %v3347 = vsub.f32 %v3327, %v3343
  %v3348 = vmul.f32 %v3344, %v3344
  %v3349 = vmul.f32 %v3345, %v3345
  %v3350 = vmul.f32 %v3346, %v3346
  %v3351 = vmul.f32 %v3347, %v3347
  %v3352 = vsel %vm52, %v3348, 0.0
  %3353 = vadd.xlane.f32.xlu0 %v3352
  %v3354 = vpop.xlane.xlu0 %3353
  %v3355 = vsel %vm56, %v3349, 0.0
  %3356 = vadd.xlane.f32.xlu0 %v3355
  %v3357 = vpop.xlane.xlu0 %3356
  %v3358 = vsel %vm52, %v3350, 0.0
  %3359 = vadd.xlane.f32.xlu0 %v3358
  %v3360 = vpop.xlane.xlu0 %3359
  %v3361 = vsel %vm56, %v3351, 0.0
  %3362 = vadd.xlane.f32.xlu0 %v3361
  %v3363 = vpop.xlane.xlu0 %3362
  %v3364 = vmul.f32 %v3354, %v66
  %v3365 = vmul.f32 %v3357, %v66
  %v3366 = vmul.f32 %v3360, %v66
  %v3367 = vmul.f32 %v3363, %v66
  %v3368 = vadd.f32 %v3364, 1e-05
  %v3369 = vadd.f32 %v3365, 1e-05
  %v3370 = vadd.f32 %v3366, 1e-05
  %v3371 = vadd.f32 %v3367, 1e-05
  %v3372 = vrsqrt.pop %v3368
  %v3373 = vrsqrt.pop %v3369
  %v3374 = vrsqrt.pop %v3370
  %v3375 = vrsqrt.pop %v3371
  %v3376 = vmul.f32 %v3344, %v3372
  %v3377 = vmul.f32 %v3345, %v3373
  %v3378 = vmul.f32 %v3346, %v3374
  %v3379 = vmul.f32 %v3347, %v3375
  %v3380 = vlaneseq
  %v3381 = vshrl.u32 %v3380, 7
  %v3382 = vsub.s32 0, %v3381
  %v3383 = vrot.slane %v26, %v3382
  %v3384 = vmul.f32 %v3376, %v3383
  %v3385 = vmul.f32 %v3377, %v3383
  %v3386 = vmul.f32 %v3378, %v3383
  %v3387 = vmul.f32 %v3379, %v3383
  %v3388 = vlaneseq
  %v3389 = vshrl.u32 %v3388, 7
  %v3390 = vsub.s32 0, %v3389
  %v3391 = vrot.slane %v27, %v3390
  %v3392 = vadd.f32 %v3384, %v3391
  %v3393 = vadd.f32 %v3385, %v3391
  %v3394 = vadd.f32 %v3386, %v3391
  %v3395 = vadd.f32 %v3387, %v3391
  %v3396 = vlaneseq
  %v3397 = vshrl.u32 %v3396, 7
  %v3398 = vsub.s32 0, %v3397
  %v3399 = vrot.slane %v30, %v3398
  %v3404 = vcombine.high %v3392, %v3392
  %v3406 = vunpack.c.l.s4 1966171168
  %v3407 = vunpack.c.0.s8 %v3406
  %v3408 = vlaneseq
  %v3409 = vshrl.u32 %v3408, 7
  %v3410 = vsub.s32 %v3407, %v3409
  %v3411 = vrot.slane %v3392, %v3410
  %v3413 = vunpack.c.l.s4 1966171168
  %v3414 = vunpack.c.0.s8 %v3413
  %v3415 = vlaneseq
  %v3416 = vshrl.u32 %v3415, 7
  %v3417 = vsub.s32 %v3414, %v3416
  %v3418 = vrot.slane %v3404, %v3417
  %v3419 = vcombine.high %v3411, %v3411
  %v3420 = vcombine.high %v3418, %v3418
  %v3422 = vunpack.c.l.s4 1966171168
  %v3423 = vunpack.c.0.s8 %v3422
  %v3424 = vlaneseq
  %v3425 = vshrl.u32 %v3424, 7
  %v3426 = vsub.s32 %v3423, %v3425
  %v3427 = vrot.slane %v3411, %v3426
  %v3429 = vunpack.c.l.s4 1966171168
  %v3430 = vunpack.c.0.s8 %v3429
  %v3431 = vlaneseq
  %v3432 = vshrl.u32 %v3431, 7
  %v3433 = vsub.s32 %v3430, %v3432
  %v3434 = vrot.slane %v3418, %v3433
  %v3436 = vunpack.c.l.s4 1966171168
  %v3437 = vunpack.c.0.s8 %v3436
  %v3438 = vlaneseq
  %v3439 = vshrl.u32 %v3438, 7
  %v3440 = vsub.s32 %v3437, %v3439
  %v3441 = vrot.slane %v3419, %v3440
  %v3443 = vunpack.c.l.s4 1966171168
  %v3444 = vunpack.c.0.s8 %v3443
  %v3445 = vlaneseq
  %v3446 = vshrl.u32 %v3445, 7
  %v3447 = vsub.s32 %v3444, %v3446
  %v3448 = vrot.slane %v3420, %v3447
  %v3449 = vcombine.high %v3427, %v3427
  %v3450 = vcombine.high %v3434, %v3434
  %v3451 = vcombine.high %v3441, %v3441
  %v3452 = vcombine.high %v3448, %v3448
  %v3454 = vunpack.c.l.s4 1966171168
  %v3455 = vunpack.c.0.s8 %v3454
  %v3456 = vlaneseq
  %v3457 = vshrl.u32 %v3456, 7
  %v3458 = vsub.s32 %v3455, %v3457
  %v3459 = vrot.slane %v3393, %v3458
  %v3460 = vcombine.high %v3459, %v3459
  %v3462 = vunpack.c.l.s4 1966171168
  %v3463 = vunpack.c.0.s8 %v3462
  %v3464 = vlaneseq
  %v3465 = vshrl.u32 %v3464, 7
  %v3466 = vsub.s32 %v3463, %v3465
  %v3467 = vrot.slane %v3459, %v3466
  %v3469 = vunpack.c.l.s4 1966171168
  %v3470 = vunpack.c.0.s8 %v3469
  %v3471 = vlaneseq
  %v3472 = vshrl.u32 %v3471, 7
  %v3473 = vsub.s32 %v3470, %v3472
  %v3474 = vrot.slane %v3460, %v3473
  %v3475 = vcombine.high %v3467, %v3467
  %v3476 = vcombine.high %v3394, %v3394
  %v3478 = vunpack.c.l.s4 1966171168
  %v3479 = vunpack.c.0.s8 %v3478
  %v3480 = vlaneseq
  %v3481 = vshrl.u32 %v3480, 7
  %v3482 = vsub.s32 %v3479, %v3481
  %v3483 = vrot.slane %v3394, %v3482
  %v3485 = vunpack.c.l.s4 1966171168
  %v3486 = vunpack.c.0.s8 %v3485
  %v3487 = vlaneseq
  %v3488 = vshrl.u32 %v3487, 7
  %v3489 = vsub.s32 %v3486, %v3488
  %v3490 = vrot.slane %v3476, %v3489
  %v3491 = vcombine.high %v3483, %v3483
  %v3492 = vcombine.high %v3490, %v3490
  %v3494 = vunpack.c.l.s4 1966171168
  %v3495 = vunpack.c.0.s8 %v3494
  %v3496 = vlaneseq
  %v3497 = vshrl.u32 %v3496, 7
  %v3498 = vsub.s32 %v3495, %v3497
  %v3499 = vrot.slane %v3483, %v3498
  %v3501 = vunpack.c.l.s4 1966171168
  %v3502 = vunpack.c.0.s8 %v3501
  %v3503 = vlaneseq
  %v3504 = vshrl.u32 %v3503, 7
  %v3505 = vsub.s32 %v3502, %v3504
  %v3506 = vrot.slane %v3490, %v3505
  %v3508 = vunpack.c.l.s4 1966171168
  %v3509 = vunpack.c.0.s8 %v3508
  %v3510 = vlaneseq
  %v3511 = vshrl.u32 %v3510, 7
  %v3512 = vsub.s32 %v3509, %v3511
  %v3513 = vrot.slane %v3491, %v3512
  %v3515 = vunpack.c.l.s4 1966171168
  %v3516 = vunpack.c.0.s8 %v3515
  %v3517 = vlaneseq
  %v3518 = vshrl.u32 %v3517, 7
  %v3519 = vsub.s32 %v3516, %v3518
  %v3520 = vrot.slane %v3492, %v3519
  %v3521 = vcombine.high %v3499, %v3499
  %v3522 = vcombine.high %v3506, %v3506
  %v3523 = vcombine.high %v3513, %v3513
  %v3524 = vcombine.high %v3520, %v3520
  %v3526 = vunpack.c.l.s4 1966171168
  %v3527 = vunpack.c.0.s8 %v3526
  %v3528 = vlaneseq
  %v3529 = vshrl.u32 %v3528, 7
  %v3530 = vsub.s32 %v3527, %v3529
  %v3531 = vrot.slane %v3395, %v3530
  %v3532 = vcombine.high %v3531, %v3531
  %v3534 = vunpack.c.l.s4 1966171168
  %v3535 = vunpack.c.0.s8 %v3534
  %v3536 = vlaneseq
  %v3537 = vshrl.u32 %v3536, 7
  %v3538 = vsub.s32 %v3535, %v3537
  %v3539 = vrot.slane %v3531, %v3538
  %v3541 = vunpack.c.l.s4 1966171168
  %v3542 = vunpack.c.0.s8 %v3541
  %v3543 = vlaneseq
  %v3544 = vshrl.u32 %v3543, 7
  %v3545 = vsub.s32 %v3542, %v3544
  %v3546 = vrot.slane %v3532, %v3545
  %v3547 = vcombine.high %v3539, %v3539
  %v3549 = vcombine.high %v3399, %v3399
  %v3551 = vunpack.c.l.s4 1966171168
  %v3552 = vunpack.c.0.s8 %v3551
  %v3553 = vlaneseq
  %v3554 = vshrl.u32 %v3553, 7
  %v3555 = vsub.s32 %v3552, %v3554
  %v3556 = vrot.slane %v3399, %v3555
  %v3558 = vunpack.c.l.s4 1966171168
  %v3559 = vunpack.c.0.s8 %v3558
  %v3560 = vlaneseq
  %v3561 = vshrl.u32 %v3560, 7
  %v3562 = vsub.s32 %v3559, %v3561
  %v3563 = vrot.slane %v3549, %v3562
  %v3564 = vcombine.high %v3556, %v3556
  %v3565 = vcombine.high %v3563, %v3563
  %v3567 = vunpack.c.l.s4 1966171168
  %v3568 = vunpack.c.0.s8 %v3567
  %v3569 = vlaneseq
  %v3570 = vshrl.u32 %v3569, 7
  %v3571 = vsub.s32 %v3568, %v3570
  %v3572 = vrot.slane %v3556, %v3571
  %v3574 = vunpack.c.l.s4 1966171168
  %v3575 = vunpack.c.0.s8 %v3574
  %v3576 = vlaneseq
  %v3577 = vshrl.u32 %v3576, 7
  %v3578 = vsub.s32 %v3575, %v3577
  %v3579 = vrot.slane %v3563, %v3578
  %v3581 = vunpack.c.l.s4 1966171168
  %v3582 = vunpack.c.0.s8 %v3581
  %v3583 = vlaneseq
  %v3584 = vshrl.u32 %v3583, 7
  %v3585 = vsub.s32 %v3582, %v3584
  %v3586 = vrot.slane %v3564, %v3585
  %v3588 = vunpack.c.l.s4 1966171168
  %v3589 = vunpack.c.0.s8 %v3588
  %v3590 = vlaneseq
  %v3591 = vshrl.u32 %v3590, 7
  %v3592 = vsub.s32 %v3589, %v3591
  %v3593 = vrot.slane %v3565, %v3592
  %v3594 = vcombine.high %v3572, %v3572
  %v3595 = vcombine.high %v3579, %v3579
  %v3596 = vcombine.high %v3586, %v3586
  %v3597 = vcombine.high %v3593, %v3593
  %v3598 = vcombine.low %v3427, %v3441
  %v3599 = vcombine.low %v3449, %v3451
  %v3600 = vcombine.low %v3434, %v3448
  %v3601 = vcombine.low %v3450, %v3452
  %v3603 = vunpack.c.l.s4 1966171168
  %v3604 = vunpack.c.0.s8 %v3603
  %v3605 = vlaneseq
  %v3606 = vshrl.u32 %v3605, 7
  %v3607 = vsub.s32 %v3604, %v3606
  %v3608 = vrot.slane %v3598, %v3607
  %v3610 = vunpack.c.l.s4 1966171168
  %v3611 = vunpack.c.0.s8 %v3610
  %v3612 = vlaneseq
  %v3613 = vshrl.u32 %v3612, 7
  %v3614 = vsub.s32 %v3611, %v3613
  %v3615 = vrot.slane %v3599, %v3614
  %v3617 = vunpack.c.l.s4 1966171168
  %v3618 = vunpack.c.0.s8 %v3617
  %v3619 = vlaneseq
  %v3620 = vshrl.u32 %v3619, 7
  %v3621 = vsub.s32 %v3618, %v3620
  %v3622 = vrot.slane %v3600, %v3621
  %v3624 = vunpack.c.l.s4 1966171168
  %v3625 = vunpack.c.0.s8 %v3624
  %v3626 = vlaneseq
  %v3627 = vshrl.u32 %v3626, 7
  %v3628 = vsub.s32 %v3625, %v3627
  %v3629 = vrot.slane %v3601, %v3628
  %v3630 = vcombine.low %v3608, %v3615
  %v3631 = vcombine.low %v3622, %v3629
  %v3633 = vunpack.c.l.s4 1966171168
  %v3634 = vunpack.c.0.s8 %v3633
  %v3635 = vlaneseq
  %v3636 = vshrl.u32 %v3635, 7
  %v3637 = vsub.s32 %v3634, %v3636
  %v3638 = vrot.slane %v3630, %v3637
  %v3640 = vunpack.c.l.s4 1966171168
  %v3641 = vunpack.c.0.s8 %v3640
  %v3642 = vlaneseq
  %v3643 = vshrl.u32 %v3642, 7
  %v3644 = vsub.s32 %v3641, %v3643
  %v3645 = vrot.slane %v3631, %v3644
  %v3646 = vcombine.low %v3638, %v3645
  %v3647 = vcombine.low %v3467, %v3474
  %v3648 = vcombine.low %v3475, %v3499
  %v3649 = vcombine.low %v3513, %v3521
  %v3650 = vcombine.low %v3523, %v3506
  %v3652 = vunpack.c.l.s4 1966171168
  %v3653 = vunpack.c.0.s8 %v3652
  %v3654 = vlaneseq
  %v3655 = vshrl.u32 %v3654, 7
  %v3656 = vsub.s32 %v3653, %v3655
  %v3657 = vrot.slane %v3647, %v3656
  %v3659 = vunpack.c.l.s4 1966171168
  %v3660 = vunpack.c.0.s8 %v3659
  %v3661 = vlaneseq
  %v3662 = vshrl.u32 %v3661, 7
  %v3663 = vsub.s32 %v3660, %v3662
  %v3664 = vrot.slane %v3648, %v3663
  %v3666 = vunpack.c.l.s4 1966171168
  %v3667 = vunpack.c.0.s8 %v3666
  %v3668 = vlaneseq
  %v3669 = vshrl.u32 %v3668, 7
  %v3670 = vsub.s32 %v3667, %v3669
  %v3671 = vrot.slane %v3649, %v3670
  %v3673 = vunpack.c.l.s4 1966171168
  %v3674 = vunpack.c.0.s8 %v3673
  %v3675 = vlaneseq
  %v3676 = vshrl.u32 %v3675, 7
  %v3677 = vsub.s32 %v3674, %v3676
  %v3678 = vrot.slane %v3650, %v3677
  %v3679 = vcombine.low %v3657, %v3664
  %v3680 = vcombine.low %v3671, %v3678
  %v3682 = vunpack.c.l.s4 1966171168
  %v3683 = vunpack.c.0.s8 %v3682
  %v3684 = vlaneseq
  %v3685 = vshrl.u32 %v3684, 7
  %v3686 = vsub.s32 %v3683, %v3685
  %v3687 = vrot.slane %v3679, %v3686
  %v3689 = vunpack.c.l.s4 1966171168
  %v3690 = vunpack.c.0.s8 %v3689
  %v3691 = vlaneseq
  %v3692 = vshrl.u32 %v3691, 7
  %v3693 = vsub.s32 %v3690, %v3692
  %v3694 = vrot.slane %v3680, %v3693
  %v3695 = vcombine.low %v3687, %v3694
  %v3696 = vcombine.low %v3520, %v3522
  %v3697 = vcombine.low %v3524, %v3539
  %v3698 = vcombine.low %v3546, %v3547
  %v3700 = vunpack.c.l.s4 1966171168
  %v3701 = vunpack.c.0.s8 %v3700
  %v3702 = vlaneseq
  %v3703 = vshrl.u32 %v3702, 7
  %v3704 = vsub.s32 %v3701, %v3703
  %v3705 = vrot.slane %v3696, %v3704
  %v3707 = vunpack.c.l.s4 1966171168
  %v3708 = vunpack.c.0.s8 %v3707
  %v3709 = vlaneseq
  %v3710 = vshrl.u32 %v3709, 7
  %v3711 = vsub.s32 %v3708, %v3710
  %v3712 = vrot.slane %v3697, %v3711
  %v3714 = vunpack.c.l.s4 1966171168
  %v3715 = vunpack.c.0.s8 %v3714
  %v3716 = vlaneseq
  %v3717 = vshrl.u32 %v3716, 7
  %v3718 = vsub.s32 %v3715, %v3717
  %v3719 = vrot.slane %v3698, %v3718
  %v3720 = vcombine.low %v3705, %v3712
  %v3722 = vunpack.c.l.s4 1966171168
  %v3723 = vunpack.c.0.s8 %v3722
  %v3724 = vlaneseq
  %v3725 = vshrl.u32 %v3724, 7
  %v3726 = vsub.s32 %v3723, %v3725
  %v3727 = vrot.slane %v3720, %v3726
  %v3729 = vunpack.c.l.s4 1966171168
  %v3730 = vunpack.c.0.s8 %v3729
  %v3731 = vlaneseq
  %v3732 = vshrl.u32 %v3731, 7
  %v3733 = vsub.s32 %v3730, %v3732
  %v3734 = vrot.slane %v3719, %v3733
  %v3735 = vcombine.low %v3727, %v3734
  %v3736 = vcombine.low %v3572, %v3586
  %v3737 = vcombine.low %v3594, %v3596
  %v3738 = vcombine.low %v3579, %v3593
  %v3739 = vcombine.low %v3595, %v3597
  %v3741 = vunpack.c.l.s4 1966171168
  %v3742 = vunpack.c.0.s8 %v3741
  %v3743 = vlaneseq
  %v3744 = vshrl.u32 %v3743, 7
  %v3745 = vsub.s32 %v3742, %v3744
  %v3746 = vrot.slane %v3736, %v3745
  %v3748 = vunpack.c.l.s4 1966171168
  %v3749 = vunpack.c.0.s8 %v3748
  %v3750 = vlaneseq
  %v3751 = vshrl.u32 %v3750, 7
  %v3752 = vsub.s32 %v3749, %v3751
  %v3753 = vrot.slane %v3737, %v3752
  %v3755 = vunpack.c.l.s4 1966171168
  %v3756 = vunpack.c.0.s8 %v3755
  %v3757 = vlaneseq
  %v3758 = vshrl.u32 %v3757, 7
  %v3759 = vsub.s32 %v3756, %v3758
  %v3760 = vrot.slane %v3738, %v3759
  %v3762 = vunpack.c.l.s4 1966171168
  %v3763 = vunpack.c.0.s8 %v3762
  %v3764 = vlaneseq
  %v3765 = vshrl.u32 %v3764, 7
  %v3766 = vsub.s32 %v3763, %v3765
  %v3767 = vrot.slane %v3739, %v3766
  %v3768 = vcombine.low %v3746, %v3753
  %v3769 = vcombine.low %v3760, %v3767
  %v3771 = vunpack.c.l.s4 1966171168
  %v3772 = vunpack.c.0.s8 %v3771
  %v3773 = vlaneseq
  %v3774 = vshrl.u32 %v3773, 7
  %v3775 = vsub.s32 %v3772, %v3774
  %v3776 = vrot.slane %v3768, %v3775
  %v3778 = vunpack.c.l.s4 1966171168
  %v3779 = vunpack.c.0.s8 %v3778
  %v3780 = vlaneseq
  %v3781 = vshrl.u32 %v3780, 7
  %v3782 = vsub.s32 %v3779, %v3781
  %v3783 = vrot.slane %v3769, %v3782
  %v3784 = vcombine.low %v3776, %v3783
  %v3785 = vcombine.low %v3594, %v3572
  %v3786 = vcombine.low %v3586, %v3594
  %v3787 = vcombine.low %v3596, %v3579
  %v3789 = vunpack.c.l.s4 1966171168
  %v3790 = vunpack.c.0.s8 %v3789
  %v3791 = vlaneseq
  %v3792 = vshrl.u32 %v3791, 7
  %v3793 = vsub.s32 %v3790, %v3792
  %v3794 = vrot.slane %v3785, %v3793
  %v3796 = vunpack.c.l.s4 1966171168
  %v3797 = vunpack.c.0.s8 %v3796
  %v3798 = vlaneseq
  %v3799 = vshrl.u32 %v3798, 7
  %v3800 = vsub.s32 %v3797, %v3799
  %v3801 = vrot.slane %v3786, %v3800
  %v3803 = vunpack.c.l.s4 1966171168
  %v3804 = vunpack.c.0.s8 %v3803
  %v3805 = vlaneseq
  %v3806 = vshrl.u32 %v3805, 7
  %v3807 = vsub.s32 %v3804, %v3806
  %v3808 = vrot.slane %v3787, %v3807
  %v3809 = vcombine.low %v3746, %v3794
  %v3810 = vcombine.low %v3801, %v3808
  %v3812 = vunpack.c.l.s4 1966171168
  %v3813 = vunpack.c.0.s8 %v3812
  %v3814 = vlaneseq
  %v3815 = vshrl.u32 %v3814, 7
  %v3816 = vsub.s32 %v3813, %v3815
  %v3817 = vrot.slane %v3809, %v3816
  %v3819 = vunpack.c.l.s4 1966171168
  %v3820 = vunpack.c.0.s8 %v3819
  %v3821 = vlaneseq
  %v3822 = vshrl.u32 %v3821, 7
  %v3823 = vsub.s32 %v3820, %v3822
  %v3824 = vrot.slane %v3810, %v3823
  %v3825 = vcombine.low %v3817, %v3824
  %v3826 = vcombine.low %v3593, %v3595
  %v3827 = vcombine.low %v3597, %v3572
  %v3829 = vunpack.c.l.s4 1966171168
  %v3830 = vunpack.c.0.s8 %v3829
  %v3831 = vlaneseq
  %v3832 = vshrl.u32 %v3831, 7
  %v3833 = vsub.s32 %v3830, %v3832
  %v3834 = vrot.slane %v3826, %v3833
  %v3836 = vunpack.c.l.s4 1966171168
  %v3837 = vunpack.c.0.s8 %v3836
  %v3838 = vlaneseq
  %v3839 = vshrl.u32 %v3838, 7
  %v3840 = vsub.s32 %v3837, %v3839
  %v3841 = vrot.slane %v3827, %v3840
  %v3842 = vcombine.low %v3834, %v3841
  %v3844 = vunpack.c.l.s4 1966171168
  %v3845 = vunpack.c.0.s8 %v3844
  %v3846 = vlaneseq
  %v3847 = vshrl.u32 %v3846, 7
  %v3848 = vsub.s32 %v3845, %v3847
  %v3849 = vrot.slane %v3842, %v3848
  %v3851 = vunpack.c.l.s4 1966171168
  %v3852 = vunpack.c.0.s8 %v3851
  %v3853 = vlaneseq
  %v3854 = vshrl.u32 %v3853, 7
  %v3855 = vsub.s32 %v3852, %v3854
  %v3856 = vrot.slane %v3801, %v3855
  %v3857 = vcombine.low %v3849, %v3856
  %v3861 = vsel %vm52, %v3646, 0
  %v3863 = vsel %vm52, %v3695, 0
  %v3865 = vsel %vm52, %v3735, 0
  %3867 = vmatprep.subr.mxu0 0.0
  %3868 = vmatpush1.msra.mxu0 %v40
  %3869 = vmatprep.subr.mxu0 0.0
  %3870 = vmatpush1.msra.mxu0 %v41
  %3871 = vmatprep.subr.mxu0 0.0
  %3872 = vmatpush1.msra.mxu0 %v42
  %3873 = vmatprep.subr.mxu0 0.0
  %3874 = vmatpush1.msra.mxu0 %v43
  %3875 = vmatprep.subr.mxu0 0.0
  %3876 = vmatpush1.msra.mxu0 0.0
  %3877 = vmatprep.subr.mxu0 0.0
  %3878 = vmatpush1.msra.mxu0 0.0
  %3879 = vmatprep.subr.mxu0 0.0
  %3880 = vmatpush1.msra.mxu0 0.0
  %3881 = vmatprep.subr.mxu0 0.0
  %3882 = vmatpush1.msra.mxu0 0.0
  %3883 = vmatprep.subr.mxu0 0.0
  %3884 = vmatpush1.msra.mxu0 0.0
  %3885 = vmatprep.subr.mxu0 0.0
  %3886 = vmatpush1.msra.mxu0 0.0
  %3887 = vmatprep.subr.mxu0 0.0
  %3888 = vmatpush1.msra.mxu0 0.0
  %3889 = vmatprep.subr.mxu0 0.0
  %3890 = vmatpush1.msra.mxu0 0.0
  %3891 = vmatprep.subr.mxu0 0.0
  %3892 = vmatpush1.msra.mxu0 0.0
  %3893 = vmatprep.subr.mxu0 0.0
  %3894 = vmatpush1.msra.mxu0 0.0
  %3895 = vmatprep.subr.mxu0 0.0
  %3896 = vmatpush1.msra.mxu0 0.0
  %3897 = vmatprep.subr.mxu0 0.0
  %3898 = vmatpush1.msra.mxu0 0.0
  %3899 = vmatprep.subr.mxu0 0.0
  %3900 = vmatpush1.msra.mxu0 0.0
  %3901 = vmatprep.subr.mxu0 0.0
  %3902 = vmatpush1.msra.mxu0 0.0
  %3903 = vmatprep.subr.mxu0 0.0
  %3904 = vmatpush1.msra.mxu0 0.0
  %3905 = vmatprep.subr.mxu0 0.0
  %3906 = vmatpush1.msra.mxu0 0.0
  %3907 = vmatprep.subr.mxu0 0.0
  %3908 = vmatpush1.msra.mxu0 0.0
  %3909 = vmatprep.subr.mxu0 0.0
  %3910 = vmatpush1.msra.mxu0 0.0
  %3911 = vmatprep.subr.mxu0 0.0
  %3912 = vmatpush1.msra.mxu0 0.0
  %3913 = vmatprep.subr.mxu0 0.0
  %3914 = vmatpush1.msra.mxu0 0.0
  %3915 = vmatprep.subr.mxu0 0.0
  %3916 = vmatpush1.msra.mxu0 0.0
  %3917 = vmatprep.subr.mxu0 0.0
  %3918 = vmatpush1.msra.mxu0 0.0
  %3919 = vmatprep.subr.mxu0 0.0
  %3920 = vmatpush1.msra.mxu0 0.0
  %3921 = vmatprep.subr.mxu0 0.0
  %3922 = vmatpush1.msra.mxu0 0.0
  %3923 = vmatprep.subr.mxu0 0.0
  %3924 = vmatpush1.msra.mxu0 0.0
  %3925 = vmatprep.subr.mxu0 0.0
  %3926 = vmatpush1.msra.mxu0 0.0
  %3927 = vmatprep.subr.mxu0 0.0
  %3928 = vmatpush1.msra.mxu0 0.0
  %3929 = vmatprep.subr.mxu0 0.0
  %3930 = vmatpush1.msra.mxu0 0.0
  %3931 = vmatprep.mubr.f32.mxu0 0.0
  %3932 = vmatmul.mubr.f32.gmra.mrb[0].mxu0 %v3861
  %v3933 = vpop.f32.mrb[0].mxu0
  %v3934 = vadd.f32 %v3784, %v3933
  %v3935 = vpop.f32.mrb[0].mxu0
  %3936 = vmatprep.mubr.f32.mxu0 0.0
  %3937 = vmatmul.mubr.f32.gmra.mrb[0].mxu0 %v3863
  %v3938 = vpop.f32.mrb[0].mxu0
  %v3939 = vadd.f32 %v3825, %v3938
  %v3940 = vpop.f32.mrb[0].mxu0
  %3941 = vmatprep.mubr.f32.mxu0 0.0
  %3942 = vmatmul.mubr.f32.gmra.mrb[0].mxu0 %v3865
  %v3943 = vpop.f32.mrb[0].mxu0
  %v3944 = vadd.f32 %v3857, %v3943
  %v3945 = vpop.f32.mrb[0].mxu0
  %3946 = vdwg.mxu0
  %v3950 = vcombine.high %v3934, %v3934
  %v3952 = vunpack.c.l.s4 1966171168
  %v3953 = vunpack.c.0.s8 %v3952
  %v3954 = vlaneseq
  %v3955 = vshrl.u32 %v3954, 7
  %v3956 = vsub.s32 %v3953, %v3955
  %v3957 = vrot.slane %v3934, %v3956
  %v3959 = vunpack.c.l.s4 1966171168
  %v3960 = vunpack.c.0.s8 %v3959
  %v3961 = vlaneseq
  %v3962 = vshrl.u32 %v3961, 7
  %v3963 = vsub.s32 %v3960, %v3962
  %v3964 = vrot.slane %v3950, %v3963
  %v3965 = vcombine.high %v3957, %v3957
  %v3966 = vcombine.high %v3964, %v3964
  %v3968 = vunpack.c.l.s4 1966171168
  %v3969 = vunpack.c.0.s8 %v3968
  %v3970 = vlaneseq
  %v3971 = vshrl.u32 %v3970, 7
  %v3972 = vsub.s32 %v3969, %v3971
  %v3973 = vrot.slane %v3957, %v3972
  %v3975 = vunpack.c.l.s4 1966171168
  %v3976 = vunpack.c.0.s8 %v3975
  %v3977 = vlaneseq
  %v3978 = vshrl.u32 %v3977, 7
  %v3979 = vsub.s32 %v3976, %v3978
  %v3980 = vrot.slane %v3964, %v3979
  %v3982 = vunpack.c.l.s4 1966171168
  %v3983 = vunpack.c.0.s8 %v3982
  %v3984 = vlaneseq
  %v3985 = vshrl.u32 %v3984, 7
  %v3986 = vsub.s32 %v3983, %v3985
  %v3987 = vrot.slane %v3965, %v3986
  %v3989 = vunpack.c.l.s4 1966171168
  %v3990 = vunpack.c.0.s8 %v3989
  %v3991 = vlaneseq
  %v3992 = vshrl.u32 %v3991, 7
  %v3993 = vsub.s32 %v3990, %v3992
  %v3994 = vrot.slane %v3966, %v3993
  %v3995 = vcombine.high %v3973, %v3973
  %v3996 = vcombine.high %v3980, %v3980
  %v3997 = vcombine.high %v3987, %v3987
  %v3998 = vcombine.high %v3994, %v3994
  %v3999 = vcombine.high %v3939, %v3939
  %v4001 = vunpack.c.l.s4 1966171168
  %v4002 = vunpack.c.0.s8 %v4001
  %v4003 = vlaneseq
  %v4004 = vshrl.u32 %v4003, 7
  %v4005 = vsub.s32 %v4002, %v4004
  %v4006 = vrot.slane %v3939, %v4005
  %v4008 = vunpack.c.l.s4 1966171168
  %v4009 = vunpack.c.0.s8 %v4008
  %v4010 = vlaneseq
  %v4011 = vshrl.u32 %v4010, 7
  %v4012 = vsub.s32 %v4009, %v4011
  %v4013 = vrot.slane %v3999, %v4012
  %v4014 = vcombine.high %v4006, %v4006
  %v4015 = vcombine.high %v4013, %v4013
  %v4017 = vunpack.c.l.s4 1966171168
  %v4018 = vunpack.c.0.s8 %v4017
  %v4019 = vlaneseq
  %v4020 = vshrl.u32 %v4019, 7
  %v4021 = vsub.s32 %v4018, %v4020
  %v4022 = vrot.slane %v4006, %v4021
  %v4024 = vunpack.c.l.s4 1966171168
  %v4025 = vunpack.c.0.s8 %v4024
  %v4026 = vlaneseq
  %v4027 = vshrl.u32 %v4026, 7
  %v4028 = vsub.s32 %v4025, %v4027
  %v4029 = vrot.slane %v4013, %v4028
  %v4031 = vunpack.c.l.s4 1966171168
  %v4032 = vunpack.c.0.s8 %v4031
  %v4033 = vlaneseq
  %v4034 = vshrl.u32 %v4033, 7
  %v4035 = vsub.s32 %v4032, %v4034
  %v4036 = vrot.slane %v4014, %v4035
  %v4038 = vunpack.c.l.s4 1966171168
  %v4039 = vunpack.c.0.s8 %v4038
  %v4040 = vlaneseq
  %v4041 = vshrl.u32 %v4040, 7
  %v4042 = vsub.s32 %v4039, %v4041
  %v4043 = vrot.slane %v4015, %v4042
  %v4044 = vcombine.high %v4022, %v4022
  %v4045 = vcombine.high %v4029, %v4029
  %v4046 = vcombine.high %v4036, %v4036
  %v4047 = vcombine.high %v4043, %v4043
  %v4048 = vcombine.high %v3944, %v3944
  %v4050 = vunpack.c.l.s4 1966171168
  %v4051 = vunpack.c.0.s8 %v4050
  %v4052 = vlaneseq
  %v4053 = vshrl.u32 %v4052, 7
  %v4054 = vsub.s32 %v4051, %v4053
  %v4055 = vrot.slane %v3944, %v4054
  %v4057 = vunpack.c.l.s4 1966171168
  %v4058 = vunpack.c.0.s8 %v4057
  %v4059 = vlaneseq
  %v4060 = vshrl.u32 %v4059, 7
  %v4061 = vsub.s32 %v4058, %v4060
  %v4062 = vrot.slane %v4048, %v4061
  %v4063 = vcombine.high %v4055, %v4055
  %v4064 = vcombine.high %v4062, %v4062
  %v4066 = vunpack.c.l.s4 1966171168
  %v4067 = vunpack.c.0.s8 %v4066
  %v4068 = vlaneseq
  %v4069 = vshrl.u32 %v4068, 7
  %v4070 = vsub.s32 %v4067, %v4069
  %v4071 = vrot.slane %v4055, %v4070
  %v4073 = vunpack.c.l.s4 1966171168
  %v4074 = vunpack.c.0.s8 %v4073
  %v4075 = vlaneseq
  %v4076 = vshrl.u32 %v4075, 7
  %v4077 = vsub.s32 %v4074, %v4076
  %v4078 = vrot.slane %v4062, %v4077
  %v4080 = vunpack.c.l.s4 1966171168
  %v4081 = vunpack.c.0.s8 %v4080
  %v4082 = vlaneseq
  %v4083 = vshrl.u32 %v4082, 7
  %v4084 = vsub.s32 %v4081, %v4083
  %v4085 = vrot.slane %v4063, %v4084
  %v4087 = vunpack.c.l.s4 1966171168
  %v4088 = vunpack.c.0.s8 %v4087
  %v4089 = vlaneseq
  %v4090 = vshrl.u32 %v4089, 7
  %v4091 = vsub.s32 %v4088, %v4090
  %v4092 = vrot.slane %v4064, %v4091
  %v4093 = vcombine.high %v4071, %v4071
  %v4094 = vcombine.high %v4085, %v4085
  %v4117 = vmul.f32 %v3973, 0.5
  %v4118 = vmul.f32 %v3987, 0.5
  %v4119 = vmul.f32 %v3995, 0.5
  %v4120 = vmul.f32 %v3997, 0.5
  %v4121 = vmul.f32 %v3980, 0.5
  %v4122 = vmul.f32 %v3994, 0.5
  %v4123 = vmul.f32 %v3996, 0.5
  %v4124 = vmul.f32 %v3998, 0.5
  %v4125 = vmul.f32 %v4022, 0.5
  %v4126 = vmul.f32 %v4036, 0.5
  %v4127 = vmul.f32 %v4044, 0.5
  %v4128 = vmul.f32 %v4046, 0.5
  %v4129 = vmul.f32 %v4029, 0.5
  %v4130 = vmul.f32 %v4043, 0.5
  %v4131 = vmul.f32 %v4045, 0.5
  %v4132 = vmul.f32 %v4047, 0.5
  %v4133 = vmul.f32 %v4071, 0.5
  %v4134 = vmul.f32 %v4085, 0.5
  %v4135 = vmul.f32 %v4093, 0.5
  %v4136 = vmul.f32 %v4094, 0.5
  %v4137 = vmul.f32 %v4078, 0.5
  %v4138 = vmul.f32 %v4092, 0.5
  %v4139 = vrcp.pop 1.4142135
  %v4140 = vmul.f32 %v3973, %v4139
  %v4141 = vmul.f32 %v3987, %v4139
  %v4142 = vmul.f32 %v3995, %v4139
  %v4143 = vmul.f32 %v3997, %v4139
  %v4144 = vmul.f32 %v3980, %v4139
  %v4145 = vmul.f32 %v3994, %v4139
  %v4146 = vmul.f32 %v3996, %v4139
  %v4147 = vmul.f32 %v3998, %v4139
  %v4148 = vmul.f32 %v4022, %v4139
  %v4149 = vmul.f32 %v4036, %v4139
  %v4150 = vmul.f32 %v4044, %v4139
  %v4151 = vmul.f32 %v4046, %v4139
  %v4152 = vmul.f32 %v4029, %v4139
  %v4153 = vmul.f32 %v4043, %v4139
  %v4154 = vmul.f32 %v4045, %v4139
  %v4155 = vmul.f32 %v4047, %v4139
  %v4156 = vmul.f32 %v4071, %v4139
  %v4157 = vmul.f32 %v4085, %v4139
  %v4158 = vmul.f32 %v4093, %v4139
  %v4159 = vmul.f32 %v4094, %v4139
  %v4160 = vmul.f32 %v4078, %v4139
  %v4161 = vmul.f32 %v4092, %v4139
  %v4162 = verf.f32.pop %v4140
  %v4163 = verf.f32.pop %v4141
  %v4164 = verf.f32.pop %v4142
  %v4165 = verf.f32.pop %v4143
  %v4166 = verf.f32.pop %v4144
  %v4167 = verf.f32.pop %v4145
  %v4168 = verf.f32.pop %v4146
  %v4169 = verf.f32.pop %v4147
  %v4170 = verf.f32.pop %v4148
  %v4171 = verf.f32.pop %v4149
  %v4172 = verf.f32.pop %v4150
  %v4173 = verf.f32.pop %v4151
  %v4174 = verf.f32.pop %v4152
  %v4175 = verf.f32.pop %v4153
  %v4176 = verf.f32.pop %v4154
  %v4177 = verf.f32.pop %v4155
  %v4178 = verf.f32.pop %v4156
  %v4179 = verf.f32.pop %v4157
  %v4180 = verf.f32.pop %v4158
  %v4181 = verf.f32.pop %v4159
  %v4182 = verf.f32.pop %v4160
  %v4183 = verf.f32.pop %v4161
  %v4184 = vadd.f32 %v4162, 1.0
  %v4185 = vadd.f32 %v4163, 1.0
  %v4186 = vadd.f32 %v4164, 1.0
  %v4187 = vadd.f32 %v4165, 1.0
  %v4188 = vadd.f32 %v4166, 1.0
  %v4189 = vadd.f32 %v4167, 1.0
  %v4190 = vadd.f32 %v4168, 1.0
  %v4191 = vadd.f32 %v4169, 1.0
  %v4192 = vadd.f32 %v4170, 1.0
  %v4193 = vadd.f32 %v4171, 1.0
  %v4194 = vadd.f32 %v4172, 1.0
  %v4195 = vadd.f32 %v4173, 1.0
  %v4196 = vadd.f32 %v4174, 1.0
  %v4197 = vadd.f32 %v4175, 1.0
  %v4198 = vadd.f32 %v4176, 1.0
  %v4199 = vadd.f32 %v4177, 1.0
  %v4200 = vadd.f32 %v4178, 1.0
  %v4201 = vadd.f32 %v4179, 1.0
  %v4202 = vadd.f32 %v4180, 1.0
  %v4203 = vadd.f32 %v4181, 1.0
  %v4204 = vadd.f32 %v4182, 1.0
  %v4205 = vadd.f32 %v4183, 1.0
  %v4206 = vmul.f32 %v4117, %v4184
  %v4207 = vmul.f32 %v4118, %v4185
  %v4208 = vmul.f32 %v4119, %v4186
  %v4209 = vmul.f32 %v4120, %v4187
  %v4210 = vmul.f32 %v4121, %v4188
  %v4211 = vmul.f32 %v4122, %v4189
  %v4212 = vmul.f32 %v4123, %v4190
  %v4213 = vmul.f32 %v4124, %v4191
  %v4214 = vmul.f32 %v4125, %v4192
  %v4215 = vmul.f32 %v4126, %v4193
  %v4216 = vmul.f32 %v4127, %v4194
  %v4217 = vmul.f32 %v4128, %v4195
  %v4218 = vmul.f32 %v4129, %v4196
  %v4219 = vmul.f32 %v4130, %v4197
  %v4220 = vmul.f32 %v4131, %v4198
  %v4221 = vmul.f32 %v4132, %v4199
  %v4222 = vmul.f32 %v4133, %v4200
  %v4223 = vmul.f32 %v4134, %v4201
  %v4224 = vmul.f32 %v4135, %v4202
  %v4225 = vmul.f32 %v4136, %v4203
  %v4226 = vmul.f32 %v4137, %v4204
  %v4227 = vmul.f32 %v4138, %v4205
  %v4250 = vcombine.low %v4206, %v4207
  %v4251 = vcombine.low %v4208, %v4209
  %v4252 = vcombine.low %v4210, %v4211
  %v4253 = vcombine.low %v4212, %v4213
  %v4255 = vunpack.c.l.s4 1966171168
  %v4256 = vunpack.c.0.s8 %v4255
  %v4257 = vlaneseq
  %v4258 = vshrl.u32 %v4257, 7
  %v4259 = vsub.s32 %v4256, %v4258
  %v4260 = vrot.slane %v4250, %v4259
  %v4262 = vunpack.c.l.s4 1966171168
  %v4263 = vunpack.c.0.s8 %v4262
  %v4264 = vlaneseq
  %v4265 = vshrl.u32 %v4264, 7
  %v4266 = vsub.s32 %v4263, %v4265
  %v4267 = vrot.slane %v4251, %v4266
  %v4269 = vunpack.c.l.s4 1966171168
  %v4270 = vunpack.c.0.s8 %v4269
  %v4271 = vlaneseq
  %v4272 = vshrl.u32 %v4271, 7
  %v4273 = vsub.s32 %v4270, %v4272
  %v4274 = vrot.slane %v4252, %v4273
  %v4276 = vunpack.c.l.s4 1966171168
  %v4277 = vunpack.c.0.s8 %v4276
  %v4278 = vlaneseq
  %v4279 = vshrl.u32 %v4278, 7
  %v4280 = vsub.s32 %v4277, %v4279
  %v4281 = vrot.slane %v4253, %v4280
  %v4282 = vcombine.low %v4260, %v4267
  %v4283 = vcombine.low %v4274, %v4281
  %v4285 = vunpack.c.l.s4 1966171168
  %v4286 = vunpack.c.0.s8 %v4285
  %v4287 = vlaneseq
  %v4288 = vshrl.u32 %v4287, 7
  %v4289 = vsub.s32 %v4286, %v4288
  %v4290 = vrot.slane %v4282, %v4289
  %v4292 = vunpack.c.l.s4 1966171168
  %v4293 = vunpack.c.0.s8 %v4292
  %v4294 = vlaneseq
  %v4295 = vshrl.u32 %v4294, 7
  %v4296 = vsub.s32 %v4293, %v4295
  %v4297 = vrot.slane %v4283, %v4296
  %v4298 = vcombine.low %v4290, %v4297
  %v4299 = vcombine.low %v4214, %v4215
  %v4300 = vcombine.low %v4216, %v4217
  %v4301 = vcombine.low %v4218, %v4219
  %v4302 = vcombine.low %v4220, %v4221
  %v4304 = vunpack.c.l.s4 1966171168
  %v4305 = vunpack.c.0.s8 %v4304
  %v4306 = vlaneseq
  %v4307 = vshrl.u32 %v4306, 7
  %v4308 = vsub.s32 %v4305, %v4307
  %v4309 = vrot.slane %v4299, %v4308
  %v4311 = vunpack.c.l.s4 1966171168
  %v4312 = vunpack.c.0.s8 %v4311
  %v4313 = vlaneseq
  %v4314 = vshrl.u32 %v4313, 7
  %v4315 = vsub.s32 %v4312, %v4314
  %v4316 = vrot.slane %v4300, %v4315
  %v4318 = vunpack.c.l.s4 1966171168
  %v4319 = vunpack.c.0.s8 %v4318
  %v4320 = vlaneseq
  %v4321 = vshrl.u32 %v4320, 7
  %v4322 = vsub.s32 %v4319, %v4321
  %v4323 = vrot.slane %v4301, %v4322
  %v4325 = vunpack.c.l.s4 1966171168
  %v4326 = vunpack.c.0.s8 %v4325
  %v4327 = vlaneseq
  %v4328 = vshrl.u32 %v4327, 7
  %v4329 = vsub.s32 %v4326, %v4328
  %v4330 = vrot.slane %v4302, %v4329
  %v4331 = vcombine.low %v4309, %v4316
  %v4332 = vcombine.low %v4323, %v4330
  %v4334 = vunpack.c.l.s4 1966171168
  %v4335 = vunpack.c.0.s8 %v4334
  %v4336 = vlaneseq
  %v4337 = vshrl.u32 %v4336, 7
  %v4338 = vsub.s32 %v4335, %v4337
  %v4339 = vrot.slane %v4331, %v4338
  %v4341 = vunpack.c.l.s4 1966171168
  %v4342 = vunpack.c.0.s8 %v4341
  %v4343 = vlaneseq
  %v4344 = vshrl.u32 %v4343, 7
  %v4345 = vsub.s32 %v4342, %v4344
  %v4346 = vrot.slane %v4332, %v4345
  %v4347 = vcombine.low %v4339, %v4346
  %v4348 = vcombine.low %v4222, %v4223
  %v4349 = vcombine.low %v4224, %v4225
  %v4350 = vcombine.low %v4226, %v4227
  %v4352 = vunpack.c.l.s4 1966171168
  %v4353 = vunpack.c.0.s8 %v4352
  %v4354 = vlaneseq
  %v4355 = vshrl.u32 %v4354, 7
  %v4356 = vsub.s32 %v4353, %v4355
  %v4357 = vrot.slane %v4348, %v4356
  %v4359 = vunpack.c.l.s4 1966171168
  %v4360 = vunpack.c.0.s8 %v4359
  %v4361 = vlaneseq
  %v4362 = vshrl.u32 %v4361, 7
  %v4363 = vsub.s32 %v4360, %v4362
  %v4364 = vrot.slane %v4349, %v4363
  %v4366 = vunpack.c.l.s4 1966171168
  %v4367 = vunpack.c.0.s8 %v4366
  %v4368 = vlaneseq
  %v4369 = vshrl.u32 %v4368, 7
  %v4370 = vsub.s32 %v4367, %v4369
  %v4371 = vrot.slane %v4350, %v4370
  %v4372 = vcombine.low %v4357, %v4364
  %v4374 = vunpack.c.l.s4 1966171168
  %v4375 = vunpack.c.0.s8 %v4374
  %v4376 = vlaneseq
  %v4377 = vshrl.u32 %v4376, 7
  %v4378 = vsub.s32 %v4375, %v4377
  %v4379 = vrot.slane %v4372, %v4378
  %v4381 = vunpack.c.l.s4 1966171168
  %v4382 = vunpack.c.0.s8 %v4381
  %v4383 = vlaneseq
  %v4384 = vshrl.u32 %v4383, 7
  %v4385 = vsub.s32 %v4382, %v4384
  %v4386 = vrot.slane %v4371, %v4385
  %v4387 = vcombine.low %v4379, %v4386
  %vm4388 = vcmask 523264
  %v4389 = vsel %vm4388, %v4298, 0
  %v4391 = vsel %vm4388, %v4347, 0
  %v4393 = vsel %vm4388, %v4387, 0
  %4395 = vmatprep.subr.mxu0 0.0
  %4396 = vmatpush1.msra.mxu0 %v44
  %4397 = vmatprep.subr.mxu0 0.0
  %4398 = vmatpush1.msra.mxu0 %v45
  %4399 = vmatprep.subr.mxu0 0.0
  %4400 = vmatpush1.msra.mxu0 %v46
  %4401 = vmatprep.subr.mxu0 0.0
  %4402 = vmatpush1.msra.mxu0 %v47
  %4403 = vmatprep.subr.mxu0 0.0
  %4404 = vmatpush1.msra.mxu0 %v48
  %4405 = vmatprep.subr.mxu0 0.0
  %4406 = vmatpush1.msra.mxu0 %v49
  %4407 = vmatprep.subr.mxu0 0.0
  %4408 = vmatpush1.msra.mxu0 %v50
  %4409 = vmatprep.subr.mxu0 0.0
  %4410 = vmatpush1.msra.mxu0 %v51
  %4411 = vmatprep.subr.mxu0 0.0
  %4412 = vmatpush1.msra.mxu0 0.0
  %4413 = vmatprep.subr.mxu0 0.0
  %4414 = vmatpush1.msra.mxu0 0.0
  %4415 = vmatprep.subr.mxu0 0.0
  %4416 = vmatpush1.msra.mxu0 0.0
  %4417 = vmatprep.subr.mxu0 0.0
  %4418 = vmatpush1.msra.mxu0 0.0
  %4419 = vmatprep.subr.mxu0 0.0
  %4420 = vmatpush1.msra.mxu0 0.0
  %4421 = vmatprep.subr.mxu0 0.0
  %4422 = vmatpush1.msra.mxu0 0.0
  %4423 = vmatprep.subr.mxu0 0.0
  %4424 = vmatpush1.msra.mxu0 0.0
  %4425 = vmatprep.subr.mxu0 0.0
  %4426 = vmatpush1.msra.mxu0 0.0
  %4427 = vmatprep.subr.mxu0 0.0
  %4428 = vmatpush1.msra.mxu0 0.0
  %4429 = vmatprep.subr.mxu0 0.0
  %4430 = vmatpush1.msra.mxu0 0.0
  %4431 = vmatprep.subr.mxu0 0.0
  %4432 = vmatpush1.msra.mxu0 0.0
  %4433 = vmatprep.subr.mxu0 0.0
  %4434 = vmatpush1.msra.mxu0 0.0
  %4435 = vmatprep.subr.mxu0 0.0
  %4436 = vmatpush1.msra.mxu0 0.0
  %4437 = vmatprep.subr.mxu0 0.0
  %4438 = vmatpush1.msra.mxu0 0.0
  %4439 = vmatprep.subr.mxu0 0.0
  %4440 = vmatpush1.msra.mxu0 0.0
  %4441 = vmatprep.subr.mxu0 0.0
  %4442 = vmatpush1.msra.mxu0 0.0
  %4443 = vmatprep.subr.mxu0 0.0
  %4444 = vmatpush1.msra.mxu0 0.0
  %4445 = vmatprep.subr.mxu0 0.0
  %4446 = vmatpush1.msra.mxu0 0.0
  %4447 = vmatprep.subr.mxu0 0.0
  %4448 = vmatpush1.msra.mxu0 0.0
  %4449 = vmatprep.subr.mxu0 0.0
  %4450 = vmatpush1.msra.mxu0 0.0
  %4451 = vmatprep.subr.mxu0 0.0
  %4452 = vmatpush1.msra.mxu0 0.0
  %4453 = vmatprep.subr.mxu0 0.0
  %4454 = vmatpush1.msra.mxu0 0.0
  %4455 = vmatprep.subr.mxu0 0.0
  %4456 = vmatpush1.msra.mxu0 0.0
  %4457 = vmatprep.subr.mxu0 0.0
  %4458 = vmatpush1.msra.mxu0 0.0
  %4459 = vmatprep.mubr.f32.mxu0 0.0
  %4460 = vmatmul.mubr.f32.gmra.mrb[0].mxu0 %v4389
  %v4461 = vpop.f32.mrb[0].mxu0
  %v4462 = vadd.f32 0.0, %v4461
  %v4463 = vpop.f32.mrb[0].mxu0
  %4464 = vmatprep.mubr.f32.mxu0 0.0
  %4465 = vmatmul.mubr.f32.gmra.mrb[0].mxu0 %v4391
  %v4466 = vpop.f32.mrb[0].mxu0
  %v4467 = vadd.f32 0.0, %v4466
  %v4468 = vpop.f32.mrb[0].mxu0
  %4469 = vmatprep.mubr.f32.mxu0 0.0
  %4470 = vmatmul.mubr.f32.gmra.mrb[0].mxu0 %v4393
  %v4471 = vpop.f32.mrb[0].mxu0
  %v4472 = vadd.f32 0.0, %v4471
  %v4473 = vpop.f32.mrb[0].mxu0
  %4474 = vdwg.mxu0
  %v4478 = vcombine.high %v4462, %v4462
  %v4480 = vunpack.c.l.s4 1966171168
  %v4481 = vunpack.c.0.s8 %v4480
  %v4482 = vlaneseq
  %v4483 = vshrl.u32 %v4482, 7
  %v4484 = vsub.s32 %v4481, %v4483
  %v4485 = vrot.slane %v4462, %v4484
  %v4487 = vunpack.c.l.s4 1966171168
  %v4488 = vunpack.c.0.s8 %v4487
  %v4489 = vlaneseq
  %v4490 = vshrl.u32 %v4489, 7
  %v4491 = vsub.s32 %v4488, %v4490
  %v4492 = vrot.slane %v4478, %v4491
  %v4493 = vcombine.high %v4485, %v4485
  %v4494 = vcombine.high %v4492, %v4492
  %v4496 = vunpack.c.l.s4 1966171168
  %v4497 = vunpack.c.0.s8 %v4496
  %v4498 = vlaneseq
  %v4499 = vshrl.u32 %v4498, 7
  %v4500 = vsub.s32 %v4497, %v4499
  %v4501 = vrot.slane %v4485, %v4500
  %v4503 = vunpack.c.l.s4 1966171168
  %v4504 = vunpack.c.0.s8 %v4503
  %v4505 = vlaneseq
  %v4506 = vshrl.u32 %v4505, 7
  %v4507 = vsub.s32 %v4504, %v4506
  %v4508 = vrot.slane %v4492, %v4507
  %v4510 = vunpack.c.l.s4 1966171168
  %v4511 = vunpack.c.0.s8 %v4510
  %v4512 = vlaneseq
  %v4513 = vshrl.u32 %v4512, 7
  %v4514 = vsub.s32 %v4511, %v4513
  %v4515 = vrot.slane %v4493, %v4514
  %v4517 = vunpack.c.l.s4 1966171168
  %v4518 = vunpack.c.0.s8 %v4517
  %v4519 = vlaneseq
  %v4520 = vshrl.u32 %v4519, 7
  %v4521 = vsub.s32 %v4518, %v4520
  %v4522 = vrot.slane %v4494, %v4521
  %v4523 = vcombine.high %v4501, %v4501
  %v4524 = vcombine.high %v4508, %v4508
  %v4525 = vcombine.high %v4515, %v4515
  %v4526 = vcombine.high %v4522, %v4522
  %v4527 = vcombine.high %v4467, %v4467
  %v4529 = vunpack.c.l.s4 1966171168
  %v4530 = vunpack.c.0.s8 %v4529
  %v4531 = vlaneseq
  %v4532 = vshrl.u32 %v4531, 7
  %v4533 = vsub.s32 %v4530, %v4532
  %v4534 = vrot.slane %v4467, %v4533
  %v4536 = vunpack.c.l.s4 1966171168
  %v4537 = vunpack.c.0.s8 %v4536
  %v4538 = vlaneseq
  %v4539 = vshrl.u32 %v4538, 7
  %v4540 = vsub.s32 %v4537, %v4539
  %v4541 = vrot.slane %v4527, %v4540
  %v4542 = vcombine.high %v4534, %v4534
  %v4543 = vcombine.high %v4541, %v4541
  %v4545 = vunpack.c.l.s4 1966171168
  %v4546 = vunpack.c.0.s8 %v4545
  %v4547 = vlaneseq
  %v4548 = vshrl.u32 %v4547, 7
  %v4549 = vsub.s32 %v4546, %v4548
  %v4550 = vrot.slane %v4534, %v4549
  %v4552 = vunpack.c.l.s4 1966171168
  %v4553 = vunpack.c.0.s8 %v4552
  %v4554 = vlaneseq
  %v4555 = vshrl.u32 %v4554, 7
  %v4556 = vsub.s32 %v4553, %v4555
  %v4557 = vrot.slane %v4541, %v4556
  %v4559 = vunpack.c.l.s4 1966171168
  %v4560 = vunpack.c.0.s8 %v4559
  %v4561 = vlaneseq
  %v4562 = vshrl.u32 %v4561, 7
  %v4563 = vsub.s32 %v4560, %v4562
  %v4564 = vrot.slane %v4542, %v4563
  %v4566 = vunpack.c.l.s4 1966171168
  %v4567 = vunpack.c.0.s8 %v4566
  %v4568 = vlaneseq
  %v4569 = vshrl.u32 %v4568, 7
  %v4570 = vsub.s32 %v4567, %v4569
  %v4571 = vrot.slane %v4543, %v4570
  %v4572 = vcombine.high %v4550, %v4550
  %v4573 = vcombine.high %v4557, %v4557
  %v4574 = vcombine.high %v4564, %v4564
  %v4575 = vcombine.high %v4571, %v4571
  %v4576 = vcombine.high %v4472, %v4472
  %v4578 = vunpack.c.l.s4 1966171168
  %v4579 = vunpack.c.0.s8 %v4578
  %v4580 = vlaneseq
  %v4581 = vshrl.u32 %v4580, 7
  %v4582 = vsub.s32 %v4579, %v4581
  %v4583 = vrot.slane %v4472, %v4582
  %v4585 = vunpack.c.l.s4 1966171168
  %v4586 = vunpack.c.0.s8 %v4585
  %v4587 = vlaneseq
  %v4588 = vshrl.u32 %v4587, 7
  %v4589 = vsub.s32 %v4586, %v4588
  %v4590 = vrot.slane %v4576, %v4589
  %v4591 = vcombine.high %v4583, %v4583
  %v4592 = vcombine.high %v4590, %v4590
  %v4594 = vunpack.c.l.s4 1966171168
  %v4595 = vunpack.c.0.s8 %v4594
  %v4596 = vlaneseq
  %v4597 = vshrl.u32 %v4596, 7
  %v4598 = vsub.s32 %v4595, %v4597
  %v4599 = vrot.slane %v4583, %v4598
  %v4601 = vunpack.c.l.s4 1966171168
  %v4602 = vunpack.c.0.s8 %v4601
  %v4603 = vlaneseq
  %v4604 = vshrl.u32 %v4603, 7
  %v4605 = vsub.s32 %v4602, %v4604
  %v4606 = vrot.slane %v4590, %v4605
  %v4608 = vunpack.c.l.s4 1966171168
  %v4609 = vunpack.c.0.s8 %v4608
  %v4610 = vlaneseq
  %v4611 = vshrl.u32 %v4610, 7
  %v4612 = vsub.s32 %v4609, %v4611
  %v4613 = vrot.slane %v4591, %v4612
  %v4615 = vunpack.c.l.s4 1966171168
  %v4616 = vunpack.c.0.s8 %v4615
  %v4617 = vlaneseq
  %v4618 = vshrl.u32 %v4617, 7
  %v4619 = vsub.s32 %v4616, %v4618
  %v4620 = vrot.slane %v4592, %v4619
  %v4621 = vcombine.high %v4599, %v4599
  %v4622 = vcombine.high %v4613, %v4613
  %v4623 = vcombine.low %v4501, %v4515
  %v4624 = vcombine.low %v4523, %v4525
  %v4625 = vcombine.low %v4508, %v4522
  %v4626 = vcombine.low %v4524, %v4526
  %v4628 = vunpack.c.l.s4 1966171168
  %v4629 = vunpack.c.0.s8 %v4628
  %v4630 = vlaneseq
  %v4631 = vshrl.u32 %v4630, 7
  %v4632 = vsub.s32 %v4629, %v4631
  %v4633 = vrot.slane %v4623, %v4632
  %v4635 = vunpack.c.l.s4 1966171168
  %v4636 = vunpack.c.0.s8 %v4635
  %v4637 = vlaneseq
  %v4638 = vshrl.u32 %v4637, 7
  %v4639 = vsub.s32 %v4636, %v4638
  %v4640 = vrot.slane %v4624, %v4639
  %v4642 = vunpack.c.l.s4 1966171168
  %v4643 = vunpack.c.0.s8 %v4642
  %v4644 = vlaneseq
  %v4645 = vshrl.u32 %v4644, 7
  %v4646 = vsub.s32 %v4643, %v4645
  %v4647 = vrot.slane %v4625, %v4646
  %v4649 = vunpack.c.l.s4 1966171168
  %v4650 = vunpack.c.0.s8 %v4649
  %v4651 = vlaneseq
  %v4652 = vshrl.u32 %v4651, 7
  %v4653 = vsub.s32 %v4650, %v4652
  %v4654 = vrot.slane %v4626, %v4653
  %v4655 = vcombine.low %v4633, %v4640
  %v4656 = vcombine.low %v4647, %v4654
  %v4658 = vunpack.c.l.s4 1966171168
  %v4659 = vunpack.c.0.s8 %v4658
  %v4660 = vlaneseq
  %v4661 = vshrl.u32 %v4660, 7
  %v4662 = vsub.s32 %v4659, %v4661
  %v4663 = vrot.slane %v4655, %v4662
  %v4665 = vunpack.c.l.s4 1966171168
  %v4666 = vunpack.c.0.s8 %v4665
  %v4667 = vlaneseq
  %v4668 = vshrl.u32 %v4667, 7
  %v4669 = vsub.s32 %v4666, %v4668
  %v4670 = vrot.slane %v4656, %v4669
  %v4671 = vcombine.low %v4663, %v4670
  %v4672 = vcombine.low %v4550, %v4564
  %v4674 = vunpack.c.l.s4 1966171168
  %v4675 = vunpack.c.0.s8 %v4674
  %v4676 = vlaneseq
  %v4677 = vshrl.u32 %v4676, 7
  %v4678 = vsub.s32 %v4675, %v4677
  %v4679 = vrot.slane %v4672, %v4678
  %v4681 = vunpack.c.l.s4 1966171168
  %v4682 = vunpack.c.0.s8 %v4681
  %v4683 = vlaneseq
  %v4684 = vshrl.u32 %v4683, 7
  %v4685 = vsub.s32 %v4682, %v4684
  %v4686 = vrot.slane %v4572, %v4685
  %v4687 = vcombine.low %v4679, %v4686
  %v4689 = vunpack.c.l.s4 1966171168
  %v4690 = vunpack.c.0.s8 %v4689
  %v4691 = vlaneseq
  %v4692 = vshrl.u32 %v4691, 7
  %v4693 = vsub.s32 %v4690, %v4692
  %v4694 = vrot.slane %v4687, %v4693
  %v4695 = vcombine.low %v4574, %v4557
  %v4696 = vcombine.low %v4571, %v4573
  %v4697 = vcombine.low %v4575, %v4599
  %v4698 = vcombine.low %v4613, %v4621
  %v4700 = vunpack.c.l.s4 1966171168
  %v4701 = vunpack.c.0.s8 %v4700
  %v4702 = vlaneseq
  %v4703 = vshrl.u32 %v4702, 7
  %v4704 = vsub.s32 %v4701, %v4703
  %v4705 = vrot.slane %v4695, %v4704
  %v4707 = vunpack.c.l.s4 1966171168
  %v4708 = vunpack.c.0.s8 %v4707
  %v4709 = vlaneseq
  %v4710 = vshrl.u32 %v4709, 7
  %v4711 = vsub.s32 %v4708, %v4710
  %v4712 = vrot.slane %v4696, %v4711
  %v4714 = vunpack.c.l.s4 1966171168
  %v4715 = vunpack.c.0.s8 %v4714
  %v4716 = vlaneseq
  %v4717 = vshrl.u32 %v4716, 7
  %v4718 = vsub.s32 %v4715, %v4717
  %v4719 = vrot.slane %v4697, %v4718
  %v4721 = vunpack.c.l.s4 1966171168
  %v4722 = vunpack.c.0.s8 %v4721
  %v4723 = vlaneseq
  %v4724 = vshrl.u32 %v4723, 7
  %v4725 = vsub.s32 %v4722, %v4724
  %v4726 = vrot.slane %v4698, %v4725
  %v4727 = vcombine.low %v4705, %v4712
  %v4728 = vcombine.low %v4719, %v4726
  %v4730 = vunpack.c.l.s4 1966171168
  %v4731 = vunpack.c.0.s8 %v4730
  %v4732 = vlaneseq
  %v4733 = vshrl.u32 %v4732, 7
  %v4734 = vsub.s32 %v4731, %v4733
  %v4735 = vrot.slane %v4727, %v4734
  %v4737 = vunpack.c.l.s4 1966171168
  %v4738 = vunpack.c.0.s8 %v4737
  %v4739 = vlaneseq
  %v4740 = vshrl.u32 %v4739, 7
  %v4741 = vsub.s32 %v4738, %v4740
  %v4742 = vrot.slane %v4728, %v4741
  %v4743 = vcombine.low %v4735, %v4742
  %v4744 = vcombine.low %v4622, %v4606
  %v4746 = vunpack.c.l.s4 1966171168
  %v4747 = vunpack.c.0.s8 %v4746
  %v4748 = vlaneseq
  %v4749 = vshrl.u32 %v4748, 7
  %v4750 = vsub.s32 %v4747, %v4749
  %v4751 = vrot.slane %v4744, %v4750
  %v4753 = vunpack.c.l.s4 1966171168
  %v4754 = vunpack.c.0.s8 %v4753
  %v4755 = vlaneseq
  %v4756 = vshrl.u32 %v4755, 7
  %v4757 = vsub.s32 %v4754, %v4756
  %v4758 = vrot.slane %v4620, %v4757
  %v4759 = vcombine.low %v4751, %v4758
  %v4761 = vunpack.c.l.s4 1966171168
  %v4762 = vunpack.c.0.s8 %v4761
  %v4763 = vlaneseq
  %v4764 = vshrl.u32 %v4763, 7
  %v4765 = vsub.s32 %v4762, %v4764
  %v4766 = vrot.slane %v4759, %v4765
  %v4771 = vadd.f32 %v3324, %v4671
  %v4772 = vadd.f32 %v3325, %v4694
  %v4773 = vadd.f32 %v3326, %v4743
  %v4774 = vadd.f32 %v3327, %v4766
  %v4775 = vlaneseq
  %v4776 = vshrl.u32 %v4775, 7
  %v4777 = vsub.s32 0, %v4776
  %v4778 = vrot.slane %v31, %v4777
  %v4779 = vadd.f32 %v4771, %v4778
  %v4780 = vadd.f32 %v4772, %v4778
  %v4781 = vadd.f32 %v4773, %v4778
  %v4782 = vadd.f32 %v4774, %v4778
  %s4783 = scalar_lea.vmem %s2, 8
  %v4784 = vld [vmem:[%s4783] sm:$0x1]
  %v4785 = vld [vmem:[%s4783 + $0x1] sm:$0x1]
  %v4786 = vld [vmem:[%s4783 + $0x2] sm:$0x1]
  %v4787 = vld [vmem:[%s4783 + $0x3] sm:$0x1]
  %v4788 = vld [vmem:[%s4783 + $0x4] sm:$0x1]
  %v4789 = vld [vmem:[%s4783 + $0x5] sm:$0x1]
  %v4790 = vld [vmem:[%s4783 + $0x6] sm:$0x1]
  %v4791 = vld [vmem:[%s4783 + $0x7] sm:$0x1]
  %s4792 = scalar_lea.vmem %s1, 256
  %v4793 = vld [vmem:[%s4792] sm:$0xff]
  %v4794 = vld [vmem:[%s4792 + $0x20] sm:$0xff]
  %v4795 = vld [vmem:[%s4792 + $0x40] sm:$0xff]
  %v4796 = vld [vmem:[%s4792 + $0x60] sm:$0xff]
  %v4797 = vld [vmem:[%s4792 + $0x8] sm:$0xff]
  %v4798 = vld [vmem:[%s4792 + $0x28] sm:$0xff]
  %v4799 = vld [vmem:[%s4792 + $0x48] sm:$0xff]
  %v4800 = vld [vmem:[%s4792 + $0x68] sm:$0xff]
  %v4801 = vld [vmem:[%s4792 + $0x10] sm:$0xff]
  %v4802 = vld [vmem:[%s4792 + $0x30] sm:$0xff]
  %v4803 = vld [vmem:[%s4792 + $0x50] sm:$0xff]
  %v4804 = vld [vmem:[%s4792 + $0x70] sm:$0xff]
  %v4805 = vld [vmem:[%s4792 + $0x18] sm:$0xff]
  %v4806 = vld [vmem:[%s4792 + $0x38] sm:$0xff]
  %v4807 = vld [vmem:[%s4792 + $0x58] sm:$0xff]
  %v4808 = vld [vmem:[%s4792 + $0x78] sm:$0xff]
  %v4809 = vld [vmem:[%s4792 + $0x98] sm:$0xff]
  %v4810 = vld [vmem:[%s4792 + $0xb8] sm:$0xff]
  %v4811 = vld [vmem:[%s4792 + $0xd8] sm:$0xff]
  %v4812 = vld [vmem:[%s4792 + $0xf8] sm:$0xff]
  %v4813 = vsel %vm52, %v4779, 0.0
  %4814 = vadd.xlane.f32.xlu0 %v4813
  %v4815 = vpop.xlane.xlu0 %4814
  %v4816 = vsel %vm56, %v4780, 0.0
  %4817 = vadd.xlane.f32.xlu0 %v4816
  %v4818 = vpop.xlane.xlu0 %4817
  %v4819 = vsel %vm52, %v4781, 0.0
  %4820 = vadd.xlane.f32.xlu0 %v4819
  %v4821 = vpop.xlane.xlu0 %4820
  %v4822 = vsel %vm56, %v4782, 0.0
  %4823 = vadd.xlane.f32.xlu0 %v4822
  %v4824 = vpop.xlane.xlu0 %4823
  %v4825 = vmul.f32 %v4815, %v66
  %v4826 = vmul.f32 %v4818, %v66
  %v4827 = vmul.f32 %v4821, %v66
  %v4828 = vmul.f32 %v4824, %v66
  %v4829 = vsub.f32 %v4779, %v4825
  %v4830 = vsub.f32 %v4780, %v4826
  %v4831 = vsub.f32 %v4781, %v4827
  %v4832 = vsub.f32 %v4782, %v4828
  %v4833 = vmul.f32 %v4829, %v4829
  %v4834 = vmul.f32 %v4830, %v4830
  %v4835 = vmul.f32 %v4831, %v4831
  %v4836 = vmul.f32 %v4832, %v4832
  %v4837 = vsel %vm52, %v4833, 0.0
  %4838 = vadd.xlane.f32.xlu0 %v4837
  %v4839 = vpop.xlane.xlu0 %4838
  %v4840 = vsel %vm56, %v4834, 0.0
  %4841 = vadd.xlane.f32.xlu0 %v4840
  %v4842 = vpop.xlane.xlu0 %4841
  %v4843 = vsel %vm52, %v4835, 0.0
  %4844 = vadd.xlane.f32.xlu0 %v4843
  %v4845 = vpop.xlane.xlu0 %4844
  %v4846 = vsel %vm56, %v4836, 0.0
  %4847 = vadd.xlane.f32.xlu0 %v4846
  %v4848 = vpop.xlane.xlu0 %4847
  %v4849 = vmul.f32 %v4839, %v66
  %v4850 = vmul.f32 %v4842, %v66
  %v4851 = vmul.f32 %v4845, %v66
  %v4852 = vmul.f32 %v4848, %v66
  %v4853 = vadd.f32 %v4849, 1e-05
  %v4854 = vadd.f32 %v4850, 1e-05
  %v4855 = vadd.f32 %v4851, 1e-05
  %v4856 = vadd.f32 %v4852, 1e-05
  %v4857 = vrsqrt.pop %v4853
  %v4858 = vrsqrt.pop %v4854
  %v4859 = vrsqrt.pop %v4855
  %v4860 = vrsqrt.pop %v4856
  %v4861 = vmul.f32 %v4829, %v4857
  %v4862 = vmul.f32 %v4830, %v4858
  %v4863 = vmul.f32 %v4831, %v4859
  %v4864 = vmul.f32 %v4832, %v4860
  %v4865 = vlaneseq
  %v4866 = vshrl.u32 %v4865, 7
  %v4867 = vsub.s32 0, %v4866
  %v4868 = vrot.slane %v4784, %v4867
  %v4869 = vmul.f32 %v4861, %v4868
  %v4870 = vmul.f32 %v4862, %v4868
  %v4871 = vmul.f32 %v4863, %v4868
  %v4872 = vmul.f32 %v4864, %v4868
  %v4873 = vlaneseq
  %v4874 = vshrl.u32 %v4873, 7
  %v4875 = vsub.s32 0, %v4874
  %v4876 = vrot.slane %v4785, %v4875
  %v4877 = vadd.f32 %v4869, %v4876
  %v4878 = vadd.f32 %v4870, %v4876
  %v4879 = vadd.f32 %v4871, %v4876
  %v4880 = vadd.f32 %v4872, %v4876
  %v4881 = vlaneseq
  %v4882 = vshrl.u32 %v4881, 7
  %v4883 = vsub.s32 0, %v4882
  %v4884 = vrot.slane %v4788, %v4883
  %v4889 = vcombine.high %v4877, %v4877
  %v4891 = vunpack.c.l.s4 1966171168
  %v4892 = vunpack.c.0.s8 %v4891
  %v4893 = vlaneseq
  %v4894 = vshrl.u32 %v4893, 7
  %v4895 = vsub.s32 %v4892, %v4894
  %v4896 = vrot.slane %v4877, %v4895
  %v4898 = vunpack.c.l.s4 1966171168
  %v4899 = vunpack.c.0.s8 %v4898
  %v4900 = vlaneseq
  %v4901 = vshrl.u32 %v4900, 7
  %v4902 = vsub.s32 %v4899, %v4901
  %v4903 = vrot.slane %v4889, %v4902
  %v4904 = vcombine.high %v4896, %v4896
  %v4905 = vcombine.high %v4903, %v4903
  %v4907 = vunpack.c.l.s4 1966171168
  %v4908 = vunpack.c.0.s8 %v4907
  %v4909 = vlaneseq
  %v4910 = vshrl.u32 %v4909, 7
  %v4911 = vsub.s32 %v4908, %v4910
  %v4912 = vrot.slane %v4896, %v4911
  %v4914 = vunpack.c.l.s4 1966171168
  %v4915 = vunpack.c.0.s8 %v4914
  %v4916 = vlaneseq
  %v4917 = vshrl.u32 %v4916, 7
  %v4918 = vsub.s32 %v4915, %v4917
  %v4919 = vrot.slane %v4903, %v4918
  %v4921 = vunpack.c.l.s4 1966171168
  %v4922 = vunpack.c.0.s8 %v4921
  %v4923 = vlaneseq
  %v4924 = vshrl.u32 %v4923, 7
  %v4925 = vsub.s32 %v4922, %v4924
  %v4926 = vrot.slane %v4904, %v4925
  %v4928 = vunpack.c.l.s4 1966171168
  %v4929 = vunpack.c.0.s8 %v4928
  %v4930 = vlaneseq
  %v4931 = vshrl.u32 %v4930, 7
  %v4932 = vsub.s32 %v4929, %v4931
  %v4933 = vrot.slane %v4905, %v4932
  %v4934 = vcombine.high %v4912, %v4912
  %v4935 = vcombine.high %v4919, %v4919
  %v4936 = vcombine.high %v4926, %v4926
  %v4937 = vcombine.high %v4933, %v4933
  %v4939 = vunpack.c.l.s4 1966171168
  %v4940 = vunpack.c.0.s8 %v4939
  %v4941 = vlaneseq
  %v4942 = vshrl.u32 %v4941, 7
  %v4943 = vsub.s32 %v4940, %v4942
  %v4944 = vrot.slane %v4878, %v4943
  %v4945 = vcombine.high %v4944, %v4944
  %v4947 = vunpack.c.l.s4 1966171168
  %v4948 = vunpack.c.0.s8 %v4947
  %v4949 = vlaneseq
  %v4950 = vshrl.u32 %v4949, 7
  %v4951 = vsub.s32 %v4948, %v4950
  %v4952 = vrot.slane %v4944, %v4951
  %v4954 = vunpack.c.l.s4 1966171168
  %v4955 = vunpack.c.0.s8 %v4954
  %v4956 = vlaneseq
  %v4957 = vshrl.u32 %v4956, 7
  %v4958 = vsub.s32 %v4955, %v4957
  %v4959 = vrot.slane %v4945, %v4958
  %v4960 = vcombine.high %v4952, %v4952
  %v4961 = vcombine.high %v4879, %v4879
  %v4963 = vunpack.c.l.s4 1966171168
  %v4964 = vunpack.c.0.s8 %v4963
  %v4965 = vlaneseq
  %v4966 = vshrl.u32 %v4965, 7
  %v4967 = vsub.s32 %v4964, %v4966
  %v4968 = vrot.slane %v4879, %v4967
  %v4970 = vunpack.c.l.s4 1966171168
  %v4971 = vunpack.c.0.s8 %v4970
  %v4972 = vlaneseq
  %v4973 = vshrl.u32 %v4972, 7
  %v4974 = vsub.s32 %v4971, %v4973
  %v4975 = vrot.slane %v4961, %v4974
  %v4976 = vcombine.high %v4968, %v4968
  %v4977 = vcombine.high %v4975, %v4975
  %v4979 = vunpack.c.l.s4 1966171168
  %v4980 = vunpack.c.0.s8 %v4979
  %v4981 = vlaneseq
  %v4982 = vshrl.u32 %v4981, 7
  %v4983 = vsub.s32 %v4980, %v4982
  %v4984 = vrot.slane %v4968, %v4983
  %v4986 = vunpack.c.l.s4 1966171168
  %v4987 = vunpack.c.0.s8 %v4986
  %v4988 = vlaneseq
  %v4989 = vshrl.u32 %v4988, 7
  %v4990 = vsub.s32 %v4987, %v4989
  %v4991 = vrot.slane %v4975, %v4990
  %v4993 = vunpack.c.l.s4 1966171168
  %v4994 = vunpack.c.0.s8 %v4993
  %v4995 = vlaneseq
  %v4996 = vshrl.u32 %v4995, 7
  %v4997 = vsub.s32 %v4994, %v4996
  %v4998 = vrot.slane %v4976, %v4997
  %v5000 = vunpack.c.l.s4 1966171168
  %v5001 = vunpack.c.0.s8 %v5000
  %v5002 = vlaneseq
  %v5003 = vshrl.u32 %v5002, 7
  %v5004 = vsub.s32 %v5001, %v5003
  %v5005 = vrot.slane %v4977, %v5004
  %v5006 = vcombine.high %v4984, %v4984
  %v5007 = vcombine.high %v4991, %v4991
  %v5008 = vcombine.high %v4998, %v4998
  %v5009 = vcombine.high %v5005, %v5005
  %v5011 = vunpack.c.l.s4 1966171168
  %v5012 = vunpack.c.0.s8 %v5011
  %v5013 = vlaneseq
  %v5014 = vshrl.u32 %v5013, 7
  %v5015 = vsub.s32 %v5012, %v5014
  %v5016 = vrot.slane %v4880, %v5015
  %v5017 = vcombine.high %v5016, %v5016
  %v5019 = vunpack.c.l.s4 1966171168
  %v5020 = vunpack.c.0.s8 %v5019
  %v5021 = vlaneseq
  %v5022 = vshrl.u32 %v5021, 7
  %v5023 = vsub.s32 %v5020, %v5022
  %v5024 = vrot.slane %v5016, %v5023
  %v5026 = vunpack.c.l.s4 1966171168
  %v5027 = vunpack.c.0.s8 %v5026
  %v5028 = vlaneseq
  %v5029 = vshrl.u32 %v5028, 7
  %v5030 = vsub.s32 %v5027, %v5029
  %v5031 = vrot.slane %v5017, %v5030
  %v5032 = vcombine.high %v5024, %v5024
  %v5034 = vcombine.high %v4884, %v4884
  %v5036 = vunpack.c.l.s4 1966171168
  %v5037 = vunpack.c.0.s8 %v5036
  %v5038 = vlaneseq
  %v5039 = vshrl.u32 %v5038, 7
  %v5040 = vsub.s32 %v5037, %v5039
  %v5041 = vrot.slane %v4884, %v5040
  %v5043 = vunpack.c.l.s4 1966171168
  %v5044 = vunpack.c.0.s8 %v5043
  %v5045 = vlaneseq
  %v5046 = vshrl.u32 %v5045, 7
  %v5047 = vsub.s32 %v5044, %v5046
  %v5048 = vrot.slane %v5034, %v5047
  %v5049 = vcombine.high %v5041, %v5041
  %v5050 = vcombine.high %v5048, %v5048
  %v5052 = vunpack.c.l.s4 1966171168
  %v5053 = vunpack.c.0.s8 %v5052
  %v5054 = vlaneseq
  %v5055 = vshrl.u32 %v5054, 7
  %v5056 = vsub.s32 %v5053, %v5055
  %v5057 = vrot.slane %v5041, %v5056
  %v5059 = vunpack.c.l.s4 1966171168
  %v5060 = vunpack.c.0.s8 %v5059
  %v5061 = vlaneseq
  %v5062 = vshrl.u32 %v5061, 7
  %v5063 = vsub.s32 %v5060, %v5062
  %v5064 = vrot.slane %v5048, %v5063
  %v5066 = vunpack.c.l.s4 1966171168
  %v5067 = vunpack.c.0.s8 %v5066
  %v5068 = vlaneseq
  %v5069 = vshrl.u32 %v5068, 7
  %v5070 = vsub.s32 %v5067, %v5069
  %v5071 = vrot.slane %v5049, %v5070
  %v5073 = vunpack.c.l.s4 1966171168
  %v5074 = vunpack.c.0.s8 %v5073
  %v5075 = vlaneseq
  %v5076 = vshrl.u32 %v5075, 7
  %v5077 = vsub.s32 %v5074, %v5076
  %v5078 = vrot.slane %v5050, %v5077
  %v5079 = vcombine.high %v5057, %v5057
  %v5080 = vcombine.high %v5064, %v5064
  %v5081 = vcombine.high %v5071, %v5071
  %v5082 = vcombine.high %v5078, %v5078
  %v5083 = vcombine.low %v4912, %v4926
  %v5084 = vcombine.low %v4934, %v4936
  %v5085 = vcombine.low %v4919, %v4933
  %v5086 = vcombine.low %v4935, %v4937
  %v5088 = vunpack.c.l.s4 1966171168
  %v5089 = vunpack.c.0.s8 %v5088
  %v5090 = vlaneseq
  %v5091 = vshrl.u32 %v5090, 7
  %v5092 = vsub.s32 %v5089, %v5091
  %v5093 = vrot.slane %v5083, %v5092
  %v5095 = vunpack.c.l.s4 1966171168
  %v5096 = vunpack.c.0.s8 %v5095
  %v5097 = vlaneseq
  %v5098 = vshrl.u32 %v5097, 7
  %v5099 = vsub.s32 %v5096, %v5098
  %v5100 = vrot.slane %v5084, %v5099
  %v5102 = vunpack.c.l.s4 1966171168
  %v5103 = vunpack.c.0.s8 %v5102
  %v5104 = vlaneseq
  %v5105 = vshrl.u32 %v5104, 7
  %v5106 = vsub.s32 %v5103, %v5105
  %v5107 = vrot.slane %v5085, %v5106
  %v5109 = vunpack.c.l.s4 1966171168
  %v5110 = vunpack.c.0.s8 %v5109
  %v5111 = vlaneseq
  %v5112 = vshrl.u32 %v5111, 7
  %v5113 = vsub.s32 %v5110, %v5112
  %v5114 = vrot.slane %v5086, %v5113
  %v5115 = vcombine.low %v5093, %v5100
  %v5116 = vcombine.low %v5107, %v5114
  %v5118 = vunpack.c.l.s4 1966171168
  %v5119 = vunpack.c.0.s8 %v5118
  %v5120 = vlaneseq
  %v5121 = vshrl.u32 %v5120, 7
  %v5122 = vsub.s32 %v5119, %v5121
  %v5123 = vrot.slane %v5115, %v5122
  %v5125 = vunpack.c.l.s4 1966171168
  %v5126 = vunpack.c.0.s8 %v5125
  %v5127 = vlaneseq
  %v5128 = vshrl.u32 %v5127, 7
  %v5129 = vsub.s32 %v5126, %v5128
  %v5130 = vrot.slane %v5116, %v5129
  %v5131 = vcombine.low %v5123, %v5130
  %v5132 = vcombine.low %v4952, %v4959
  %v5133 = vcombine.low %v4960, %v4984
  %v5134 = vcombine.low %v4998, %v5006
  %v5135 = vcombine.low %v5008, %v4991
  %v5137 = vunpack.c.l.s4 1966171168
  %v5138 = vunpack.c.0.s8 %v5137
  %v5139 = vlaneseq
  %v5140 = vshrl.u32 %v5139, 7
  %v5141 = vsub.s32 %v5138, %v5140
  %v5142 = vrot.slane %v5132, %v5141
  %v5144 = vunpack.c.l.s4 1966171168
  %v5145 = vunpack.c.0.s8 %v5144
  %v5146 = vlaneseq
  %v5147 = vshrl.u32 %v5146, 7
  %v5148 = vsub.s32 %v5145, %v5147
  %v5149 = vrot.slane %v5133, %v5148
  %v5151 = vunpack.c.l.s4 1966171168
  %v5152 = vunpack.c.0.s8 %v5151
  %v5153 = vlaneseq
  %v5154 = vshrl.u32 %v5153, 7
  %v5155 = vsub.s32 %v5152, %v5154
  %v5156 = vrot.slane %v5134, %v5155
  %v5158 = vunpack.c.l.s4 1966171168
  %v5159 = vunpack.c.0.s8 %v5158
  %v5160 = vlaneseq
  %v5161 = vshrl.u32 %v5160, 7
  %v5162 = vsub.s32 %v5159, %v5161
  %v5163 = vrot.slane %v5135, %v5162
  %v5164 = vcombine.low %v5142, %v5149
  %v5165 = vcombine.low %v5156, %v5163
  %v5167 = vunpack.c.l.s4 1966171168
  %v5168 = vunpack.c.0.s8 %v5167
  %v5169 = vlaneseq
  %v5170 = vshrl.u32 %v5169, 7
  %v5171 = vsub.s32 %v5168, %v5170
  %v5172 = vrot.slane %v5164, %v5171
  %v5174 = vunpack.c.l.s4 1966171168
  %v5175 = vunpack.c.0.s8 %v5174
  %v5176 = vlaneseq
  %v5177 = vshrl.u32 %v5176, 7
  %v5178 = vsub.s32 %v5175, %v5177
  %v5179 = vrot.slane %v5165, %v5178
  %v5180 = vcombine.low %v5172, %v5179
  %v5181 = vcombine.low %v5005, %v5007
  %v5182 = vcombine.low %v5009, %v5024
  %v5183 = vcombine.low %v5031, %v5032
  %v5185 = vunpack.c.l.s4 1966171168
  %v5186 = vunpack.c.0.s8 %v5185
  %v5187 = vlaneseq
  %v5188 = vshrl.u32 %v5187, 7
  %v5189 = vsub.s32 %v5186, %v5188
  %v5190 = vrot.slane %v5181, %v5189
  %v5192 = vunpack.c.l.s4 1966171168
  %v5193 = vunpack.c.0.s8 %v5192
  %v5194 = vlaneseq
  %v5195 = vshrl.u32 %v5194, 7
  %v5196 = vsub.s32 %v5193, %v5195
  %v5197 = vrot.slane %v5182, %v5196
  %v5199 = vunpack.c.l.s4 1966171168
  %v5200 = vunpack.c.0.s8 %v5199
  %v5201 = vlaneseq
  %v5202 = vshrl.u32 %v5201, 7
  %v5203 = vsub.s32 %v5200, %v5202
  %v5204 = vrot.slane %v5183, %v5203
  %v5205 = vcombine.low %v5190, %v5197
  %v5207 = vunpack.c.l.s4 1966171168
  %v5208 = vunpack.c.0.s8 %v5207
  %v5209 = vlaneseq
  %v5210 = vshrl.u32 %v5209, 7
  %v5211 = vsub.s32 %v5208, %v5210
  %v5212 = vrot.slane %v5205, %v5211
  %v5214 = vunpack.c.l.s4 1966171168
  %v5215 = vunpack.c.0.s8 %v5214
  %v5216 = vlaneseq
  %v5217 = vshrl.u32 %v5216, 7
  %v5218 = vsub.s32 %v5215, %v5217
  %v5219 = vrot.slane %v5204, %v5218
  %v5220 = vcombine.low %v5212, %v5219
  %v5221 = vcombine.low %v5057, %v5071
  %v5222 = vcombine.low %v5079, %v5081
  %v5223 = vcombine.low %v5064, %v5078
  %v5224 = vcombine.low %v5080, %v5082
  %v5226 = vunpack.c.l.s4 1966171168
  %v5227 = vunpack.c.0.s8 %v5226
  %v5228 = vlaneseq
  %v5229 = vshrl.u32 %v5228, 7
  %v5230 = vsub.s32 %v5227, %v5229
  %v5231 = vrot.slane %v5221, %v5230
  %v5233 = vunpack.c.l.s4 1966171168
  %v5234 = vunpack.c.0.s8 %v5233
  %v5235 = vlaneseq
  %v5236 = vshrl.u32 %v5235, 7
  %v5237 = vsub.s32 %v5234, %v5236
  %v5238 = vrot.slane %v5222, %v5237
  %v5240 = vunpack.c.l.s4 1966171168
  %v5241 = vunpack.c.0.s8 %v5240
  %v5242 = vlaneseq
  %v5243 = vshrl.u32 %v5242, 7
  %v5244 = vsub.s32 %v5241, %v5243
  %v5245 = vrot.slane %v5223, %v5244
  %v5247 = vunpack.c.l.s4 1966171168
  %v5248 = vunpack.c.0.s8 %v5247
  %v5249 = vlaneseq
  %v5250 = vshrl.u32 %v5249, 7
  %v5251 = vsub.s32 %v5248, %v5250
  %v5252 = vrot.slane %v5224, %v5251
  %v5253 = vcombine.low %v5231, %v5238
  %v5254 = vcombine.low %v5245, %v5252
  %v5256 = vunpack.c.l.s4 1966171168
  %v5257 = vunpack.c.0.s8 %v5256
  %v5258 = vlaneseq
  %v5259 = vshrl.u32 %v5258, 7
  %v5260 = vsub.s32 %v5257, %v5259
  %v5261 = vrot.slane %v5253, %v5260
  %v5263 = vunpack.c.l.s4 1966171168
  %v5264 = vunpack.c.0.s8 %v5263
  %v5265 = vlaneseq
  %v5266 = vshrl.u32 %v5265, 7
  %v5267 = vsub.s32 %v5264, %v5266
  %v5268 = vrot.slane %v5254, %v5267
  %v5269 = vcombine.low %v5261, %v5268
  %v5270 = vcombine.low %v5079, %v5057
  %v5271 = vcombine.low %v5071, %v5079
  %v5272 = vcombine.low %v5081, %v5064
  %v5274 = vunpack.c.l.s4 1966171168
  %v5275 = vunpack.c.0.s8 %v5274
  %v5276 = vlaneseq
  %v5277 = vshrl.u32 %v5276, 7
  %v5278 = vsub.s32 %v5275, %v5277
  %v5279 = vrot.slane %v5270, %v5278
  %v5281 = vunpack.c.l.s4 1966171168
  %v5282 = vunpack.c.0.s8 %v5281
  %v5283 = vlaneseq
  %v5284 = vshrl.u32 %v5283, 7
  %v5285 = vsub.s32 %v5282, %v5284
  %v5286 = vrot.slane %v5271, %v5285
  %v5288 = vunpack.c.l.s4 1966171168
  %v5289 = vunpack.c.0.s8 %v5288
  %v5290 = vlaneseq
  %v5291 = vshrl.u32 %v5290, 7
  %v5292 = vsub.s32 %v5289, %v5291
  %v5293 = vrot.slane %v5272, %v5292
  %v5294 = vcombine.low %v5231, %v5279
  %v5295 = vcombine.low %v5286, %v5293
  %v5297 = vunpack.c.l.s4 1966171168
  %v5298 = vunpack.c.0.s8 %v5297
  %v5299 = vlaneseq
  %v5300 = vshrl.u32 %v5299, 7
  %v5301 = vsub.s32 %v5298, %v5300
  %v5302 = vrot.slane %v5294, %v5301
  %v5304 = vunpack.c.l.s4 1966171168
  %v5305 = vunpack.c.0.s8 %v5304
  %v5306 = vlaneseq
  %v5307 = vshrl.u32 %v5306, 7
  %v5308 = vsub.s32 %v5305, %v5307
  %v5309 = vrot.slane %v5295, %v5308
  %v5310 = vcombine.low %v5302, %v5309
  %v5311 = vcombine.low %v5078, %v5080
  %v5312 = vcombine.low %v5082, %v5057
  %v5314 = vunpack.c.l.s4 1966171168
  %v5315 = vunpack.c.0.s8 %v5314
  %v5316 = vlaneseq
  %v5317 = vshrl.u32 %v5316, 7
  %v5318 = vsub.s32 %v5315, %v5317
  %v5319 = vrot.slane %v5311, %v5318
  %v5321 = vunpack.c.l.s4 1966171168
  %v5322 = vunpack.c.0.s8 %v5321
  %v5323 = vlaneseq
  %v5324 = vshrl.u32 %v5323, 7
  %v5325 = vsub.s32 %v5322, %v5324
  %v5326 = vrot.slane %v5312, %v5325
  %v5327 = vcombine.low %v5319, %v5326
  %v5329 = vunpack.c.l.s4 1966171168
  %v5330 = vunpack.c.0.s8 %v5329
  %v5331 = vlaneseq
  %v5332 = vshrl.u32 %v5331, 7
  %v5333 = vsub.s32 %v5330, %v5332
  %v5334 = vrot.slane %v5327, %v5333
  %v5336 = vunpack.c.l.s4 1966171168
  %v5337 = vunpack.c.0.s8 %v5336
  %v5338 = vlaneseq
  %v5339 = vshrl.u32 %v5338, 7
  %v5340 = vsub.s32 %v5337, %v5339
  %v5341 = vrot.slane %v5286, %v5340
  %v5342 = vcombine.low %v5334, %v5341
  %v5346 = vsel %vm52, %v5131, 0
  %v5348 = vsel %vm52, %v5180, 0
  %v5350 = vsel %vm52, %v5220, 0
  %5352 = vmatprep.subr.mxu0 0.0
  %5353 = vmatpush1.msra.mxu0 %v4793
  %5354 = vmatprep.subr.mxu0 0.0
  %5355 = vmatpush1.msra.mxu0 %v4794
  %5356 = vmatprep.subr.mxu0 0.0
  %5357 = vmatpush1.msra.mxu0 %v4795
  %5358 = vmatprep.subr.mxu0 0.0
  %5359 = vmatpush1.msra.mxu0 %v4796
  %5360 = vmatprep.subr.mxu0 0.0
  %5361 = vmatpush1.msra.mxu0 0.0
  %5362 = vmatprep.subr.mxu0 0.0
  %5363 = vmatpush1.msra.mxu0 0.0
  %5364 = vmatprep.subr.mxu0 0.0
  %5365 = vmatpush1.msra.mxu0 0.0
  %5366 = vmatprep.subr.mxu0 0.0
  %5367 = vmatpush1.msra.mxu0 0.0
  %5368 = vmatprep.subr.mxu0 0.0
  %5369 = vmatpush1.msra.mxu0 0.0
  %5370 = vmatprep.subr.mxu0 0.0
  %5371 = vmatpush1.msra.mxu0 0.0
  %5372 = vmatprep.subr.mxu0 0.0
  %5373 = vmatpush1.msra.mxu0 0.0
  %5374 = vmatprep.subr.mxu0 0.0
  %5375 = vmatpush1.msra.mxu0 0.0
  %5376 = vmatprep.subr.mxu0 0.0
  %5377 = vmatpush1.msra.mxu0 0.0
  %5378 = vmatprep.subr.mxu0 0.0
  %5379 = vmatpush1.msra.mxu0 0.0
  %5380 = vmatprep.subr.mxu0 0.0
  %5381 = vmatpush1.msra.mxu0 0.0
  %5382 = vmatprep.subr.mxu0 0.0
  %5383 = vmatpush1.msra.mxu0 0.0
  %5384 = vmatprep.subr.mxu0 0.0
  %5385 = vmatpush1.msra.mxu0 0.0
  %5386 = vmatprep.subr.mxu0 0.0
  %5387 = vmatpush1.msra.mxu0 0.0
  %5388 = vmatprep.subr.mxu0 0.0
  %5389 = vmatpush1.msra.mxu0 0.0
  %5390 = vmatprep.subr.mxu0 0.0
  %5391 = vmatpush1.msra.mxu0 0.0
  %5392 = vmatprep.subr.mxu0 0.0
  %5393 = vmatpush1.msra.mxu0 0.0
  %5394 = vmatprep.subr.mxu0 0.0
  %5395 = vmatpush1.msra.mxu0 0.0
  %5396 = vmatprep.subr.mxu0 0.0
  %5397 = vmatpush1.msra.mxu0 0.0
  %5398 = vmatprep.subr.mxu0 0.0
  %5399 = vmatpush1.msra.mxu0 0.0
  %5400 = vmatprep.subr.mxu0 0.0
  %5401 = vmatpush1.msra.mxu0 0.0
  %5402 = vmatprep.subr.mxu0 0.0
  %5403 = vmatpush1.msra.mxu0 0.0
  %5404 = vmatprep.subr.mxu0 0.0
  %5405 = vmatpush1.msra.mxu0 0.0
  %5406 = vmatprep.subr.mxu0 0.0
  %5407 = vmatpush1.msra.mxu0 0.0
  %5408 = vmatprep.subr.mxu0 0.0
  %5409 = vmatpush1.msra.mxu0 0.0
  %5410 = vmatprep.subr.mxu0 0.0
  %5411 = vmatpush1.msra.mxu0 0.0
  %5412 = vmatprep.subr.mxu0 0.0
  %5413 = vmatpush1.msra.mxu0 0.0
  %5414 = vmatprep.subr.mxu0 0.0
  %5415 = vmatpush1.msra.mxu0 0.0
  %5416 = vmatprep.mubr.f32.mxu0 0.0
  %5417 = vmatmul.mubr.f32.gmra.mrb[0].mxu0 %v5346
  %v5418 = vpop.f32.mrb[0].mxu0
  %v5419 = vadd.f32 %v5269, %v5418
  %v5420 = vpop.f32.mrb[0].mxu0
  %5421 = vmatprep.mubr.f32.mxu0 0.0
  %5422 = vmatmul.mubr.f32.gmra.mrb[0].mxu0 %v5348
  %v5423 = vpop.f32.mrb[0].mxu0
  %v5424 = vadd.f32 %v5310, %v5423
  %v5425 = vpop.f32.mrb[0].mxu0
  %5426 = vmatprep.mubr.f32.mxu0 0.0
  %5427 = vmatmul.mubr.f32.gmra.mrb[0].mxu0 %v5350
  %v5428 = vpop.f32.mrb[0].mxu0
  %v5429 = vadd.f32 %v5342, %v5428
  %v5430 = vpop.f32.mrb[0].mxu0
  %5431 = vdwg.mxu0
  %v5435 = vcombine.high %v5419, %v5419
  %v5437 = vunpack.c.l.s4 1966171168
  %v5438 = vunpack.c.0.s8 %v5437
  %v5439 = vlaneseq
  %v5440 = vshrl.u32 %v5439, 7
  %v5441 = vsub.s32 %v5438, %v5440
  %v5442 = vrot.slane %v5419, %v5441
  %v5444 = vunpack.c.l.s4 1966171168
  %v5445 = vunpack.c.0.s8 %v5444
  %v5446 = vlaneseq
  %v5447 = vshrl.u32 %v5446, 7
  %v5448 = vsub.s32 %v5445, %v5447
  %v5449 = vrot.slane %v5435, %v5448
  %v5450 = vcombine.high %v5442, %v5442
  %v5451 = vcombine.high %v5449, %v5449
  %v5453 = vunpack.c.l.s4 1966171168
  %v5454 = vunpack.c.0.s8 %v5453
  %v5455 = vlaneseq
  %v5456 = vshrl.u32 %v5455, 7
  %v5457 = vsub.s32 %v5454, %v5456
  %v5458 = vrot.slane %v5442, %v5457
  %v5460 = vunpack.c.l.s4 1966171168
  %v5461 = vunpack.c.0.s8 %v5460
  %v5462 = vlaneseq
  %v5463 = vshrl.u32 %v5462, 7
  %v5464 = vsub.s32 %v5461, %v5463
  %v5465 = vrot.slane %v5449, %v5464
  %v5467 = vunpack.c.l.s4 1966171168
  %v5468 = vunpack.c.0.s8 %v5467
  %v5469 = vlaneseq
  %v5470 = vshrl.u32 %v5469, 7
  %v5471 = vsub.s32 %v5468, %v5470
  %v5472 = vrot.slane %v5450, %v5471
  %v5474 = vunpack.c.l.s4 1966171168
  %v5475 = vunpack.c.0.s8 %v5474
  %v5476 = vlaneseq
  %v5477 = vshrl.u32 %v5476, 7
  %v5478 = vsub.s32 %v5475, %v5477
  %v5479 = vrot.slane %v5451, %v5478
  %v5480 = vcombine.high %v5458, %v5458
  %v5481 = vcombine.high %v5465, %v5465
  %v5482 = vcombine.high %v5472, %v5472
  %v5483 = vcombine.high %v5479, %v5479
  %v5484 = vcombine.high %v5424, %v5424
  %v5486 = vunpack.c.l.s4 1966171168
  %v5487 = vunpack.c.0.s8 %v5486
  %v5488 = vlaneseq
  %v5489 = vshrl.u32 %v5488, 7
  %v5490 = vsub.s32 %v5487, %v5489
  %v5491 = vrot.slane %v5424, %v5490
  %v5493 = vunpack.c.l.s4 1966171168
  %v5494 = vunpack.c.0.s8 %v5493
  %v5495 = vlaneseq
  %v5496 = vshrl.u32 %v5495, 7
  %v5497 = vsub.s32 %v5494, %v5496
  %v5498 = vrot.slane %v5484, %v5497
  %v5499 = vcombine.high %v5491, %v5491
  %v5500 = vcombine.high %v5498, %v5498
  %v5502 = vunpack.c.l.s4 1966171168
  %v5503 = vunpack.c.0.s8 %v5502
  %v5504 = vlaneseq
  %v5505 = vshrl.u32 %v5504, 7
  %v5506 = vsub.s32 %v5503, %v5505
  %v5507 = vrot.slane %v5491, %v5506
  %v5509 = vunpack.c.l.s4 1966171168
  %v5510 = vunpack.c.0.s8 %v5509
  %v5511 = vlaneseq
  %v5512 = vshrl.u32 %v5511, 7
  %v5513 = vsub.s32 %v5510, %v5512
  %v5514 = vrot.slane %v5498, %v5513
  %v5516 = vunpack.c.l.s4 1966171168
  %v5517 = vunpack.c.0.s8 %v5516
  %v5518 = vlaneseq
  %v5519 = vshrl.u32 %v5518, 7
  %v5520 = vsub.s32 %v5517, %v5519
  %v5521 = vrot.slane %v5499, %v5520
  %v5523 = vunpack.c.l.s4 1966171168
  %v5524 = vunpack.c.0.s8 %v5523
  %v5525 = vlaneseq
  %v5526 = vshrl.u32 %v5525, 7
  %v5527 = vsub.s32 %v5524, %v5526
  %v5528 = vrot.slane %v5500, %v5527
  %v5529 = vcombine.high %v5507, %v5507
  %v5530 = vcombine.high %v5514, %v5514
  %v5531 = vcombine.high %v5521, %v5521
  %v5532 = vcombine.high %v5528, %v5528
  %v5533 = vcombine.high %v5429, %v5429
  %v5535 = vunpack.c.l.s4 1966171168
  %v5536 = vunpack.c.0.s8 %v5535
  %v5537 = vlaneseq
  %v5538 = vshrl.u32 %v5537, 7
  %v5539 = vsub.s32 %v5536, %v5538
  %v5540 = vrot.slane %v5429, %v5539
  %v5542 = vunpack.c.l.s4 1966171168
  %v5543 = vunpack.c.0.s8 %v5542
  %v5544 = vlaneseq
  %v5545 = vshrl.u32 %v5544, 7
  %v5546 = vsub.s32 %v5543, %v5545
  %v5547 = vrot.slane %v5533, %v5546
  %v5548 = vcombine.high %v5540, %v5540
  %v5549 = vcombine.high %v5547, %v5547
  %v5551 = vunpack.c.l.s4 1966171168
  %v5552 = vunpack.c.0.s8 %v5551
  %v5553 = vlaneseq
  %v5554 = vshrl.u32 %v5553, 7
  %v5555 = vsub.s32 %v5552, %v5554
  %v5556 = vrot.slane %v5540, %v5555
  %v5558 = vunpack.c.l.s4 1966171168
  %v5559 = vunpack.c.0.s8 %v5558
  %v5560 = vlaneseq
  %v5561 = vshrl.u32 %v5560, 7
  %v5562 = vsub.s32 %v5559, %v5561
  %v5563 = vrot.slane %v5547, %v5562
  %v5565 = vunpack.c.l.s4 1966171168
  %v5566 = vunpack.c.0.s8 %v5565
  %v5567 = vlaneseq
  %v5568 = vshrl.u32 %v5567, 7
  %v5569 = vsub.s32 %v5566, %v5568
  %v5570 = vrot.slane %v5548, %v5569
  %v5572 = vunpack.c.l.s4 1966171168
  %v5573 = vunpack.c.0.s8 %v5572
  %v5574 = vlaneseq
  %v5575 = vshrl.u32 %v5574, 7
  %v5576 = vsub.s32 %v5573, %v5575
  %v5577 = vrot.slane %v5549, %v5576
  %v5578 = vcombine.high %v5556, %v5556
  %v5579 = vcombine.high %v5570, %v5570
  %v5580 = vcombine.low %v5458, %v5472
  %v5581 = vcombine.low %v5480, %v5482
  %v5582 = vcombine.low %v5465, %v5479
  %v5583 = vcombine.low %v5481, %v5483
  %v5585 = vunpack.c.l.s4 1966171168
  %v5586 = vunpack.c.0.s8 %v5585
  %v5587 = vlaneseq
  %v5588 = vshrl.u32 %v5587, 7
  %v5589 = vsub.s32 %v5586, %v5588
  %v5590 = vrot.slane %v5580, %v5589
  %v5592 = vunpack.c.l.s4 1966171168
  %v5593 = vunpack.c.0.s8 %v5592
  %v5594 = vlaneseq
  %v5595 = vshrl.u32 %v5594, 7
  %v5596 = vsub.s32 %v5593, %v5595
  %v5597 = vrot.slane %v5581, %v5596
  %v5599 = vunpack.c.l.s4 1966171168
  %v5600 = vunpack.c.0.s8 %v5599
  %v5601 = vlaneseq
  %v5602 = vshrl.u32 %v5601, 7
  %v5603 = vsub.s32 %v5600, %v5602
  %v5604 = vrot.slane %v5582, %v5603
  %v5606 = vunpack.c.l.s4 1966171168
  %v5607 = vunpack.c.0.s8 %v5606
  %v5608 = vlaneseq
  %v5609 = vshrl.u32 %v5608, 7
  %v5610 = vsub.s32 %v5607, %v5609
  %v5611 = vrot.slane %v5583, %v5610
  %v5612 = vcombine.low %v5590, %v5597
  %v5613 = vcombine.low %v5604, %v5611
  %v5615 = vunpack.c.l.s4 1966171168
  %v5616 = vunpack.c.0.s8 %v5615
  %v5617 = vlaneseq
  %v5618 = vshrl.u32 %v5617, 7
  %v5619 = vsub.s32 %v5616, %v5618
  %v5620 = vrot.slane %v5612, %v5619
  %v5622 = vunpack.c.l.s4 1966171168
  %v5623 = vunpack.c.0.s8 %v5622
  %v5624 = vlaneseq
  %v5625 = vshrl.u32 %v5624, 7
  %v5626 = vsub.s32 %v5623, %v5625
  %v5627 = vrot.slane %v5613, %v5626
  %v5628 = vcombine.low %v5620, %v5627
  %v5629 = vcombine.low %v5507, %v5521
  %v5631 = vunpack.c.l.s4 1966171168
  %v5632 = vunpack.c.0.s8 %v5631
  %v5633 = vlaneseq
  %v5634 = vshrl.u32 %v5633, 7
  %v5635 = vsub.s32 %v5632, %v5634
  %v5636 = vrot.slane %v5629, %v5635
  %v5638 = vunpack.c.l.s4 1966171168
  %v5639 = vunpack.c.0.s8 %v5638
  %v5640 = vlaneseq
  %v5641 = vshrl.u32 %v5640, 7
  %v5642 = vsub.s32 %v5639, %v5641
  %v5643 = vrot.slane %v5529, %v5642
  %v5644 = vcombine.low %v5636, %v5643
  %v5646 = vunpack.c.l.s4 1966171168
  %v5647 = vunpack.c.0.s8 %v5646
  %v5648 = vlaneseq
  %v5649 = vshrl.u32 %v5648, 7
  %v5650 = vsub.s32 %v5647, %v5649
  %v5651 = vrot.slane %v5644, %v5650
  %5652 = vrot.lane.b32.xlu0 %v5628, 96
  %v5653 = vpop.permute.xlu0 %5652
  %5654 = vrot.lane.b32.xlu0 %v5651, 96
  %v5655 = vpop.permute.xlu0 %5654
  %v5656 = vsel %vm898, %v5628, 0
  %v5658 = vsel %vm898, %v5651, 0
  %v5660 = vsel %vm898, %v5653, 0
  %v5662 = vsel %vm898, %v5655, 0
  %5664 = vmatprep.subr.mxu0 0.0
  %5665 = vmatpush1.xpose.msra.mxu0 %v5660
  %5666 = vmatprep.subr.mxu0 0.0
  %5667 = vmatpush1.xpose.msra.mxu0 %v5662
  %5668 = vmatprep.subr.mxu0 0.0
  %5669 = vmatpush1.xpose.msra.mxu0 0.0
  %5670 = vmatprep.subr.mxu0 0.0
  %5671 = vmatpush1.xpose.msra.mxu0 0.0
  %5672 = vmatprep.subr.mxu0 0.0
  %5673 = vmatpush1.xpose.msra.mxu0 0.0
  %5674 = vmatprep.subr.mxu0 0.0
  %5675 = vmatpush1.xpose.msra.mxu0 0.0
  %5676 = vmatprep.subr.mxu0 0.0
  %5677 = vmatpush1.xpose.msra.mxu0 0.0
  %5678 = vmatprep.subr.mxu0 0.0
  %5679 = vmatpush1.xpose.msra.mxu0 0.0
  %5680 = vmatprep.subr.mxu0 0.0
  %5681 = vmatpush1.xpose.msra.mxu0 0.0
  %5682 = vmatprep.subr.mxu0 0.0
  %5683 = vmatpush1.xpose.msra.mxu0 0.0
  %5684 = vmatprep.subr.mxu0 0.0
  %5685 = vmatpush1.xpose.msra.mxu0 0.0
  %5686 = vmatprep.subr.mxu0 0.0
  %5687 = vmatpush1.xpose.msra.mxu0 0.0
  %5688 = vmatprep.subr.mxu0 0.0
  %5689 = vmatpush1.xpose.msra.mxu0 0.0
  %5690 = vmatprep.subr.mxu0 0.0
  %5691 = vmatpush1.xpose.msra.mxu0 0.0
  %5692 = vmatprep.subr.mxu0 0.0
  %5693 = vmatpush1.xpose.msra.mxu0 0.0
  %5694 = vmatprep.subr.mxu0 0.0
  %5695 = vmatpush1.xpose.msra.mxu0 0.0
  %5696 = vmatprep.subr.mxu0 0.0
  %5697 = vmatpush1.xpose.msra.mxu0 0.0
  %5698 = vmatprep.subr.mxu0 0.0
  %5699 = vmatpush1.xpose.msra.mxu0 0.0
  %5700 = vmatprep.subr.mxu0 0.0
  %5701 = vmatpush1.xpose.msra.mxu0 0.0
  %5702 = vmatprep.subr.mxu0 0.0
  %5703 = vmatpush1.xpose.msra.mxu0 0.0
  %5704 = vmatprep.subr.mxu0 0.0
  %5705 = vmatpush1.xpose.msra.mxu0 0.0
  %5706 = vmatprep.subr.mxu0 0.0
  %5707 = vmatpush1.xpose.msra.mxu0 0.0
  %5708 = vmatprep.subr.mxu0 0.0
  %5709 = vmatpush1.xpose.msra.mxu0 0.0
  %5710 = vmatprep.subr.mxu0 0.0
  %5711 = vmatpush1.xpose.msra.mxu0 0.0
  %5712 = vmatprep.subr.mxu0 0.0
  %5713 = vmatpush1.xpose.msra.mxu0 0.0
  %5714 = vmatprep.subr.mxu0 0.0
  %5715 = vmatpush1.xpose.msra.mxu0 0.0
  %5716 = vmatprep.subr.mxu0 0.0
  %5717 = vmatpush1.xpose.msra.mxu0 0.0
  %5718 = vmatprep.subr.mxu0 0.0
  %5719 = vmatpush1.xpose.msra.mxu0 0.0
  %5720 = vmatprep.subr.mxu0 0.0
  %5721 = vmatpush1.xpose.msra.mxu0 0.0
  %5722 = vmatprep.subr.mxu0 0.0
  %5723 = vmatpush1.xpose.msra.mxu0 0.0
  %5724 = vmatprep.subr.mxu0 0.0
  %5725 = vmatpush1.xpose.msra.mxu0 0.0
  %5726 = vmatprep.subr.mxu0 0.0
  %5727 = vmatpush1.xpose.msra.mxu0 0.0
  %5728 = vmatprep.mubr.f32.mxu0 0.0
  %5729 = vmatmul.mubr.f32.gmra.mrb[0].mxu0 %v5656
  %v5730 = vpop.f32.mrb[0].mxu0
  %v5731 = vadd.f32 0.0, %v5730
  %v5732 = vpop.f32.mrb[0].mxu0
  %5733 = vmatprep.mubr.f32.mxu0 0.0
  %5734 = vmatmul.mubr.f32.gmra.mrb[0].mxu0 %v5658
  %v5735 = vpop.f32.mrb[0].mxu0
  %v5736 = vadd.f32 0.0, %v5735
  %v5737 = vpop.f32.mrb[0].mxu0
  %5738 = vdwg.mxu0
  %v5739 = vcombine.low %v5531, %v5514
  %v5740 = vcombine.low %v5528, %v5530
  %v5741 = vcombine.low %v5532, %v5556
  %v5742 = vcombine.low %v5570, %v5578
  %v5744 = vunpack.c.l.s4 1966171168
  %v5745 = vunpack.c.0.s8 %v5744
  %v5746 = vlaneseq
  %v5747 = vshrl.u32 %v5746, 7
  %v5748 = vsub.s32 %v5745, %v5747
  %v5749 = vrot.slane %v5739, %v5748
  %v5751 = vunpack.c.l.s4 1966171168
  %v5752 = vunpack.c.0.s8 %v5751
  %v5753 = vlaneseq
  %v5754 = vshrl.u32 %v5753, 7
  %v5755 = vsub.s32 %v5752, %v5754
  %v5756 = vrot.slane %v5740, %v5755
  %v5758 = vunpack.c.l.s4 1966171168
  %v5759 = vunpack.c.0.s8 %v5758
  %v5760 = vlaneseq
  %v5761 = vshrl.u32 %v5760, 7
  %v5762 = vsub.s32 %v5759, %v5761
  %v5763 = vrot.slane %v5741, %v5762
  %v5765 = vunpack.c.l.s4 1966171168
  %v5766 = vunpack.c.0.s8 %v5765
  %v5767 = vlaneseq
  %v5768 = vshrl.u32 %v5767, 7
  %v5769 = vsub.s32 %v5766, %v5768
  %v5770 = vrot.slane %v5742, %v5769
  %v5771 = vcombine.low %v5749, %v5756
  %v5772 = vcombine.low %v5763, %v5770
  %v5774 = vunpack.c.l.s4 1966171168
  %v5775 = vunpack.c.0.s8 %v5774
  %v5776 = vlaneseq
  %v5777 = vshrl.u32 %v5776, 7
  %v5778 = vsub.s32 %v5775, %v5777
  %v5779 = vrot.slane %v5771, %v5778
  %v5781 = vunpack.c.l.s4 1966171168
  %v5782 = vunpack.c.0.s8 %v5781
  %v5783 = vlaneseq
  %v5784 = vshrl.u32 %v5783, 7
  %v5785 = vsub.s32 %v5782, %v5784
  %v5786 = vrot.slane %v5772, %v5785
  %v5787 = vcombine.low %v5779, %v5786
  %v5788 = vcombine.low %v5579, %v5563
  %v5790 = vunpack.c.l.s4 1966171168
  %v5791 = vunpack.c.0.s8 %v5790
  %v5792 = vlaneseq
  %v5793 = vshrl.u32 %v5792, 7
  %v5794 = vsub.s32 %v5791, %v5793
  %v5795 = vrot.slane %v5788, %v5794
  %v5797 = vunpack.c.l.s4 1966171168
  %v5798 = vunpack.c.0.s8 %v5797
  %v5799 = vlaneseq
  %v5800 = vshrl.u32 %v5799, 7
  %v5801 = vsub.s32 %v5798, %v5800
  %v5802 = vrot.slane %v5577, %v5801
  %v5803 = vcombine.low %v5795, %v5802
  %v5805 = vunpack.c.l.s4 1966171168
  %v5806 = vunpack.c.0.s8 %v5805
  %v5807 = vlaneseq
  %v5808 = vshrl.u32 %v5807, 7
  %v5809 = vsub.s32 %v5806, %v5808
  %v5810 = vrot.slane %v5803, %v5809
  %5811 = vrot.lane.b32.xlu0 %v5787, 96
  %v5812 = vpop.permute.xlu0 %5811
  %5813 = vrot.lane.b32.xlu0 %v5810, 96
  %v5814 = vpop.permute.xlu0 %5813
  %v5815 = vsel %vm898, %v5787, 0
  %v5817 = vsel %vm898, %v5810, 0
  %v5819 = vsel %vm898, %v5812, 0
  %v5821 = vsel %vm898, %v5814, 0
  %5823 = vmatprep.subr.mxu0 0.0
  %5824 = vmatpush1.xpose.msra.mxu0 %v5819
  %5825 = vmatprep.subr.mxu0 0.0
  %5826 = vmatpush1.xpose.msra.mxu0 %v5821
  %5827 = vmatprep.subr.mxu0 0.0
  %5828 = vmatpush1.xpose.msra.mxu0 0.0
  %5829 = vmatprep.subr.mxu0 0.0
  %5830 = vmatpush1.xpose.msra.mxu0 0.0
  %5831 = vmatprep.subr.mxu0 0.0
  %5832 = vmatpush1.xpose.msra.mxu0 0.0
  %5833 = vmatprep.subr.mxu0 0.0
  %5834 = vmatpush1.xpose.msra.mxu0 0.0
  %5835 = vmatprep.subr.mxu0 0.0
  %5836 = vmatpush1.xpose.msra.mxu0 0.0
  %5837 = vmatprep.subr.mxu0 0.0
  %5838 = vmatpush1.xpose.msra.mxu0 0.0
  %5839 = vmatprep.subr.mxu0 0.0
  %5840 = vmatpush1.xpose.msra.mxu0 0.0
  %5841 = vmatprep.subr.mxu0 0.0
  %5842 = vmatpush1.xpose.msra.mxu0 0.0
  %5843 = vmatprep.subr.mxu0 0.0
  %5844 = vmatpush1.xpose.msra.mxu0 0.0
  %5845 = vmatprep.subr.mxu0 0.0
  %5846 = vmatpush1.xpose.msra.mxu0 0.0
  %5847 = vmatprep.subr.mxu0 0.0
  %5848 = vmatpush1.xpose.msra.mxu0 0.0
  %5849 = vmatprep.subr.mxu0 0.0
  %5850 = vmatpush1.xpose.msra.mxu0 0.0
  %5851 = vmatprep.subr.mxu0 0.0
  %5852 = vmatpush1.xpose.msra.mxu0 0.0
  %5853 = vmatprep.subr.mxu0 0.0
  %5854 = vmatpush1.xpose.msra.mxu0 0.0
  %5855 = vmatprep.subr.mxu0 0.0
  %5856 = vmatpush1.xpose.msra.mxu0 0.0
  %5857 = vmatprep.subr.mxu0 0.0
  %5858 = vmatpush1.xpose.msra.mxu0 0.0
  %5859 = vmatprep.subr.mxu0 0.0
  %5860 = vmatpush1.xpose.msra.mxu0 0.0
  %5861 = vmatprep.subr.mxu0 0.0
  %5862 = vmatpush1.xpose.msra.mxu0 0.0
  %5863 = vmatprep.subr.mxu0 0.0
  %5864 = vmatpush1.xpose.msra.mxu0 0.0
  %5865 = vmatprep.subr.mxu0 0.0
  %5866 = vmatpush1.xpose.msra.mxu0 0.0
  %5867 = vmatprep.subr.mxu0 0.0
  %5868 = vmatpush1.xpose.msra.mxu0 0.0
  %5869 = vmatprep.subr.mxu0 0.0
  %5870 = vmatpush1.xpose.msra.mxu0 0.0
  %5871 = vmatprep.subr.mxu0 0.0
  %5872 = vmatpush1.xpose.msra.mxu0 0.0
  %5873 = vmatprep.subr.mxu0 0.0
  %5874 = vmatpush1.xpose.msra.mxu0 0.0
  %5875 = vmatprep.subr.mxu0 0.0
  %5876 = vmatpush1.xpose.msra.mxu0 0.0
  %5877 = vmatprep.subr.mxu0 0.0
  %5878 = vmatpush1.xpose.msra.mxu0 0.0
  %5879 = vmatprep.subr.mxu0 0.0
  %5880 = vmatpush1.xpose.msra.mxu0 0.0
  %5881 = vmatprep.subr.mxu0 0.0
  %5882 = vmatpush1.xpose.msra.mxu0 0.0
  %5883 = vmatprep.subr.mxu0 0.0
  %5884 = vmatpush1.xpose.msra.mxu0 0.0
  %5885 = vmatprep.subr.mxu0 0.0
  %5886 = vmatpush1.xpose.msra.mxu0 0.0
  %5887 = vmatprep.mubr.f32.mxu0 0.0
  %5888 = vmatmul.mubr.f32.gmra.mrb[0].mxu0 %v5815
  %v5889 = vpop.f32.mrb[0].mxu0
  %v5890 = vadd.f32 0.0, %v5889
  %v5891 = vpop.f32.mrb[0].mxu0
  %5892 = vmatprep.mubr.f32.mxu0 0.0
  %5893 = vmatmul.mubr.f32.gmra.mrb[0].mxu0 %v5817
  %v5894 = vpop.f32.mrb[0].mxu0
  %v5895 = vadd.f32 0.0, %v5894
  %v5896 = vpop.f32.mrb[0].mxu0
  %5897 = vdwg.mxu0
  %5898 = vrot.lane.b32.xlu0 %v5628, 120
  %v5899 = vpop.permute.xlu0 %5898
  %5900 = vrot.lane.b32.xlu0 %v5651, 120
  %v5901 = vpop.permute.xlu0 %5900
  %5902 = vrot.lane.b32.xlu0 %v5628, 88
  %v5903 = vpop.permute.xlu0 %5902
  %5904 = vrot.lane.b32.xlu0 %v5651, 88
  %v5905 = vpop.permute.xlu0 %5904
  %v5906 = vsel %vm898, %v5899, 0
  %v5908 = vsel %vm898, %v5901, 0
  %v5910 = vsel %vm898, %v5903, 0
  %v5912 = vsel %vm898, %v5905, 0
  %5914 = vmatprep.subr.mxu0 0.0
  %5915 = vmatpush1.xpose.msra.mxu0 %v5910
  %5916 = vmatprep.subr.mxu0 0.0
  %5917 = vmatpush1.xpose.msra.mxu0 %v5912
  %5918 = vmatprep.subr.mxu0 0.0
  %5919 = vmatpush1.xpose.msra.mxu0 0.0
  %5920 = vmatprep.subr.mxu0 0.0
  %5921 = vmatpush1.xpose.msra.mxu0 0.0
  %5922 = vmatprep.subr.mxu0 0.0
  %5923 = vmatpush1.xpose.msra.mxu0 0.0
  %5924 = vmatprep.subr.mxu0 0.0
  %5925 = vmatpush1.xpose.msra.mxu0 0.0
  %5926 = vmatprep.subr.mxu0 0.0
  %5927 = vmatpush1.xpose.msra.mxu0 0.0
  %5928 = vmatprep.subr.mxu0 0.0
  %5929 = vmatpush1.xpose.msra.mxu0 0.0
  %5930 = vmatprep.subr.mxu0 0.0
  %5931 = vmatpush1.xpose.msra.mxu0 0.0
  %5932 = vmatprep.subr.mxu0 0.0
  %5933 = vmatpush1.xpose.msra.mxu0 0.0
  %5934 = vmatprep.subr.mxu0 0.0
  %5935 = vmatpush1.xpose.msra.mxu0 0.0
  %5936 = vmatprep.subr.mxu0 0.0
  %5937 = vmatpush1.xpose.msra.mxu0 0.0
  %5938 = vmatprep.subr.mxu0 0.0
  %5939 = vmatpush1.xpose.msra.mxu0 0.0
  %5940 = vmatprep.subr.mxu0 0.0
  %5941 = vmatpush1.xpose.msra.mxu0 0.0
  %5942 = vmatprep.subr.mxu0 0.0
  %5943 = vmatpush1.xpose.msra.mxu0 0.0
  %5944 = vmatprep.subr.mxu0 0.0
  %5945 = vmatpush1.xpose.msra.mxu0 0.0
  %5946 = vmatprep.subr.mxu0 0.0
  %5947 = vmatpush1.xpose.msra.mxu0 0.0
  %5948 = vmatprep.subr.mxu0 0.0
  %5949 = vmatpush1.xpose.msra.mxu0 0.0
  %5950 = vmatprep.subr.mxu0 0.0
  %5951 = vmatpush1.xpose.msra.mxu0 0.0
  %5952 = vmatprep.subr.mxu0 0.0
  %5953 = vmatpush1.xpose.msra.mxu0 0.0
  %5954 = vmatprep.subr.mxu0 0.0
  %5955 = vmatpush1.xpose.msra.mxu0 0.0
  %5956 = vmatprep.subr.mxu0 0.0
  %5957 = vmatpush1.xpose.msra.mxu0 0.0
  %5958 = vmatprep.subr.mxu0 0.0
  %5959 = vmatpush1.xpose.msra.mxu0 0.0
  %5960 = vmatprep.subr.mxu0 0.0
  %5961 = vmatpush1.xpose.msra.mxu0 0.0
  %5962 = vmatprep.subr.mxu0 0.0
  %5963 = vmatpush1.xpose.msra.mxu0 0.0
  %5964 = vmatprep.subr.mxu0 0.0
  %5965 = vmatpush1.xpose.msra.mxu0 0.0
  %5966 = vmatprep.subr.mxu0 0.0
  %5967 = vmatpush1.xpose.msra.mxu0 0.0
  %5968 = vmatprep.subr.mxu0 0.0
  %5969 = vmatpush1.xpose.msra.mxu0 0.0
  %5970 = vmatprep.subr.mxu0 0.0
  %5971 = vmatpush1.xpose.msra.mxu0 0.0
  %5972 = vmatprep.subr.mxu0 0.0
  %5973 = vmatpush1.xpose.msra.mxu0 0.0
  %5974 = vmatprep.subr.mxu0 0.0
  %5975 = vmatpush1.xpose.msra.mxu0 0.0
  %5976 = vmatprep.subr.mxu0 0.0
  %5977 = vmatpush1.xpose.msra.mxu0 0.0
  %5978 = vmatprep.mubr.f32.mxu0 0.0
  %5979 = vmatmul.mubr.f32.gmra.mrb[0].mxu0 %v5906
  %v5980 = vpop.f32.mrb[0].mxu0
  %v5981 = vadd.f32 0.0, %v5980
  %v5982 = vpop.f32.mrb[0].mxu0
  %5983 = vmatprep.mubr.f32.mxu0 0.0
  %5984 = vmatmul.mubr.f32.gmra.mrb[0].mxu0 %v5908
  %v5985 = vpop.f32.mrb[0].mxu0
  %v5986 = vadd.f32 0.0, %v5985
  %v5987 = vpop.f32.mrb[0].mxu0
  %5988 = vdwg.mxu0
  %5989 = vrot.lane.b32.xlu0 %v5787, 120
  %v5990 = vpop.permute.xlu0 %5989
  %5991 = vrot.lane.b32.xlu0 %v5810, 120
  %v5992 = vpop.permute.xlu0 %5991
  %5993 = vrot.lane.b32.xlu0 %v5787, 88
  %v5994 = vpop.permute.xlu0 %5993
  %5995 = vrot.lane.b32.xlu0 %v5810, 88
  %v5996 = vpop.permute.xlu0 %5995
  %v5997 = vsel %vm898, %v5990, 0
  %v5999 = vsel %vm898, %v5992, 0
  %v6001 = vsel %vm898, %v5994, 0
  %v6003 = vsel %vm898, %v5996, 0
  %6005 = vmatprep.subr.mxu0 0.0
  %6006 = vmatpush1.xpose.msra.mxu0 %v6001
  %6007 = vmatprep.subr.mxu0 0.0
  %6008 = vmatpush1.xpose.msra.mxu0 %v6003
  %6009 = vmatprep.subr.mxu0 0.0
  %6010 = vmatpush1.xpose.msra.mxu0 0.0
  %6011 = vmatprep.subr.mxu0 0.0
  %6012 = vmatpush1.xpose.msra.mxu0 0.0
  %6013 = vmatprep.subr.mxu0 0.0
  %6014 = vmatpush1.xpose.msra.mxu0 0.0
  %6015 = vmatprep.subr.mxu0 0.0
  %6016 = vmatpush1.xpose.msra.mxu0 0.0
  %6017 = vmatprep.subr.mxu0 0.0
  %6018 = vmatpush1.xpose.msra.mxu0 0.0
  %6019 = vmatprep.subr.mxu0 0.0
  %6020 = vmatpush1.xpose.msra.mxu0 0.0
  %6021 = vmatprep.subr.mxu0 0.0
  %6022 = vmatpush1.xpose.msra.mxu0 0.0
  %6023 = vmatprep.subr.mxu0 0.0
  %6024 = vmatpush1.xpose.msra.mxu0 0.0
  %6025 = vmatprep.subr.mxu0 0.0
  %6026 = vmatpush1.xpose.msra.mxu0 0.0
  %6027 = vmatprep.subr.mxu0 0.0
  %6028 = vmatpush1.xpose.msra.mxu0 0.0
  %6029 = vmatprep.subr.mxu0 0.0
  %6030 = vmatpush1.xpose.msra.mxu0 0.0
  %6031 = vmatprep.subr.mxu0 0.0
  %6032 = vmatpush1.xpose.msra.mxu0 0.0
  %6033 = vmatprep.subr.mxu0 0.0
  %6034 = vmatpush1.xpose.msra.mxu0 0.0
  %6035 = vmatprep.subr.mxu0 0.0
  %6036 = vmatpush1.xpose.msra.mxu0 0.0
  %6037 = vmatprep.subr.mxu0 0.0
  %6038 = vmatpush1.xpose.msra.mxu0 0.0
  %6039 = vmatprep.subr.mxu0 0.0
  %6040 = vmatpush1.xpose.msra.mxu0 0.0
  %6041 = vmatprep.subr.mxu0 0.0
  %6042 = vmatpush1.xpose.msra.mxu0 0.0
  %6043 = vmatprep.subr.mxu0 0.0
  %6044 = vmatpush1.xpose.msra.mxu0 0.0
  %6045 = vmatprep.subr.mxu0 0.0
  %6046 = vmatpush1.xpose.msra.mxu0 0.0
  %6047 = vmatprep.subr.mxu0 0.0
  %6048 = vmatpush1.xpose.msra.mxu0 0.0
  %6049 = vmatprep.subr.mxu0 0.0
  %6050 = vmatpush1.xpose.msra.mxu0 0.0
  %6051 = vmatprep.subr.mxu0 0.0
  %6052 = vmatpush1.xpose.msra.mxu0 0.0
  %6053 = vmatprep.subr.mxu0 0.0
  %6054 = vmatpush1.xpose.msra.mxu0 0.0
  %6055 = vmatprep.subr.mxu0 0.0
  %6056 = vmatpush1.xpose.msra.mxu0 0.0
  %6057 = vmatprep.subr.mxu0 0.0
  %6058 = vmatpush1.xpose.msra.mxu0 0.0
  %6059 = vmatprep.subr.mxu0 0.0
  %6060 = vmatpush1.xpose.msra.mxu0 0.0
  %6061 = vmatprep.subr.mxu0 0.0
  %6062 = vmatpush1.xpose.msra.mxu0 0.0
  %6063 = vmatprep.subr.mxu0 0.0
  %6064 = vmatpush1.xpose.msra.mxu0 0.0
  %6065 = vmatprep.subr.mxu0 0.0
  %6066 = vmatpush1.xpose.msra.mxu0 0.0
  %6067 = vmatprep.subr.mxu0 0.0
  %6068 = vmatpush1.xpose.msra.mxu0 0.0
  %6069 = vmatprep.mubr.f32.mxu0 0.0
  %6070 = vmatmul.mubr.f32.gmra.mrb[0].mxu0 %v5997
  %v6071 = vpop.f32.mrb[0].mxu0
  %v6072 = vadd.f32 0.0, %v6071
  %v6073 = vpop.f32.mrb[0].mxu0
  %6074 = vmatprep.mubr.f32.mxu0 0.0
  %6075 = vmatmul.mubr.f32.gmra.mrb[0].mxu0 %v5999
  %v6076 = vpop.f32.mrb[0].mxu0
  %v6077 = vadd.f32 0.0, %v6076
  %v6078 = vpop.f32.mrb[0].mxu0
  %6079 = vdwg.mxu0
  %6080 = vrot.lane.b32.xlu0 %v5628, 112
  %v6081 = vpop.permute.xlu0 %6080
  %6082 = vrot.lane.b32.xlu0 %v5651, 112
  %v6083 = vpop.permute.xlu0 %6082
  %6084 = vrot.lane.b32.xlu0 %v5628, 80
  %v6085 = vpop.permute.xlu0 %6084
  %6086 = vrot.lane.b32.xlu0 %v5651, 80
  %v6087 = vpop.permute.xlu0 %6086
  %v6088 = vsel %vm898, %v6081, 0
  %v6090 = vsel %vm898, %v6083, 0
  %v6092 = vsel %vm898, %v6085, 0
  %v6094 = vsel %vm898, %v6087, 0
  %6096 = vmatprep.subr.mxu0 0.0
  %6097 = vmatpush1.xpose.msra.mxu0 %v6092
  %6098 = vmatprep.subr.mxu0 0.0
  %6099 = vmatpush1.xpose.msra.mxu0 %v6094
  %6100 = vmatprep.subr.mxu0 0.0
  %6101 = vmatpush1.xpose.msra.mxu0 0.0
  %6102 = vmatprep.subr.mxu0 0.0
  %6103 = vmatpush1.xpose.msra.mxu0 0.0
  %6104 = vmatprep.subr.mxu0 0.0
  %6105 = vmatpush1.xpose.msra.mxu0 0.0
  %6106 = vmatprep.subr.mxu0 0.0
  %6107 = vmatpush1.xpose.msra.mxu0 0.0
  %6108 = vmatprep.subr.mxu0 0.0
  %6109 = vmatpush1.xpose.msra.mxu0 0.0
  %6110 = vmatprep.subr.mxu0 0.0
  %6111 = vmatpush1.xpose.msra.mxu0 0.0
  %6112 = vmatprep.subr.mxu0 0.0
  %6113 = vmatpush1.xpose.msra.mxu0 0.0
  %6114 = vmatprep.subr.mxu0 0.0
  %6115 = vmatpush1.xpose.msra.mxu0 0.0
  %6116 = vmatprep.subr.mxu0 0.0
  %6117 = vmatpush1.xpose.msra.mxu0 0.0
  %6118 = vmatprep.subr.mxu0 0.0
  %6119 = vmatpush1.xpose.msra.mxu0 0.0
  %6120 = vmatprep.subr.mxu0 0.0
  %6121 = vmatpush1.xpose.msra.mxu0 0.0
  %6122 = vmatprep.subr.mxu0 0.0
  %6123 = vmatpush1.xpose.msra.mxu0 0.0
  %6124 = vmatprep.subr.mxu0 0.0
  %6125 = vmatpush1.xpose.msra.mxu0 0.0
  %6126 = vmatprep.subr.mxu0 0.0
  %6127 = vmatpush1.xpose.msra.mxu0 0.0
  %6128 = vmatprep.subr.mxu0 0.0
  %6129 = vmatpush1.xpose.msra.mxu0 0.0
  %6130 = vmatprep.subr.mxu0 0.0
  %6131 = vmatpush1.xpose.msra.mxu0 0.0
  %6132 = vmatprep.subr.mxu0 0.0
  %6133 = vmatpush1.xpose.msra.mxu0 0.0
  %6134 = vmatprep.subr.mxu0 0.0
  %6135 = vmatpush1.xpose.msra.mxu0 0.0
  %6136 = vmatprep.subr.mxu0 0.0
  %6137 = vmatpush1.xpose.msra.mxu0 0.0
  %6138 = vmatprep.subr.mxu0 0.0
  %6139 = vmatpush1.xpose.msra.mxu0 0.0
  %6140 = vmatprep.subr.mxu0 0.0
  %6141 = vmatpush1.xpose.msra.mxu0 0.0
  %6142 = vmatprep.subr.mxu0 0.0
  %6143 = vmatpush1.xpose.msra.mxu0 0.0
  %6144 = vmatprep.subr.mxu0 0.0
  %6145 = vmatpush1.xpose.msra.mxu0 0.0
  %6146 = vmatprep.subr.mxu0 0.0
  %6147 = vmatpush1.xpose.msra.mxu0 0.0
  %6148 = vmatprep.subr.mxu0 0.0
  %6149 = vmatpush1.xpose.msra.mxu0 0.0
  %6150 = vmatprep.subr.mxu0 0.0
  %6151 = vmatpush1.xpose.msra.mxu0 0.0
  %6152 = vmatprep.subr.mxu0 0.0
  %6153 = vmatpush1.xpose.msra.mxu0 0.0
  %6154 = vmatprep.subr.mxu0 0.0
  %6155 = vmatpush1.xpose.msra.mxu0 0.0
  %6156 = vmatprep.subr.mxu0 0.0
  %6157 = vmatpush1.xpose.msra.mxu0 0.0
  %6158 = vmatprep.subr.mxu0 0.0
  %6159 = vmatpush1.xpose.msra.mxu0 0.0
  %6160 = vmatprep.mubr.f32.mxu0 0.0
  %6161 = vmatmul.mubr.f32.gmra.mrb[0].mxu0 %v6088
  %v6162 = vpop.f32.mrb[0].mxu0
  %v6163 = vadd.f32 0.0, %v6162
  %v6164 = vpop.f32.mrb[0].mxu0
  %6165 = vmatprep.mubr.f32.mxu0 0.0
  %6166 = vmatmul.mubr.f32.gmra.mrb[0].mxu0 %v6090
  %v6167 = vpop.f32.mrb[0].mxu0
  %v6168 = vadd.f32 0.0, %v6167
  %v6169 = vpop.f32.mrb[0].mxu0
  %6170 = vdwg.mxu0
  %6171 = vrot.lane.b32.xlu0 %v5787, 112
  %v6172 = vpop.permute.xlu0 %6171
  %6173 = vrot.lane.b32.xlu0 %v5810, 112
  %v6174 = vpop.permute.xlu0 %6173
  %6175 = vrot.lane.b32.xlu0 %v5787, 80
  %v6176 = vpop.permute.xlu0 %6175
  %6177 = vrot.lane.b32.xlu0 %v5810, 80
  %v6178 = vpop.permute.xlu0 %6177
  %v6179 = vsel %vm898, %v6172, 0
  %v6181 = vsel %vm898, %v6174, 0
  %v6183 = vsel %vm898, %v6176, 0
  %v6185 = vsel %vm898, %v6178, 0
  %6187 = vmatprep.subr.mxu0 0.0
  %6188 = vmatpush1.xpose.msra.mxu0 %v6183
  %6189 = vmatprep.subr.mxu0 0.0
  %6190 = vmatpush1.xpose.msra.mxu0 %v6185
  %6191 = vmatprep.subr.mxu0 0.0
  %6192 = vmatpush1.xpose.msra.mxu0 0.0
  %6193 = vmatprep.subr.mxu0 0.0
  %6194 = vmatpush1.xpose.msra.mxu0 0.0
  %6195 = vmatprep.subr.mxu0 0.0
  %6196 = vmatpush1.xpose.msra.mxu0 0.0
  %6197 = vmatprep.subr.mxu0 0.0
  %6198 = vmatpush1.xpose.msra.mxu0 0.0
  %6199 = vmatprep.subr.mxu0 0.0
  %6200 = vmatpush1.xpose.msra.mxu0 0.0
  %6201 = vmatprep.subr.mxu0 0.0
  %6202 = vmatpush1.xpose.msra.mxu0 0.0
  %6203 = vmatprep.subr.mxu0 0.0
  %6204 = vmatpush1.xpose.msra.mxu0 0.0
  %6205 = vmatprep.subr.mxu0 0.0
  %6206 = vmatpush1.xpose.msra.mxu0 0.0
  %6207 = vmatprep.subr.mxu0 0.0
  %6208 = vmatpush1.xpose.msra.mxu0 0.0
  %6209 = vmatprep.subr.mxu0 0.0
  %6210 = vmatpush1.xpose.msra.mxu0 0.0
  %6211 = vmatprep.subr.mxu0 0.0
  %6212 = vmatpush1.xpose.msra.mxu0 0.0
  %6213 = vmatprep.subr.mxu0 0.0
  %6214 = vmatpush1.xpose.msra.mxu0 0.0
  %6215 = vmatprep.subr.mxu0 0.0
  %6216 = vmatpush1.xpose.msra.mxu0 0.0
  %6217 = vmatprep.subr.mxu0 0.0
  %6218 = vmatpush1.xpose.msra.mxu0 0.0
  %6219 = vmatprep.subr.mxu0 0.0
  %6220 = vmatpush1.xpose.msra.mxu0 0.0
  %6221 = vmatprep.subr.mxu0 0.0
  %6222 = vmatpush1.xpose.msra.mxu0 0.0
  %6223 = vmatprep.subr.mxu0 0.0
  %6224 = vmatpush1.xpose.msra.mxu0 0.0
  %6225 = vmatprep.subr.mxu0 0.0
  %6226 = vmatpush1.xpose.msra.mxu0 0.0
  %6227 = vmatprep.subr.mxu0 0.0
  %6228 = vmatpush1.xpose.msra.mxu0 0.0
  %6229 = vmatprep.subr.mxu0 0.0
  %6230 = vmatpush1.xpose.msra.mxu0 0.0
  %6231 = vmatprep.subr.mxu0 0.0
  %6232 = vmatpush1.xpose.msra.mxu0 0.0
  %6233 = vmatprep.subr.mxu0 0.0
  %6234 = vmatpush1.xpose.msra.mxu0 0.0
  %6235 = vmatprep.subr.mxu0 0.0
  %6236 = vmatpush1.xpose.msra.mxu0 0.0
  %6237 = vmatprep.subr.mxu0 0.0
  %6238 = vmatpush1.xpose.msra.mxu0 0.0
  %6239 = vmatprep.subr.mxu0 0.0
  %6240 = vmatpush1.xpose.msra.mxu0 0.0
  %6241 = vmatprep.subr.mxu0 0.0
  %6242 = vmatpush1.xpose.msra.mxu0 0.0
  %6243 = vmatprep.subr.mxu0 0.0
  %6244 = vmatpush1.xpose.msra.mxu0 0.0
  %6245 = vmatprep.subr.mxu0 0.0
  %6246 = vmatpush1.xpose.msra.mxu0 0.0
  %6247 = vmatprep.subr.mxu0 0.0
  %6248 = vmatpush1.xpose.msra.mxu0 0.0
  %6249 = vmatprep.subr.mxu0 0.0
  %6250 = vmatpush1.xpose.msra.mxu0 0.0
  %6251 = vmatprep.mubr.f32.mxu0 0.0
  %6252 = vmatmul.mubr.f32.gmra.mrb[0].mxu0 %v6179
  %v6253 = vpop.f32.mrb[0].mxu0
  %v6254 = vadd.f32 0.0, %v6253
  %v6255 = vpop.f32.mrb[0].mxu0
  %6256 = vmatprep.mubr.f32.mxu0 0.0
  %6257 = vmatmul.mubr.f32.gmra.mrb[0].mxu0 %v6181
  %v6258 = vpop.f32.mrb[0].mxu0
  %v6259 = vadd.f32 0.0, %v6258
  %v6260 = vpop.f32.mrb[0].mxu0
  %6261 = vdwg.mxu0
  %6262 = vrot.lane.b32.xlu0 %v5628, 104
  %v6263 = vpop.permute.xlu0 %6262
  %6264 = vrot.lane.b32.xlu0 %v5651, 104
  %v6265 = vpop.permute.xlu0 %6264
  %6266 = vrot.lane.b32.xlu0 %v5628, 72
  %v6267 = vpop.permute.xlu0 %6266
  %6268 = vrot.lane.b32.xlu0 %v5651, 72
  %v6269 = vpop.permute.xlu0 %6268
  %v6270 = vsel %vm898, %v6263, 0
  %v6272 = vsel %vm898, %v6265, 0
  %v6274 = vsel %vm898, %v6267, 0
  %v6276 = vsel %vm898, %v6269, 0
  %6278 = vmatprep.subr.mxu0 0.0
  %6279 = vmatpush1.xpose.msra.mxu0 %v6274
  %6280 = vmatprep.subr.mxu0 0.0
  %6281 = vmatpush1.xpose.msra.mxu0 %v6276
  %6282 = vmatprep.subr.mxu0 0.0
  %6283 = vmatpush1.xpose.msra.mxu0 0.0
  %6284 = vmatprep.subr.mxu0 0.0
  %6285 = vmatpush1.xpose.msra.mxu0 0.0
  %6286 = vmatprep.subr.mxu0 0.0
  %6287 = vmatpush1.xpose.msra.mxu0 0.0
  %6288 = vmatprep.subr.mxu0 0.0
  %6289 = vmatpush1.xpose.msra.mxu0 0.0
  %6290 = vmatprep.subr.mxu0 0.0
  %6291 = vmatpush1.xpose.msra.mxu0 0.0
  %6292 = vmatprep.subr.mxu0 0.0
  %6293 = vmatpush1.xpose.msra.mxu0 0.0
  %6294 = vmatprep.subr.mxu0 0.0
  %6295 = vmatpush1.xpose.msra.mxu0 0.0
  %6296 = vmatprep.subr.mxu0 0.0
  %6297 = vmatpush1.xpose.msra.mxu0 0.0
  %6298 = vmatprep.subr.mxu0 0.0
  %6299 = vmatpush1.xpose.msra.mxu0 0.0
  %6300 = vmatprep.subr.mxu0 0.0
  %6301 = vmatpush1.xpose.msra.mxu0 0.0
  %6302 = vmatprep.subr.mxu0 0.0
  %6303 = vmatpush1.xpose.msra.mxu0 0.0
  %6304 = vmatprep.subr.mxu0 0.0
  %6305 = vmatpush1.xpose.msra.mxu0 0.0
  %6306 = vmatprep.subr.mxu0 0.0
  %6307 = vmatpush1.xpose.msra.mxu0 0.0
  %6308 = vmatprep.subr.mxu0 0.0
  %6309 = vmatpush1.xpose.msra.mxu0 0.0
  %6310 = vmatprep.subr.mxu0 0.0
  %6311 = vmatpush1.xpose.msra.mxu0 0.0
  %6312 = vmatprep.subr.mxu0 0.0
  %6313 = vmatpush1.xpose.msra.mxu0 0.0
  %6314 = vmatprep.subr.mxu0 0.0
  %6315 = vmatpush1.xpose.msra.mxu0 0.0
  %6316 = vmatprep.subr.mxu0 0.0
  %6317 = vmatpush1.xpose.msra.mxu0 0.0
  %6318 = vmatprep.subr.mxu0 0.0
  %6319 = vmatpush1.xpose.msra.mxu0 0.0
  %6320 = vmatprep.subr.mxu0 0.0
  %6321 = vmatpush1.xpose.msra.mxu0 0.0
  %6322 = vmatprep.subr.mxu0 0.0
  %6323 = vmatpush1.xpose.msra.mxu0 0.0
  %6324 = vmatprep.subr.mxu0 0.0
  %6325 = vmatpush1.xpose.msra.mxu0 0.0
  %6326 = vmatprep.subr.mxu0 0.0
  %6327 = vmatpush1.xpose.msra.mxu0 0.0
  %6328 = vmatprep.subr.mxu0 0.0
  %6329 = vmatpush1.xpose.msra.mxu0 0.0
  %6330 = vmatprep.subr.mxu0 0.0
  %6331 = vmatpush1.xpose.msra.mxu0 0.0
  %6332 = vmatprep.subr.mxu0 0.0
  %6333 = vmatpush1.xpose.msra.mxu0 0.0
  %6334 = vmatprep.subr.mxu0 0.0
  %6335 = vmatpush1.xpose.msra.mxu0 0.0
  %6336 = vmatprep.subr.mxu0 0.0
  %6337 = vmatpush1.xpose.msra.mxu0 0.0
  %6338 = vmatprep.subr.mxu0 0.0
  %6339 = vmatpush1.xpose.msra.mxu0 0.0
  %6340 = vmatprep.subr.mxu0 0.0
  %6341 = vmatpush1.xpose.msra.mxu0 0.0
  %6342 = vmatprep.mubr.f32.mxu0 0.0
  %6343 = vmatmul.mubr.f32.gmra.mrb[0].mxu0 %v6270
  %v6344 = vpop.f32.mrb[0].mxu0
  %v6345 = vadd.f32 0.0, %v6344
  %v6346 = vpop.f32.mrb[0].mxu0
  %6347 = vmatprep.mubr.f32.mxu0 0.0
  %6348 = vmatmul.mubr.f32.gmra.mrb[0].mxu0 %v6272
  %v6349 = vpop.f32.mrb[0].mxu0
  %v6350 = vadd.f32 0.0, %v6349
  %v6351 = vpop.f32.mrb[0].mxu0
  %6352 = vdwg.mxu0
  %6353 = vrot.lane.b32.xlu0 %v5787, 104
  %v6354 = vpop.permute.xlu0 %6353
  %6355 = vrot.lane.b32.xlu0 %v5810, 104
  %v6356 = vpop.permute.xlu0 %6355
  %6357 = vrot.lane.b32.xlu0 %v5787, 72
  %v6358 = vpop.permute.xlu0 %6357
  %6359 = vrot.lane.b32.xlu0 %v5810, 72
  %v6360 = vpop.permute.xlu0 %6359
  %v6361 = vsel %vm898, %v6354, 0
  %v6363 = vsel %vm898, %v6356, 0
  %v6365 = vsel %vm898, %v6358, 0
  %v6367 = vsel %vm898, %v6360, 0
  %6369 = vmatprep.subr.mxu0 0.0
  %6370 = vmatpush1.xpose.msra.mxu0 %v6365
  %6371 = vmatprep.subr.mxu0 0.0
  %6372 = vmatpush1.xpose.msra.mxu0 %v6367
  %6373 = vmatprep.subr.mxu0 0.0
  %6374 = vmatpush1.xpose.msra.mxu0 0.0
  %6375 = vmatprep.subr.mxu0 0.0
  %6376 = vmatpush1.xpose.msra.mxu0 0.0
  %6377 = vmatprep.subr.mxu0 0.0
  %6378 = vmatpush1.xpose.msra.mxu0 0.0
  %6379 = vmatprep.subr.mxu0 0.0
  %6380 = vmatpush1.xpose.msra.mxu0 0.0
  %6381 = vmatprep.subr.mxu0 0.0
  %6382 = vmatpush1.xpose.msra.mxu0 0.0
  %6383 = vmatprep.subr.mxu0 0.0
  %6384 = vmatpush1.xpose.msra.mxu0 0.0
  %6385 = vmatprep.subr.mxu0 0.0
  %6386 = vmatpush1.xpose.msra.mxu0 0.0
  %6387 = vmatprep.subr.mxu0 0.0
  %6388 = vmatpush1.xpose.msra.mxu0 0.0
  %6389 = vmatprep.subr.mxu0 0.0
  %6390 = vmatpush1.xpose.msra.mxu0 0.0
  %6391 = vmatprep.subr.mxu0 0.0
  %6392 = vmatpush1.xpose.msra.mxu0 0.0
  %6393 = vmatprep.subr.mxu0 0.0
  %6394 = vmatpush1.xpose.msra.mxu0 0.0
  %6395 = vmatprep.subr.mxu0 0.0
  %6396 = vmatpush1.xpose.msra.mxu0 0.0
  %6397 = vmatprep.subr.mxu0 0.0
  %6398 = vmatpush1.xpose.msra.mxu0 0.0
  %6399 = vmatprep.subr.mxu0 0.0
  %6400 = vmatpush1.xpose.msra.mxu0 0.0
  %6401 = vmatprep.subr.mxu0 0.0
  %6402 = vmatpush1.xpose.msra.mxu0 0.0
  %6403 = vmatprep.subr.mxu0 0.0
  %6404 = vmatpush1.xpose.msra.mxu0 0.0
  %6405 = vmatprep.subr.mxu0 0.0
  %6406 = vmatpush1.xpose.msra.mxu0 0.0
  %6407 = vmatprep.subr.mxu0 0.0
  %6408 = vmatpush1.xpose.msra.mxu0 0.0
  %6409 = vmatprep.subr.mxu0 0.0
  %6410 = vmatpush1.xpose.msra.mxu0 0.0
  %6411 = vmatprep.subr.mxu0 0.0
  %6412 = vmatpush1.xpose.msra.mxu0 0.0
  %6413 = vmatprep.subr.mxu0 0.0
  %6414 = vmatpush1.xpose.msra.mxu0 0.0
  %6415 = vmatprep.subr.mxu0 0.0
  %6416 = vmatpush1.xpose.msra.mxu0 0.0
  %6417 = vmatprep.subr.mxu0 0.0
  %6418 = vmatpush1.xpose.msra.mxu0 0.0
  %6419 = vmatprep.subr.mxu0 0.0
  %6420 = vmatpush1.xpose.msra.mxu0 0.0
  %6421 = vmatprep.subr.mxu0 0.0
  %6422 = vmatpush1.xpose.msra.mxu0 0.0
  %6423 = vmatprep.subr.mxu0 0.0
  %6424 = vmatpush1.xpose.msra.mxu0 0.0
  %6425 = vmatprep.subr.mxu0 0.0
  %6426 = vmatpush1.xpose.msra.mxu0 0.0
  %6427 = vmatprep.subr.mxu0 0.0
  %6428 = vmatpush1.xpose.msra.mxu0 0.0
  %6429 = vmatprep.subr.mxu0 0.0
  %6430 = vmatpush1.xpose.msra.mxu0 0.0
  %6431 = vmatprep.subr.mxu0 0.0
  %6432 = vmatpush1.xpose.msra.mxu0 0.0
  %6433 = vmatprep.mubr.f32.mxu0 0.0
  %6434 = vmatmul.mubr.f32.gmra.mrb[0].mxu0 %v6361
  %v6435 = vpop.f32.mrb[0].mxu0
  %v6436 = vadd.f32 0.0, %v6435
  %v6437 = vpop.f32.mrb[0].mxu0
  %6438 = vmatprep.mubr.f32.mxu0 0.0
  %6439 = vmatmul.mubr.f32.gmra.mrb[0].mxu0 %v6363
  %v6440 = vpop.f32.mrb[0].mxu0
  %v6441 = vadd.f32 0.0, %v6440
  %v6442 = vpop.f32.mrb[0].mxu0
  %6443 = vdwg.mxu0
  %v6444 = vmul.f32 %v5731, 0.35355338
  %v6445 = vmul.f32 %v5736, 0.35355338
  %v6446 = vmul.f32 %v5981, 0.35355338
  %v6447 = vmul.f32 %v5986, 0.35355338
  %v6448 = vmul.f32 %v6163, 0.35355338
  %v6449 = vmul.f32 %v6168, 0.35355338
  %v6450 = vmul.f32 %v6345, 0.35355338
  %v6451 = vmul.f32 %v6350, 0.35355338
  %v6452 = vmul.f32 %v5890, 0.35355338
  %v6453 = vmul.f32 %v5895, 0.35355338
  %v6454 = vmul.f32 %v6072, 0.35355338
  %v6455 = vmul.f32 %v6077, 0.35355338
  %v6456 = vmul.f32 %v6254, 0.35355338
  %v6457 = vmul.f32 %v6259, 0.35355338
  %v6458 = vmul.f32 %v6436, 0.35355338
  %v6459 = vmul.f32 %v6441, 0.35355338
  %v6460 = vsel %vm1703, %v6444, -inf
  %6461 = vmax.xlane.f32.xlu0 %v6460
  %v6462 = vpop.xlane.xlu0 %6461
  %v6463 = vsel %vm1707, %v6445, -inf
  %6464 = vmax.xlane.f32.xlu0 %v6463
  %v6465 = vpop.xlane.xlu0 %6464
  %v6466 = vsel %vm1703, %v6446, -inf
  %6467 = vmax.xlane.f32.xlu0 %v6466
  %v6468 = vpop.xlane.xlu0 %6467
  %v6469 = vsel %vm1707, %v6447, -inf
  %6470 = vmax.xlane.f32.xlu0 %v6469
  %v6471 = vpop.xlane.xlu0 %6470
  %v6472 = vsel %vm1703, %v6448, -inf
  %6473 = vmax.xlane.f32.xlu0 %v6472
  %v6474 = vpop.xlane.xlu0 %6473
  %v6475 = vsel %vm1707, %v6449, -inf
  %6476 = vmax.xlane.f32.xlu0 %v6475
  %v6477 = vpop.xlane.xlu0 %6476
  %v6478 = vsel %vm1703, %v6450, -inf
  %6479 = vmax.xlane.f32.xlu0 %v6478
  %v6480 = vpop.xlane.xlu0 %6479
  %v6481 = vsel %vm1707, %v6451, -inf
  %6482 = vmax.xlane.f32.xlu0 %v6481
  %v6483 = vpop.xlane.xlu0 %6482
  %v6484 = vsel %vm1703, %v6452, -inf
  %6485 = vmax.xlane.f32.xlu0 %v6484
  %v6486 = vpop.xlane.xlu0 %6485
  %v6487 = vsel %vm1707, %v6453, -inf
  %6488 = vmax.xlane.f32.xlu0 %v6487
  %v6489 = vpop.xlane.xlu0 %6488
  %v6490 = vsel %vm1703, %v6454, -inf
  %6491 = vmax.xlane.f32.xlu0 %v6490
  %v6492 = vpop.xlane.xlu0 %6491
  %v6493 = vsel %vm1707, %v6455, -inf
  %6494 = vmax.xlane.f32.xlu0 %v6493
  %v6495 = vpop.xlane.xlu0 %6494
  %v6496 = vsel %vm1703, %v6456, -inf
  %6497 = vmax.xlane.f32.xlu0 %v6496
  %v6498 = vpop.xlane.xlu0 %6497
  %v6499 = vsel %vm1707, %v6457, -inf
  %6500 = vmax.xlane.f32.xlu0 %v6499
  %v6501 = vpop.xlane.xlu0 %6500
  %v6502 = vsel %vm1703, %v6458, -inf
  %6503 = vmax.xlane.f32.xlu0 %v6502
  %v6504 = vpop.xlane.xlu0 %6503
  %v6505 = vsel %vm1707, %v6459, -inf
  %6506 = vmax.xlane.f32.xlu0 %v6505
  %v6507 = vpop.xlane.xlu0 %6506
  %v6508 = vsub.f32 %v6444, %v6462
  %v6509 = vsub.f32 %v6445, %v6465
  %v6510 = vsub.f32 %v6446, %v6468
  %v6511 = vsub.f32 %v6447, %v6471
  %v6512 = vsub.f32 %v6448, %v6474
  %v6513 = vsub.f32 %v6449, %v6477
  %v6514 = vsub.f32 %v6450, %v6480
  %v6515 = vsub.f32 %v6451, %v6483
  %v6516 = vsub.f32 %v6452, %v6486
  %v6517 = vsub.f32 %v6453, %v6489
  %v6518 = vsub.f32 %v6454, %v6492
  %v6519 = vsub.f32 %v6455, %v6495
  %v6520 = vsub.f32 %v6456, %v6498
  %v6521 = vsub.f32 %v6457, %v6501
  %v6522 = vsub.f32 %v6458, %v6504
  %v6523 = vsub.f32 %v6459, %v6507
  %v6524 = vmul.f32 %v6508, 1.442695
  %v6525 = vpow.pop %v6524
  %v6526 = vmul.f32 %v6509, 1.442695
  %v6527 = vpow.pop %v6526
  %v6528 = vmul.f32 %v6510, 1.442695
  %v6529 = vpow.pop %v6528
  %v6530 = vmul.f32 %v6511, 1.442695
  %v6531 = vpow.pop %v6530
  %v6532 = vmul.f32 %v6512, 1.442695
  %v6533 = vpow.pop %v6532
  %v6534 = vmul.f32 %v6513, 1.442695
  %v6535 = vpow.pop %v6534
  %v6536 = vmul.f32 %v6514, 1.442695
  %v6537 = vpow.pop %v6536
  %v6538 = vmul.f32 %v6515, 1.442695
  %v6539 = vpow.pop %v6538
  %v6540 = vmul.f32 %v6516, 1.442695
  %v6541 = vpow.pop %v6540
  %v6542 = vmul.f32 %v6517, 1.442695
  %v6543 = vpow.pop %v6542
  %v6544 = vmul.f32 %v6518, 1.442695
  %v6545 = vpow.pop %v6544
  %v6546 = vmul.f32 %v6519, 1.442695
  %v6547 = vpow.pop %v6546
  %v6548 = vmul.f32 %v6520, 1.442695
  %v6549 = vpow.pop %v6548
  %v6550 = vmul.f32 %v6521, 1.442695
  %v6551 = vpow.pop %v6550
  %v6552 = vmul.f32 %v6522, 1.442695
  %v6553 = vpow.pop %v6552
  %v6554 = vmul.f32 %v6523, 1.442695
  %v6555 = vpow.pop %v6554
  %v6556 = vsel %vm1703, %v6525, 0.0
  %6557 = vadd.xlane.f32.xlu0 %v6556
  %v6558 = vpop.xlane.xlu0 %6557
  %v6559 = vsel %vm1707, %v6527, 0.0
  %6560 = vadd.xlane.f32.xlu0 %v6559
  %v6561 = vpop.xlane.xlu0 %6560
  %v6562 = vsel %vm1703, %v6529, 0.0
  %6563 = vadd.xlane.f32.xlu0 %v6562
  %v6564 = vpop.xlane.xlu0 %6563
  %v6565 = vsel %vm1707, %v6531, 0.0
  %6566 = vadd.xlane.f32.xlu0 %v6565
  %v6567 = vpop.xlane.xlu0 %6566
  %v6568 = vsel %vm1703, %v6533, 0.0
  %6569 = vadd.xlane.f32.xlu0 %v6568
  %v6570 = vpop.xlane.xlu0 %6569
  %v6571 = vsel %vm1707, %v6535, 0.0
  %6572 = vadd.xlane.f32.xlu0 %v6571
  %v6573 = vpop.xlane.xlu0 %6572
  %v6574 = vsel %vm1703, %v6537, 0.0
  %6575 = vadd.xlane.f32.xlu0 %v6574
  %v6576 = vpop.xlane.xlu0 %6575
  %v6577 = vsel %vm1707, %v6539, 0.0
  %6578 = vadd.xlane.f32.xlu0 %v6577
  %v6579 = vpop.xlane.xlu0 %6578
  %v6580 = vsel %vm1703, %v6541, 0.0
  %6581 = vadd.xlane.f32.xlu0 %v6580
  %v6582 = vpop.xlane.xlu0 %6581
  %v6583 = vsel %vm1707, %v6543, 0.0
  %6584 = vadd.xlane.f32.xlu0 %v6583
  %v6585 = vpop.xlane.xlu0 %6584
  %v6586 = vsel %vm1703, %v6545, 0.0
  %6587 = vadd.xlane.f32.xlu0 %v6586
  %v6588 = vpop.xlane.xlu0 %6587
  %v6589 = vsel %vm1707, %v6547, 0.0
  %6590 = vadd.xlane.f32.xlu0 %v6589
  %v6591 = vpop.xlane.xlu0 %6590
  %v6592 = vsel %vm1703, %v6549, 0.0
  %6593 = vadd.xlane.f32.xlu0 %v6592
  %v6594 = vpop.xlane.xlu0 %6593
  %v6595 = vsel %vm1707, %v6551, 0.0
  %6596 = vadd.xlane.f32.xlu0 %v6595
  %v6597 = vpop.xlane.xlu0 %6596
  %v6598 = vsel %vm1703, %v6553, 0.0
  %6599 = vadd.xlane.f32.xlu0 %v6598
  %v6600 = vpop.xlane.xlu0 %6599
  %v6601 = vsel %vm1707, %v6555, 0.0
  %6602 = vadd.xlane.f32.xlu0 %v6601
  %v6603 = vpop.xlane.xlu0 %6602
  %v6604 = vrcp.pop %v6558
  %v6605 = vrcp.pop %v6561
  %v6606 = vrcp.pop %v6564
  %v6607 = vrcp.pop %v6567
  %v6608 = vrcp.pop %v6570
  %v6609 = vrcp.pop %v6573
  %v6610 = vrcp.pop %v6576
  %v6611 = vrcp.pop %v6579
  %v6612 = vrcp.pop %v6582
  %v6613 = vrcp.pop %v6585
  %v6614 = vrcp.pop %v6588
  %v6615 = vrcp.pop %v6591
  %v6616 = vrcp.pop %v6594
  %v6617 = vrcp.pop %v6597
  %v6618 = vrcp.pop %v6600
  %v6619 = vrcp.pop %v6603
  %v6620 = vmul.f32 %v6525, %v6604
  %v6621 = vmul.f32 %v6527, %v6605
  %v6622 = vmul.f32 %v6529, %v6606
  %v6623 = vmul.f32 %v6531, %v6607
  %v6624 = vmul.f32 %v6533, %v6608
  %v6625 = vmul.f32 %v6535, %v6609
  %v6626 = vmul.f32 %v6537, %v6610
  %v6627 = vmul.f32 %v6539, %v6611
  %v6628 = vmul.f32 %v6541, %v6612
  %v6629 = vmul.f32 %v6543, %v6613
  %v6630 = vmul.f32 %v6545, %v6614
  %v6631 = vmul.f32 %v6547, %v6615
  %v6632 = vmul.f32 %v6549, %v6616
  %v6633 = vmul.f32 %v6551, %v6617
  %v6634 = vmul.f32 %v6553, %v6618
  %v6635 = vmul.f32 %v6555, %v6619
  %6636 = vrot.lane.b32.xlu0 %v5628, 64
  %v6637 = vpop.permute.xlu0 %6636
  %6638 = vrot.lane.b32.xlu0 %v5651, 64
  %v6639 = vpop.permute.xlu0 %6638
  %v6642 = vsel %vm1703, %v6620, 0
  %v6645 = vsel %vm1703, %v6621, 0
  %v6647 = vsel %vm1892, %v6639, 0
  %6649 = vmatprep.subr.mxu0 0.0
  %6650 = vmatpush1.msra.mxu0 %v6637
  %6651 = vmatprep.subr.mxu0 0.0
  %6652 = vmatpush1.msra.mxu0 %v6647
  %6653 = vmatprep.subr.mxu0 0.0
  %6654 = vmatpush1.msra.mxu0 0.0
  %6655 = vmatprep.subr.mxu0 0.0
  %6656 = vmatpush1.msra.mxu0 0.0
  %6657 = vmatprep.subr.mxu0 0.0
  %6658 = vmatpush1.msra.mxu0 0.0
  %6659 = vmatprep.subr.mxu0 0.0
  %6660 = vmatpush1.msra.mxu0 0.0
  %6661 = vmatprep.subr.mxu0 0.0
  %6662 = vmatpush1.msra.mxu0 0.0
  %6663 = vmatprep.subr.mxu0 0.0
  %6664 = vmatpush1.msra.mxu0 0.0
  %6665 = vmatprep.subr.mxu0 0.0
  %6666 = vmatpush1.msra.mxu0 0.0
  %6667 = vmatprep.subr.mxu0 0.0
  %6668 = vmatpush1.msra.mxu0 0.0
  %6669 = vmatprep.subr.mxu0 0.0
  %6670 = vmatpush1.msra.mxu0 0.0
  %6671 = vmatprep.subr.mxu0 0.0
  %6672 = vmatpush1.msra.mxu0 0.0
  %6673 = vmatprep.subr.mxu0 0.0
  %6674 = vmatpush1.msra.mxu0 0.0
  %6675 = vmatprep.subr.mxu0 0.0
  %6676 = vmatpush1.msra.mxu0 0.0
  %6677 = vmatprep.subr.mxu0 0.0
  %6678 = vmatpush1.msra.mxu0 0.0
  %6679 = vmatprep.subr.mxu0 0.0
  %6680 = vmatpush1.msra.mxu0 0.0
  %6681 = vmatprep.subr.mxu0 0.0
  %6682 = vmatpush1.msra.mxu0 0.0
  %6683 = vmatprep.subr.mxu0 0.0
  %6684 = vmatpush1.msra.mxu0 0.0
  %6685 = vmatprep.subr.mxu0 0.0
  %6686 = vmatpush1.msra.mxu0 0.0
  %6687 = vmatprep.subr.mxu0 0.0
  %6688 = vmatpush1.msra.mxu0 0.0
  %6689 = vmatprep.subr.mxu0 0.0
  %6690 = vmatpush1.msra.mxu0 0.0
  %6691 = vmatprep.subr.mxu0 0.0
  %6692 = vmatpush1.msra.mxu0 0.0
  %6693 = vmatprep.subr.mxu0 0.0
  %6694 = vmatpush1.msra.mxu0 0.0
  %6695 = vmatprep.subr.mxu0 0.0
  %6696 = vmatpush1.msra.mxu0 0.0
  %6697 = vmatprep.subr.mxu0 0.0
  %6698 = vmatpush1.msra.mxu0 0.0
  %6699 = vmatprep.subr.mxu0 0.0
  %6700 = vmatpush1.msra.mxu0 0.0
  %6701 = vmatprep.subr.mxu0 0.0
  %6702 = vmatpush1.msra.mxu0 0.0
  %6703 = vmatprep.subr.mxu0 0.0
  %6704 = vmatpush1.msra.mxu0 0.0
  %6705 = vmatprep.subr.mxu0 0.0
  %6706 = vmatpush1.msra.mxu0 0.0
  %6707 = vmatprep.subr.mxu0 0.0
  %6708 = vmatpush1.msra.mxu0 0.0
  %6709 = vmatprep.subr.mxu0 0.0
  %6710 = vmatpush1.msra.mxu0 0.0
  %6711 = vmatprep.subr.mxu0 0.0
  %6712 = vmatpush1.msra.mxu0 0.0
  %6713 = vmatprep.mubr.f32.mxu0 0.0
  %6714 = vmatmul.mubr.f32.gmra.mrb[0].mxu0 %v6642
  %v6715 = vpop.f32.mrb[0].mxu0
  %v6716 = vadd.f32 0.0, %v6715
  %v6717 = vpop.f32.mrb[0].mxu0
  %6718 = vmatprep.mubr.f32.mxu0 0.0
  %6719 = vmatmul.mubr.f32.gmra.mrb[0].mxu0 %v6645
  %v6720 = vpop.f32.mrb[0].mxu0
  %v6721 = vadd.f32 0.0, %v6720
  %v6722 = vpop.f32.mrb[0].mxu0
  %6723 = vdwg.mxu0
  %6724 = vrot.lane.b32.xlu0 %v5787, 64
  %v6725 = vpop.permute.xlu0 %6724
  %6726 = vrot.lane.b32.xlu0 %v5810, 64
  %v6727 = vpop.permute.xlu0 %6726
  %v6730 = vsel %vm1703, %v6628, 0
  %v6733 = vsel %vm1703, %v6629, 0
  %v6735 = vsel %vm1892, %v6727, 0
  %6737 = vmatprep.subr.mxu0 0.0
  %6738 = vmatpush1.msra.mxu0 %v6725
  %6739 = vmatprep.subr.mxu0 0.0
  %6740 = vmatpush1.msra.mxu0 %v6735
  %6741 = vmatprep.subr.mxu0 0.0
  %6742 = vmatpush1.msra.mxu0 0.0
  %6743 = vmatprep.subr.mxu0 0.0
  %6744 = vmatpush1.msra.mxu0 0.0
  %6745 = vmatprep.subr.mxu0 0.0
  %6746 = vmatpush1.msra.mxu0 0.0
  %6747 = vmatprep.subr.mxu0 0.0
  %6748 = vmatpush1.msra.mxu0 0.0
  %6749 = vmatprep.subr.mxu0 0.0
  %6750 = vmatpush1.msra.mxu0 0.0
  %6751 = vmatprep.subr.mxu0 0.0
  %6752 = vmatpush1.msra.mxu0 0.0
  %6753 = vmatprep.subr.mxu0 0.0
  %6754 = vmatpush1.msra.mxu0 0.0
  %6755 = vmatprep.subr.mxu0 0.0
  %6756 = vmatpush1.msra.mxu0 0.0
  %6757 = vmatprep.subr.mxu0 0.0
  %6758 = vmatpush1.msra.mxu0 0.0
  %6759 = vmatprep.subr.mxu0 0.0
  %6760 = vmatpush1.msra.mxu0 0.0
  %6761 = vmatprep.subr.mxu0 0.0
  %6762 = vmatpush1.msra.mxu0 0.0
  %6763 = vmatprep.subr.mxu0 0.0
  %6764 = vmatpush1.msra.mxu0 0.0
  %6765 = vmatprep.subr.mxu0 0.0
  %6766 = vmatpush1.msra.mxu0 0.0
  %6767 = vmatprep.subr.mxu0 0.0
  %6768 = vmatpush1.msra.mxu0 0.0
  %6769 = vmatprep.subr.mxu0 0.0
  %6770 = vmatpush1.msra.mxu0 0.0
  %6771 = vmatprep.subr.mxu0 0.0
  %6772 = vmatpush1.msra.mxu0 0.0
  %6773 = vmatprep.subr.mxu0 0.0
  %6774 = vmatpush1.msra.mxu0 0.0
  %6775 = vmatprep.subr.mxu0 0.0
  %6776 = vmatpush1.msra.mxu0 0.0
  %6777 = vmatprep.subr.mxu0 0.0
  %6778 = vmatpush1.msra.mxu0 0.0
  %6779 = vmatprep.subr.mxu0 0.0
  %6780 = vmatpush1.msra.mxu0 0.0
  %6781 = vmatprep.subr.mxu0 0.0
  %6782 = vmatpush1.msra.mxu0 0.0
  %6783 = vmatprep.subr.mxu0 0.0
  %6784 = vmatpush1.msra.mxu0 0.0
  %6785 = vmatprep.subr.mxu0 0.0
  %6786 = vmatpush1.msra.mxu0 0.0
  %6787 = vmatprep.subr.mxu0 0.0
  %6788 = vmatpush1.msra.mxu0 0.0
  %6789 = vmatprep.subr.mxu0 0.0
  %6790 = vmatpush1.msra.mxu0 0.0
  %6791 = vmatprep.subr.mxu0 0.0
  %6792 = vmatpush1.msra.mxu0 0.0
  %6793 = vmatprep.subr.mxu0 0.0
  %6794 = vmatpush1.msra.mxu0 0.0
  %6795 = vmatprep.subr.mxu0 0.0
  %6796 = vmatpush1.msra.mxu0 0.0
  %6797 = vmatprep.subr.mxu0 0.0
  %6798 = vmatpush1.msra.mxu0 0.0
  %6799 = vmatprep.subr.mxu0 0.0
  %6800 = vmatpush1.msra.mxu0 0.0
  %6801 = vmatprep.mubr.f32.mxu0 0.0
  %6802 = vmatmul.mubr.f32.gmra.mrb[0].mxu0 %v6730
  %v6803 = vpop.f32.mrb[0].mxu0
  %v6804 = vadd.f32 0.0, %v6803
  %v6805 = vpop.f32.mrb[0].mxu0
  %6806 = vmatprep.mubr.f32.mxu0 0.0
  %6807 = vmatmul.mubr.f32.gmra.mrb[0].mxu0 %v6733
  %v6808 = vpop.f32.mrb[0].mxu0
  %v6809 = vadd.f32 0.0, %v6808
  %v6810 = vpop.f32.mrb[0].mxu0
  %6811 = vdwg.mxu0
  %6812 = vrot.lane.b32.xlu0 %v5628, 56
  %v6813 = vpop.permute.xlu0 %6812
  %6814 = vrot.lane.b32.xlu0 %v5651, 56
  %v6815 = vpop.permute.xlu0 %6814
  %v6818 = vsel %vm1703, %v6622, 0
  %v6821 = vsel %vm1703, %v6623, 0
  %v6823 = vsel %vm1892, %v6815, 0
  %6825 = vmatprep.subr.mxu0 0.0
  %6826 = vmatpush1.msra.mxu0 %v6813
  %6827 = vmatprep.subr.mxu0 0.0
  %6828 = vmatpush1.msra.mxu0 %v6823
  %6829 = vmatprep.subr.mxu0 0.0
  %6830 = vmatpush1.msra.mxu0 0.0
  %6831 = vmatprep.subr.mxu0 0.0
  %6832 = vmatpush1.msra.mxu0 0.0
  %6833 = vmatprep.subr.mxu0 0.0
  %6834 = vmatpush1.msra.mxu0 0.0
  %6835 = vmatprep.subr.mxu0 0.0
  %6836 = vmatpush1.msra.mxu0 0.0
  %6837 = vmatprep.subr.mxu0 0.0
  %6838 = vmatpush1.msra.mxu0 0.0
  %6839 = vmatprep.subr.mxu0 0.0
  %6840 = vmatpush1.msra.mxu0 0.0
  %6841 = vmatprep.subr.mxu0 0.0
  %6842 = vmatpush1.msra.mxu0 0.0
  %6843 = vmatprep.subr.mxu0 0.0
  %6844 = vmatpush1.msra.mxu0 0.0
  %6845 = vmatprep.subr.mxu0 0.0
  %6846 = vmatpush1.msra.mxu0 0.0
  %6847 = vmatprep.subr.mxu0 0.0
  %6848 = vmatpush1.msra.mxu0 0.0
  %6849 = vmatprep.subr.mxu0 0.0
  %6850 = vmatpush1.msra.mxu0 0.0
  %6851 = vmatprep.subr.mxu0 0.0
  %6852 = vmatpush1.msra.mxu0 0.0
  %6853 = vmatprep.subr.mxu0 0.0
  %6854 = vmatpush1.msra.mxu0 0.0
  %6855 = vmatprep.subr.mxu0 0.0
  %6856 = vmatpush1.msra.mxu0 0.0
  %6857 = vmatprep.subr.mxu0 0.0
  %6858 = vmatpush1.msra.mxu0 0.0
  %6859 = vmatprep.subr.mxu0 0.0
  %6860 = vmatpush1.msra.mxu0 0.0
  %6861 = vmatprep.subr.mxu0 0.0
  %6862 = vmatpush1.msra.mxu0 0.0
  %6863 = vmatprep.subr.mxu0 0.0
  %6864 = vmatpush1.msra.mxu0 0.0
  %6865 = vmatprep.subr.mxu0 0.0
  %6866 = vmatpush1.msra.mxu0 0.0
  %6867 = vmatprep.subr.mxu0 0.0
  %6868 = vmatpush1.msra.mxu0 0.0
  %6869 = vmatprep.subr.mxu0 0.0
  %6870 = vmatpush1.msra.mxu0 0.0
  %6871 = vmatprep.subr.mxu0 0.0
  %6872 = vmatpush1.msra.mxu0 0.0
  %6873 = vmatprep.subr.mxu0 0.0
  %6874 = vmatpush1.msra.mxu0 0.0
  %6875 = vmatprep.subr.mxu0 0.0
  %6876 = vmatpush1.msra.mxu0 0.0
  %6877 = vmatprep.subr.mxu0 0.0
  %6878 = vmatpush1.msra.mxu0 0.0
  %6879 = vmatprep.subr.mxu0 0.0
  %6880 = vmatpush1.msra.mxu0 0.0
  %6881 = vmatprep.subr.mxu0 0.0
  %6882 = vmatpush1.msra.mxu0 0.0
  %6883 = vmatprep.subr.mxu0 0.0
  %6884 = vmatpush1.msra.mxu0 0.0
  %6885 = vmatprep.subr.mxu0 0.0
  %6886 = vmatpush1.msra.mxu0 0.0
  %6887 = vmatprep.subr.mxu0 0.0
  %6888 = vmatpush1.msra.mxu0 0.0
  %6889 = vmatprep.mubr.f32.mxu0 0.0
  %6890 = vmatmul.mubr.f32.gmra.mrb[0].mxu0 %v6818
  %v6891 = vpop.f32.mrb[0].mxu0
  %v6892 = vadd.f32 0.0, %v6891
  %v6893 = vpop.f32.mrb[0].mxu0
  %6894 = vmatprep.mubr.f32.mxu0 0.0
  %6895 = vmatmul.mubr.f32.gmra.mrb[0].mxu0 %v6821
  %v6896 = vpop.f32.mrb[0].mxu0
  %v6897 = vadd.f32 0.0, %v6896
  %v6898 = vpop.f32.mrb[0].mxu0
  %6899 = vdwg.mxu0
  %6900 = vrot.lane.b32.xlu0 %v5787, 56
  %v6901 = vpop.permute.xlu0 %6900
  %6902 = vrot.lane.b32.xlu0 %v5810, 56
  %v6903 = vpop.permute.xlu0 %6902
  %v6906 = vsel %vm1703, %v6630, 0
  %v6909 = vsel %vm1703, %v6631, 0
  %v6911 = vsel %vm1892, %v6903, 0
  %6913 = vmatprep.subr.mxu0 0.0
  %6914 = vmatpush1.msra.mxu0 %v6901
  %6915 = vmatprep.subr.mxu0 0.0
  %6916 = vmatpush1.msra.mxu0 %v6911
  %6917 = vmatprep.subr.mxu0 0.0
  %6918 = vmatpush1.msra.mxu0 0.0
  %6919 = vmatprep.subr.mxu0 0.0
  %6920 = vmatpush1.msra.mxu0 0.0
  %6921 = vmatprep.subr.mxu0 0.0
  %6922 = vmatpush1.msra.mxu0 0.0
  %6923 = vmatprep.subr.mxu0 0.0
  %6924 = vmatpush1.msra.mxu0 0.0
  %6925 = vmatprep.subr.mxu0 0.0
  %6926 = vmatpush1.msra.mxu0 0.0
  %6927 = vmatprep.subr.mxu0 0.0
  %6928 = vmatpush1.msra.mxu0 0.0
  %6929 = vmatprep.subr.mxu0 0.0
  %6930 = vmatpush1.msra.mxu0 0.0
  %6931 = vmatprep.subr.mxu0 0.0
  %6932 = vmatpush1.msra.mxu0 0.0
  %6933 = vmatprep.subr.mxu0 0.0
  %6934 = vmatpush1.msra.mxu0 0.0
  %6935 = vmatprep.subr.mxu0 0.0
  %6936 = vmatpush1.msra.mxu0 0.0
  %6937 = vmatprep.subr.mxu0 0.0
  %6938 = vmatpush1.msra.mxu0 0.0
  %6939 = vmatprep.subr.mxu0 0.0
  %6940 = vmatpush1.msra.mxu0 0.0
  %6941 = vmatprep.subr.mxu0 0.0
  %6942 = vmatpush1.msra.mxu0 0.0
  %6943 = vmatprep.subr.mxu0 0.0
  %6944 = vmatpush1.msra.mxu0 0.0
  %6945 = vmatprep.subr.mxu0 0.0
  %6946 = vmatpush1.msra.mxu0 0.0
  %6947 = vmatprep.subr.mxu0 0.0
  %6948 = vmatpush1.msra.mxu0 0.0
  %6949 = vmatprep.subr.mxu0 0.0
  %6950 = vmatpush1.msra.mxu0 0.0
  %6951 = vmatprep.subr.mxu0 0.0
  %6952 = vmatpush1.msra.mxu0 0.0
  %6953 = vmatprep.subr.mxu0 0.0
  %6954 = vmatpush1.msra.mxu0 0.0
  %6955 = vmatprep.subr.mxu0 0.0
  %6956 = vmatpush1.msra.mxu0 0.0
  %6957 = vmatprep.subr.mxu0 0.0
  %6958 = vmatpush1.msra.mxu0 0.0
  %6959 = vmatprep.subr.mxu0 0.0
  %6960 = vmatpush1.msra.mxu0 0.0
  %6961 = vmatprep.subr.mxu0 0.0
  %6962 = vmatpush1.msra.mxu0 0.0
  %6963 = vmatprep.subr.mxu0 0.0
  %6964 = vmatpush1.msra.mxu0 0.0
  %6965 = vmatprep.subr.mxu0 0.0
  %6966 = vmatpush1.msra.mxu0 0.0
  %6967 = vmatprep.subr.mxu0 0.0
  %6968 = vmatpush1.msra.mxu0 0.0
  %6969 = vmatprep.subr.mxu0 0.0
  %6970 = vmatpush1.msra.mxu0 0.0
  %6971 = vmatprep.subr.mxu0 0.0
  %6972 = vmatpush1.msra.mxu0 0.0
  %6973 = vmatprep.subr.mxu0 0.0
  %6974 = vmatpush1.msra.mxu0 0.0
  %6975 = vmatprep.subr.mxu0 0.0
  %6976 = vmatpush1.msra.mxu0 0.0
  %6977 = vmatprep.mubr.f32.mxu0 0.0
  %6978 = vmatmul.mubr.f32.gmra.mrb[0].mxu0 %v6906
  %v6979 = vpop.f32.mrb[0].mxu0
  %v6980 = vadd.f32 0.0, %v6979
  %v6981 = vpop.f32.mrb[0].mxu0
  %6982 = vmatprep.mubr.f32.mxu0 0.0
  %6983 = vmatmul.mubr.f32.gmra.mrb[0].mxu0 %v6909
  %v6984 = vpop.f32.mrb[0].mxu0
  %v6985 = vadd.f32 0.0, %v6984
  %v6986 = vpop.f32.mrb[0].mxu0
  %6987 = vdwg.mxu0
  %6988 = vrot.lane.b32.xlu0 %v5628, 48
  %v6989 = vpop.permute.xlu0 %6988
  %6990 = vrot.lane.b32.xlu0 %v5651, 48
  %v6991 = vpop.permute.xlu0 %6990
  %v6994 = vsel %vm1703, %v6624, 0
  %v6997 = vsel %vm1703, %v6625, 0
  %v6999 = vsel %vm1892, %v6991, 0
  %7001 = vmatprep.subr.mxu0 0.0
  %7002 = vmatpush1.msra.mxu0 %v6989
  %7003 = vmatprep.subr.mxu0 0.0
  %7004 = vmatpush1.msra.mxu0 %v6999
  %7005 = vmatprep.subr.mxu0 0.0
  %7006 = vmatpush1.msra.mxu0 0.0
  %7007 = vmatprep.subr.mxu0 0.0
  %7008 = vmatpush1.msra.mxu0 0.0
  %7009 = vmatprep.subr.mxu0 0.0
  %7010 = vmatpush1.msra.mxu0 0.0
  %7011 = vmatprep.subr.mxu0 0.0
  %7012 = vmatpush1.msra.mxu0 0.0
  %7013 = vmatprep.subr.mxu0 0.0
  %7014 = vmatpush1.msra.mxu0 0.0
  %7015 = vmatprep.subr.mxu0 0.0
  %7016 = vmatpush1.msra.mxu0 0.0
  %7017 = vmatprep.subr.mxu0 0.0
  %7018 = vmatpush1.msra.mxu0 0.0
  %7019 = vmatprep.subr.mxu0 0.0
  %7020 = vmatpush1.msra.mxu0 0.0
  %7021 = vmatprep.subr.mxu0 0.0
  %7022 = vmatpush1.msra.mxu0 0.0
  %7023 = vmatprep.subr.mxu0 0.0
  %7024 = vmatpush1.msra.mxu0 0.0
  %7025 = vmatprep.subr.mxu0 0.0
  %7026 = vmatpush1.msra.mxu0 0.0
  %7027 = vmatprep.subr.mxu0 0.0
  %7028 = vmatpush1.msra.mxu0 0.0
  %7029 = vmatprep.subr.mxu0 0.0
  %7030 = vmatpush1.msra.mxu0 0.0
  %7031 = vmatprep.subr.mxu0 0.0
  %7032 = vmatpush1.msra.mxu0 0.0
  %7033 = vmatprep.subr.mxu0 0.0
  %7034 = vmatpush1.msra.mxu0 0.0
  %7035 = vmatprep.subr.mxu0 0.0
  %7036 = vmatpush1.msra.mxu0 0.0
  %7037 = vmatprep.subr.mxu0 0.0
  %7038 = vmatpush1.msra.mxu0 0.0
  %7039 = vmatprep.subr.mxu0 0.0
  %7040 = vmatpush1.msra.mxu0 0.0
  %7041 = vmatprep.subr.mxu0 0.0
  %7042 = vmatpush1.msra.mxu0 0.0
  %7043 = vmatprep.subr.mxu0 0.0
  %7044 = vmatpush1.msra.mxu0 0.0
  %7045 = vmatprep.subr.mxu0 0.0
  %7046 = vmatpush1.msra.mxu0 0.0
  %7047 = vmatprep.subr.mxu0 0.0
  %7048 = vmatpush1.msra.mxu0 0.0
  %7049 = vmatprep.subr.mxu0 0.0
  %7050 = vmatpush1.msra.mxu0 0.0
  %7051 = vmatprep.subr.mxu0 0.0
  %7052 = vmatpush1.msra.mxu0 0.0
  %7053 = vmatprep.subr.mxu0 0.0
  %7054 = vmatpush1.msra.mxu0 0.0
  %7055 = vmatprep.subr.mxu0 0.0
  %7056 = vmatpush1.msra.mxu0 0.0
  %7057 = vmatprep.subr.mxu0 0.0
  %7058 = vmatpush1.msra.mxu0 0.0
  %7059 = vmatprep.subr.mxu0 0.0
  %7060 = vmatpush1.msra.mxu0 0.0
  %7061 = vmatprep.subr.mxu0 0.0
  %7062 = vmatpush1.msra.mxu0 0.0
  %7063 = vmatprep.subr.mxu0 0.0
  %7064 = vmatpush1.msra.mxu0 0.0
  %7065 = vmatprep.mubr.f32.mxu0 0.0
  %7066 = vmatmul.mubr.f32.gmra.mrb[0].mxu0 %v6994
  %v7067 = vpop.f32.mrb[0].mxu0
  %v7068 = vadd.f32 0.0, %v7067
  %v7069 = vpop.f32.mrb[0].mxu0
  %7070 = vmatprep.mubr.f32.mxu0 0.0
  %7071 = vmatmul.mubr.f32.gmra.mrb[0].mxu0 %v6997
  %v7072 = vpop.f32.mrb[0].mxu0
  %v7073 = vadd.f32 0.0, %v7072
  %v7074 = vpop.f32.mrb[0].mxu0
  %7075 = vdwg.mxu0
  %7076 = vrot.lane.b32.xlu0 %v5787, 48
  %v7077 = vpop.permute.xlu0 %7076
  %7078 = vrot.lane.b32.xlu0 %v5810, 48
  %v7079 = vpop.permute.xlu0 %7078
  %v7082 = vsel %vm1703, %v6632, 0
  %v7085 = vsel %vm1703, %v6633, 0
  %v7087 = vsel %vm1892, %v7079, 0
  %7089 = vmatprep.subr.mxu0 0.0
  %7090 = vmatpush1.msra.mxu0 %v7077
  %7091 = vmatprep.subr.mxu0 0.0
  %7092 = vmatpush1.msra.mxu0 %v7087
  %7093 = vmatprep.subr.mxu0 0.0
  %7094 = vmatpush1.msra.mxu0 0.0
  %7095 = vmatprep.subr.mxu0 0.0
  %7096 = vmatpush1.msra.mxu0 0.0
  %7097 = vmatprep.subr.mxu0 0.0
  %7098 = vmatpush1.msra.mxu0 0.0
  %7099 = vmatprep.subr.mxu0 0.0
  %7100 = vmatpush1.msra.mxu0 0.0
  %7101 = vmatprep.subr.mxu0 0.0
  %7102 = vmatpush1.msra.mxu0 0.0
  %7103 = vmatprep.subr.mxu0 0.0
  %7104 = vmatpush1.msra.mxu0 0.0
  %7105 = vmatprep.subr.mxu0 0.0
  %7106 = vmatpush1.msra.mxu0 0.0
  %7107 = vmatprep.subr.mxu0 0.0
  %7108 = vmatpush1.msra.mxu0 0.0
  %7109 = vmatprep.subr.mxu0 0.0
  %7110 = vmatpush1.msra.mxu0 0.0
  %7111 = vmatprep.subr.mxu0 0.0
  %7112 = vmatpush1.msra.mxu0 0.0
  %7113 = vmatprep.subr.mxu0 0.0
  %7114 = vmatpush1.msra.mxu0 0.0
  %7115 = vmatprep.subr.mxu0 0.0
  %7116 = vmatpush1.msra.mxu0 0.0
  %7117 = vmatprep.subr.mxu0 0.0
  %7118 = vmatpush1.msra.mxu0 0.0
  %7119 = vmatprep.subr.mxu0 0.0
  %7120 = vmatpush1.msra.mxu0 0.0
  %7121 = vmatprep.subr.mxu0 0.0
  %7122 = vmatpush1.msra.mxu0 0.0
  %7123 = vmatprep.subr.mxu0 0.0
  %7124 = vmatpush1.msra.mxu0 0.0
  %7125 = vmatprep.subr.mxu0 0.0
  %7126 = vmatpush1.msra.mxu0 0.0
  %7127 = vmatprep.subr.mxu0 0.0
  %7128 = vmatpush1.msra.mxu0 0.0
  %7129 = vmatprep.subr.mxu0 0.0
  %7130 = vmatpush1.msra.mxu0 0.0
  %7131 = vmatprep.subr.mxu0 0.0
  %7132 = vmatpush1.msra.mxu0 0.0
  %7133 = vmatprep.subr.mxu0 0.0
  %7134 = vmatpush1.msra.mxu0 0.0
  %7135 = vmatprep.subr.mxu0 0.0
  %7136 = vmatpush1.msra.mxu0 0.0
  %7137 = vmatprep.subr.mxu0 0.0
  %7138 = vmatpush1.msra.mxu0 0.0
  %7139 = vmatprep.subr.mxu0 0.0
  %7140 = vmatpush1.msra.mxu0 0.0
  %7141 = vmatprep.subr.mxu0 0.0
  %7142 = vmatpush1.msra.mxu0 0.0
  %7143 = vmatprep.subr.mxu0 0.0
  %7144 = vmatpush1.msra.mxu0 0.0
  %7145 = vmatprep.subr.mxu0 0.0
  %7146 = vmatpush1.msra.mxu0 0.0
  %7147 = vmatprep.subr.mxu0 0.0
  %7148 = vmatpush1.msra.mxu0 0.0
  %7149 = vmatprep.subr.mxu0 0.0
  %7150 = vmatpush1.msra.mxu0 0.0
  %7151 = vmatprep.subr.mxu0 0.0
  %7152 = vmatpush1.msra.mxu0 0.0
  %7153 = vmatprep.mubr.f32.mxu0 0.0
  %7154 = vmatmul.mubr.f32.gmra.mrb[0].mxu0 %v7082
  %v7155 = vpop.f32.mrb[0].mxu0
  %v7156 = vadd.f32 0.0, %v7155
  %v7157 = vpop.f32.mrb[0].mxu0
  %7158 = vmatprep.mubr.f32.mxu0 0.0
  %7159 = vmatmul.mubr.f32.gmra.mrb[0].mxu0 %v7085
  %v7160 = vpop.f32.mrb[0].mxu0
  %v7161 = vadd.f32 0.0, %v7160
  %v7162 = vpop.f32.mrb[0].mxu0
  %7163 = vdwg.mxu0
  %7164 = vrot.lane.b32.xlu0 %v5628, 40
  %v7165 = vpop.permute.xlu0 %7164
  %7166 = vrot.lane.b32.xlu0 %v5651, 40
  %v7167 = vpop.permute.xlu0 %7166
  %v7170 = vsel %vm1703, %v6626, 0
  %v7173 = vsel %vm1703, %v6627, 0
  %v7175 = vsel %vm1892, %v7167, 0
  %7177 = vmatprep.subr.mxu0 0.0
  %7178 = vmatpush1.msra.mxu0 %v7165
  %7179 = vmatprep.subr.mxu0 0.0
  %7180 = vmatpush1.msra.mxu0 %v7175
  %7181 = vmatprep.subr.mxu0 0.0
  %7182 = vmatpush1.msra.mxu0 0.0
  %7183 = vmatprep.subr.mxu0 0.0
  %7184 = vmatpush1.msra.mxu0 0.0
  %7185 = vmatprep.subr.mxu0 0.0
  %7186 = vmatpush1.msra.mxu0 0.0
  %7187 = vmatprep.subr.mxu0 0.0
  %7188 = vmatpush1.msra.mxu0 0.0
  %7189 = vmatprep.subr.mxu0 0.0
  %7190 = vmatpush1.msra.mxu0 0.0
  %7191 = vmatprep.subr.mxu0 0.0
  %7192 = vmatpush1.msra.mxu0 0.0
  %7193 = vmatprep.subr.mxu0 0.0
  %7194 = vmatpush1.msra.mxu0 0.0
  %7195 = vmatprep.subr.mxu0 0.0
  %7196 = vmatpush1.msra.mxu0 0.0
  %7197 = vmatprep.subr.mxu0 0.0
  %7198 = vmatpush1.msra.mxu0 0.0
  %7199 = vmatprep.subr.mxu0 0.0
  %7200 = vmatpush1.msra.mxu0 0.0
  %7201 = vmatprep.subr.mxu0 0.0
  %7202 = vmatpush1.msra.mxu0 0.0
  %7203 = vmatprep.subr.mxu0 0.0
  %7204 = vmatpush1.msra.mxu0 0.0
  %7205 = vmatprep.subr.mxu0 0.0
  %7206 = vmatpush1.msra.mxu0 0.0
  %7207 = vmatprep.subr.mxu0 0.0
  %7208 = vmatpush1.msra.mxu0 0.0
  %7209 = vmatprep.subr.mxu0 0.0
  %7210 = vmatpush1.msra.mxu0 0.0
  %7211 = vmatprep.subr.mxu0 0.0
  %7212 = vmatpush1.msra.mxu0 0.0
  %7213 = vmatprep.subr.mxu0 0.0
  %7214 = vmatpush1.msra.mxu0 0.0
  %7215 = vmatprep.subr.mxu0 0.0
  %7216 = vmatpush1.msra.mxu0 0.0
  %7217 = vmatprep.subr.mxu0 0.0
  %7218 = vmatpush1.msra.mxu0 0.0
  %7219 = vmatprep.subr.mxu0 0.0
  %7220 = vmatpush1.msra.mxu0 0.0
  %7221 = vmatprep.subr.mxu0 0.0
  %7222 = vmatpush1.msra.mxu0 0.0
  %7223 = vmatprep.subr.mxu0 0.0
  %7224 = vmatpush1.msra.mxu0 0.0
  %7225 = vmatprep.subr.mxu0 0.0
  %7226 = vmatpush1.msra.mxu0 0.0
  %7227 = vmatprep.subr.mxu0 0.0
  %7228 = vmatpush1.msra.mxu0 0.0
  %7229 = vmatprep.subr.mxu0 0.0
  %7230 = vmatpush1.msra.mxu0 0.0
  %7231 = vmatprep.subr.mxu0 0.0
  %7232 = vmatpush1.msra.mxu0 0.0
  %7233 = vmatprep.subr.mxu0 0.0
  %7234 = vmatpush1.msra.mxu0 0.0
  %7235 = vmatprep.subr.mxu0 0.0
  %7236 = vmatpush1.msra.mxu0 0.0
  %7237 = vmatprep.subr.mxu0 0.0
  %7238 = vmatpush1.msra.mxu0 0.0
  %7239 = vmatprep.subr.mxu0 0.0
  %7240 = vmatpush1.msra.mxu0 0.0
  %7241 = vmatprep.mubr.f32.mxu0 0.0
  %7242 = vmatmul.mubr.f32.gmra.mrb[0].mxu0 %v7170
  %v7243 = vpop.f32.mrb[0].mxu0
  %v7244 = vadd.f32 0.0, %v7243
  %v7245 = vpop.f32.mrb[0].mxu0
  %7246 = vmatprep.mubr.f32.mxu0 0.0
  %7247 = vmatmul.mubr.f32.gmra.mrb[0].mxu0 %v7173
  %v7248 = vpop.f32.mrb[0].mxu0
  %v7249 = vadd.f32 0.0, %v7248
  %v7250 = vpop.f32.mrb[0].mxu0
  %7251 = vdwg.mxu0
  %7252 = vrot.lane.b32.xlu0 %v5787, 40
  %v7253 = vpop.permute.xlu0 %7252
  %7254 = vrot.lane.b32.xlu0 %v5810, 40
  %v7255 = vpop.permute.xlu0 %7254
  %v7258 = vsel %vm1703, %v6634, 0
  %v7261 = vsel %vm1703, %v6635, 0
  %v7263 = vsel %vm1892, %v7255, 0
  %7265 = vmatprep.subr.mxu0 0.0
  %7266 = vmatpush1.msra.mxu0 %v7253
  %7267 = vmatprep.subr.mxu0 0.0
  %7268 = vmatpush1.msra.mxu0 %v7263
  %7269 = vmatprep.subr.mxu0 0.0
  %7270 = vmatpush1.msra.mxu0 0.0
  %7271 = vmatprep.subr.mxu0 0.0
  %7272 = vmatpush1.msra.mxu0 0.0
  %7273 = vmatprep.subr.mxu0 0.0
  %7274 = vmatpush1.msra.mxu0 0.0
  %7275 = vmatprep.subr.mxu0 0.0
  %7276 = vmatpush1.msra.mxu0 0.0
  %7277 = vmatprep.subr.mxu0 0.0
  %7278 = vmatpush1.msra.mxu0 0.0
  %7279 = vmatprep.subr.mxu0 0.0
  %7280 = vmatpush1.msra.mxu0 0.0
  %7281 = vmatprep.subr.mxu0 0.0
  %7282 = vmatpush1.msra.mxu0 0.0
  %7283 = vmatprep.subr.mxu0 0.0
  %7284 = vmatpush1.msra.mxu0 0.0
  %7285 = vmatprep.subr.mxu0 0.0
  %7286 = vmatpush1.msra.mxu0 0.0
  %7287 = vmatprep.subr.mxu0 0.0
  %7288 = vmatpush1.msra.mxu0 0.0
  %7289 = vmatprep.subr.mxu0 0.0
  %7290 = vmatpush1.msra.mxu0 0.0
  %7291 = vmatprep.subr.mxu0 0.0
  %7292 = vmatpush1.msra.mxu0 0.0
  %7293 = vmatprep.subr.mxu0 0.0
  %7294 = vmatpush1.msra.mxu0 0.0
  %7295 = vmatprep.subr.mxu0 0.0
  %7296 = vmatpush1.msra.mxu0 0.0
  %7297 = vmatprep.subr.mxu0 0.0
  %7298 = vmatpush1.msra.mxu0 0.0
  %7299 = vmatprep.subr.mxu0 0.0
  %7300 = vmatpush1.msra.mxu0 0.0
  %7301 = vmatprep.subr.mxu0 0.0
  %7302 = vmatpush1.msra.mxu0 0.0
  %7303 = vmatprep.subr.mxu0 0.0
  %7304 = vmatpush1.msra.mxu0 0.0
  %7305 = vmatprep.subr.mxu0 0.0
  %7306 = vmatpush1.msra.mxu0 0.0
  %7307 = vmatprep.subr.mxu0 0.0
  %7308 = vmatpush1.msra.mxu0 0.0
  %7309 = vmatprep.subr.mxu0 0.0
  %7310 = vmatpush1.msra.mxu0 0.0
  %7311 = vmatprep.subr.mxu0 0.0
  %7312 = vmatpush1.msra.mxu0 0.0
  %7313 = vmatprep.subr.mxu0 0.0
  %7314 = vmatpush1.msra.mxu0 0.0
  %7315 = vmatprep.subr.mxu0 0.0
  %7316 = vmatpush1.msra.mxu0 0.0
  %7317 = vmatprep.subr.mxu0 0.0
  %7318 = vmatpush1.msra.mxu0 0.0
  %7319 = vmatprep.subr.mxu0 0.0
  %7320 = vmatpush1.msra.mxu0 0.0
  %7321 = vmatprep.subr.mxu0 0.0
  %7322 = vmatpush1.msra.mxu0 0.0
  %7323 = vmatprep.subr.mxu0 0.0
  %7324 = vmatpush1.msra.mxu0 0.0
  %7325 = vmatprep.subr.mxu0 0.0
  %7326 = vmatpush1.msra.mxu0 0.0
  %7327 = vmatprep.subr.mxu0 0.0
  %7328 = vmatpush1.msra.mxu0 0.0
  %7329 = vmatprep.mubr.f32.mxu0 0.0
  %7330 = vmatmul.mubr.f32.gmra.mrb[0].mxu0 %v7258
  %v7331 = vpop.f32.mrb[0].mxu0
  %v7332 = vadd.f32 0.0, %v7331
  %v7333 = vpop.f32.mrb[0].mxu0
  %7334 = vmatprep.mubr.f32.mxu0 0.0
  %7335 = vmatmul.mubr.f32.gmra.mrb[0].mxu0 %v7261
  %v7336 = vpop.f32.mrb[0].mxu0
  %v7337 = vadd.f32 0.0, %v7336
  %v7338 = vpop.f32.mrb[0].mxu0
  %7339 = vdwg.mxu0
  %7344 = vrot.lane.b32.xlu0 %v6892, 8
  %v7345 = vpop.permute.xlu0 %7344
  %7346 = vrot.lane.b32.xlu0 %v6897, 8
  %v7347 = vpop.permute.xlu0 %7346
  %7348 = vrot.lane.b32.xlu0 %v6980, 8
  %v7349 = vpop.permute.xlu0 %7348
  %7350 = vrot.lane.b32.xlu0 %v6985, 8
  %v7351 = vpop.permute.xlu0 %7350
  %7360 = vrot.lane.b32.xlu0 %v7068, 16
  %v7361 = vpop.permute.xlu0 %7360
  %7362 = vrot.lane.b32.xlu0 %v7073, 16
  %v7363 = vpop.permute.xlu0 %7362
  %7364 = vrot.lane.b32.xlu0 %v7156, 16
  %v7365 = vpop.permute.xlu0 %7364
  %7366 = vrot.lane.b32.xlu0 %v7161, 16
  %v7367 = vpop.permute.xlu0 %7366
  %7376 = vrot.lane.b32.xlu0 %v7244, 24
  %v7377 = vpop.permute.xlu0 %7376
  %7378 = vrot.lane.b32.xlu0 %v7249, 24
  %v7379 = vpop.permute.xlu0 %7378
  %7380 = vrot.lane.b32.xlu0 %v7332, 24
  %v7381 = vpop.permute.xlu0 %7380
  %7382 = vrot.lane.b32.xlu0 %v7337, 24
  %v7383 = vpop.permute.xlu0 %7382
  %v7388 = vsel %vm898, %v6716, %v7345
  %v7389 = vsel %vm898, %v6721, %v7347
  %v7390 = vsel %vm898, %v6804, %v7349
  %v7391 = vsel %vm898, %v6809, %v7351
  %v7392 = vsel %vm2638, %v7388, %v7361
  %v7393 = vsel %vm2638, %v7389, %v7363
  %v7394 = vsel %vm2638, %v7390, %v7365
  %v7395 = vsel %vm2638, %v7391, %v7367
  %v7396 = vsel %vm2643, %v7392, %v7377
  %v7397 = vsel %vm2643, %v7393, %v7379
  %v7398 = vsel %vm2643, %v7394, %v7381
  %v7399 = vsel %vm2643, %v7395, %v7383
  %v7404 = vcombine.high %v7396, %v7396
  %v7406 = vunpack.c.l.s4 1966171168
  %v7407 = vunpack.c.0.s8 %v7406
  %v7408 = vlaneseq
  %v7409 = vshrl.u32 %v7408, 7
  %v7410 = vsub.s32 %v7407, %v7409
  %v7411 = vrot.slane %v7396, %v7410
  %v7413 = vunpack.c.l.s4 1966171168
  %v7414 = vunpack.c.0.s8 %v7413
  %v7415 = vlaneseq
  %v7416 = vshrl.u32 %v7415, 7
  %v7417 = vsub.s32 %v7414, %v7416
  %v7418 = vrot.slane %v7404, %v7417
  %v7419 = vcombine.high %v7411, %v7411
  %v7420 = vcombine.high %v7418, %v7418
  %v7422 = vunpack.c.l.s4 1966171168
  %v7423 = vunpack.c.0.s8 %v7422
  %v7424 = vlaneseq
  %v7425 = vshrl.u32 %v7424, 7
  %v7426 = vsub.s32 %v7423, %v7425
  %v7427 = vrot.slane %v7411, %v7426
  %v7429 = vunpack.c.l.s4 1966171168
  %v7430 = vunpack.c.0.s8 %v7429
  %v7431 = vlaneseq
  %v7432 = vshrl.u32 %v7431, 7
  %v7433 = vsub.s32 %v7430, %v7432
  %v7434 = vrot.slane %v7418, %v7433
  %v7436 = vunpack.c.l.s4 1966171168
  %v7437 = vunpack.c.0.s8 %v7436
  %v7438 = vlaneseq
  %v7439 = vshrl.u32 %v7438, 7
  %v7440 = vsub.s32 %v7437, %v7439
  %v7441 = vrot.slane %v7419, %v7440
  %v7443 = vunpack.c.l.s4 1966171168
  %v7444 = vunpack.c.0.s8 %v7443
  %v7445 = vlaneseq
  %v7446 = vshrl.u32 %v7445, 7
  %v7447 = vsub.s32 %v7444, %v7446
  %v7448 = vrot.slane %v7420, %v7447
  %v7449 = vcombine.high %v7427, %v7427
  %v7450 = vcombine.high %v7434, %v7434
  %v7451 = vcombine.high %v7441, %v7441
  %v7452 = vcombine.high %v7448, %v7448
  %v7454 = vunpack.c.l.s4 1966171168
  %v7455 = vunpack.c.0.s8 %v7454
  %v7456 = vlaneseq
  %v7457 = vshrl.u32 %v7456, 7
  %v7458 = vsub.s32 %v7455, %v7457
  %v7459 = vrot.slane %v7397, %v7458
  %v7460 = vcombine.high %v7459, %v7459
  %v7462 = vunpack.c.l.s4 1966171168
  %v7463 = vunpack.c.0.s8 %v7462
  %v7464 = vlaneseq
  %v7465 = vshrl.u32 %v7464, 7
  %v7466 = vsub.s32 %v7463, %v7465
  %v7467 = vrot.slane %v7459, %v7466
  %v7469 = vunpack.c.l.s4 1966171168
  %v7470 = vunpack.c.0.s8 %v7469
  %v7471 = vlaneseq
  %v7472 = vshrl.u32 %v7471, 7
  %v7473 = vsub.s32 %v7470, %v7472
  %v7474 = vrot.slane %v7460, %v7473
  %v7475 = vcombine.high %v7467, %v7467
  %v7476 = vcombine.high %v7398, %v7398
  %v7478 = vunpack.c.l.s4 1966171168
  %v7479 = vunpack.c.0.s8 %v7478
  %v7480 = vlaneseq
  %v7481 = vshrl.u32 %v7480, 7
  %v7482 = vsub.s32 %v7479, %v7481
  %v7483 = vrot.slane %v7398, %v7482
  %v7485 = vunpack.c.l.s4 1966171168
  %v7486 = vunpack.c.0.s8 %v7485
  %v7487 = vlaneseq
  %v7488 = vshrl.u32 %v7487, 7
  %v7489 = vsub.s32 %v7486, %v7488
  %v7490 = vrot.slane %v7476, %v7489
  %v7491 = vcombine.high %v7483, %v7483
  %v7492 = vcombine.high %v7490, %v7490
  %v7494 = vunpack.c.l.s4 1966171168
  %v7495 = vunpack.c.0.s8 %v7494
  %v7496 = vlaneseq
  %v7497 = vshrl.u32 %v7496, 7
  %v7498 = vsub.s32 %v7495, %v7497
  %v7499 = vrot.slane %v7483, %v7498
  %v7501 = vunpack.c.l.s4 1966171168
  %v7502 = vunpack.c.0.s8 %v7501
  %v7503 = vlaneseq
  %v7504 = vshrl.u32 %v7503, 7
  %v7505 = vsub.s32 %v7502, %v7504
  %v7506 = vrot.slane %v7490, %v7505
  %v7508 = vunpack.c.l.s4 1966171168
  %v7509 = vunpack.c.0.s8 %v7508
  %v7510 = vlaneseq
  %v7511 = vshrl.u32 %v7510, 7
  %v7512 = vsub.s32 %v7509, %v7511
  %v7513 = vrot.slane %v7491, %v7512
  %v7515 = vunpack.c.l.s4 1966171168
  %v7516 = vunpack.c.0.s8 %v7515
  %v7517 = vlaneseq
  %v7518 = vshrl.u32 %v7517, 7
  %v7519 = vsub.s32 %v7516, %v7518
  %v7520 = vrot.slane %v7492, %v7519
  %v7521 = vcombine.high %v7499, %v7499
  %v7522 = vcombine.high %v7506, %v7506
  %v7523 = vcombine.high %v7513, %v7513
  %v7524 = vcombine.high %v7520, %v7520
  %v7526 = vunpack.c.l.s4 1966171168
  %v7527 = vunpack.c.0.s8 %v7526
  %v7528 = vlaneseq
  %v7529 = vshrl.u32 %v7528, 7
  %v7530 = vsub.s32 %v7527, %v7529
  %v7531 = vrot.slane %v7399, %v7530
  %v7532 = vcombine.high %v7531, %v7531
  %v7534 = vunpack.c.l.s4 1966171168
  %v7535 = vunpack.c.0.s8 %v7534
  %v7536 = vlaneseq
  %v7537 = vshrl.u32 %v7536, 7
  %v7538 = vsub.s32 %v7535, %v7537
  %v7539 = vrot.slane %v7531, %v7538
  %v7541 = vunpack.c.l.s4 1966171168
  %v7542 = vunpack.c.0.s8 %v7541
  %v7543 = vlaneseq
  %v7544 = vshrl.u32 %v7543, 7
  %v7545 = vsub.s32 %v7542, %v7544
  %v7546 = vrot.slane %v7532, %v7545
  %v7547 = vcombine.high %v7539, %v7539
  %v7548 = vcombine.low %v7427, %v7441
  %v7549 = vcombine.low %v7449, %v7451
  %v7550 = vcombine.low %v7434, %v7448
  %v7551 = vcombine.low %v7450, %v7452
  %v7553 = vunpack.c.l.s4 1966171168
  %v7554 = vunpack.c.0.s8 %v7553
  %v7555 = vlaneseq
  %v7556 = vshrl.u32 %v7555, 7
  %v7557 = vsub.s32 %v7554, %v7556
  %v7558 = vrot.slane %v7548, %v7557
  %v7560 = vunpack.c.l.s4 1966171168
  %v7561 = vunpack.c.0.s8 %v7560
  %v7562 = vlaneseq
  %v7563 = vshrl.u32 %v7562, 7
  %v7564 = vsub.s32 %v7561, %v7563
  %v7565 = vrot.slane %v7549, %v7564
  %v7567 = vunpack.c.l.s4 1966171168
  %v7568 = vunpack.c.0.s8 %v7567
  %v7569 = vlaneseq
  %v7570 = vshrl.u32 %v7569, 7
  %v7571 = vsub.s32 %v7568, %v7570
  %v7572 = vrot.slane %v7550, %v7571
  %v7574 = vunpack.c.l.s4 1966171168
  %v7575 = vunpack.c.0.s8 %v7574
  %v7576 = vlaneseq
  %v7577 = vshrl.u32 %v7576, 7
  %v7578 = vsub.s32 %v7575, %v7577
  %v7579 = vrot.slane %v7551, %v7578
  %v7580 = vcombine.low %v7558, %v7565
  %v7581 = vcombine.low %v7572, %v7579
  %v7583 = vunpack.c.l.s4 1966171168
  %v7584 = vunpack.c.0.s8 %v7583
  %v7585 = vlaneseq
  %v7586 = vshrl.u32 %v7585, 7
  %v7587 = vsub.s32 %v7584, %v7586
  %v7588 = vrot.slane %v7580, %v7587
  %v7590 = vunpack.c.l.s4 1966171168
  %v7591 = vunpack.c.0.s8 %v7590
  %v7592 = vlaneseq
  %v7593 = vshrl.u32 %v7592, 7
  %v7594 = vsub.s32 %v7591, %v7593
  %v7595 = vrot.slane %v7581, %v7594
  %v7596 = vcombine.low %v7588, %v7595
  %v7597 = vcombine.low %v7467, %v7474
  %v7598 = vcombine.low %v7475, %v7499
  %v7599 = vcombine.low %v7513, %v7521
  %v7600 = vcombine.low %v7523, %v7506
  %v7602 = vunpack.c.l.s4 1966171168
  %v7603 = vunpack.c.0.s8 %v7602
  %v7604 = vlaneseq
  %v7605 = vshrl.u32 %v7604, 7
  %v7606 = vsub.s32 %v7603, %v7605
  %v7607 = vrot.slane %v7597, %v7606
  %v7609 = vunpack.c.l.s4 1966171168
  %v7610 = vunpack.c.0.s8 %v7609
  %v7611 = vlaneseq
  %v7612 = vshrl.u32 %v7611, 7
  %v7613 = vsub.s32 %v7610, %v7612
  %v7614 = vrot.slane %v7598, %v7613
  %v7616 = vunpack.c.l.s4 1966171168
  %v7617 = vunpack.c.0.s8 %v7616
  %v7618 = vlaneseq
  %v7619 = vshrl.u32 %v7618, 7
  %v7620 = vsub.s32 %v7617, %v7619
  %v7621 = vrot.slane %v7599, %v7620
  %v7623 = vunpack.c.l.s4 1966171168
  %v7624 = vunpack.c.0.s8 %v7623
  %v7625 = vlaneseq
  %v7626 = vshrl.u32 %v7625, 7
  %v7627 = vsub.s32 %v7624, %v7626
  %v7628 = vrot.slane %v7600, %v7627
  %v7629 = vcombine.low %v7607, %v7614
  %v7630 = vcombine.low %v7621, %v7628
  %v7632 = vunpack.c.l.s4 1966171168
  %v7633 = vunpack.c.0.s8 %v7632
  %v7634 = vlaneseq
  %v7635 = vshrl.u32 %v7634, 7
  %v7636 = vsub.s32 %v7633, %v7635
  %v7637 = vrot.slane %v7629, %v7636
  %v7639 = vunpack.c.l.s4 1966171168
  %v7640 = vunpack.c.0.s8 %v7639
  %v7641 = vlaneseq
  %v7642 = vshrl.u32 %v7641, 7
  %v7643 = vsub.s32 %v7640, %v7642
  %v7644 = vrot.slane %v7630, %v7643
  %v7645 = vcombine.low %v7637, %v7644
  %v7646 = vcombine.low %v7520, %v7522
  %v7647 = vcombine.low %v7524, %v7539
  %v7648 = vcombine.low %v7546, %v7547
  %v7650 = vunpack.c.l.s4 1966171168
  %v7651 = vunpack.c.0.s8 %v7650
  %v7652 = vlaneseq
  %v7653 = vshrl.u32 %v7652, 7
  %v7654 = vsub.s32 %v7651, %v7653
  %v7655 = vrot.slane %v7646, %v7654
  %v7657 = vunpack.c.l.s4 1966171168
  %v7658 = vunpack.c.0.s8 %v7657
  %v7659 = vlaneseq
  %v7660 = vshrl.u32 %v7659, 7
  %v7661 = vsub.s32 %v7658, %v7660
  %v7662 = vrot.slane %v7647, %v7661
  %v7664 = vunpack.c.l.s4 1966171168
  %v7665 = vunpack.c.0.s8 %v7664
  %v7666 = vlaneseq
  %v7667 = vshrl.u32 %v7666, 7
  %v7668 = vsub.s32 %v7665, %v7667
  %v7669 = vrot.slane %v7648, %v7668
  %v7670 = vcombine.low %v7655, %v7662
  %v7672 = vunpack.c.l.s4 1966171168
  %v7673 = vunpack.c.0.s8 %v7672
  %v7674 = vlaneseq
  %v7675 = vshrl.u32 %v7674, 7
  %v7676 = vsub.s32 %v7673, %v7675
  %v7677 = vrot.slane %v7670, %v7676
  %v7679 = vunpack.c.l.s4 1966171168
  %v7680 = vunpack.c.0.s8 %v7679
  %v7681 = vlaneseq
  %v7682 = vshrl.u32 %v7681, 7
  %v7683 = vsub.s32 %v7680, %v7682
  %v7684 = vrot.slane %v7669, %v7683
  %v7685 = vcombine.low %v7677, %v7684
  %v7686 = vsel %vm52, %v7596, 0
  %v7688 = vsel %vm52, %v7645, 0
  %v7690 = vsel %vm52, %v7685, 0
  %7692 = vmatprep.subr.mxu0 0.0
  %7693 = vmatpush1.msra.mxu0 %v4797
  %7694 = vmatprep.subr.mxu0 0.0
  %7695 = vmatpush1.msra.mxu0 %v4798
  %7696 = vmatprep.subr.mxu0 0.0
  %7697 = vmatpush1.msra.mxu0 %v4799
  %7698 = vmatprep.subr.mxu0 0.0
  %7699 = vmatpush1.msra.mxu0 %v4800
  %7700 = vmatprep.subr.mxu0 0.0
  %7701 = vmatpush1.msra.mxu0 0.0
  %7702 = vmatprep.subr.mxu0 0.0
  %7703 = vmatpush1.msra.mxu0 0.0
  %7704 = vmatprep.subr.mxu0 0.0
  %7705 = vmatpush1.msra.mxu0 0.0
  %7706 = vmatprep.subr.mxu0 0.0
  %7707 = vmatpush1.msra.mxu0 0.0
  %7708 = vmatprep.subr.mxu0 0.0
  %7709 = vmatpush1.msra.mxu0 0.0
  %7710 = vmatprep.subr.mxu0 0.0
  %7711 = vmatpush1.msra.mxu0 0.0
  %7712 = vmatprep.subr.mxu0 0.0
  %7713 = vmatpush1.msra.mxu0 0.0
  %7714 = vmatprep.subr.mxu0 0.0
  %7715 = vmatpush1.msra.mxu0 0.0
  %7716 = vmatprep.subr.mxu0 0.0
  %7717 = vmatpush1.msra.mxu0 0.0
  %7718 = vmatprep.subr.mxu0 0.0
  %7719 = vmatpush1.msra.mxu0 0.0
  %7720 = vmatprep.subr.mxu0 0.0
  %7721 = vmatpush1.msra.mxu0 0.0
  %7722 = vmatprep.subr.mxu0 0.0
  %7723 = vmatpush1.msra.mxu0 0.0
  %7724 = vmatprep.subr.mxu0 0.0
  %7725 = vmatpush1.msra.mxu0 0.0
  %7726 = vmatprep.subr.mxu0 0.0
  %7727 = vmatpush1.msra.mxu0 0.0
  %7728 = vmatprep.subr.mxu0 0.0
  %7729 = vmatpush1.msra.mxu0 0.0
  %7730 = vmatprep.subr.mxu0 0.0
  %7731 = vmatpush1.msra.mxu0 0.0
  %7732 = vmatprep.subr.mxu0 0.0
  %7733 = vmatpush1.msra.mxu0 0.0
  %7734 = vmatprep.subr.mxu0 0.0
  %7735 = vmatpush1.msra.mxu0 0.0
  %7736 = vmatprep.subr.mxu0 0.0
  %7737 = vmatpush1.msra.mxu0 0.0
  %7738 = vmatprep.subr.mxu0 0.0
  %7739 = vmatpush1.msra.mxu0 0.0
  %7740 = vmatprep.subr.mxu0 0.0
  %7741 = vmatpush1.msra.mxu0 0.0
  %7742 = vmatprep.subr.mxu0 0.0
  %7743 = vmatpush1.msra.mxu0 0.0
  %7744 = vmatprep.subr.mxu0 0.0
  %7745 = vmatpush1.msra.mxu0 0.0
  %7746 = vmatprep.subr.mxu0 0.0
  %7747 = vmatpush1.msra.mxu0 0.0
  %7748 = vmatprep.subr.mxu0 0.0
  %7749 = vmatpush1.msra.mxu0 0.0
  %7750 = vmatprep.subr.mxu0 0.0
  %7751 = vmatpush1.msra.mxu0 0.0
  %7752 = vmatprep.subr.mxu0 0.0
  %7753 = vmatpush1.msra.mxu0 0.0
  %7754 = vmatprep.subr.mxu0 0.0
  %7755 = vmatpush1.msra.mxu0 0.0
  %7756 = vmatprep.mubr.f32.mxu0 0.0
  %7757 = vmatmul.mubr.f32.gmra.mrb[0].mxu0 %v7686
  %v7758 = vpop.f32.mrb[0].mxu0
  %v7759 = vadd.f32 0.0, %v7758
  %v7760 = vpop.f32.mrb[0].mxu0
  %7761 = vmatprep.mubr.f32.mxu0 0.0
  %7762 = vmatmul.mubr.f32.gmra.mrb[0].mxu0 %v7688
  %v7763 = vpop.f32.mrb[0].mxu0
  %v7764 = vadd.f32 0.0, %v7763
  %v7765 = vpop.f32.mrb[0].mxu0
  %7766 = vmatprep.mubr.f32.mxu0 0.0
  %7767 = vmatmul.mubr.f32.gmra.mrb[0].mxu0 %v7690
  %v7768 = vpop.f32.mrb[0].mxu0
  %v7769 = vadd.f32 0.0, %v7768
  %v7770 = vpop.f32.mrb[0].mxu0
  %7771 = vdwg.mxu0
  %v7775 = vcombine.high %v7759, %v7759
  %v7777 = vunpack.c.l.s4 1966171168
  %v7778 = vunpack.c.0.s8 %v7777
  %v7779 = vlaneseq
  %v7780 = vshrl.u32 %v7779, 7
  %v7781 = vsub.s32 %v7778, %v7780
  %v7782 = vrot.slane %v7759, %v7781
  %v7784 = vunpack.c.l.s4 1966171168
  %v7785 = vunpack.c.0.s8 %v7784
  %v7786 = vlaneseq
  %v7787 = vshrl.u32 %v7786, 7
  %v7788 = vsub.s32 %v7785, %v7787
  %v7789 = vrot.slane %v7775, %v7788
  %v7790 = vcombine.high %v7782, %v7782
  %v7791 = vcombine.high %v7789, %v7789
  %v7793 = vunpack.c.l.s4 1966171168
  %v7794 = vunpack.c.0.s8 %v7793
  %v7795 = vlaneseq
  %v7796 = vshrl.u32 %v7795, 7
  %v7797 = vsub.s32 %v7794, %v7796
  %v7798 = vrot.slane %v7782, %v7797
  %v7800 = vunpack.c.l.s4 1966171168
  %v7801 = vunpack.c.0.s8 %v7800
  %v7802 = vlaneseq
  %v7803 = vshrl.u32 %v7802, 7
  %v7804 = vsub.s32 %v7801, %v7803
  %v7805 = vrot.slane %v7789, %v7804
  %v7807 = vunpack.c.l.s4 1966171168
  %v7808 = vunpack.c.0.s8 %v7807
  %v7809 = vlaneseq
  %v7810 = vshrl.u32 %v7809, 7
  %v7811 = vsub.s32 %v7808, %v7810
  %v7812 = vrot.slane %v7790, %v7811
  %v7814 = vunpack.c.l.s4 1966171168
  %v7815 = vunpack.c.0.s8 %v7814
  %v7816 = vlaneseq
  %v7817 = vshrl.u32 %v7816, 7
  %v7818 = vsub.s32 %v7815, %v7817
  %v7819 = vrot.slane %v7791, %v7818
  %v7820 = vcombine.high %v7798, %v7798
  %v7821 = vcombine.high %v7805, %v7805
  %v7822 = vcombine.high %v7812, %v7812
  %v7823 = vcombine.high %v7819, %v7819
  %v7824 = vcombine.high %v7764, %v7764
  %v7826 = vunpack.c.l.s4 1966171168
  %v7827 = vunpack.c.0.s8 %v7826
  %v7828 = vlaneseq
  %v7829 = vshrl.u32 %v7828, 7
  %v7830 = vsub.s32 %v7827, %v7829
  %v7831 = vrot.slane %v7764, %v7830
  %v7833 = vunpack.c.l.s4 1966171168
  %v7834 = vunpack.c.0.s8 %v7833
  %v7835 = vlaneseq
  %v7836 = vshrl.u32 %v7835, 7
  %v7837 = vsub.s32 %v7834, %v7836
  %v7838 = vrot.slane %v7824, %v7837
  %v7839 = vcombine.high %v7831, %v7831
  %v7840 = vcombine.high %v7838, %v7838
  %v7842 = vunpack.c.l.s4 1966171168
  %v7843 = vunpack.c.0.s8 %v7842
  %v7844 = vlaneseq
  %v7845 = vshrl.u32 %v7844, 7
  %v7846 = vsub.s32 %v7843, %v7845
  %v7847 = vrot.slane %v7831, %v7846
  %v7849 = vunpack.c.l.s4 1966171168
  %v7850 = vunpack.c.0.s8 %v7849
  %v7851 = vlaneseq
  %v7852 = vshrl.u32 %v7851, 7
  %v7853 = vsub.s32 %v7850, %v7852
  %v7854 = vrot.slane %v7838, %v7853
  %v7856 = vunpack.c.l.s4 1966171168
  %v7857 = vunpack.c.0.s8 %v7856
  %v7858 = vlaneseq
  %v7859 = vshrl.u32 %v7858, 7
  %v7860 = vsub.s32 %v7857, %v7859
  %v7861 = vrot.slane %v7839, %v7860
  %v7863 = vunpack.c.l.s4 1966171168
  %v7864 = vunpack.c.0.s8 %v7863
  %v7865 = vlaneseq
  %v7866 = vshrl.u32 %v7865, 7
  %v7867 = vsub.s32 %v7864, %v7866
  %v7868 = vrot.slane %v7840, %v7867
  %v7869 = vcombine.high %v7847, %v7847
  %v7870 = vcombine.high %v7854, %v7854
  %v7871 = vcombine.high %v7861, %v7861
  %v7872 = vcombine.high %v7868, %v7868
  %v7873 = vcombine.high %v7769, %v7769
  %v7875 = vunpack.c.l.s4 1966171168
  %v7876 = vunpack.c.0.s8 %v7875
  %v7877 = vlaneseq
  %v7878 = vshrl.u32 %v7877, 7
  %v7879 = vsub.s32 %v7876, %v7878
  %v7880 = vrot.slane %v7769, %v7879
  %v7882 = vunpack.c.l.s4 1966171168
  %v7883 = vunpack.c.0.s8 %v7882
  %v7884 = vlaneseq
  %v7885 = vshrl.u32 %v7884, 7
  %v7886 = vsub.s32 %v7883, %v7885
  %v7887 = vrot.slane %v7873, %v7886
  %v7888 = vcombine.high %v7880, %v7880
  %v7889 = vcombine.high %v7887, %v7887
  %v7891 = vunpack.c.l.s4 1966171168
  %v7892 = vunpack.c.0.s8 %v7891
  %v7893 = vlaneseq
  %v7894 = vshrl.u32 %v7893, 7
  %v7895 = vsub.s32 %v7892, %v7894
  %v7896 = vrot.slane %v7880, %v7895
  %v7898 = vunpack.c.l.s4 1966171168
  %v7899 = vunpack.c.0.s8 %v7898
  %v7900 = vlaneseq
  %v7901 = vshrl.u32 %v7900, 7
  %v7902 = vsub.s32 %v7899, %v7901
  %v7903 = vrot.slane %v7887, %v7902
  %v7905 = vunpack.c.l.s4 1966171168
  %v7906 = vunpack.c.0.s8 %v7905
  %v7907 = vlaneseq
  %v7908 = vshrl.u32 %v7907, 7
  %v7909 = vsub.s32 %v7906, %v7908
  %v7910 = vrot.slane %v7888, %v7909
  %v7912 = vunpack.c.l.s4 1966171168
  %v7913 = vunpack.c.0.s8 %v7912
  %v7914 = vlaneseq
  %v7915 = vshrl.u32 %v7914, 7
  %v7916 = vsub.s32 %v7913, %v7915
  %v7917 = vrot.slane %v7889, %v7916
  %v7918 = vcombine.high %v7896, %v7896
  %v7919 = vcombine.high %v7910, %v7910
  %v7920 = vcombine.low %v7798, %v7812
  %v7921 = vcombine.low %v7820, %v7822
  %v7922 = vcombine.low %v7805, %v7819
  %v7923 = vcombine.low %v7821, %v7823
  %v7925 = vunpack.c.l.s4 1966171168
  %v7926 = vunpack.c.0.s8 %v7925
  %v7927 = vlaneseq
  %v7928 = vshrl.u32 %v7927, 7
  %v7929 = vsub.s32 %v7926, %v7928
  %v7930 = vrot.slane %v7920, %v7929
  %v7932 = vunpack.c.l.s4 1966171168
  %v7933 = vunpack.c.0.s8 %v7932
  %v7934 = vlaneseq
  %v7935 = vshrl.u32 %v7934, 7
  %v7936 = vsub.s32 %v7933, %v7935
  %v7937 = vrot.slane %v7921, %v7936
  %v7939 = vunpack.c.l.s4 1966171168
  %v7940 = vunpack.c.0.s8 %v7939
  %v7941 = vlaneseq
  %v7942 = vshrl.u32 %v7941, 7
  %v7943 = vsub.s32 %v7940, %v7942
  %v7944 = vrot.slane %v7922, %v7943
  %v7946 = vunpack.c.l.s4 1966171168
  %v7947 = vunpack.c.0.s8 %v7946
  %v7948 = vlaneseq
  %v7949 = vshrl.u32 %v7948, 7
  %v7950 = vsub.s32 %v7947, %v7949
  %v7951 = vrot.slane %v7923, %v7950
  %v7952 = vcombine.low %v7930, %v7937
  %v7953 = vcombine.low %v7944, %v7951
  %v7955 = vunpack.c.l.s4 1966171168
  %v7956 = vunpack.c.0.s8 %v7955
  %v7957 = vlaneseq
  %v7958 = vshrl.u32 %v7957, 7
  %v7959 = vsub.s32 %v7956, %v7958
  %v7960 = vrot.slane %v7952, %v7959
  %v7962 = vunpack.c.l.s4 1966171168
  %v7963 = vunpack.c.0.s8 %v7962
  %v7964 = vlaneseq
  %v7965 = vshrl.u32 %v7964, 7
  %v7966 = vsub.s32 %v7963, %v7965
  %v7967 = vrot.slane %v7953, %v7966
  %v7968 = vcombine.low %v7960, %v7967
  %v7969 = vcombine.low %v7847, %v7861
  %v7971 = vunpack.c.l.s4 1966171168
  %v7972 = vunpack.c.0.s8 %v7971
  %v7973 = vlaneseq
  %v7974 = vshrl.u32 %v7973, 7
  %v7975 = vsub.s32 %v7972, %v7974
  %v7976 = vrot.slane %v7969, %v7975
  %v7978 = vunpack.c.l.s4 1966171168
  %v7979 = vunpack.c.0.s8 %v7978
  %v7980 = vlaneseq
  %v7981 = vshrl.u32 %v7980, 7
  %v7982 = vsub.s32 %v7979, %v7981
  %v7983 = vrot.slane %v7869, %v7982
  %v7984 = vcombine.low %v7976, %v7983
  %v7986 = vunpack.c.l.s4 1966171168
  %v7987 = vunpack.c.0.s8 %v7986
  %v7988 = vlaneseq
  %v7989 = vshrl.u32 %v7988, 7
  %v7990 = vsub.s32 %v7987, %v7989
  %v7991 = vrot.slane %v7984, %v7990
  %v7992 = vcombine.low %v7871, %v7854
  %v7993 = vcombine.low %v7868, %v7870
  %v7994 = vcombine.low %v7872, %v7896
  %v7995 = vcombine.low %v7910, %v7918
  %v7997 = vunpack.c.l.s4 1966171168
  %v7998 = vunpack.c.0.s8 %v7997
  %v7999 = vlaneseq
  %v8000 = vshrl.u32 %v7999, 7
  %v8001 = vsub.s32 %v7998, %v8000
  %v8002 = vrot.slane %v7992, %v8001
  %v8004 = vunpack.c.l.s4 1966171168
  %v8005 = vunpack.c.0.s8 %v8004
  %v8006 = vlaneseq
  %v8007 = vshrl.u32 %v8006, 7
  %v8008 = vsub.s32 %v8005, %v8007
  %v8009 = vrot.slane %v7993, %v8008
  %v8011 = vunpack.c.l.s4 1966171168
  %v8012 = vunpack.c.0.s8 %v8011
  %v8013 = vlaneseq
  %v8014 = vshrl.u32 %v8013, 7
  %v8015 = vsub.s32 %v8012, %v8014
  %v8016 = vrot.slane %v7994, %v8015
  %v8018 = vunpack.c.l.s4 1966171168
  %v8019 = vunpack.c.0.s8 %v8018
  %v8020 = vlaneseq
  %v8021 = vshrl.u32 %v8020, 7
  %v8022 = vsub.s32 %v8019, %v8021
  %v8023 = vrot.slane %v7995, %v8022
  %v8024 = vcombine.low %v8002, %v8009
  %v8025 = vcombine.low %v8016, %v8023
  %v8027 = vunpack.c.l.s4 1966171168
  %v8028 = vunpack.c.0.s8 %v8027
  %v8029 = vlaneseq
  %v8030 = vshrl.u32 %v8029, 7
  %v8031 = vsub.s32 %v8028, %v8030
  %v8032 = vrot.slane %v8024, %v8031
  %v8034 = vunpack.c.l.s4 1966171168
  %v8035 = vunpack.c.0.s8 %v8034
  %v8036 = vlaneseq
  %v8037 = vshrl.u32 %v8036, 7
  %v8038 = vsub.s32 %v8035, %v8037
  %v8039 = vrot.slane %v8025, %v8038
  %v8040 = vcombine.low %v8032, %v8039
  %v8041 = vcombine.low %v7919, %v7903
  %v8043 = vunpack.c.l.s4 1966171168
  %v8044 = vunpack.c.0.s8 %v8043
  %v8045 = vlaneseq
  %v8046 = vshrl.u32 %v8045, 7
  %v8047 = vsub.s32 %v8044, %v8046
  %v8048 = vrot.slane %v8041, %v8047
  %v8050 = vunpack.c.l.s4 1966171168
  %v8051 = vunpack.c.0.s8 %v8050
  %v8052 = vlaneseq
  %v8053 = vshrl.u32 %v8052, 7
  %v8054 = vsub.s32 %v8051, %v8053
  %v8055 = vrot.slane %v7917, %v8054
  %v8056 = vcombine.low %v8048, %v8055
  %v8058 = vunpack.c.l.s4 1966171168
  %v8059 = vunpack.c.0.s8 %v8058
  %v8060 = vlaneseq
  %v8061 = vshrl.u32 %v8060, 7
  %v8062 = vsub.s32 %v8059, %v8061
  %v8063 = vrot.slane %v8056, %v8062
  %v8068 = vadd.f32 %v4779, %v7968
  %v8069 = vadd.f32 %v4780, %v7991
  %v8070 = vadd.f32 %v4781, %v8040
  %v8071 = vadd.f32 %v4782, %v8063
  %v8072 = vlaneseq
  %v8073 = vshrl.u32 %v8072, 7
  %v8074 = vsub.s32 0, %v8073
  %v8075 = vrot.slane %v4789, %v8074
  %v8076 = vadd.f32 %v8068, %v8075
  %v8077 = vadd.f32 %v8069, %v8075
  %v8078 = vadd.f32 %v8070, %v8075
  %v8079 = vadd.f32 %v8071, %v8075
  %v8080 = vsel %vm52, %v8076, 0.0
  %8081 = vadd.xlane.f32.xlu0 %v8080
  %v8082 = vpop.xlane.xlu0 %8081
  %v8083 = vsel %vm56, %v8077, 0.0
  %8084 = vadd.xlane.f32.xlu0 %v8083
  %v8085 = vpop.xlane.xlu0 %8084
  %v8086 = vsel %vm52, %v8078, 0.0
  %8087 = vadd.xlane.f32.xlu0 %v8086
  %v8088 = vpop.xlane.xlu0 %8087
  %v8089 = vsel %vm56, %v8079, 0.0
  %8090 = vadd.xlane.f32.xlu0 %v8089
  %v8091 = vpop.xlane.xlu0 %8090
  %v8092 = vmul.f32 %v8082, %v66
  %v8093 = vmul.f32 %v8085, %v66
  %v8094 = vmul.f32 %v8088, %v66
  %v8095 = vmul.f32 %v8091, %v66
  %v8096 = vsub.f32 %v8076, %v8092
  %v8097 = vsub.f32 %v8077, %v8093
  %v8098 = vsub.f32 %v8078, %v8094
  %v8099 = vsub.f32 %v8079, %v8095
  %v8100 = vmul.f32 %v8096, %v8096
  %v8101 = vmul.f32 %v8097, %v8097
  %v8102 = vmul.f32 %v8098, %v8098
  %v8103 = vmul.f32 %v8099, %v8099
  %v8104 = vsel %vm52, %v8100, 0.0
  %8105 = vadd.xlane.f32.xlu0 %v8104
  %v8106 = vpop.xlane.xlu0 %8105
  %v8107 = vsel %vm56, %v8101, 0.0
  %8108 = vadd.xlane.f32.xlu0 %v8107
  %v8109 = vpop.xlane.xlu0 %8108
  %v8110 = vsel %vm52, %v8102, 0.0
  %8111 = vadd.xlane.f32.xlu0 %v8110
  %v8112 = vpop.xlane.xlu0 %8111
  %v8113 = vsel %vm56, %v8103, 0.0
  %8114 = vadd.xlane.f32.xlu0 %v8113
  %v8115 = vpop.xlane.xlu0 %8114
  %v8116 = vmul.f32 %v8106, %v66
  %v8117 = vmul.f32 %v8109, %v66
  %v8118 = vmul.f32 %v8112, %v66
  %v8119 = vmul.f32 %v8115, %v66
  %v8120 = vadd.f32 %v8116, 1e-05
  %v8121 = vadd.f32 %v8117, 1e-05
  %v8122 = vadd.f32 %v8118, 1e-05
  %v8123 = vadd.f32 %v8119, 1e-05
  %v8124 = vrsqrt.pop %v8120
  %v8125 = vrsqrt.pop %v8121
  %v8126 = vrsqrt.pop %v8122
  %v8127 = vrsqrt.pop %v8123
  %v8128 = vmul.f32 %v8096, %v8124
  %v8129 = vmul.f32 %v8097, %v8125
  %v8130 = vmul.f32 %v8098, %v8126
  %v8131 = vmul.f32 %v8099, %v8127
  %v8132 = vlaneseq
  %v8133 = vshrl.u32 %v8132, 7
  %v8134 = vsub.s32 0, %v8133
  %v8135 = vrot.slane %v4786, %v8134
  %v8136 = vmul.f32 %v8128, %v8135
  %v8137 = vmul.f32 %v8129, %v8135
  %v8138 = vmul.f32 %v8130, %v8135
  %v8139 = vmul.f32 %v8131, %v8135
  %v8140 = vlaneseq
  %v8141 = vshrl.u32 %v8140, 7
  %v8142 = vsub.s32 0, %v8141
  %v8143 = vrot.slane %v4787, %v8142
  %v8144 = vadd.f32 %v8136, %v8143
  %v8145 = vadd.f32 %v8137, %v8143
  %v8146 = vadd.f32 %v8138, %v8143
  %v8147 = vadd.f32 %v8139, %v8143
  %v8148 = vlaneseq
  %v8149 = vshrl.u32 %v8148, 7
  %v8150 = vsub.s32 0, %v8149
  %v8151 = vrot.slane %v4790, %v8150
  %v8156 = vcombine.high %v8144, %v8144
  %v8158 = vunpack.c.l.s4 1966171168
  %v8159 = vunpack.c.0.s8 %v8158
  %v8160 = vlaneseq
  %v8161 = vshrl.u32 %v8160, 7
  %v8162 = vsub.s32 %v8159, %v8161
  %v8163 = vrot.slane %v8144, %v8162
  %v8165 = vunpack.c.l.s4 1966171168
  %v8166 = vunpack.c.0.s8 %v8165
  %v8167 = vlaneseq
  %v8168 = vshrl.u32 %v8167, 7
  %v8169 = vsub.s32 %v8166, %v8168
  %v8170 = vrot.slane %v8156, %v8169
  %v8171 = vcombine.high %v8163, %v8163
  %v8172 = vcombine.high %v8170, %v8170
  %v8174 = vunpack.c.l.s4 1966171168
  %v8175 = vunpack.c.0.s8 %v8174
  %v8176 = vlaneseq
  %v8177 = vshrl.u32 %v8176, 7
  %v8178 = vsub.s32 %v8175, %v8177
  %v8179 = vrot.slane %v8163, %v8178
  %v8181 = vunpack.c.l.s4 1966171168
  %v8182 = vunpack.c.0.s8 %v8181
  %v8183 = vlaneseq
  %v8184 = vshrl.u32 %v8183, 7
  %v8185 = vsub.s32 %v8182, %v8184
  %v8186 = vrot.slane %v8170, %v8185
  %v8188 = vunpack.c.l.s4 1966171168
  %v8189 = vunpack.c.0.s8 %v8188
  %v8190 = vlaneseq
  %v8191 = vshrl.u32 %v8190, 7
  %v8192 = vsub.s32 %v8189, %v8191
  %v8193 = vrot.slane %v8171, %v8192
  %v8195 = vunpack.c.l.s4 1966171168
  %v8196 = vunpack.c.0.s8 %v8195
  %v8197 = vlaneseq
  %v8198 = vshrl.u32 %v8197, 7
  %v8199 = vsub.s32 %v8196, %v8198
  %v8200 = vrot.slane %v8172, %v8199
  %v8201 = vcombine.high %v8179, %v8179
  %v8202 = vcombine.high %v8186, %v8186
  %v8203 = vcombine.high %v8193, %v8193
  %v8204 = vcombine.high %v8200, %v8200
  %v8206 = vunpack.c.l.s4 1966171168
  %v8207 = vunpack.c.0.s8 %v8206
  %v8208 = vlaneseq
  %v8209 = vshrl.u32 %v8208, 7
  %v8210 = vsub.s32 %v8207, %v8209
  %v8211 = vrot.slane %v8145, %v8210
  %v8212 = vcombine.high %v8211, %v8211
  %v8214 = vunpack.c.l.s4 1966171168
  %v8215 = vunpack.c.0.s8 %v8214
  %v8216 = vlaneseq
  %v8217 = vshrl.u32 %v8216, 7
  %v8218 = vsub.s32 %v8215, %v8217
  %v8219 = vrot.slane %v8211, %v8218
  %v8221 = vunpack.c.l.s4 1966171168
  %v8222 = vunpack.c.0.s8 %v8221
  %v8223 = vlaneseq
  %v8224 = vshrl.u32 %v8223, 7
  %v8225 = vsub.s32 %v8222, %v8224
  %v8226 = vrot.slane %v8212, %v8225
  %v8227 = vcombine.high %v8219, %v8219
  %v8228 = vcombine.high %v8146, %v8146
  %v8230 = vunpack.c.l.s4 1966171168
  %v8231 = vunpack.c.0.s8 %v8230
  %v8232 = vlaneseq
  %v8233 = vshrl.u32 %v8232, 7
  %v8234 = vsub.s32 %v8231, %v8233
  %v8235 = vrot.slane %v8146, %v8234
  %v8237 = vunpack.c.l.s4 1966171168
  %v8238 = vunpack.c.0.s8 %v8237
  %v8239 = vlaneseq
  %v8240 = vshrl.u32 %v8239, 7
  %v8241 = vsub.s32 %v8238, %v8240
  %v8242 = vrot.slane %v8228, %v8241
  %v8243 = vcombine.high %v8235, %v8235
  %v8244 = vcombine.high %v8242, %v8242
  %v8246 = vunpack.c.l.s4 1966171168
  %v8247 = vunpack.c.0.s8 %v8246
  %v8248 = vlaneseq
  %v8249 = vshrl.u32 %v8248, 7
  %v8250 = vsub.s32 %v8247, %v8249
  %v8251 = vrot.slane %v8235, %v8250
  %v8253 = vunpack.c.l.s4 1966171168
  %v8254 = vunpack.c.0.s8 %v8253
  %v8255 = vlaneseq
  %v8256 = vshrl.u32 %v8255, 7
  %v8257 = vsub.s32 %v8254, %v8256
  %v8258 = vrot.slane %v8242, %v8257
  %v8260 = vunpack.c.l.s4 1966171168
  %v8261 = vunpack.c.0.s8 %v8260
  %v8262 = vlaneseq
  %v8263 = vshrl.u32 %v8262, 7
  %v8264 = vsub.s32 %v8261, %v8263
  %v8265 = vrot.slane %v8243, %v8264
  %v8267 = vunpack.c.l.s4 1966171168
  %v8268 = vunpack.c.0.s8 %v8267
  %v8269 = vlaneseq
  %v8270 = vshrl.u32 %v8269, 7
  %v8271 = vsub.s32 %v8268, %v8270
  %v8272 = vrot.slane %v8244, %v8271
  %v8273 = vcombine.high %v8251, %v8251
  %v8274 = vcombine.high %v8258, %v8258
  %v8275 = vcombine.high %v8265, %v8265
  %v8276 = vcombine.high %v8272, %v8272
  %v8278 = vunpack.c.l.s4 1966171168
  %v8279 = vunpack.c.0.s8 %v8278
  %v8280 = vlaneseq
  %v8281 = vshrl.u32 %v8280, 7
  %v8282 = vsub.s32 %v8279, %v8281
  %v8283 = vrot.slane %v8147, %v8282
  %v8284 = vcombine.high %v8283, %v8283
  %v8286 = vunpack.c.l.s4 1966171168
  %v8287 = vunpack.c.0.s8 %v8286
  %v8288 = vlaneseq
  %v8289 = vshrl.u32 %v8288, 7
  %v8290 = vsub.s32 %v8287, %v8289
  %v8291 = vrot.slane %v8283, %v8290
  %v8293 = vunpack.c.l.s4 1966171168
  %v8294 = vunpack.c.0.s8 %v8293
  %v8295 = vlaneseq
  %v8296 = vshrl.u32 %v8295, 7
  %v8297 = vsub.s32 %v8294, %v8296
  %v8298 = vrot.slane %v8284, %v8297
  %v8299 = vcombine.high %v8291, %v8291
  %v8301 = vcombine.high %v8151, %v8151
  %v8303 = vunpack.c.l.s4 1966171168
  %v8304 = vunpack.c.0.s8 %v8303
  %v8305 = vlaneseq
  %v8306 = vshrl.u32 %v8305, 7
  %v8307 = vsub.s32 %v8304, %v8306
  %v8308 = vrot.slane %v8151, %v8307
  %v8310 = vunpack.c.l.s4 1966171168
  %v8311 = vunpack.c.0.s8 %v8310
  %v8312 = vlaneseq
  %v8313 = vshrl.u32 %v8312, 7
  %v8314 = vsub.s32 %v8311, %v8313
  %v8315 = vrot.slane %v8301, %v8314
  %v8316 = vcombine.high %v8308, %v8308
  %v8317 = vcombine.high %v8315, %v8315
  %v8319 = vunpack.c.l.s4 1966171168
  %v8320 = vunpack.c.0.s8 %v8319
  %v8321 = vlaneseq
  %v8322 = vshrl.u32 %v8321, 7
  %v8323 = vsub.s32 %v8320, %v8322
  %v8324 = vrot.slane %v8308, %v8323
  %v8326 = vunpack.c.l.s4 1966171168
  %v8327 = vunpack.c.0.s8 %v8326
  %v8328 = vlaneseq
  %v8329 = vshrl.u32 %v8328, 7
  %v8330 = vsub.s32 %v8327, %v8329
  %v8331 = vrot.slane %v8315, %v8330
  %v8333 = vunpack.c.l.s4 1966171168
  %v8334 = vunpack.c.0.s8 %v8333
  %v8335 = vlaneseq
  %v8336 = vshrl.u32 %v8335, 7
  %v8337 = vsub.s32 %v8334, %v8336
  %v8338 = vrot.slane %v8316, %v8337
  %v8340 = vunpack.c.l.s4 1966171168
  %v8341 = vunpack.c.0.s8 %v8340
  %v8342 = vlaneseq
  %v8343 = vshrl.u32 %v8342, 7
  %v8344 = vsub.s32 %v8341, %v8343
  %v8345 = vrot.slane %v8317, %v8344
  %v8346 = vcombine.high %v8324, %v8324
  %v8347 = vcombine.high %v8331, %v8331
  %v8348 = vcombine.high %v8338, %v8338
  %v8349 = vcombine.high %v8345, %v8345
  %v8350 = vcombine.low %v8179, %v8193
  %v8351 = vcombine.low %v8201, %v8203
  %v8352 = vcombine.low %v8186, %v8200
  %v8353 = vcombine.low %v8202, %v8204
  %v8355 = vunpack.c.l.s4 1966171168
  %v8356 = vunpack.c.0.s8 %v8355
  %v8357 = vlaneseq
  %v8358 = vshrl.u32 %v8357, 7
  %v8359 = vsub.s32 %v8356, %v8358
  %v8360 = vrot.slane %v8350, %v8359
  %v8362 = vunpack.c.l.s4 1966171168
  %v8363 = vunpack.c.0.s8 %v8362
  %v8364 = vlaneseq
  %v8365 = vshrl.u32 %v8364, 7
  %v8366 = vsub.s32 %v8363, %v8365
  %v8367 = vrot.slane %v8351, %v8366
  %v8369 = vunpack.c.l.s4 1966171168
  %v8370 = vunpack.c.0.s8 %v8369
  %v8371 = vlaneseq
  %v8372 = vshrl.u32 %v8371, 7
  %v8373 = vsub.s32 %v8370, %v8372
  %v8374 = vrot.slane %v8352, %v8373
  %v8376 = vunpack.c.l.s4 1966171168
  %v8377 = vunpack.c.0.s8 %v8376
  %v8378 = vlaneseq
  %v8379 = vshrl.u32 %v8378, 7
  %v8380 = vsub.s32 %v8377, %v8379
  %v8381 = vrot.slane %v8353, %v8380
  %v8382 = vcombine.low %v8360, %v8367
  %v8383 = vcombine.low %v8374, %v8381
  %v8385 = vunpack.c.l.s4 1966171168
  %v8386 = vunpack.c.0.s8 %v8385
  %v8387 = vlaneseq
  %v8388 = vshrl.u32 %v8387, 7
  %v8389 = vsub.s32 %v8386, %v8388
  %v8390 = vrot.slane %v8382, %v8389
  %v8392 = vunpack.c.l.s4 1966171168
  %v8393 = vunpack.c.0.s8 %v8392
  %v8394 = vlaneseq
  %v8395 = vshrl.u32 %v8394, 7
  %v8396 = vsub.s32 %v8393, %v8395
  %v8397 = vrot.slane %v8383, %v8396
  %v8398 = vcombine.low %v8390, %v8397
  %v8399 = vcombine.low %v8219, %v8226
  %v8400 = vcombine.low %v8227, %v8251
  %v8401 = vcombine.low %v8265, %v8273
  %v8402 = vcombine.low %v8275, %v8258
  %v8404 = vunpack.c.l.s4 1966171168
  %v8405 = vunpack.c.0.s8 %v8404
  %v8406 = vlaneseq
  %v8407 = vshrl.u32 %v8406, 7
  %v8408 = vsub.s32 %v8405, %v8407
  %v8409 = vrot.slane %v8399, %v8408
  %v8411 = vunpack.c.l.s4 1966171168
  %v8412 = vunpack.c.0.s8 %v8411
  %v8413 = vlaneseq
  %v8414 = vshrl.u32 %v8413, 7
  %v8415 = vsub.s32 %v8412, %v8414
  %v8416 = vrot.slane %v8400, %v8415
  %v8418 = vunpack.c.l.s4 1966171168
  %v8419 = vunpack.c.0.s8 %v8418
  %v8420 = vlaneseq
  %v8421 = vshrl.u32 %v8420, 7
  %v8422 = vsub.s32 %v8419, %v8421
  %v8423 = vrot.slane %v8401, %v8422
  %v8425 = vunpack.c.l.s4 1966171168
  %v8426 = vunpack.c.0.s8 %v8425
  %v8427 = vlaneseq
  %v8428 = vshrl.u32 %v8427, 7
  %v8429 = vsub.s32 %v8426, %v8428
  %v8430 = vrot.slane %v8402, %v8429
  %v8431 = vcombine.low %v8409, %v8416
  %v8432 = vcombine.low %v8423, %v8430
  %v8434 = vunpack.c.l.s4 1966171168
  %v8435 = vunpack.c.0.s8 %v8434
  %v8436 = vlaneseq
  %v8437 = vshrl.u32 %v8436, 7
  %v8438 = vsub.s32 %v8435, %v8437
  %v8439 = vrot.slane %v8431, %v8438
  %v8441 = vunpack.c.l.s4 1966171168
  %v8442 = vunpack.c.0.s8 %v8441
  %v8443 = vlaneseq
  %v8444 = vshrl.u32 %v8443, 7
  %v8445 = vsub.s32 %v8442, %v8444
  %v8446 = vrot.slane %v8432, %v8445
  %v8447 = vcombine.low %v8439, %v8446
  %v8448 = vcombine.low %v8272, %v8274
  %v8449 = vcombine.low %v8276, %v8291
  %v8450 = vcombine.low %v8298, %v8299
  %v8452 = vunpack.c.l.s4 1966171168
  %v8453 = vunpack.c.0.s8 %v8452
  %v8454 = vlaneseq
  %v8455 = vshrl.u32 %v8454, 7
  %v8456 = vsub.s32 %v8453, %v8455
  %v8457 = vrot.slane %v8448, %v8456
  %v8459 = vunpack.c.l.s4 1966171168
  %v8460 = vunpack.c.0.s8 %v8459
  %v8461 = vlaneseq
  %v8462 = vshrl.u32 %v8461, 7
  %v8463 = vsub.s32 %v8460, %v8462
  %v8464 = vrot.slane %v8449, %v8463
  %v8466 = vunpack.c.l.s4 1966171168
  %v8467 = vunpack.c.0.s8 %v8466
  %v8468 = vlaneseq
  %v8469 = vshrl.u32 %v8468, 7
  %v8470 = vsub.s32 %v8467, %v8469
  %v8471 = vrot.slane %v8450, %v8470
  %v8472 = vcombine.low %v8457, %v8464
  %v8474 = vunpack.c.l.s4 1966171168
  %v8475 = vunpack.c.0.s8 %v8474
  %v8476 = vlaneseq
  %v8477 = vshrl.u32 %v8476, 7
  %v8478 = vsub.s32 %v8475, %v8477
  %v8479 = vrot.slane %v8472, %v8478
  %v8481 = vunpack.c.l.s4 1966171168
  %v8482 = vunpack.c.0.s8 %v8481
  %v8483 = vlaneseq
  %v8484 = vshrl.u32 %v8483, 7
  %v8485 = vsub.s32 %v8482, %v8484
  %v8486 = vrot.slane %v8471, %v8485
  %v8487 = vcombine.low %v8479, %v8486
  %v8488 = vcombine.low %v8324, %v8338
  %v8489 = vcombine.low %v8346, %v8348
  %v8490 = vcombine.low %v8331, %v8345
  %v8491 = vcombine.low %v8347, %v8349
  %v8493 = vunpack.c.l.s4 1966171168
  %v8494 = vunpack.c.0.s8 %v8493
  %v8495 = vlaneseq
  %v8496 = vshrl.u32 %v8495, 7
  %v8497 = vsub.s32 %v8494, %v8496
  %v8498 = vrot.slane %v8488, %v8497
  %v8500 = vunpack.c.l.s4 1966171168
  %v8501 = vunpack.c.0.s8 %v8500
  %v8502 = vlaneseq
  %v8503 = vshrl.u32 %v8502, 7
  %v8504 = vsub.s32 %v8501, %v8503
  %v8505 = vrot.slane %v8489, %v8504
  %v8507 = vunpack.c.l.s4 1966171168
  %v8508 = vunpack.c.0.s8 %v8507
  %v8509 = vlaneseq
  %v8510 = vshrl.u32 %v8509, 7
  %v8511 = vsub.s32 %v8508, %v8510
  %v8512 = vrot.slane %v8490, %v8511
  %v8514 = vunpack.c.l.s4 1966171168
  %v8515 = vunpack.c.0.s8 %v8514
  %v8516 = vlaneseq
  %v8517 = vshrl.u32 %v8516, 7
  %v8518 = vsub.s32 %v8515, %v8517
  %v8519 = vrot.slane %v8491, %v8518
  %v8520 = vcombine.low %v8498, %v8505
  %v8521 = vcombine.low %v8512, %v8519
  %v8523 = vunpack.c.l.s4 1966171168
  %v8524 = vunpack.c.0.s8 %v8523
  %v8525 = vlaneseq
  %v8526 = vshrl.u32 %v8525, 7
  %v8527 = vsub.s32 %v8524, %v8526
  %v8528 = vrot.slane %v8520, %v8527
  %v8530 = vunpack.c.l.s4 1966171168
  %v8531 = vunpack.c.0.s8 %v8530
  %v8532 = vlaneseq
  %v8533 = vshrl.u32 %v8532, 7
  %v8534 = vsub.s32 %v8531, %v8533
  %v8535 = vrot.slane %v8521, %v8534
  %v8536 = vcombine.low %v8528, %v8535
  %v8537 = vcombine.low %v8346, %v8324
  %v8538 = vcombine.low %v8338, %v8346
  %v8539 = vcombine.low %v8348, %v8331
  %v8541 = vunpack.c.l.s4 1966171168
  %v8542 = vunpack.c.0.s8 %v8541
  %v8543 = vlaneseq
  %v8544 = vshrl.u32 %v8543, 7
  %v8545 = vsub.s32 %v8542, %v8544
  %v8546 = vrot.slane %v8537, %v8545
  %v8548 = vunpack.c.l.s4 1966171168
  %v8549 = vunpack.c.0.s8 %v8548
  %v8550 = vlaneseq
  %v8551 = vshrl.u32 %v8550, 7
  %v8552 = vsub.s32 %v8549, %v8551
  %v8553 = vrot.slane %v8538, %v8552
  %v8555 = vunpack.c.l.s4 1966171168
  %v8556 = vunpack.c.0.s8 %v8555
  %v8557 = vlaneseq
  %v8558 = vshrl.u32 %v8557, 7
  %v8559 = vsub.s32 %v8556, %v8558
  %v8560 = vrot.slane %v8539, %v8559
  %v8561 = vcombine.low %v8498, %v8546
  %v8562 = vcombine.low %v8553, %v8560
  %v8564 = vunpack.c.l.s4 1966171168
  %v8565 = vunpack.c.0.s8 %v8564
  %v8566 = vlaneseq
  %v8567 = vshrl.u32 %v8566, 7
  %v8568 = vsub.s32 %v8565, %v8567
  %v8569 = vrot.slane %v8561, %v8568
  %v8571 = vunpack.c.l.s4 1966171168
  %v8572 = vunpack.c.0.s8 %v8571
  %v8573 = vlaneseq
  %v8574 = vshrl.u32 %v8573, 7
  %v8575 = vsub.s32 %v8572, %v8574
  %v8576 = vrot.slane %v8562, %v8575
  %v8577 = vcombine.low %v8569, %v8576
  %v8578 = vcombine.low %v8345, %v8347
  %v8579 = vcombine.low %v8349, %v8324
  %v8581 = vunpack.c.l.s4 1966171168
  %v8582 = vunpack.c.0.s8 %v8581
  %v8583 = vlaneseq
  %v8584 = vshrl.u32 %v8583, 7
  %v8585 = vsub.s32 %v8582, %v8584
  %v8586 = vrot.slane %v8578, %v8585
  %v8588 = vunpack.c.l.s4 1966171168
  %v8589 = vunpack.c.0.s8 %v8588
  %v8590 = vlaneseq
  %v8591 = vshrl.u32 %v8590, 7
  %v8592 = vsub.s32 %v8589, %v8591
  %v8593 = vrot.slane %v8579, %v8592
  %v8594 = vcombine.low %v8586, %v8593
  %v8596 = vunpack.c.l.s4 1966171168
  %v8597 = vunpack.c.0.s8 %v8596
  %v8598 = vlaneseq
  %v8599 = vshrl.u32 %v8598, 7
  %v8600 = vsub.s32 %v8597, %v8599
  %v8601 = vrot.slane %v8594, %v8600
  %v8603 = vunpack.c.l.s4 1966171168
  %v8604 = vunpack.c.0.s8 %v8603
  %v8605 = vlaneseq
  %v8606 = vshrl.u32 %v8605, 7
  %v8607 = vsub.s32 %v8604, %v8606
  %v8608 = vrot.slane %v8553, %v8607
  %v8609 = vcombine.low %v8601, %v8608
  %v8613 = vsel %vm52, %v8398, 0
  %v8615 = vsel %vm52, %v8447, 0
  %v8617 = vsel %vm52, %v8487, 0
  %8619 = vmatprep.subr.mxu0 0.0
  %8620 = vmatpush1.msra.mxu0 %v4801
  %8621 = vmatprep.subr.mxu0 0.0
  %8622 = vmatpush1.msra.mxu0 %v4802
  %8623 = vmatprep.subr.mxu0 0.0
  %8624 = vmatpush1.msra.mxu0 %v4803
  %8625 = vmatprep.subr.mxu0 0.0
  %8626 = vmatpush1.msra.mxu0 %v4804
  %8627 = vmatprep.subr.mxu0 0.0
  %8628 = vmatpush1.msra.mxu0 0.0
  %8629 = vmatprep.subr.mxu0 0.0
  %8630 = vmatpush1.msra.mxu0 0.0
  %8631 = vmatprep.subr.mxu0 0.0
  %8632 = vmatpush1.msra.mxu0 0.0
  %8633 = vmatprep.subr.mxu0 0.0
  %8634 = vmatpush1.msra.mxu0 0.0
  %8635 = vmatprep.subr.mxu0 0.0
  %8636 = vmatpush1.msra.mxu0 0.0
  %8637 = vmatprep.subr.mxu0 0.0
  %8638 = vmatpush1.msra.mxu0 0.0
  %8639 = vmatprep.subr.mxu0 0.0
  %8640 = vmatpush1.msra.mxu0 0.0
  %8641 = vmatprep.subr.mxu0 0.0
  %8642 = vmatpush1.msra.mxu0 0.0
  %8643 = vmatprep.subr.mxu0 0.0
  %8644 = vmatpush1.msra.mxu0 0.0
  %8645 = vmatprep.subr.mxu0 0.0
  %8646 = vmatpush1.msra.mxu0 0.0
  %8647 = vmatprep.subr.mxu0 0.0
  %8648 = vmatpush1.msra.mxu0 0.0
  %8649 = vmatprep.subr.mxu0 0.0
  %8650 = vmatpush1.msra.mxu0 0.0
  %8651 = vmatprep.subr.mxu0 0.0
  %8652 = vmatpush1.msra.mxu0 0.0
  %8653 = vmatprep.subr.mxu0 0.0
  %8654 = vmatpush1.msra.mxu0 0.0
  %8655 = vmatprep.subr.mxu0 0.0
  %8656 = vmatpush1.msra.mxu0 0.0
  %8657 = vmatprep.subr.mxu0 0.0
  %8658 = vmatpush1.msra.mxu0 0.0
  %8659 = vmatprep.subr.mxu0 0.0
  %8660 = vmatpush1.msra.mxu0 0.0
  %8661 = vmatprep.subr.mxu0 0.0
  %8662 = vmatpush1.msra.mxu0 0.0
  %8663 = vmatprep.subr.mxu0 0.0
  %8664 = vmatpush1.msra.mxu0 0.0
  %8665 = vmatprep.subr.mxu0 0.0
  %8666 = vmatpush1.msra.mxu0 0.0
  %8667 = vmatprep.subr.mxu0 0.0
  %8668 = vmatpush1.msra.mxu0 0.0
  %8669 = vmatprep.subr.mxu0 0.0
  %8670 = vmatpush1.msra.mxu0 0.0
  %8671 = vmatprep.subr.mxu0 0.0
  %8672 = vmatpush1.msra.mxu0 0.0
  %8673 = vmatprep.subr.mxu0 0.0
  %8674 = vmatpush1.msra.mxu0 0.0
  %8675 = vmatprep.subr.mxu0 0.0
  %8676 = vmatpush1.msra.mxu0 0.0
  %8677 = vmatprep.subr.mxu0 0.0
  %8678 = vmatpush1.msra.mxu0 0.0
  %8679 = vmatprep.subr.mxu0 0.0
  %8680 = vmatpush1.msra.mxu0 0.0
  %8681 = vmatprep.subr.mxu0 0.0
  %8682 = vmatpush1.msra.mxu0 0.0
  %8683 = vmatprep.mubr.f32.mxu0 0.0
  %8684 = vmatmul.mubr.f32.gmra.mrb[0].mxu0 %v8613
  %v8685 = vpop.f32.mrb[0].mxu0
  %v8686 = vadd.f32 %v8536, %v8685
  %v8687 = vpop.f32.mrb[0].mxu0
  %8688 = vmatprep.mubr.f32.mxu0 0.0
  %8689 = vmatmul.mubr.f32.gmra.mrb[0].mxu0 %v8615
  %v8690 = vpop.f32.mrb[0].mxu0
  %v8691 = vadd.f32 %v8577, %v8690
  %v8692 = vpop.f32.mrb[0].mxu0
  %8693 = vmatprep.mubr.f32.mxu0 0.0
  %8694 = vmatmul.mubr.f32.gmra.mrb[0].mxu0 %v8617
  %v8695 = vpop.f32.mrb[0].mxu0
  %v8696 = vadd.f32 %v8609, %v8695
  %v8697 = vpop.f32.mrb[0].mxu0
  %8698 = vdwg.mxu0
  %v8702 = vcombine.high %v8686, %v8686
  %v8704 = vunpack.c.l.s4 1966171168
  %v8705 = vunpack.c.0.s8 %v8704
  %v8706 = vlaneseq
  %v8707 = vshrl.u32 %v8706, 7
  %v8708 = vsub.s32 %v8705, %v8707
  %v8709 = vrot.slane %v8686, %v8708
  %v8711 = vunpack.c.l.s4 1966171168
  %v8712 = vunpack.c.0.s8 %v8711
  %v8713 = vlaneseq
  %v8714 = vshrl.u32 %v8713, 7
  %v8715 = vsub.s32 %v8712, %v8714
  %v8716 = vrot.slane %v8702, %v8715
  %v8717 = vcombine.high %v8709, %v8709
  %v8718 = vcombine.high %v8716, %v8716
  %v8720 = vunpack.c.l.s4 1966171168
  %v8721 = vunpack.c.0.s8 %v8720
  %v8722 = vlaneseq
  %v8723 = vshrl.u32 %v8722, 7
  %v8724 = vsub.s32 %v8721, %v8723
  %v8725 = vrot.slane %v8709, %v8724
  %v8727 = vunpack.c.l.s4 1966171168
  %v8728 = vunpack.c.0.s8 %v8727
  %v8729 = vlaneseq
  %v8730 = vshrl.u32 %v8729, 7
  %v8731 = vsub.s32 %v8728, %v8730
  %v8732 = vrot.slane %v8716, %v8731
  %v8734 = vunpack.c.l.s4 1966171168
  %v8735 = vunpack.c.0.s8 %v8734
  %v8736 = vlaneseq
  %v8737 = vshrl.u32 %v8736, 7
  %v8738 = vsub.s32 %v8735, %v8737
  %v8739 = vrot.slane %v8717, %v8738
  %v8741 = vunpack.c.l.s4 1966171168
  %v8742 = vunpack.c.0.s8 %v8741
  %v8743 = vlaneseq
  %v8744 = vshrl.u32 %v8743, 7
  %v8745 = vsub.s32 %v8742, %v8744
  %v8746 = vrot.slane %v8718, %v8745
  %v8747 = vcombine.high %v8725, %v8725
  %v8748 = vcombine.high %v8732, %v8732
  %v8749 = vcombine.high %v8739, %v8739
  %v8750 = vcombine.high %v8746, %v8746
  %v8751 = vcombine.high %v8691, %v8691
  %v8753 = vunpack.c.l.s4 1966171168
  %v8754 = vunpack.c.0.s8 %v8753
  %v8755 = vlaneseq
  %v8756 = vshrl.u32 %v8755, 7
  %v8757 = vsub.s32 %v8754, %v8756
  %v8758 = vrot.slane %v8691, %v8757
  %v8760 = vunpack.c.l.s4 1966171168
  %v8761 = vunpack.c.0.s8 %v8760
  %v8762 = vlaneseq
  %v8763 = vshrl.u32 %v8762, 7
  %v8764 = vsub.s32 %v8761, %v8763
  %v8765 = vrot.slane %v8751, %v8764
  %v8766 = vcombine.high %v8758, %v8758
  %v8767 = vcombine.high %v8765, %v8765
  %v8769 = vunpack.c.l.s4 1966171168
  %v8770 = vunpack.c.0.s8 %v8769
  %v8771 = vlaneseq
  %v8772 = vshrl.u32 %v8771, 7
  %v8773 = vsub.s32 %v8770, %v8772
  %v8774 = vrot.slane %v8758, %v8773
  %v8776 = vunpack.c.l.s4 1966171168
  %v8777 = vunpack.c.0.s8 %v8776
  %v8778 = vlaneseq
  %v8779 = vshrl.u32 %v8778, 7
  %v8780 = vsub.s32 %v8777, %v8779
  %v8781 = vrot.slane %v8765, %v8780
  %v8783 = vunpack.c.l.s4 1966171168
  %v8784 = vunpack.c.0.s8 %v8783
  %v8785 = vlaneseq
  %v8786 = vshrl.u32 %v8785, 7
  %v8787 = vsub.s32 %v8784, %v8786
  %v8788 = vrot.slane %v8766, %v8787
  %v8790 = vunpack.c.l.s4 1966171168
  %v8791 = vunpack.c.0.s8 %v8790
  %v8792 = vlaneseq
  %v8793 = vshrl.u32 %v8792, 7
  %v8794 = vsub.s32 %v8791, %v8793
  %v8795 = vrot.slane %v8767, %v8794
  %v8796 = vcombine.high %v8774, %v8774
  %v8797 = vcombine.high %v8781, %v8781
  %v8798 = vcombine.high %v8788, %v8788
  %v8799 = vcombine.high %v8795, %v8795
  %v8800 = vcombine.high %v8696, %v8696
  %v8802 = vunpack.c.l.s4 1966171168
  %v8803 = vunpack.c.0.s8 %v8802
  %v8804 = vlaneseq
  %v8805 = vshrl.u32 %v8804, 7
  %v8806 = vsub.s32 %v8803, %v8805
  %v8807 = vrot.slane %v8696, %v8806
  %v8809 = vunpack.c.l.s4 1966171168
  %v8810 = vunpack.c.0.s8 %v8809
  %v8811 = vlaneseq
  %v8812 = vshrl.u32 %v8811, 7
  %v8813 = vsub.s32 %v8810, %v8812
  %v8814 = vrot.slane %v8800, %v8813
  %v8815 = vcombine.high %v8807, %v8807
  %v8816 = vcombine.high %v8814, %v8814
  %v8818 = vunpack.c.l.s4 1966171168
  %v8819 = vunpack.c.0.s8 %v8818
  %v8820 = vlaneseq
  %v8821 = vshrl.u32 %v8820, 7
  %v8822 = vsub.s32 %v8819, %v8821
  %v8823 = vrot.slane %v8807, %v8822
  %v8825 = vunpack.c.l.s4 1966171168
  %v8826 = vunpack.c.0.s8 %v8825
  %v8827 = vlaneseq
  %v8828 = vshrl.u32 %v8827, 7
  %v8829 = vsub.s32 %v8826, %v8828
  %v8830 = vrot.slane %v8814, %v8829
  %v8832 = vunpack.c.l.s4 1966171168
  %v8833 = vunpack.c.0.s8 %v8832
  %v8834 = vlaneseq
  %v8835 = vshrl.u32 %v8834, 7
  %v8836 = vsub.s32 %v8833, %v8835
  %v8837 = vrot.slane %v8815, %v8836
  %v8839 = vunpack.c.l.s4 1966171168
  %v8840 = vunpack.c.0.s8 %v8839
  %v8841 = vlaneseq
  %v8842 = vshrl.u32 %v8841, 7
  %v8843 = vsub.s32 %v8840, %v8842
  %v8844 = vrot.slane %v8816, %v8843
  %v8845 = vcombine.high %v8823, %v8823
  %v8846 = vcombine.high %v8837, %v8837
  %v8869 = vmul.f32 %v8725, 0.5
  %v8870 = vmul.f32 %v8739, 0.5
  %v8871 = vmul.f32 %v8747, 0.5
  %v8872 = vmul.f32 %v8749, 0.5
  %v8873 = vmul.f32 %v8732, 0.5
  %v8874 = vmul.f32 %v8746, 0.5
  %v8875 = vmul.f32 %v8748, 0.5
  %v8876 = vmul.f32 %v8750, 0.5
  %v8877 = vmul.f32 %v8774, 0.5
  %v8878 = vmul.f32 %v8788, 0.5
  %v8879 = vmul.f32 %v8796, 0.5
  %v8880 = vmul.f32 %v8798, 0.5
  %v8881 = vmul.f32 %v8781, 0.5
  %v8882 = vmul.f32 %v8795, 0.5
  %v8883 = vmul.f32 %v8797, 0.5
  %v8884 = vmul.f32 %v8799, 0.5
  %v8885 = vmul.f32 %v8823, 0.5
  %v8886 = vmul.f32 %v8837, 0.5
  %v8887 = vmul.f32 %v8845, 0.5
  %v8888 = vmul.f32 %v8846, 0.5
  %v8889 = vmul.f32 %v8830, 0.5
  %v8890 = vmul.f32 %v8844, 0.5
  %v8891 = vmul.f32 %v8725, %v4139
  %v8892 = vmul.f32 %v8739, %v4139
  %v8893 = vmul.f32 %v8747, %v4139
  %v8894 = vmul.f32 %v8749, %v4139
  %v8895 = vmul.f32 %v8732, %v4139
  %v8896 = vmul.f32 %v8746, %v4139
  %v8897 = vmul.f32 %v8748, %v4139
  %v8898 = vmul.f32 %v8750, %v4139
  %v8899 = vmul.f32 %v8774, %v4139
  %v8900 = vmul.f32 %v8788, %v4139
  %v8901 = vmul.f32 %v8796, %v4139
  %v8902 = vmul.f32 %v8798, %v4139
  %v8903 = vmul.f32 %v8781, %v4139
  %v8904 = vmul.f32 %v8795, %v4139
  %v8905 = vmul.f32 %v8797, %v4139
  %v8906 = vmul.f32 %v8799, %v4139
  %v8907 = vmul.f32 %v8823, %v4139
  %v8908 = vmul.f32 %v8837, %v4139
  %v8909 = vmul.f32 %v8845, %v4139
  %v8910 = vmul.f32 %v8846, %v4139
  %v8911 = vmul.f32 %v8830, %v4139
  %v8912 = vmul.f32 %v8844, %v4139
  %v8913 = verf.f32.pop %v8891
  %v8914 = verf.f32.pop %v8892
  %v8915 = verf.f32.pop %v8893
  %v8916 = verf.f32.pop %v8894
  %v8917 = verf.f32.pop %v8895
  %v8918 = verf.f32.pop %v8896
  %v8919 = verf.f32.pop %v8897
  %v8920 = verf.f32.pop %v8898
  %v8921 = verf.f32.pop %v8899
  %v8922 = verf.f32.pop %v8900
  %v8923 = verf.f32.pop %v8901
  %v8924 = verf.f32.pop %v8902
  %v8925 = verf.f32.pop %v8903
  %v8926 = verf.f32.pop %v8904
  %v8927 = verf.f32.pop %v8905
  %v8928 = verf.f32.pop %v8906
  %v8929 = verf.f32.pop %v8907
  %v8930 = verf.f32.pop %v8908
  %v8931 = verf.f32.pop %v8909
  %v8932 = verf.f32.pop %v8910
  %v8933 = verf.f32.pop %v8911
  %v8934 = verf.f32.pop %v8912
  %v8935 = vadd.f32 %v8913, 1.0
  %v8936 = vadd.f32 %v8914, 1.0
  %v8937 = vadd.f32 %v8915, 1.0
  %v8938 = vadd.f32 %v8916, 1.0
  %v8939 = vadd.f32 %v8917, 1.0
  %v8940 = vadd.f32 %v8918, 1.0
  %v8941 = vadd.f32 %v8919, 1.0
  %v8942 = vadd.f32 %v8920, 1.0
  %v8943 = vadd.f32 %v8921, 1.0
  %v8944 = vadd.f32 %v8922, 1.0
  %v8945 = vadd.f32 %v8923, 1.0
  %v8946 = vadd.f32 %v8924, 1.0
  %v8947 = vadd.f32 %v8925, 1.0
  %v8948 = vadd.f32 %v8926, 1.0
  %v8949 = vadd.f32 %v8927, 1.0
  %v8950 = vadd.f32 %v8928, 1.0
  %v8951 = vadd.f32 %v8929, 1.0
  %v8952 = vadd.f32 %v8930, 1.0
  %v8953 = vadd.f32 %v8931, 1.0
  %v8954 = vadd.f32 %v8932, 1.0
  %v8955 = vadd.f32 %v8933, 1.0
  %v8956 = vadd.f32 %v8934, 1.0
  %v8957 = vmul.f32 %v8869, %v8935
  %v8958 = vmul.f32 %v8870, %v8936
  %v8959 = vmul.f32 %v8871, %v8937
  %v8960 = vmul.f32 %v8872, %v8938
  %v8961 = vmul.f32 %v8873, %v8939
  %v8962 = vmul.f32 %v8874, %v8940
  %v8963 = vmul.f32 %v8875, %v8941
  %v8964 = vmul.f32 %v8876, %v8942
  %v8965 = vmul.f32 %v8877, %v8943
  %v8966 = vmul.f32 %v8878, %v8944
  %v8967 = vmul.f32 %v8879, %v8945
  %v8968 = vmul.f32 %v8880, %v8946
  %v8969 = vmul.f32 %v8881, %v8947
  %v8970 = vmul.f32 %v8882, %v8948
  %v8971 = vmul.f32 %v8883, %v8949
  %v8972 = vmul.f32 %v8884, %v8950
  %v8973 = vmul.f32 %v8885, %v8951
  %v8974 = vmul.f32 %v8886, %v8952
  %v8975 = vmul.f32 %v8887, %v8953
  %v8976 = vmul.f32 %v8888, %v8954
  %v8977 = vmul.f32 %v8889, %v8955
  %v8978 = vmul.f32 %v8890, %v8956
  %v9001 = vcombine.low %v8957, %v8958
  %v9002 = vcombine.low %v8959, %v8960
  %v9003 = vcombine.low %v8961, %v8962
  %v9004 = vcombine.low %v8963, %v8964
  %v9006 = vunpack.c.l.s4 1966171168
  %v9007 = vunpack.c.0.s8 %v9006
  %v9008 = vlaneseq
  %v9009 = vshrl.u32 %v9008, 7
  %v9010 = vsub.s32 %v9007, %v9009
  %v9011 = vrot.slane %v9001, %v9010
  %v9013 = vunpack.c.l.s4 1966171168
  %v9014 = vunpack.c.0.s8 %v9013
  %v9015 = vlaneseq
  %v9016 = vshrl.u32 %v9015, 7
  %v9017 = vsub.s32 %v9014, %v9016
  %v9018 = vrot.slane %v9002, %v9017
  %v9020 = vunpack.c.l.s4 1966171168
  %v9021 = vunpack.c.0.s8 %v9020
  %v9022 = vlaneseq
  %v9023 = vshrl.u32 %v9022, 7
  %v9024 = vsub.s32 %v9021, %v9023
  %v9025 = vrot.slane %v9003, %v9024
  %v9027 = vunpack.c.l.s4 1966171168
  %v9028 = vunpack.c.0.s8 %v9027
  %v9029 = vlaneseq
  %v9030 = vshrl.u32 %v9029, 7
  %v9031 = vsub.s32 %v9028, %v9030
  %v9032 = vrot.slane %v9004, %v9031
  %v9033 = vcombine.low %v9011, %v9018
  %v9034 = vcombine.low %v9025, %v9032
  %v9036 = vunpack.c.l.s4 1966171168
  %v9037 = vunpack.c.0.s8 %v9036
  %v9038 = vlaneseq
  %v9039 = vshrl.u32 %v9038, 7
  %v9040 = vsub.s32 %v9037, %v9039
  %v9041 = vrot.slane %v9033, %v9040
  %v9043 = vunpack.c.l.s4 1966171168
  %v9044 = vunpack.c.0.s8 %v9043
  %v9045 = vlaneseq
  %v9046 = vshrl.u32 %v9045, 7
  %v9047 = vsub.s32 %v9044, %v9046
  %v9048 = vrot.slane %v9034, %v9047
  %v9049 = vcombine.low %v9041, %v9048
  %v9050 = vcombine.low %v8965, %v8966
  %v9051 = vcombine.low %v8967, %v8968
  %v9052 = vcombine.low %v8969, %v8970
  %v9053 = vcombine.low %v8971, %v8972
  %v9055 = vunpack.c.l.s4 1966171168
  %v9056 = vunpack.c.0.s8 %v9055
  %v9057 = vlaneseq
  %v9058 = vshrl.u32 %v9057, 7
  %v9059 = vsub.s32 %v9056, %v9058
  %v9060 = vrot.slane %v9050, %v9059
  %v9062 = vunpack.c.l.s4 1966171168
  %v9063 = vunpack.c.0.s8 %v9062
  %v9064 = vlaneseq
  %v9065 = vshrl.u32 %v9064, 7
  %v9066 = vsub.s32 %v9063, %v9065
  %v9067 = vrot.slane %v9051, %v9066
  %v9069 = vunpack.c.l.s4 1966171168
  %v9070 = vunpack.c.0.s8 %v9069
  %v9071 = vlaneseq
  %v9072 = vshrl.u32 %v9071, 7
  %v9073 = vsub.s32 %v9070, %v9072
  %v9074 = vrot.slane %v9052, %v9073
  %v9076 = vunpack.c.l.s4 1966171168
  %v9077 = vunpack.c.0.s8 %v9076
  %v9078 = vlaneseq
  %v9079 = vshrl.u32 %v9078, 7
  %v9080 = vsub.s32 %v9077, %v9079
  %v9081 = vrot.slane %v9053, %v9080
  %v9082 = vcombine.low %v9060, %v9067
  %v9083 = vcombine.low %v9074, %v9081
  %v9085 = vunpack.c.l.s4 1966171168
  %v9086 = vunpack.c.0.s8 %v9085
  %v9087 = vlaneseq
  %v9088 = vshrl.u32 %v9087, 7
  %v9089 = vsub.s32 %v9086, %v9088
  %v9090 = vrot.slane %v9082, %v9089
  %v9092 = vunpack.c.l.s4 1966171168
  %v9093 = vunpack.c.0.s8 %v9092
  %v9094 = vlaneseq
  %v9095 = vshrl.u32 %v9094, 7
  %v9096 = vsub.s32 %v9093, %v9095
  %v9097 = vrot.slane %v9083, %v9096
  %v9098 = vcombine.low %v9090, %v9097
  %v9099 = vcombine.low %v8973, %v8974
  %v9100 = vcombine.low %v8975, %v8976
  %v9101 = vcombine.low %v8977, %v8978
  %v9103 = vunpack.c.l.s4 1966171168
  %v9104 = vunpack.c.0.s8 %v9103
  %v9105 = vlaneseq
  %v9106 = vshrl.u32 %v9105, 7
  %v9107 = vsub.s32 %v9104, %v9106
  %v9108 = vrot.slane %v9099, %v9107
  %v9110 = vunpack.c.l.s4 1966171168
  %v9111 = vunpack.c.0.s8 %v9110
  %v9112 = vlaneseq
  %v9113 = vshrl.u32 %v9112, 7
  %v9114 = vsub.s32 %v9111, %v9113
  %v9115 = vrot.slane %v9100, %v9114
  %v9117 = vunpack.c.l.s4 1966171168
  %v9118 = vunpack.c.0.s8 %v9117
  %v9119 = vlaneseq
  %v9120 = vshrl.u32 %v9119, 7
  %v9121 = vsub.s32 %v9118, %v9120
  %v9122 = vrot.slane %v9101, %v9121
  %v9123 = vcombine.low %v9108, %v9115
  %v9125 = vunpack.c.l.s4 1966171168
  %v9126 = vunpack.c.0.s8 %v9125
  %v9127 = vlaneseq
  %v9128 = vshrl.u32 %v9127, 7
  %v9129 = vsub.s32 %v9126, %v9128
  %v9130 = vrot.slane %v9123, %v9129
  %v9132 = vunpack.c.l.s4 1966171168
  %v9133 = vunpack.c.0.s8 %v9132
  %v9134 = vlaneseq
  %v9135 = vshrl.u32 %v9134, 7
  %v9136 = vsub.s32 %v9133, %v9135
  %v9137 = vrot.slane %v9122, %v9136
  %v9138 = vcombine.low %v9130, %v9137
  %v9139 = vsel %vm4388, %v9049, 0
  %v9141 = vsel %vm4388, %v9098, 0
  %v9143 = vsel %vm4388, %v9138, 0
  %9145 = vmatprep.subr.mxu0 0.0
  %9146 = vmatpush1.msra.mxu0 %v4805
  %9147 = vmatprep.subr.mxu0 0.0
  %9148 = vmatpush1.msra.mxu0 %v4806
  %9149 = vmatprep.subr.mxu0 0.0
  %9150 = vmatpush1.msra.mxu0 %v4807
  %9151 = vmatprep.subr.mxu0 0.0
  %9152 = vmatpush1.msra.mxu0 %v4808
  %9153 = vmatprep.subr.mxu0 0.0
  %9154 = vmatpush1.msra.mxu0 %v4809
  %9155 = vmatprep.subr.mxu0 0.0
  %9156 = vmatpush1.msra.mxu0 %v4810
  %9157 = vmatprep.subr.mxu0 0.0
  %9158 = vmatpush1.msra.mxu0 %v4811
  %9159 = vmatprep.subr.mxu0 0.0
  %9160 = vmatpush1.msra.mxu0 %v4812
  %9161 = vmatprep.subr.mxu0 0.0
  %9162 = vmatpush1.msra.mxu0 0.0
  %9163 = vmatprep.subr.mxu0 0.0
  %9164 = vmatpush1.msra.mxu0 0.0
  %9165 = vmatprep.subr.mxu0 0.0
  %9166 = vmatpush1.msra.mxu0 0.0
  %9167 = vmatprep.subr.mxu0 0.0
  %9168 = vmatpush1.msra.mxu0 0.0
  %9169 = vmatprep.subr.mxu0 0.0
  %9170 = vmatpush1.msra.mxu0 0.0
  %9171 = vmatprep.subr.mxu0 0.0
  %9172 = vmatpush1.msra.mxu0 0.0
  %9173 = vmatprep.subr.mxu0 0.0
  %9174 = vmatpush1.msra.mxu0 0.0
  %9175 = vmatprep.subr.mxu0 0.0
  %9176 = vmatpush1.msra.mxu0 0.0
  %9177 = vmatprep.subr.mxu0 0.0
  %9178 = vmatpush1.msra.mxu0 0.0
  %9179 = vmatprep.subr.mxu0 0.0
  %9180 = vmatpush1.msra.mxu0 0.0
  %9181 = vmatprep.subr.mxu0 0.0
  %9182 = vmatpush1.msra.mxu0 0.0
  %9183 = vmatprep.subr.mxu0 0.0
  %9184 = vmatpush1.msra.mxu0 0.0
  %9185 = vmatprep.subr.mxu0 0.0
  %9186 = vmatpush1.msra.mxu0 0.0
  %9187 = vmatprep.subr.mxu0 0.0
  %9188 = vmatpush1.msra.mxu0 0.0
  %9189 = vmatprep.subr.mxu0 0.0
  %9190 = vmatpush1.msra.mxu0 0.0
  %9191 = vmatprep.subr.mxu0 0.0
  %9192 = vmatpush1.msra.mxu0 0.0
  %9193 = vmatprep.subr.mxu0 0.0
  %9194 = vmatpush1.msra.mxu0 0.0
  %9195 = vmatprep.subr.mxu0 0.0
  %9196 = vmatpush1.msra.mxu0 0.0
  %9197 = vmatprep.subr.mxu0 0.0
  %9198 = vmatpush1.msra.mxu0 0.0
  %9199 = vmatprep.subr.mxu0 0.0
  %9200 = vmatpush1.msra.mxu0 0.0
  %9201 = vmatprep.subr.mxu0 0.0
  %9202 = vmatpush1.msra.mxu0 0.0
  %9203 = vmatprep.subr.mxu0 0.0
  %9204 = vmatpush1.msra.mxu0 0.0
  %9205 = vmatprep.subr.mxu0 0.0
  %9206 = vmatpush1.msra.mxu0 0.0
  %9207 = vmatprep.subr.mxu0 0.0
  %9208 = vmatpush1.msra.mxu0 0.0
  %9209 = vmatprep.mubr.f32.mxu0 0.0
  %9210 = vmatmul.mubr.f32.gmra.mrb[0].mxu0 %v9139
  %v9211 = vpop.f32.mrb[0].mxu0
  %v9212 = vadd.f32 0.0, %v9211
  %v9213 = vpop.f32.mrb[0].mxu0
  %9214 = vmatprep.mubr.f32.mxu0 0.0
  %9215 = vmatmul.mubr.f32.gmra.mrb[0].mxu0 %v9141
  %v9216 = vpop.f32.mrb[0].mxu0
  %v9217 = vadd.f32 0.0, %v9216
  %v9218 = vpop.f32.mrb[0].mxu0
  %9219 = vmatprep.mubr.f32.mxu0 0.0
  %9220 = vmatmul.mubr.f32.gmra.mrb[0].mxu0 %v9143
  %v9221 = vpop.f32.mrb[0].mxu0
  %v9222 = vadd.f32 0.0, %v9221
  %v9223 = vpop.f32.mrb[0].mxu0
  %9224 = vdwg.mxu0
  %v9228 = vcombine.high %v9212, %v9212
  %v9230 = vunpack.c.l.s4 1966171168
  %v9231 = vunpack.c.0.s8 %v9230
  %v9232 = vlaneseq
  %v9233 = vshrl.u32 %v9232, 7
  %v9234 = vsub.s32 %v9231, %v9233
  %v9235 = vrot.slane %v9212, %v9234
  %v9237 = vunpack.c.l.s4 1966171168
  %v9238 = vunpack.c.0.s8 %v9237
  %v9239 = vlaneseq
  %v9240 = vshrl.u32 %v9239, 7
  %v9241 = vsub.s32 %v9238, %v9240
  %v9242 = vrot.slane %v9228, %v9241
  %v9243 = vcombine.high %v9235, %v9235
  %v9244 = vcombine.high %v9242, %v9242
  %v9246 = vunpack.c.l.s4 1966171168
  %v9247 = vunpack.c.0.s8 %v9246
  %v9248 = vlaneseq
  %v9249 = vshrl.u32 %v9248, 7
  %v9250 = vsub.s32 %v9247, %v9249
  %v9251 = vrot.slane %v9235, %v9250
  %v9253 = vunpack.c.l.s4 1966171168
  %v9254 = vunpack.c.0.s8 %v9253
  %v9255 = vlaneseq
  %v9256 = vshrl.u32 %v9255, 7
  %v9257 = vsub.s32 %v9254, %v9256
  %v9258 = vrot.slane %v9242, %v9257
  %v9260 = vunpack.c.l.s4 1966171168
  %v9261 = vunpack.c.0.s8 %v9260
  %v9262 = vlaneseq
  %v9263 = vshrl.u32 %v9262, 7
  %v9264 = vsub.s32 %v9261, %v9263
  %v9265 = vrot.slane %v9243, %v9264
  %v9267 = vunpack.c.l.s4 1966171168
  %v9268 = vunpack.c.0.s8 %v9267
  %v9269 = vlaneseq
  %v9270 = vshrl.u32 %v9269, 7
  %v9271 = vsub.s32 %v9268, %v9270
  %v9272 = vrot.slane %v9244, %v9271
  %v9273 = vcombine.high %v9251, %v9251
  %v9274 = vcombine.high %v9258, %v9258
  %v9275 = vcombine.high %v9265, %v9265
  %v9276 = vcombine.high %v9272, %v9272
  %v9277 = vcombine.high %v9217, %v9217
  %v9279 = vunpack.c.l.s4 1966171168
  %v9280 = vunpack.c.0.s8 %v9279
  %v9281 = vlaneseq
  %v9282 = vshrl.u32 %v9281, 7
  %v9283 = vsub.s32 %v9280, %v9282
  %v9284 = vrot.slane %v9217, %v9283
  %v9286 = vunpack.c.l.s4 1966171168
  %v9287 = vunpack.c.0.s8 %v9286
  %v9288 = vlaneseq
  %v9289 = vshrl.u32 %v9288, 7
  %v9290 = vsub.s32 %v9287, %v9289
  %v9291 = vrot.slane %v9277, %v9290
  %v9292 = vcombine.high %v9284, %v9284
  %v9293 = vcombine.high %v9291, %v9291
  %v9295 = vunpack.c.l.s4 1966171168
  %v9296 = vunpack.c.0.s8 %v9295
  %v9297 = vlaneseq
  %v9298 = vshrl.u32 %v9297, 7
  %v9299 = vsub.s32 %v9296, %v9298
  %v9300 = vrot.slane %v9291, %v9299
  %v9302 = vunpack.c.l.s4 1966171168
  %v9303 = vunpack.c.0.s8 %v9302
  %v9304 = vlaneseq
  %v9305 = vshrl.u32 %v9304, 7
  %v9306 = vsub.s32 %v9303, %v9305
  %v9307 = vrot.slane %v9292, %v9306
  %v9309 = vunpack.c.l.s4 1966171168
  %v9310 = vunpack.c.0.s8 %v9309
  %v9311 = vlaneseq
  %v9312 = vshrl.u32 %v9311, 7
  %v9313 = vsub.s32 %v9310, %v9312
  %v9314 = vrot.slane %v9293, %v9313
  %v9315 = vcombine.high %v9300, %v9300
  %v9316 = vcombine.high %v9307, %v9307
  %v9317 = vcombine.high %v9314, %v9314
  %v9319 = vunpack.c.l.s4 1966171168
  %v9320 = vunpack.c.0.s8 %v9319
  %v9321 = vlaneseq
  %v9322 = vshrl.u32 %v9321, 7
  %v9323 = vsub.s32 %v9320, %v9322
  %v9324 = vrot.slane %v9222, %v9323
  %v9325 = vcombine.high %v9324, %v9324
  %v9327 = vunpack.c.l.s4 1966171168
  %v9328 = vunpack.c.0.s8 %v9327
  %v9329 = vlaneseq
  %v9330 = vshrl.u32 %v9329, 7
  %v9331 = vsub.s32 %v9328, %v9330
  %v9332 = vrot.slane %v9324, %v9331
  %v9334 = vunpack.c.l.s4 1966171168
  %v9335 = vunpack.c.0.s8 %v9334
  %v9336 = vlaneseq
  %v9337 = vshrl.u32 %v9336, 7
  %v9338 = vsub.s32 %v9335, %v9337
  %v9339 = vrot.slane %v9325, %v9338
  %v9340 = vcombine.high %v9332, %v9332
  %v9341 = vcombine.low %v9251, %v9265
  %v9342 = vcombine.low %v9273, %v9275
  %v9343 = vcombine.low %v9258, %v9272
  %v9344 = vcombine.low %v9274, %v9276
  %v9346 = vunpack.c.l.s4 1966171168
  %v9347 = vunpack.c.0.s8 %v9346
  %v9348 = vlaneseq
  %v9349 = vshrl.u32 %v9348, 7
  %v9350 = vsub.s32 %v9347, %v9349
  %v9351 = vrot.slane %v9341, %v9350
  %v9353 = vunpack.c.l.s4 1966171168
  %v9354 = vunpack.c.0.s8 %v9353
  %v9355 = vlaneseq
  %v9356 = vshrl.u32 %v9355, 7
  %v9357 = vsub.s32 %v9354, %v9356
  %v9358 = vrot.slane %v9342, %v9357
  %v9360 = vunpack.c.l.s4 1966171168
  %v9361 = vunpack.c.0.s8 %v9360
  %v9362 = vlaneseq
  %v9363 = vshrl.u32 %v9362, 7
  %v9364 = vsub.s32 %v9361, %v9363
  %v9365 = vrot.slane %v9343, %v9364
  %v9367 = vunpack.c.l.s4 1966171168
  %v9368 = vunpack.c.0.s8 %v9367
  %v9369 = vlaneseq
  %v9370 = vshrl.u32 %v9369, 7
  %v9371 = vsub.s32 %v9368, %v9370
  %v9372 = vrot.slane %v9344, %v9371
  %v9373 = vcombine.low %v9351, %v9358
  %v9374 = vcombine.low %v9365, %v9372
  %v9376 = vunpack.c.l.s4 1966171168
  %v9377 = vunpack.c.0.s8 %v9376
  %v9378 = vlaneseq
  %v9379 = vshrl.u32 %v9378, 7
  %v9380 = vsub.s32 %v9377, %v9379
  %v9381 = vrot.slane %v9373, %v9380
  %v9383 = vunpack.c.l.s4 1966171168
  %v9384 = vunpack.c.0.s8 %v9383
  %v9385 = vlaneseq
  %v9386 = vshrl.u32 %v9385, 7
  %v9387 = vsub.s32 %v9384, %v9386
  %v9388 = vrot.slane %v9374, %v9387
  %v9389 = vcombine.low %v9381, %v9388
  %v9390 = vcombine.low %v9316, %v9300
  %v9391 = vcombine.low %v9314, %v9315
  %v9392 = vcombine.low %v9317, %v9332
  %v9393 = vcombine.low %v9339, %v9340
  %v9395 = vunpack.c.l.s4 1966171168
  %v9396 = vunpack.c.0.s8 %v9395
  %v9397 = vlaneseq
  %v9398 = vshrl.u32 %v9397, 7
  %v9399 = vsub.s32 %v9396, %v9398
  %v9400 = vrot.slane %v9390, %v9399
  %v9402 = vunpack.c.l.s4 1966171168
  %v9403 = vunpack.c.0.s8 %v9402
  %v9404 = vlaneseq
  %v9405 = vshrl.u32 %v9404, 7
  %v9406 = vsub.s32 %v9403, %v9405
  %v9407 = vrot.slane %v9391, %v9406
  %v9409 = vunpack.c.l.s4 1966171168
  %v9410 = vunpack.c.0.s8 %v9409
  %v9411 = vlaneseq
  %v9412 = vshrl.u32 %v9411, 7
  %v9413 = vsub.s32 %v9410, %v9412
  %v9414 = vrot.slane %v9392, %v9413
  %v9416 = vunpack.c.l.s4 1966171168
  %v9417 = vunpack.c.0.s8 %v9416
  %v9418 = vlaneseq
  %v9419 = vshrl.u32 %v9418, 7
  %v9420 = vsub.s32 %v9417, %v9419
  %v9421 = vrot.slane %v9393, %v9420
  %v9422 = vcombine.low %v9400, %v9407
  %v9423 = vcombine.low %v9414, %v9421
  %v9425 = vunpack.c.l.s4 1966171168
  %v9426 = vunpack.c.0.s8 %v9425
  %v9427 = vlaneseq
  %v9428 = vshrl.u32 %v9427, 7
  %v9429 = vsub.s32 %v9426, %v9428
  %v9430 = vrot.slane %v9422, %v9429
  %v9432 = vunpack.c.l.s4 1966171168
  %v9433 = vunpack.c.0.s8 %v9432
  %v9434 = vlaneseq
  %v9435 = vshrl.u32 %v9434, 7
  %v9436 = vsub.s32 %v9433, %v9435
  %v9437 = vrot.slane %v9423, %v9436
  %v9438 = vcombine.low %v9430, %v9437
  %v9441 = vadd.f32 %v8076, %v9389
  %v9442 = vadd.f32 %v8078, %v9438
  %v9443 = vlaneseq
  %v9444 = vshrl.u32 %v9443, 7
  %v9445 = vsub.s32 0, %v9444
  %v9446 = vrot.slane %v4791, %v9445
  %v9447 = vadd.f32 %v9441, %v9446
  %v9448 = vadd.f32 %v9442, %v9446
  %v9449 = vld [vmem:[%s4] sm:$0x1]
  %v9450 = vld [vmem:[%s4 + $0x1] sm:$0x1]
  %v9453 = vrot.slane %v9448, 7
  %vm9454 = vcmask 1041409
  %v9455 = vsel %vm9454, %v9453, %v9447
  %vm9457 = vcmask 254976
  %v9458 = vsel %vm9457, %v9455, 0.0
  %9459 = vadd.xlane.f32.xlu0 %v9458
  %v9460 = vpop.xlane.xlu0 %9459
  %v9461 = vmul.f32 %v9460, %v66
  %v9463 = vrot.slane %v9461, 1
  %v9466 = vsub.f32 %v9447, %v9461
  %v9467 = vsub.f32 %v9448, %v9463
  %v9468 = vmul.f32 %v9466, %v9466
  %v9469 = vmul.f32 %v9467, %v9467
  %v9472 = vrot.slane %v9469, 7
  %v9473 = vsel %vm9454, %v9472, %v9468
  %v9475 = vsel %vm9457, %v9473, 0.0
  %9476 = vadd.xlane.f32.xlu0 %v9475
  %v9477 = vpop.xlane.xlu0 %9476
  %v9478 = vmul.f32 %v9477, %v66
  %v9479 = vadd.f32 %v9478, 1e-05
  %v9480 = vrsqrt.pop %v9479
  %v9482 = vrot.slane %v9480, 1
  %v9485 = vmul.f32 %v9466, %v9480
  %v9486 = vmul.f32 %v9467, %v9482
  %v9487 = vlaneseq
  %v9488 = vshrl.u32 %v9487, 7
  %v9489 = vsub.s32 0, %v9488
  %v9490 = vrot.slane %v9449, %v9489
  %v9491 = vmul.f32 %v9485, %v9490
  %v9492 = vmul.f32 %v9486, %v9490
  %v9493 = vlaneseq
  %v9494 = vshrl.u32 %v9493, 7
  %v9495 = vsub.s32 0, %v9494
  %v9496 = vrot.slane %v9450, %v9495
  %v9497 = vadd.f32 %v9491, %v9496
  %v9498 = vadd.f32 %v9492, %v9496
  %v9499 = vld [vmem:[%s3] sm:$0xff]
  %v9500 = vld [vmem:[%s3 + $0x10] sm:$0xff]
  %v9501 = vld [vmem:[%s3 + $0x20] sm:$0xff]
  %v9502 = vld [vmem:[%s3 + $0x30] sm:$0xff]
  %v9503 = vld [vmem:[%s3 + $0x8] sm:$0xff]
  %v9504 = vld [vmem:[%s3 + $0x18] sm:$0xff]
  %v9505 = vld [vmem:[%s3 + $0x28] sm:$0xff]
  %v9506 = vld [vmem:[%s3 + $0x38] sm:$0xff]
  %v9507 = vld [vmem:[%s3 + $0x48] sm:$0xff]
  %v9508 = vld [vmem:[%s3 + $0x58] sm:$0xff]
  %v9509 = vld [vmem:[%s3 + $0x68] sm:$0xff]
  %v9510 = vld [vmem:[%s3 + $0x78] sm:$0xff]
  %v9511 = vld [vmem:[%s4 + $0x2] sm:$0x1]
  %v9512 = vld [vmem:[%s4 + $0x3] sm:$0x1]
  %v9513 = vlaneseq
  %v9514 = vshrl.u32 %v9513, 7
  %v9515 = vsub.s32 0, %v9514
  %v9516 = vrot.slane %v9511, %v9515
  %v9519 = vrot.slane %v9498, 7
  %v9520 = vsel %vm9454, %v9519, %v9497
  %v9521 = vsel %vm52, %v9520, 0
  %9523 = vmatprep.subr.mxu0 0.0
  %9524 = vmatpush1.msra.mxu0 %v9499
  %9525 = vmatprep.subr.mxu0 0.0
  %9526 = vmatpush1.msra.mxu0 %v9500
  %9527 = vmatprep.subr.mxu0 0.0
  %9528 = vmatpush1.msra.mxu0 %v9501
  %9529 = vmatprep.subr.mxu0 0.0
  %9530 = vmatpush1.msra.mxu0 %v9502
  %9531 = vmatprep.subr.mxu0 0.0
  %9532 = vmatpush1.msra.mxu0 0.0
  %9533 = vmatprep.subr.mxu0 0.0
  %9534 = vmatpush1.msra.mxu0 0.0
  %9535 = vmatprep.subr.mxu0 0.0
  %9536 = vmatpush1.msra.mxu0 0.0
  %9537 = vmatprep.subr.mxu0 0.0
  %9538 = vmatpush1.msra.mxu0 0.0
  %9539 = vmatprep.subr.mxu0 0.0
  %9540 = vmatpush1.msra.mxu0 0.0
  %9541 = vmatprep.subr.mxu0 0.0
  %9542 = vmatpush1.msra.mxu0 0.0
  %9543 = vmatprep.subr.mxu0 0.0
  %9544 = vmatpush1.msra.mxu0 0.0
  %9545 = vmatprep.subr.mxu0 0.0
  %9546 = vmatpush1.msra.mxu0 0.0
  %9547 = vmatprep.subr.mxu0 0.0
  %9548 = vmatpush1.msra.mxu0 0.0
  %9549 = vmatprep.subr.mxu0 0.0
  %9550 = vmatpush1.msra.mxu0 0.0
  %9551 = vmatprep.subr.mxu0 0.0
  %9552 = vmatpush1.msra.mxu0 0.0
  %9553 = vmatprep.subr.mxu0 0.0
  %9554 = vmatpush1.msra.mxu0 0.0
  %9555 = vmatprep.subr.mxu0 0.0
  %9556 = vmatpush1.msra.mxu0 0.0
  %9557 = vmatprep.subr.mxu0 0.0
  %9558 = vmatpush1.msra.mxu0 0.0
  %9559 = vmatprep.subr.mxu0 0.0
  %9560 = vmatpush1.msra.mxu0 0.0
  %9561 = vmatprep.subr.mxu0 0.0
  %9562 = vmatpush1.msra.mxu0 0.0
  %9563 = vmatprep.subr.mxu0 0.0
  %9564 = vmatpush1.msra.mxu0 0.0
  %9565 = vmatprep.subr.mxu0 0.0
  %9566 = vmatpush1.msra.mxu0 0.0
  %9567 = vmatprep.subr.mxu0 0.0
  %9568 = vmatpush1.msra.mxu0 0.0
  %9569 = vmatprep.subr.mxu0 0.0
  %9570 = vmatpush1.msra.mxu0 0.0
  %9571 = vmatprep.subr.mxu0 0.0
  %9572 = vmatpush1.msra.mxu0 0.0
  %9573 = vmatprep.subr.mxu0 0.0
  %9574 = vmatpush1.msra.mxu0 0.0
  %9575 = vmatprep.subr.mxu0 0.0
  %9576 = vmatpush1.msra.mxu0 0.0
  %9577 = vmatprep.subr.mxu0 0.0
  %9578 = vmatpush1.msra.mxu0 0.0
  %9579 = vmatprep.subr.mxu0 0.0
  %9580 = vmatpush1.msra.mxu0 0.0
  %9581 = vmatprep.subr.mxu0 0.0
  %9582 = vmatpush1.msra.mxu0 0.0
  %9583 = vmatprep.subr.mxu0 0.0
  %9584 = vmatpush1.msra.mxu0 0.0
  %9585 = vmatprep.subr.mxu0 0.0
  %9586 = vmatpush1.msra.mxu0 0.0
  %9587 = vmatprep.mubr.f32.mxu0 0.0
  %9588 = vmatmul.mubr.f32.gmra.mrb[0].mxu0 %v9521
  %v9589 = vpop.f32.mrb[0].mxu0
  %v9590 = vadd.f32 %v9516, %v9589
  %v9591 = vpop.f32.mrb[0].mxu0
  %9592 = vdwg.mxu0
  %v9593 = vmax.f32 %v9590, 0.0
  %9596 = vrot.lane.b32.xlu0 %v9593, 32
  %v9597 = vpop.permute.xlu0 %9596
  %v9599 = vsel %vm52, %v9520, %v9597
  %v9600 = vlaneseq
  %v9601 = vshrl.u32 %v9600, 7
  %v9602 = vsub.s32 0, %v9601
  %v9603 = vrot.slane %v9512, %v9602
  %v9605 = vsel %vm4388, %v9599, 0
  %9607 = vmatprep.subr.mxu0 0.0
  %9608 = vmatpush1.msra.mxu0 %v9503
  %9609 = vmatprep.subr.mxu0 0.0
  %9610 = vmatpush1.msra.mxu0 %v9504
  %9611 = vmatprep.subr.mxu0 0.0
  %9612 = vmatpush1.msra.mxu0 %v9505
  %9613 = vmatprep.subr.mxu0 0.0
  %9614 = vmatpush1.msra.mxu0 %v9506
  %9615 = vmatprep.subr.mxu0 0.0
  %9616 = vmatpush1.msra.mxu0 %v9507
  %9617 = vmatprep.subr.mxu0 0.0
  %9618 = vmatpush1.msra.mxu0 %v9508
  %9619 = vmatprep.subr.mxu0 0.0
  %9620 = vmatpush1.msra.mxu0 %v9509
  %9621 = vmatprep.subr.mxu0 0.0
  %9622 = vmatpush1.msra.mxu0 %v9510
  %9623 = vmatprep.subr.mxu0 0.0
  %9624 = vmatpush1.msra.mxu0 0.0
  %9625 = vmatprep.subr.mxu0 0.0
  %9626 = vmatpush1.msra.mxu0 0.0
  %9627 = vmatprep.subr.mxu0 0.0
  %9628 = vmatpush1.msra.mxu0 0.0
  %9629 = vmatprep.subr.mxu0 0.0
  %9630 = vmatpush1.msra.mxu0 0.0
  %9631 = vmatprep.subr.mxu0 0.0
  %9632 = vmatpush1.msra.mxu0 0.0
  %9633 = vmatprep.subr.mxu0 0.0
  %9634 = vmatpush1.msra.mxu0 0.0
  %9635 = vmatprep.subr.mxu0 0.0
  %9636 = vmatpush1.msra.mxu0 0.0
  %9637 = vmatprep.subr.mxu0 0.0
  %9638 = vmatpush1.msra.mxu0 0.0
  %9639 = vmatprep.subr.mxu0 0.0
  %9640 = vmatpush1.msra.mxu0 0.0
  %9641 = vmatprep.subr.mxu0 0.0
  %9642 = vmatpush1.msra.mxu0 0.0
  %9643 = vmatprep.subr.mxu0 0.0
  %9644 = vmatpush1.msra.mxu0 0.0
  %9645 = vmatprep.subr.mxu0 0.0
  %9646 = vmatpush1.msra.mxu0 0.0
  %9647 = vmatprep.subr.mxu0 0.0
  %9648 = vmatpush1.msra.mxu0 0.0
  %9649 = vmatprep.subr.mxu0 0.0
  %9650 = vmatpush1.msra.mxu0 0.0
  %9651 = vmatprep.subr.mxu0 0.0
  %9652 = vmatpush1.msra.mxu0 0.0
  %9653 = vmatprep.subr.mxu0 0.0
  %9654 = vmatpush1.msra.mxu0 0.0
  %9655 = vmatprep.subr.mxu0 0.0
  %9656 = vmatpush1.msra.mxu0 0.0
  %9657 = vmatprep.subr.mxu0 0.0
  %9658 = vmatpush1.msra.mxu0 0.0
  %9659 = vmatprep.subr.mxu0 0.0
  %9660 = vmatpush1.msra.mxu0 0.0
  %9661 = vmatprep.subr.mxu0 0.0
  %9662 = vmatpush1.msra.mxu0 0.0
  %9663 = vmatprep.subr.mxu0 0.0
  %9664 = vmatpush1.msra.mxu0 0.0
  %9665 = vmatprep.subr.mxu0 0.0
  %9666 = vmatpush1.msra.mxu0 0.0
  %9667 = vmatprep.subr.mxu0 0.0
  %9668 = vmatpush1.msra.mxu0 0.0
  %9669 = vmatprep.subr.mxu0 0.0
  %9670 = vmatpush1.msra.mxu0 0.0
  %9671 = vmatprep.mubr.f32.mxu0 0.0
  %9672 = vmatmul.mubr.f32.gmra.mrb[0].mxu0 %v9605
  %v9673 = vpop.f32.mrb[0].mxu0
  %v9674 = vadd.f32 %v9603, %v9673
  %v9675 = vpop.f32.mrb[0].mxu0
  %9676 = vdwg.mxu0
  %9677 = vst [vmem:[%s5] sm:$0x3] %v9674
  // Predicated region
  $region22: #{transformer_policy_forward.1} parent=0 // pred_check
    _
  $region23: #{transformer_policy_forward.1} parent=0 // pred_check_branch
    %9679 = sbr.rel (0) target = $region25
  $region24: #{transformer_policy_forward.1} parent=0 // pred_region
    _
  $region25: #{transformer_policy_forward.1} parent=0 // pred_fallthru
    _
  // Predicated region
  $region26: #{transformer_policy_forward.1} parent=0 // pred_check
    _
  $region27: #{transformer_policy_forward.1} parent=0 // pred_check_branch
    %9681 = sbr.rel (0) target = $region29
  $region28: #{transformer_policy_forward.1} parent=0 // pred_region
    _
  $region29: #{transformer_policy_forward.1} parent=0 // pred_fallthru
    _

</llo_original>
